<compile_context>
chip_gen: v6e
topology: v6e:2x2x1
jax: 0.10.0
libtpu: 0.0.40
codegen_flags: <defaults>
</compile_context>

<pallas_src>
import jax
import jax.numpy as jnp
import numpy as np
from jax import lax
from jax.experimental import pallas as pl
from jax.experimental.pallas import tpu as pltpu

NUM_HEADS = 4                    # num_heads
WINDOW = 7                       # window_size -> T = 49
DIM = 32                         # dim (divisible by num_heads)
MLP_RATIO = 4.0
LN_EPS = 1e-5
RMS_EPS = 1e-6
BN_EPS = 1e-5

KD = DIM // NUM_HEADS            # per-head dim (8)
IDIM = NUM_HEADS // (NUM_HEADS // 2)   # dynamic_hidden_dim (2)
T_TOK = WINDOW * WINDOW          # 49 tokens per window
T_PAD = ((T_TOK + 7) // 8) * 8   # 56, sublane-aligned token count
PACK = NUM_HEADS * T_TOK         # 196 packed lanes (col = s*NUM_HEADS + head)
DW_HID = NUM_HEADS * 4           # dynamic_w_hidden_dim per chunk (16)
DW_CHUNK = 2 * IDIM * NUM_HEADS  # dw output width per chunk (16)
MLP_HID = int(DIM * MLP_RATIO)   # 128

# rows of the stacked row-vector constant (all (1, DIM) vectors in one array)
R_LN1W, R_LN1B, R_BQ, R_BV, R_QSCALE, R_BPROJ = 0, 1, 2, 3, 4, 5
R_BNSCALE, R_BNSHIFT, R_LN2W, R_LN2B, R_MLPB2 = 6, 7, 8, 9, 10
R_CONVW = 11                     # 9 rows: depthwise conv taps 0..8
N_ROWVEC = R_CONVW + 9           # 20


def _gelu_exact(x):
    # exact (erf-based) GELU matching torch.nn.GELU(); erf via the
    # Abramowitz-Stegun 7.1.26 rational approximation (|err| < 1.5e-7).
    z = x * 0.7071067811865476
    az = jnp.abs(z)
    t = 1.0 / (1.0 + 0.3275911 * az)
    poly = ((((1.061405429 * t - 1.453152027) * t + 1.421413741) * t
             - 0.284496736) * t + 0.254829592) * t
    erf_abs = 1.0 - poly * jnp.exp(-az * az)
    erf = jnp.where(z >= 0, erf_abs, -erf_abs)
    return 0.5 * x * (1.0 + erf)


# ----------------------------------------------------------------------------
# Fused kernel: attention + depthwise conv/BN + MLP, one batch element per step
# ----------------------------------------------------------------------------
def _dcformer_kernel(
        x_ref,
        rv_ref, kcol_ref,
        wq_ref, wk_ref, wv_ref,
        wdwh_ref, qkwbd_ref, wdd_ref,
        m8_ref, m4_ref,
        seln_ref, sels_ref,
        bs_ref, bsbf_ref, bnbf_ref,
        hmk_ref, selst_ref, hmv_ref,
        wproj_ref,
        convg_ref,
        mw1_ref, mb1_ref, mw2_ref,
        out_ref):
    f32 = jnp.float32
    bf16 = jnp.bfloat16
    x = x_ref[0]                                          # (T, C)
    rv = rv_ref[...]                                      # (20, C) row vectors

    def row(i):
        return rv[i:i + 1, :]

    def layernorm(t, w, b):
        mu = jnp.mean(t, axis=-1, keepdims=True)
        tc = t - mu
        var = jnp.mean(tc * tc, axis=-1, keepdims=True)
        return tc * lax.rsqrt(var + LN_EPS) * w + b

    # ------------------------- DCMH attention -------------------------
    xn = layernorm(x, row(R_LN1W), row(R_LN1B))

    # qkv + per-head RMSnorm (group stats via block-mask matmuls, no slicing)
    m8 = m8_ref[...]
    q = jnp.dot(xn, wq_ref[...], preferred_element_type=f32) + row(R_BQ)
    qvar = jnp.dot(q * q, m8, preferred_element_type=f32) * (1.0 / KD)
    q = q * lax.rsqrt(qvar + RMS_EPS) * row(R_QSCALE)

    # k computed directly transposed: kT[ch, s]  (avoids an in-kernel transpose)
    kT = lax.dot_general(wk_ref[...], xn, (((0,), (1,)), ((), ())),
                         preferred_element_type=f32) + kcol_ref[:, 0:1]
    kvar = jnp.dot(m8, kT * kT, preferred_element_type=f32) * (1.0 / KD)
    kT = kT * lax.rsqrt(kvar + RMS_EPS) * kcol_ref[:, 1:2]

    v = jnp.dot(xn, wv_ref[...], preferred_element_type=f32) + row(R_BV)

    # fused dynamic-weight projections (block-diagonal qkw)
    hid = _gelu_exact(jnp.dot(xn, wdwh_ref[...], preferred_element_type=f32))
    dw = jnp.dot(hid, qkwbd_ref[...], preferred_element_type=f32)     # (T, 64)
    gvar = jnp.dot(dw * dw, m4_ref[...],
                   preferred_element_type=f32) * (1.0 / NUM_HEADS)
    dwn = dw * lax.rsqrt(gvar + RMS_EPS)       # w1 chunks read from dwn (RMSed)
    dd = jnp.tanh(jnp.dot(xn, wdd_ref[...], preferred_element_type=f32))

    seln = seln_ref[...]
    sels = sels_ref[...]
    ones_t = jnp.ones((1, T_TOK), f32)

    def q_expand(w):     # (T, N) -> (T, PACK): out[t, s*N+n] = w[t, n]
        return jnp.dot(w, seln, preferred_element_type=f32)

    def k_expand(w):     # (T, N) -> (1, PACK): out[0, s*N+n] = w[s, n]
        rep = jnp.dot(w, seln, preferred_element_type=f32)
        # row-select folded into an MXU matmul instead of an XLU sublane reduce
        return jnp.dot(ones_t, rep * sels, preferred_element_type=f32)

    def cross_head(a, cq, ck, bs_c, cdt):
        # a: packed (T, PACK) f32; cq/ck select the query/key dynamic-weight
        # chunks; bs_c is the key-position head-sum selector in dtype cdt.
        a_c = a.astype(cdt)
        out = a
        q0, k0 = cq * DW_CHUNK, ck * DW_CHUNK
        for i in range(IDIM):
            q1 = q_expand(dwn[:, q0 + i * NUM_HEADS:q0 + (i + 1) * NUM_HEADS])
            hsum = jnp.dot(a_c * q1.astype(cdt), bs_c,
                           preferred_element_type=f32)
            q2 = q_expand(dw[:, q0 + (IDIM + i) * NUM_HEADS:
                              q0 + (IDIM + i + 1) * NUM_HEADS])
            out = out + hsum * q2
            k1 = k_expand(dwn[:, k0 + i * NUM_HEADS:k0 + (i + 1) * NUM_HEADS])
            hsum = jnp.dot(a_c * k1.astype(cdt), bs_c,
                           preferred_element_type=f32)
            k2 = k_expand(dw[:, k0 + (IDIM + i) * NUM_HEADS:
                              k0 + (IDIM + i + 1) * NUM_HEADS])
            out = out + hsum * k2
        out = out + a * q_expand(dd[:, cq * NUM_HEADS:(cq + 1) * NUM_HEADS])
        out = out + a * k_expand(dd[:, ck * NUM_HEADS:(ck + 1) * NUM_HEADS])
        return out

    # packed per-head logits: (T, PACK), lane index = s*NUM_HEADS + head
    kbd = jnp.dot(kT, sels, preferred_element_type=f32) * hmk_ref[...]
    logits = jnp.dot(q, kbd, preferred_element_type=f32)

    pre = cross_head(logits, 0, 1, bs_ref[...], f32)          # f32 (feeds exp)

    # per-head softmax on the packed layout: one global row max (shift
    # invariant per head); denominator = sum over keys of the SAME head (bn).
    mx = jnp.max(pre, axis=-1, keepdims=True)
    e = jnp.exp(pre - mx)
    denom = jnp.dot(e.astype(bf16), bnbf_ref[...], preferred_element_type=f32)
    r = pl.reciprocal(denom, approx=True)
    r = r * (2.0 - denom * r)                 # one Newton step for accuracy
    probs = e * r

    post = cross_head(probs, 2, 3, bsbf_ref[...], bf16)       # bf16 MXU

    # P @ V (heads land channel-contiguous), output projection, residual
    vs = (jnp.dot(selst_ref[...], v.astype(bf16), preferred_element_type=f32)
          * hmv_ref[...]).astype(bf16)                              # (PACK, C)
    o = jnp.dot(post.astype(bf16), vs, preferred_element_type=f32)  # (T, C)
    x1 = x + jnp.dot(o, wproj_ref[...], preferred_element_type=f32) + row(R_BPROJ)

    # ---------------- depthwise 3x3 conv + BatchNorm (inference) ----------------
    # single bf16 gather matmul; each tap occupies a 56-row (aligned) block
    g = jnp.dot(convg_ref[...], x1.astype(bf16),
                preferred_element_type=f32)                     # (9*T_PAD, C)
    acc = g[0:T_PAD, :] * row(R_CONVW)
    for tap in range(1, 9):
        acc = acc + g[tap * T_PAD:(tap + 1) * T_PAD, :] * row(R_CONVW + tap)
    x2 = acc[0:T_TOK, :] * row(R_BNSCALE) + row(R_BNSHIFT)

    # ------------------------------- MLP + residual ------------------------------
    x2n = layernorm(x2, row(R_LN2W), row(R_LN2B))
    h = _gelu_exact(jnp.dot(x2n, mw1_ref[...], preferred_element_type=f32)
                    + mb1_ref[...])
    out_ref[0] = (x2 + jnp.dot(h, mw2_ref[...], preferred_element_type=f32)
                  + row(R_MLPB2))


# ----------------------------------------------------------------------------
# Wrapper (BlockSpecs / grid)
# ----------------------------------------------------------------------------
PARAM_ORDER = (
    'rowvecs', 'kcol',
    'wq', 'wk', 'wv',
    'w_dwh_cat', 'qkw_bd', 'w_dd_cat',
    'm8', 'm4',
    'seln', 'sels',
    'bs', 'bs_bf', 'bn_bf',
    'hmask_k', 'selst_bf', 'hmv_bf',
    'w_proj',
    'conv_g_bf',
    'mlp_w1', 'mlp_b1', 'mlp_w2',
)


def dcformer_block(x, kp):
    B, T, C = x.shape
    params = [kp[name] for name in PARAM_ORDER]

    def const_spec(a):
        nd = a.ndim
        return pl.BlockSpec(tuple(a.shape), lambda b, _nd=nd: (0,) * _nd)

    in_specs = ([pl.BlockSpec((1, T, C), lambda b: (b, 0, 0))]
                + [const_spec(a) for a in params])
    return pl.pallas_call(
        _dcformer_kernel,
        out_shape=jax.ShapeDtypeStruct((B, T, C), jnp.float32),
        grid=(B,),
        in_specs=in_specs,
        out_specs=pl.BlockSpec((1, T, C), lambda b: (b, 0, 0)),
        compiler_params=pltpu.CompilerParams(dimension_semantics=("parallel",)),
    )(x, *params)


# ----------------------------------------------------------------------------
# Host-side parameter packing (block-diagonal / lane-friendly layouts)
# ----------------------------------------------------------------------------
def pack_params(p):
    f = np.float32
    bf = jnp.bfloat16
    dim, N, kd, T = DIM, NUM_HEADS, KD, T_TOK
    kp = {}

    # stacked (1, dim) row vectors + per-tap conv weights in one array
    rowvecs = np.zeros((N_ROWVEC, dim), f)
    rowvecs[R_LN1W] = np.asarray(p['ln_w'], f)[0]
    rowvecs[R_LN1B] = np.asarray(p['ln_b'], f)[0]
    rowvecs[R_BQ] = np.asarray(p['bq'], f)[0]
    rowvecs[R_BV] = np.asarray(p['bv'], f)[0]
    rowvecs[R_QSCALE] = np.tile(np.asarray(p['q_scale'], f)[0], N)
    rowvecs[R_BPROJ] = np.asarray(p['b_proj'], f)[0]
    rowvecs[R_BNSCALE] = np.asarray(p['bn_scale'], f)[0]
    rowvecs[R_BNSHIFT] = np.asarray(p['bn_shift'], f)[0]
    rowvecs[R_LN2W] = np.asarray(p['ln2_w'], f)[0]
    rowvecs[R_LN2B] = np.asarray(p['ln2_b'], f)[0]
    rowvecs[R_MLPB2] = np.asarray(p['mlp_b2'], f)[0]
    rowvecs[R_CONVW:R_CONVW + 9] = np.asarray(p['conv_w9'], f)
    kp['rowvecs'] = jnp.asarray(rowvecs)

    kcol = np.zeros((dim, 2), f)
    kcol[:, 0] = np.asarray(p['bk'], f)[0]
    kcol[:, 1] = np.tile(np.asarray(p['k_scale'], f)[0], N)
    kp['kcol'] = jnp.asarray(kcol)

    kp['wq'], kp['wk'], kp['wv'] = p['wq'], p['wk'], p['wv']

    # fused dynamic-weight projections
    kp['w_dwh_cat'] = jnp.concatenate([p['w_dwh'][c] for c in range(4)], axis=1)
    kp['w_dd_cat'] = jnp.concatenate([p['w_dd'][c] for c in range(4)], axis=1)
    qkw1 = np.asarray(p['qkw1'], f)
    qkw2 = np.asarray(p['qkw2'], f)
    qkw_bd = np.zeros((4 * DW_HID, 4 * DW_CHUNK), f)
    for c in range(4):
        r0, c0 = c * DW_HID, c * DW_CHUNK
        for i in range(IDIM):
            qkw_bd[r0:r0 + DW_HID, c0 + i * N:c0 + (i + 1) * N] = qkw1[c, i]
            qkw_bd[r0:r0 + DW_HID,
                   c0 + (IDIM + i) * N:c0 + (IDIM + i + 1) * N] = qkw2[c, i]
    kp['qkw_bd'] = jnp.asarray(qkw_bd)

    # group-statistics block masks
    r32 = np.arange(dim)
    kp['m8'] = jnp.asarray((r32[:, None] // kd == r32[None, :] // kd).astype(f))
    r64 = np.arange(4 * DW_CHUNK)
    kp['m4'] = jnp.asarray((r64[:, None] // N == r64[None, :] // N).astype(f))

    # packed-attention selectors (head-minor lane packing: col = s*N + head)
    cols = np.arange(PACK)
    s_of = cols // N
    n_of = cols % N
    seln = (np.arange(N)[:, None] == n_of[None, :]).astype(f)          # (N, PACK)
    sels = (np.arange(T)[:, None] == s_of[None, :]).astype(f)          # (T, PACK)
    kp['seln'] = jnp.asarray(seln)
    kp['sels'] = jnp.asarray(sels)
    kp['selst_bf'] = jnp.asarray(np.ascontiguousarray(sels.T), dtype=bf)
    bs = (s_of[:, None] == s_of[None, :]).astype(f)    # key-position equality
    bn = (n_of[:, None] == n_of[None, :]).astype(f)    # head equality (softmax)
    kp['bs'] = jnp.asarray(bs)
    kp['bs_bf'] = jnp.asarray(bs, dtype=bf)
    kp['bn_bf'] = jnp.asarray(bn, dtype=bf)
    kp['hmask_k'] = jnp.asarray((r32[:, None] // kd == n_of[None, :]).astype(f))
    kp['hmv_bf'] = jnp.asarray((n_of[:, None] == r32[None, :] // kd).astype(f),
                               dtype=bf)

    kp['w_proj'] = p['w_proj'].reshape(dim, dim)

    # depthwise 3x3 conv as one gather matmul (zero rows implement zero padding)
    gather = np.zeros((9 * T_PAD, T), f)
    for ki in range(3):
        for kj in range(3):
            tap = ki * 3 + kj
            for rr in range(WINDOW):
                for cc in range(WINDOW):
                    sr, sc = rr + ki - 1, cc + kj - 1
                    if 0 <= sr < WINDOW and 0 <= sc < WINDOW:
                        gather[tap * T_PAD + rr * WINDOW + cc,
                               sr * WINDOW + sc] = 1.0
    kp['conv_g_bf'] = jnp.asarray(gather, dtype=bf)

    kp['mlp_w1'], kp['mlp_b1'], kp['mlp_w2'] = p['mlp_w1'], p['mlp_b1'], p['mlp_w2']
    return kp


# ----------------------------------------------------------------------------
# Deterministic parameter init (synthetic; no checkpoint loading)
# ----------------------------------------------------------------------------
def init_params(key):
    dim, N = DIM, NUM_HEADS
    kd = dim // N
    K = N * 4                                   # dynamic_w_hidden_dim
    idim = N // (N // 2)                        # dynamic_hidden_dim
    hidden = int(dim * MLP_RATIO)
    keys = list(jax.random.split(key, 32))
    it = iter(keys)

    def rnd(shape, scale):
        return (scale * jax.random.normal(next(it), shape)).astype(jnp.float32)

    p = {}
    p['ln_w'] = 1.0 + rnd((1, dim), 0.1)
    p['ln_b'] = rnd((1, dim), 0.1)
    p['wq'] = rnd((dim, N * kd), dim ** -0.5)
    p['bq'] = rnd((1, N * kd), 0.02)
    p['wk'] = rnd((dim, N * kd), dim ** -0.5)
    p['bk'] = rnd((1, N * kd), 0.02)
    p['wv'] = rnd((dim, N * kd), dim ** -0.5)
    p['bv'] = rnd((1, N * kd), 0.02)
    p['q_scale'] = 1.0 + rnd((1, kd), 0.1)
    p['k_scale'] = 1.0 + rnd((1, kd), 0.1)
    p['w_dwh'] = rnd((4, dim, K), dim ** -0.5)
    p['w_dd'] = rnd((4, dim, N), dim ** -0.5)
    p['qkw1'] = rnd((4, idim, K, N), K ** -0.5)
    p['qkw2'] = rnd((4, idim, K, N), K ** -0.5)
    p['w_proj'] = rnd((N, kd, dim), dim ** -0.5)
    p['b_proj'] = rnd((1, dim), 0.02)
    p['conv_w9'] = rnd((9, dim), 0.2)
    gamma = 1.0 + rnd((1, dim), 0.1)
    beta = rnd((1, dim), 0.1)
    rmean = rnd((1, dim), 0.05)
    rvar = 1.0 + jnp.abs(rnd((1, dim), 0.1))
    scale = gamma * lax.rsqrt(rvar + BN_EPS)
    p['bn_scale'] = scale
    p['bn_shift'] = beta - rmean * scale
    p['ln2_w'] = 1.0 + rnd((1, dim), 0.1)
    p['ln2_b'] = rnd((1, dim), 0.1)
    p['mlp_w1'] = rnd((dim, hidden), dim ** -0.5)
    p['mlp_b1'] = rnd((1, hidden), 0.02)
    p['mlp_w2'] = rnd((hidden, dim), hidden ** -0.5)
    p['mlp_b2'] = rnd((1, dim), 0.02)
    return p


# ----------------------------------------------------------------------------
# Pure-JAX reference (mirrors the PyTorch forward), used for a sanity check
# ----------------------------------------------------------------------------
def _reference(x, p, H, W):
    B, L, C = x.shape
    N = NUM_HEADS
    kd = C // N
    idim = p['qkw1'].shape[1]

    def layernorm(t, w, b):
        mu = jnp.mean(t, -1, keepdims=True)
        var = jnp.mean((t - mu) ** 2, -1, keepdims=True)
        return (t - mu) * lax.rsqrt(var + LN_EPS) * w + b

    xn = layernorm(x, p['ln_w'][0], p['ln_b'][0])
    qf = xn @ p['wq'] + p['bq'][0]
    kf = xn @ p['wk'] + p['bk'][0]
    vf = xn @ p['wv'] + p['bv'][0]

    def rms(t, scale):
        v = jnp.mean(t * t, -1, keepdims=True)
        return t * lax.rsqrt(v + RMS_EPS) * scale

    q = rms(qf.reshape(B, L, N, kd), p['q_scale'][0]).transpose(0, 2, 1, 3)
    k = rms(kf.reshape(B, L, N, kd), p['k_scale'][0]).transpose(0, 2, 1, 3)
    v = vf.reshape(B, L, N, kd).transpose(0, 2, 1, 3)

    w1, w2, dds = [], [], []
    for c in range(4):
        hid = jax.nn.gelu(xn @ p['w_dwh'][c], approximate=False)       # (B,T,K)
        a = jnp.einsum('btk,ikn->btin', hid, p['qkw1'][c])
        a = a * lax.rsqrt(jnp.mean(a * a, -1, keepdims=True) + RMS_EPS)
        b = jnp.einsum('btk,ikn->btin', hid, p['qkw2'][c])
        w1.append(a)
        w2.append(b)
        dds.append(jnp.tanh(xn @ p['w_dd'][c]))                        # (B,T,N)

    def cross(inp, qw1, qw2, kw1, kw2, qdd, kdd):
        out = inp
        for i in range(idim):
            qh = jnp.einsum('bnts,btn->bts', inp, qw1[:, :, i, :])
            out = out + jnp.einsum('bts,btn->bnts', qh, qw2[:, :, i, :])
            kh = jnp.einsum('bnts,bsn->bts', inp, kw1[:, :, i, :])
            out = out + jnp.einsum('bts,bsn->bnts', kh, kw2[:, :, i, :])
        out = out + inp * qdd.transpose(0, 2, 1)[:, :, :, None]
        out = out + inp * kdd.transpose(0, 2, 1)[:, :, None, :]
        return out

    logits = jnp.einsum('bntd,bnsd->bnts', q, k)
    logits = cross(logits, w1[0], w2[0], w1[1], w2[1], dds[0], dds[1])
    probs = jax.nn.softmax(logits, -1)
    probs = cross(probs, w1[2], w2[2], w1[3], w2[3], dds[2], dds[3])
    o = jnp.einsum('bnts,bnsd->bntd', probs, v)
    o = o.transpose(0, 2, 1, 3).reshape(B, L, N * kd)
    x1 = x + o @ p['w_proj'].reshape(N * kd, C) + p['b_proj'][0]

    xi = x1.reshape(B, H, W, C)
    w_hwio = p['conv_w9'].reshape(3, 3, C)[:, :, None, :]
    y = lax.conv_general_dilated(xi, w_hwio, (1, 1), 'SAME',
                                 dimension_numbers=('NHWC', 'HWIO', 'NHWC'),
                                 feature_group_count=C)
    x2 = (y * p['bn_scale'][0] + p['bn_shift'][0]).reshape(B, L, C)

    hn = layernorm(x2, p['ln2_w'][0], p['ln2_b'][0])
    h = jax.nn.gelu(hn @ p['mlp_w1'] + p['mlp_b1'][0], approximate=False)
    return x2 + h @ p['mlp_w2'] + p['mlp_b2'][0]


if __name__ == "__main__":
    key = jax.random.PRNGKey(0)
    kx, kparam = jax.random.split(key)
    H = W = WINDOW
    B = 2
    L = H * W
    x = jax.random.normal(kx, (B, L, DIM), dtype=jnp.float32)
    params = init_params(kparam)
    packed = pack_params(params)

    run = jax.jit(dcformer_block)
    out = jax.block_until_ready(run(x, packed))

    ref = _reference(x, params, H, W)
    assert out.shape == ref.shape == (B, L, DIM)
    max_diff = float(jnp.max(jnp.abs(out - ref)))
    assert bool(jnp.allclose(out, ref, rtol=2e-2, atol=2e-2)), max_diff

    print("KERNEL_OK")
</pallas_src>

<mosaic_0001>
module attributes {stable_mosaic.version = 11 : i64} {
  func.func @_dcformer_kernel(%arg0: i32, %arg1: memref<1x49x32xf32, #tpu.memory_space<vmem>>, %arg2: memref<20x32xf32, #tpu.memory_space<vmem>>, %arg3: memref<32x2xf32, #tpu.memory_space<vmem>>, %arg4: memref<32x32xf32, #tpu.memory_space<vmem>>, %arg5: memref<32x32xf32, #tpu.memory_space<vmem>>, %arg6: memref<32x32xf32, #tpu.memory_space<vmem>>, %arg7: memref<32x64xf32, #tpu.memory_space<vmem>>, %arg8: memref<64x64xf32, #tpu.memory_space<vmem>>, %arg9: memref<32x16xf32, #tpu.memory_space<vmem>>, %arg10: memref<32x32xf32, #tpu.memory_space<vmem>>, %arg11: memref<64x64xf32, #tpu.memory_space<vmem>>, %arg12: memref<4x196xf32, #tpu.memory_space<vmem>>, %arg13: memref<49x196xf32, #tpu.memory_space<vmem>>, %arg14: memref<196x196xf32, #tpu.memory_space<vmem>>, %arg15: memref<196x196xbf16, #tpu.memory_space<vmem>>, %arg16: memref<196x196xbf16, #tpu.memory_space<vmem>>, %arg17: memref<32x196xf32, #tpu.memory_space<vmem>>, %arg18: memref<196x49xbf16, #tpu.memory_space<vmem>>, %arg19: memref<196x32xbf16, #tpu.memory_space<vmem>>, %arg20: memref<32x32xf32, #tpu.memory_space<vmem>>, %arg21: memref<504x49xbf16, #tpu.memory_space<vmem>>, %arg22: memref<32x128xf32, #tpu.memory_space<vmem>>, %arg23: memref<1x128xf32, #tpu.memory_space<vmem>>, %arg24: memref<128x32xf32, #tpu.memory_space<vmem>>, %arg25: memref<1x49x32xf32, #tpu.memory_space<vmem>>) attributes {dimension_semantics = [#tpu.dimension_semantics<parallel>], iteration_bounds = array<i64: 2>, scalar_prefetch = 0 : i64, scratch_operands = 0 : i64, tpu.core_type = #tpu.core_type<tc>, window_params = [{transform_indices = @transform_0, window_bounds = array<i64: 1, 49, 32>}, {pipeline_mode = #tpu.pipeline_mode<synchronous>, transform_indices = @transform_1, window_bounds = array<i64: 20, 32>}, {pipeline_mode = #tpu.pipeline_mode<synchronous>, transform_indices = @transform_2, window_bounds = array<i64: 32, 2>}, {pipeline_mode = #tpu.pipeline_mode<synchronous>, transform_indices = @transform_3, window_bounds = array<i64: 32, 32>}, {pipeline_mode = #tpu.pipeline_mode<synchronous>, transform_indices = @transform_4, window_bounds = array<i64: 32, 32>}, {pipeline_mode = #tpu.pipeline_mode<synchronous>, transform_indices = @transform_5, window_bounds = array<i64: 32, 32>}, {pipeline_mode = #tpu.pipeline_mode<synchronous>, transform_indices = @transform_6, window_bounds = array<i64: 32, 64>}, {pipeline_mode = #tpu.pipeline_mode<synchronous>, transform_indices = @transform_7, window_bounds = array<i64: 64, 64>}, {pipeline_mode = #tpu.pipeline_mode<synchronous>, transform_indices = @transform_8, window_bounds = array<i64: 32, 16>}, {pipeline_mode = #tpu.pipeline_mode<synchronous>, transform_indices = @transform_9, window_bounds = array<i64: 32, 32>}, {pipeline_mode = #tpu.pipeline_mode<synchronous>, transform_indices = @transform_10, window_bounds = array<i64: 64, 64>}, {pipeline_mode = #tpu.pipeline_mode<synchronous>, transform_indices = @transform_11, window_bounds = array<i64: 4, 196>}, {pipeline_mode = #tpu.pipeline_mode<synchronous>, transform_indices = @transform_12, window_bounds = array<i64: 49, 196>}, {pipeline_mode = #tpu.pipeline_mode<synchronous>, transform_indices = @transform_13, window_bounds = array<i64: 196, 196>}, {pipeline_mode = #tpu.pipeline_mode<synchronous>, transform_indices = @transform_14, window_bounds = array<i64: 196, 196>}, {pipeline_mode = #tpu.pipeline_mode<synchronous>, transform_indices = @transform_15, window_bounds = array<i64: 196, 196>}, {pipeline_mode = #tpu.pipeline_mode<synchronous>, transform_indices = @transform_16, window_bounds = array<i64: 32, 196>}, {pipeline_mode = #tpu.pipeline_mode<synchronous>, transform_indices = @transform_17, window_bounds = array<i64: 196, 49>}, {pipeline_mode = #tpu.pipeline_mode<synchronous>, transform_indices = @transform_18, window_bounds = array<i64: 196, 32>}, {pipeline_mode = #tpu.pipeline_mode<synchronous>, transform_indices = @transform_19, window_bounds = array<i64: 32, 32>}, {pipeline_mode = #tpu.pipeline_mode<synchronous>, transform_indices = @transform_20, window_bounds = array<i64: 504, 49>}, {pipeline_mode = #tpu.pipeline_mode<synchronous>, transform_indices = @transform_21, window_bounds = array<i64: 32, 128>}, {pipeline_mode = #tpu.pipeline_mode<synchronous>, transform_indices = @transform_22, window_bounds = array<i64: 1, 128>}, {pipeline_mode = #tpu.pipeline_mode<synchronous>, transform_indices = @transform_23, window_bounds = array<i64: 128, 32>}, {transform_indices = @transform_24, window_bounds = array<i64: 1, 49, 32>}]} {
    %c0 = arith.constant 0 : index
    %c0_0 = arith.constant 0 : index
    %c0_1 = arith.constant 0 : index
    %0 = vector.load %arg1[%c0, %c0_0, %c0_1] : memref<1x49x32xf32, #tpu.memory_space<vmem>>, vector<1x49x32xf32>
    %1 = vector.shape_cast %0 : vector<1x49x32xf32> to vector<49x32xf32>
    %c0_2 = arith.constant 0 : index
    %c0_3 = arith.constant 0 : index
    %2 = vector.load %arg2[%c0_2, %c0_3] : memref<20x32xf32, #tpu.memory_space<vmem>>, vector<20x32xf32>
    %3 = vector.extract_strided_slice %2 {offsets = [0, 0], sizes = [1, 32], strides = [1, 1]} : vector<20x32xf32> to vector<1x32xf32>
    %4 = vector.extract_strided_slice %2 {offsets = [1, 0], sizes = [1, 32], strides = [1, 1]} : vector<20x32xf32> to vector<1x32xf32>
    %cst = arith.constant dense<0.000000e+00> : vector<49xf32>
    %5 = vector.multi_reduction <add>, %1, %cst [1] : vector<49x32xf32> to vector<49xf32>
    %6 = vector.shape_cast %5 : vector<49xf32> to vector<49x1xf32>
    %cst_4 = arith.constant 3.200000e+01 : f32
    %7 = vector.broadcast %cst_4 : f32 to vector<49x1xf32>
    %8 = arith.divf %6, %7 : vector<49x1xf32>
    %9 = vector.broadcast %8 : vector<49x1xf32> to vector<49x32xf32>
    %10 = arith.subf %1, %9 : vector<49x32xf32>
    %11 = arith.mulf %10, %10 : vector<49x32xf32>
    %cst_5 = arith.constant dense<0.000000e+00> : vector<49xf32>
    %12 = vector.multi_reduction <add>, %11, %cst_5 [1] : vector<49x32xf32> to vector<49xf32>
    %13 = vector.shape_cast %12 : vector<49xf32> to vector<49x1xf32>
    %cst_6 = arith.constant 3.200000e+01 : f32
    %14 = vector.broadcast %cst_6 : f32 to vector<49x1xf32>
    %15 = arith.divf %13, %14 : vector<49x1xf32>
    %cst_7 = arith.constant 9.99999974E-6 : f32
    %16 = vector.broadcast %cst_7 : f32 to vector<49x1xf32>
    %17 = arith.addf %15, %16 : vector<49x1xf32>
    %18 = math.rsqrt %17 : vector<49x1xf32>
    %19 = vector.broadcast %18 : vector<49x1xf32> to vector<49x32xf32>
    %20 = arith.mulf %10, %19 : vector<49x32xf32>
    %21 = vector.broadcast %3 : vector<1x32xf32> to vector<49x32xf32>
    %22 = arith.mulf %20, %21 : vector<49x32xf32>
    %23 = vector.broadcast %4 : vector<1x32xf32> to vector<49x32xf32>
    %24 = arith.addf %22, %23 : vector<49x32xf32>
    %c0_8 = arith.constant 0 : index
    %c0_9 = arith.constant 0 : index
    %25 = vector.load %arg10[%c0_8, %c0_9] : memref<32x32xf32, #tpu.memory_space<vmem>>, vector<32x32xf32>
    %c0_10 = arith.constant 0 : index
    %c0_11 = arith.constant 0 : index
    %26 = vector.load %arg4[%c0_10, %c0_11] : memref<32x32xf32, #tpu.memory_space<vmem>>, vector<32x32xf32>
    %cst_12 = arith.constant dense<0.000000e+00> : vector<49x32xf32>
    %27 = tpu.matmul %24, %26, %cst_12 {dimension_numbers = #tpu.dot_dimension_numbers<[1], [0], [0], [1], [0, 0, 1, 1], [], []>} : vector<49x32xf32>, vector<32x32xf32>, vector<49x32xf32> -> vector<49x32xf32>
    %28 = vector.extract_strided_slice %2 {offsets = [2, 0], sizes = [1, 32], strides = [1, 1]} : vector<20x32xf32> to vector<1x32xf32>
    %29 = vector.broadcast %28 : vector<1x32xf32> to vector<49x32xf32>
    %30 = arith.addf %27, %29 : vector<49x32xf32>
    %31 = arith.mulf %30, %30 : vector<49x32xf32>
    %cst_13 = arith.constant dense<0.000000e+00> : vector<49x32xf32>
    %32 = tpu.matmul %31, %25, %cst_13 {dimension_numbers = #tpu.dot_dimension_numbers<[1], [0], [0], [1], [0, 0, 1, 1], [], []>} : vector<49x32xf32>, vector<32x32xf32>, vector<49x32xf32> -> vector<49x32xf32>
    %cst_14 = arith.constant 1.250000e-01 : f32
    %33 = vector.broadcast %cst_14 : f32 to vector<49x32xf32>
    %34 = arith.mulf %32, %33 : vector<49x32xf32>
    %cst_15 = arith.constant 9.99999997E-7 : f32
    %35 = vector.broadcast %cst_15 : f32 to vector<49x32xf32>
    %36 = arith.addf %34, %35 : vector<49x32xf32>
    %37 = math.rsqrt %36 : vector<49x32xf32>
    %38 = arith.mulf %30, %37 : vector<49x32xf32>
    %39 = vector.extract_strided_slice %2 {offsets = [4, 0], sizes = [1, 32], strides = [1, 1]} : vector<20x32xf32> to vector<1x32xf32>
    %40 = vector.broadcast %39 : vector<1x32xf32> to vector<49x32xf32>
    %41 = arith.mulf %38, %40 : vector<49x32xf32>
    %c0_16 = arith.constant 0 : index
    %c0_17 = arith.constant 0 : index
    %42 = vector.load %arg5[%c0_16, %c0_17] : memref<32x32xf32, #tpu.memory_space<vmem>>, vector<32x32xf32>
    %cst_18 = arith.constant dense<0.000000e+00> : vector<32x49xf32>
    %43 = tpu.matmul %42, %24, %cst_18 {dimension_numbers = #tpu.dot_dimension_numbers<[0], [1], [1], [0], [0, 1, 1, 0], [], []>} : vector<32x32xf32>, vector<49x32xf32>, vector<32x49xf32> -> vector<32x49xf32>
    %c0_19 = arith.constant 0 : index
    %c0_20 = arith.constant 0 : index
    %44 = vector.load %arg3[%c0_19, %c0_20] : memref<32x2xf32, #tpu.memory_space<vmem>>, vector<32x1xf32>
    %45 = vector.broadcast %44 : vector<32x1xf32> to vector<32x49xf32>
    %46 = arith.addf %43, %45 : vector<32x49xf32>
    %47 = arith.mulf %46, %46 : vector<32x49xf32>
    %cst_21 = arith.constant dense<0.000000e+00> : vector<32x49xf32>
    %48 = tpu.matmul %25, %47, %cst_21 {dimension_numbers = #tpu.dot_dimension_numbers<[1], [0], [0], [1], [0, 0, 1, 1], [], []>} : vector<32x32xf32>, vector<32x49xf32>, vector<32x49xf32> -> vector<32x49xf32>
    %cst_22 = arith.constant 1.250000e-01 : f32
    %49 = vector.broadcast %cst_22 : f32 to vector<32x49xf32>
    %50 = arith.mulf %48, %49 : vector<32x49xf32>
    %cst_23 = arith.constant 9.99999997E-7 : f32
    %51 = vector.broadcast %cst_23 : f32 to vector<32x49xf32>
    %52 = arith.addf %50, %51 : vector<32x49xf32>
    %53 = math.rsqrt %52 : vector<32x49xf32>
    %54 = arith.mulf %46, %53 : vector<32x49xf32>
    %c0_24 = arith.constant 0 : index
    %c1 = arith.constant 1 : index
    %55 = vector.load %arg3[%c0_24, %c1] : memref<32x2xf32, #tpu.memory_space<vmem>>, vector<32x1xf32>
    %56 = vector.broadcast %55 : vector<32x1xf32> to vector<32x49xf32>
    %57 = arith.mulf %54, %56 : vector<32x49xf32>
    %c0_25 = arith.constant 0 : index
    %c0_26 = arith.constant 0 : index
    %58 = vector.load %arg6[%c0_25, %c0_26] : memref<32x32xf32, #tpu.memory_space<vmem>>, vector<32x32xf32>
    %cst_27 = arith.constant dense<0.000000e+00> : vector<49x32xf32>
    %59 = tpu.matmul %24, %58, %cst_27 {dimension_numbers = #tpu.dot_dimension_numbers<[1], [0], [0], [1], [0, 0, 1, 1], [], []>} : vector<49x32xf32>, vector<32x32xf32>, vector<49x32xf32> -> vector<49x32xf32>
    %60 = vector.extract_strided_slice %2 {offsets = [3, 0], sizes = [1, 32], strides = [1, 1]} : vector<20x32xf32> to vector<1x32xf32>
    %61 = vector.broadcast %60 : vector<1x32xf32> to vector<49x32xf32>
    %62 = arith.addf %59, %61 : vector<49x32xf32>
    %c0_28 = arith.constant 0 : index
    %c0_29 = arith.constant 0 : index
    %63 = vector.load %arg7[%c0_28, %c0_29] : memref<32x64xf32, #tpu.memory_space<vmem>>, vector<32x64xf32>
    %cst_30 = arith.constant dense<0.000000e+00> : vector<49x64xf32>
    %64 = tpu.matmul %24, %63, %cst_30 {dimension_numbers = #tpu.dot_dimension_numbers<[1], [0], [0], [1], [0, 0, 1, 1], [], []>} : vector<49x32xf32>, vector<32x64xf32>, vector<49x64xf32> -> vector<49x64xf32>
    %cst_31 = arith.constant 0.707106769 : f32
    %65 = vector.broadcast %cst_31 : f32 to vector<49x64xf32>
    %66 = arith.mulf %64, %65 : vector<49x64xf32>
    %67 = math.absf %66 : vector<49x64xf32>
    %cst_32 = arith.constant 0.327591091 : f32
    %68 = vector.broadcast %cst_32 : f32 to vector<49x64xf32>
    %69 = arith.mulf %68, %67 : vector<49x64xf32>
    %cst_33 = arith.constant 1.000000e+00 : f32
    %70 = vector.broadcast %cst_33 : f32 to vector<49x64xf32>
    %71 = arith.addf %70, %69 : vector<49x64xf32>
    %cst_34 = arith.constant 1.000000e+00 : f32
    %72 = vector.broadcast %cst_34 : f32 to vector<49x64xf32>
    %73 = arith.divf %72, %71 : vector<49x64xf32>
    %cst_35 = arith.constant 1.06140542 : f32
    %74 = vector.broadcast %cst_35 : f32 to vector<49x64xf32>
    %75 = arith.mulf %74, %73 : vector<49x64xf32>
    %cst_36 = arith.constant 1.45315206 : f32
    %76 = vector.broadcast %cst_36 : f32 to vector<49x64xf32>
    %77 = arith.subf %75, %76 : vector<49x64xf32>
    %78 = arith.mulf %77, %73 : vector<49x64xf32>
    %cst_37 = arith.constant 1.42141378 : f32
    %79 = vector.broadcast %cst_37 : f32 to vector<49x64xf32>
    %80 = arith.addf %78, %79 : vector<49x64xf32>
    %81 = arith.mulf %80, %73 : vector<49x64xf32>
    %cst_38 = arith.constant 0.284496725 : f32
    %82 = vector.broadcast %cst_38 : f32 to vector<49x64xf32>
    %83 = arith.subf %81, %82 : vector<49x64xf32>
    %84 = arith.mulf %83, %73 : vector<49x64xf32>
    %cst_39 = arith.constant 0.254829586 : f32
    %85 = vector.broadcast %cst_39 : f32 to vector<49x64xf32>
    %86 = arith.addf %84, %85 : vector<49x64xf32>
    %87 = arith.mulf %86, %73 : vector<49x64xf32>
    %cst_40 = arith.constant 0.000000e+00 : f32
    %88 = vector.broadcast %cst_40 : f32 to vector<49x64xf32>
    %89 = arith.subf %88, %67 : vector<49x64xf32>
    %90 = arith.mulf %89, %67 : vector<49x64xf32>
    %91 = math.exp %90 : vector<49x64xf32>
    %92 = arith.mulf %87, %91 : vector<49x64xf32>
    %cst_41 = arith.constant 1.000000e+00 : f32
    %93 = vector.broadcast %cst_41 : f32 to vector<49x64xf32>
    %94 = arith.subf %93, %92 : vector<49x64xf32>
    %cst_42 = arith.constant 0.000000e+00 : f32
    %95 = vector.broadcast %cst_42 : f32 to vector<49x64xf32>
    %96 = arith.cmpf oge, %66, %95 : vector<49x64xf32>
    %cst_43 = arith.constant 0.000000e+00 : f32
    %97 = vector.broadcast %cst_43 : f32 to vector<49x64xf32>
    %98 = arith.subf %97, %94 : vector<49x64xf32>
    %99 = arith.select %96, %94, %98 : vector<49x64xi1>, vector<49x64xf32>
    %cst_44 = arith.constant 5.000000e-01 : f32
    %100 = vector.broadcast %cst_44 : f32 to vector<49x64xf32>
    %101 = arith.mulf %100, %64 : vector<49x64xf32>
    %cst_45 = arith.constant 1.000000e+00 : f32
    %102 = vector.broadcast %cst_45 : f32 to vector<49x64xf32>
    %103 = arith.addf %102, %99 : vector<49x64xf32>
    %104 = arith.mulf %101, %103 : vector<49x64xf32>
    %c0_46 = arith.constant 0 : index
    %c0_47 = arith.constant 0 : index
    %105 = vector.load %arg8[%c0_46, %c0_47] : memref<64x64xf32, #tpu.memory_space<vmem>>, vector<64x64xf32>
    %cst_48 = arith.constant dense<0.000000e+00> : vector<49x64xf32>
    %106 = tpu.matmul %104, %105, %cst_48 {dimension_numbers = #tpu.dot_dimension_numbers<[1], [0], [0], [1], [0, 0, 1, 1], [], []>} : vector<49x64xf32>, vector<64x64xf32>, vector<49x64xf32> -> vector<49x64xf32>
    %107 = arith.mulf %106, %106 : vector<49x64xf32>
    %c0_49 = arith.constant 0 : index
    %c0_50 = arith.constant 0 : index
    %108 = vector.load %arg11[%c0_49, %c0_50] : memref<64x64xf32, #tpu.memory_space<vmem>>, vector<64x64xf32>
    %cst_51 = arith.constant dense<0.000000e+00> : vector<49x64xf32>
    %109 = tpu.matmul %107, %108, %cst_51 {dimension_numbers = #tpu.dot_dimension_numbers<[1], [0], [0], [1], [0, 0, 1, 1], [], []>} : vector<49x64xf32>, vector<64x64xf32>, vector<49x64xf32> -> vector<49x64xf32>
    %cst_52 = arith.constant 2.500000e-01 : f32
    %110 = vector.broadcast %cst_52 : f32 to vector<49x64xf32>
    %111 = arith.mulf %109, %110 : vector<49x64xf32>
    %cst_53 = arith.constant 9.99999997E-7 : f32
    %112 = vector.broadcast %cst_53 : f32 to vector<49x64xf32>
    %113 = arith.addf %111, %112 : vector<49x64xf32>
    %114 = math.rsqrt %113 : vector<49x64xf32>
    %115 = arith.mulf %106, %114 : vector<49x64xf32>
    %c0_54 = arith.constant 0 : index
    %c0_55 = arith.constant 0 : index
    %116 = vector.load %arg9[%c0_54, %c0_55] : memref<32x16xf32, #tpu.memory_space<vmem>>, vector<32x16xf32>
    %cst_56 = arith.constant dense<0.000000e+00> : vector<49x16xf32>
    %117 = tpu.matmul %24, %116, %cst_56 {dimension_numbers = #tpu.dot_dimension_numbers<[1], [0], [0], [1], [0, 0, 1, 1], [], []>} : vector<49x32xf32>, vector<32x16xf32>, vector<49x16xf32> -> vector<49x16xf32>
    %118 = math.tanh %117 : vector<49x16xf32>
    %c0_57 = arith.constant 0 : index
    %c0_58 = arith.constant 0 : index
    %119 = vector.load %arg12[%c0_57, %c0_58] : memref<4x196xf32, #tpu.memory_space<vmem>>, vector<4x196xf32>
    %c0_59 = arith.constant 0 : index
    %c0_60 = arith.constant 0 : index
    %120 = vector.load %arg13[%c0_59, %c0_60] : memref<49x196xf32, #tpu.memory_space<vmem>>, vector<49x196xf32>
    %cst_61 = arith.constant 1.000000e+00 : f32
    %121 = vector.broadcast %cst_61 : f32 to vector<1x49xf32>
    %cst_62 = arith.constant dense<0.000000e+00> : vector<32x196xf32>
    %122 = tpu.matmul %57, %120, %cst_62 {dimension_numbers = #tpu.dot_dimension_numbers<[1], [0], [0], [1], [0, 0, 1, 1], [], []>} : vector<32x49xf32>, vector<49x196xf32>, vector<32x196xf32> -> vector<32x196xf32>
    %c0_63 = arith.constant 0 : index
    %c0_64 = arith.constant 0 : index
    %123 = vector.load %arg17[%c0_63, %c0_64] : memref<32x196xf32, #tpu.memory_space<vmem>>, vector<32x196xf32>
    %124 = arith.mulf %122, %123 : vector<32x196xf32>
    %cst_65 = arith.constant dense<0.000000e+00> : vector<49x196xf32>
    %125 = tpu.matmul %41, %124, %cst_65 {dimension_numbers = #tpu.dot_dimension_numbers<[1], [0], [0], [1], [0, 0, 1, 1], [], []>} : vector<49x32xf32>, vector<32x196xf32>, vector<49x196xf32> -> vector<49x196xf32>
    %c0_66 = arith.constant 0 : index
    %c0_67 = arith.constant 0 : index
    %126 = vector.load %arg14[%c0_66, %c0_67] : memref<196x196xf32, #tpu.memory_space<vmem>>, vector<196x196xf32>
    %127 = vector.extract_strided_slice %115 {offsets = [0, 0], sizes = [49, 4], strides = [1, 1]} : vector<49x64xf32> to vector<49x4xf32>
    %cst_68 = arith.constant dense<0.000000e+00> : vector<49x196xf32>
    %128 = tpu.matmul %127, %119, %cst_68 {dimension_numbers = #tpu.dot_dimension_numbers<[1], [0], [0], [1], [0, 0, 1, 1], [], []>} : vector<49x4xf32>, vector<4x196xf32>, vector<49x196xf32> -> vector<49x196xf32>
    %129 = arith.mulf %125, %128 : vector<49x196xf32>
    %cst_69 = arith.constant dense<0.000000e+00> : vector<49x196xf32>
    %130 = tpu.matmul %129, %126, %cst_69 {dimension_numbers = #tpu.dot_dimension_numbers<[1], [0], [0], [1], [0, 0, 1, 1], [], []>} : vector<49x196xf32>, vector<196x196xf32>, vector<49x196xf32> -> vector<49x196xf32>
    %131 = vector.extract_strided_slice %106 {offsets = [0, 8], sizes = [49, 4], strides = [1, 1]} : vector<49x64xf32> to vector<49x4xf32>
    %cst_70 = arith.constant dense<0.000000e+00> : vector<49x196xf32>
    %132 = tpu.matmul %131, %119, %cst_70 {dimension_numbers = #tpu.dot_dimension_numbers<[1], [0], [0], [1], [0, 0, 1, 1], [], []>} : vector<49x4xf32>, vector<4x196xf32>, vector<49x196xf32> -> vector<49x196xf32>
    %133 = arith.mulf %130, %132 : vector<49x196xf32>
    %134 = arith.addf %125, %133 : vector<49x196xf32>
    %135 = vector.extract_strided_slice %115 {offsets = [0, 16], sizes = [49, 4], strides = [1, 1]} : vector<49x64xf32> to vector<49x4xf32>
    %cst_71 = arith.constant dense<0.000000e+00> : vector<49x196xf32>
    %136 = tpu.matmul %135, %119, %cst_71 {dimension_numbers = #tpu.dot_dimension_numbers<[1], [0], [0], [1], [0, 0, 1, 1], [], []>} : vector<49x4xf32>, vector<4x196xf32>, vector<49x196xf32> -> vector<49x196xf32>
    %137 = arith.mulf %136, %120 : vector<49x196xf32>
    %cst_72 = arith.constant dense<0.000000e+00> : vector<1x196xf32>
    %138 = tpu.matmul %121, %137, %cst_72 {dimension_numbers = #tpu.dot_dimension_numbers<[1], [0], [0], [1], [0, 0, 1, 1], [], []>} : vector<1x49xf32>, vector<49x196xf32>, vector<1x196xf32> -> vector<1x196xf32>
    %139 = vector.broadcast %138 : vector<1x196xf32> to vector<49x196xf32>
    %140 = arith.mulf %125, %139 : vector<49x196xf32>
    %cst_73 = arith.constant dense<0.000000e+00> : vector<49x196xf32>
    %141 = tpu.matmul %140, %126, %cst_73 {dimension_numbers = #tpu.dot_dimension_numbers<[1], [0], [0], [1], [0, 0, 1, 1], [], []>} : vector<49x196xf32>, vector<196x196xf32>, vector<49x196xf32> -> vector<49x196xf32>
    %142 = vector.extract_strided_slice %106 {offsets = [0, 24], sizes = [49, 4], strides = [1, 1]} : vector<49x64xf32> to vector<49x4xf32>
    %cst_74 = arith.constant dense<0.000000e+00> : vector<49x196xf32>
    %143 = tpu.matmul %142, %119, %cst_74 {dimension_numbers = #tpu.dot_dimension_numbers<[1], [0], [0], [1], [0, 0, 1, 1], [], []>} : vector<49x4xf32>, vector<4x196xf32>, vector<49x196xf32> -> vector<49x196xf32>
    %144 = arith.mulf %143, %120 : vector<49x196xf32>
    %cst_75 = arith.constant dense<0.000000e+00> : vector<1x196xf32>
    %145 = tpu.matmul %121, %144, %cst_75 {dimension_numbers = #tpu.dot_dimension_numbers<[1], [0], [0], [1], [0, 0, 1, 1], [], []>} : vector<1x49xf32>, vector<49x196xf32>, vector<1x196xf32> -> vector<1x196xf32>
    %146 = vector.broadcast %145 : vector<1x196xf32> to vector<49x196xf32>
    %147 = arith.mulf %141, %146 : vector<49x196xf32>
    %148 = arith.addf %134, %147 : vector<49x196xf32>
    %149 = vector.extract_strided_slice %115 {offsets = [0, 4], sizes = [49, 4], strides = [1, 1]} : vector<49x64xf32> to vector<49x4xf32>
    %cst_76 = arith.constant dense<0.000000e+00> : vector<49x196xf32>
    %150 = tpu.matmul %149, %119, %cst_76 {dimension_numbers = #tpu.dot_dimension_numbers<[1], [0], [0], [1], [0, 0, 1, 1], [], []>} : vector<49x4xf32>, vector<4x196xf32>, vector<49x196xf32> -> vector<49x196xf32>
    %151 = arith.mulf %125, %150 : vector<49x196xf32>
    %cst_77 = arith.constant dense<0.000000e+00> : vector<49x196xf32>
    %152 = tpu.matmul %151, %126, %cst_77 {dimension_numbers = #tpu.dot_dimension_numbers<[1], [0], [0], [1], [0, 0, 1, 1], [], []>} : vector<49x196xf32>, vector<196x196xf32>, vector<49x196xf32> -> vector<49x196xf32>
    %153 = vector.extract_strided_slice %106 {offsets = [0, 12], sizes = [49, 4], strides = [1, 1]} : vector<49x64xf32> to vector<49x4xf32>
    %cst_78 = arith.constant dense<0.000000e+00> : vector<49x196xf32>
    %154 = tpu.matmul %153, %119, %cst_78 {dimension_numbers = #tpu.dot_dimension_numbers<[1], [0], [0], [1], [0, 0, 1, 1], [], []>} : vector<49x4xf32>, vector<4x196xf32>, vector<49x196xf32> -> vector<49x196xf32>
    %155 = arith.mulf %152, %154 : vector<49x196xf32>
    %156 = arith.addf %148, %155 : vector<49x196xf32>
    %157 = vector.extract_strided_slice %115 {offsets = [0, 20], sizes = [49, 4], strides = [1, 1]} : vector<49x64xf32> to vector<49x4xf32>
    %cst_79 = arith.constant dense<0.000000e+00> : vector<49x196xf32>
    %158 = tpu.matmul %157, %119, %cst_79 {dimension_numbers = #tpu.dot_dimension_numbers<[1], [0], [0], [1], [0, 0, 1, 1], [], []>} : vector<49x4xf32>, vector<4x196xf32>, vector<49x196xf32> -> vector<49x196xf32>
    %159 = arith.mulf %158, %120 : vector<49x196xf32>
    %cst_80 = arith.constant dense<0.000000e+00> : vector<1x196xf32>
    %160 = tpu.matmul %121, %159, %cst_80 {dimension_numbers = #tpu.dot_dimension_numbers<[1], [0], [0], [1], [0, 0, 1, 1], [], []>} : vector<1x49xf32>, vector<49x196xf32>, vector<1x196xf32> -> vector<1x196xf32>
    %161 = vector.broadcast %160 : vector<1x196xf32> to vector<49x196xf32>
    %162 = arith.mulf %125, %161 : vector<49x196xf32>
    %cst_81 = arith.constant dense<0.000000e+00> : vector<49x196xf32>
    %163 = tpu.matmul %162, %126, %cst_81 {dimension_numbers = #tpu.dot_dimension_numbers<[1], [0], [0], [1], [0, 0, 1, 1], [], []>} : vector<49x196xf32>, vector<196x196xf32>, vector<49x196xf32> -> vector<49x196xf32>
    %164 = vector.extract_strided_slice %106 {offsets = [0, 28], sizes = [49, 4], strides = [1, 1]} : vector<49x64xf32> to vector<49x4xf32>
    %cst_82 = arith.constant dense<0.000000e+00> : vector<49x196xf32>
    %165 = tpu.matmul %164, %119, %cst_82 {dimension_numbers = #tpu.dot_dimension_numbers<[1], [0], [0], [1], [0, 0, 1, 1], [], []>} : vector<49x4xf32>, vector<4x196xf32>, vector<49x196xf32> -> vector<49x196xf32>
    %166 = arith.mulf %165, %120 : vector<49x196xf32>
    %cst_83 = arith.constant dense<0.000000e+00> : vector<1x196xf32>
    %167 = tpu.matmul %121, %166, %cst_83 {dimension_numbers = #tpu.dot_dimension_numbers<[1], [0], [0], [1], [0, 0, 1, 1], [], []>} : vector<1x49xf32>, vector<49x196xf32>, vector<1x196xf32> -> vector<1x196xf32>
    %168 = vector.broadcast %167 : vector<1x196xf32> to vector<49x196xf32>
    %169 = arith.mulf %163, %168 : vector<49x196xf32>
    %170 = arith.addf %156, %169 : vector<49x196xf32>
    %171 = vector.extract_strided_slice %118 {offsets = [0, 0], sizes = [49, 4], strides = [1, 1]} : vector<49x16xf32> to vector<49x4xf32>
    %cst_84 = arith.constant dense<0.000000e+00> : vector<49x196xf32>
    %172 = tpu.matmul %171, %119, %cst_84 {dimension_numbers = #tpu.dot_dimension_numbers<[1], [0], [0], [1], [0, 0, 1, 1], [], []>} : vector<49x4xf32>, vector<4x196xf32>, vector<49x196xf32> -> vector<49x196xf32>
    %173 = arith.mulf %125, %172 : vector<49x196xf32>
    %174 = arith.addf %170, %173 : vector<49x196xf32>
    %175 = vector.extract_strided_slice %118 {offsets = [0, 4], sizes = [49, 4], strides = [1, 1]} : vector<49x16xf32> to vector<49x4xf32>
    %cst_85 = arith.constant dense<0.000000e+00> : vector<49x196xf32>
    %176 = tpu.matmul %175, %119, %cst_85 {dimension_numbers = #tpu.dot_dimension_numbers<[1], [0], [0], [1], [0, 0, 1, 1], [], []>} : vector<49x4xf32>, vector<4x196xf32>, vector<49x196xf32> -> vector<49x196xf32>
    %177 = arith.mulf %176, %120 : vector<49x196xf32>
    %cst_86 = arith.constant dense<0.000000e+00> : vector<1x196xf32>
    %178 = tpu.matmul %121, %177, %cst_86 {dimension_numbers = #tpu.dot_dimension_numbers<[1], [0], [0], [1], [0, 0, 1, 1], [], []>} : vector<1x49xf32>, vector<49x196xf32>, vector<1x196xf32> -> vector<1x196xf32>
    %179 = vector.broadcast %178 : vector<1x196xf32> to vector<49x196xf32>
    %180 = arith.mulf %125, %179 : vector<49x196xf32>
    %181 = arith.addf %174, %180 : vector<49x196xf32>
    %cst_87 = arith.constant dense<0xFF800000> : vector<49xf32>
    %182 = vector.multi_reduction <maximumf>, %181, %cst_87 [1] : vector<49x196xf32> to vector<49xf32>
    %183 = vector.shape_cast %182 : vector<49xf32> to vector<49x1xf32>
    %184 = vector.broadcast %183 : vector<49x1xf32> to vector<49x196xf32>
    %185 = arith.subf %181, %184 : vector<49x196xf32>
    %186 = math.exp %185 : vector<49x196xf32>
    %187 = arith.truncf %186 : vector<49x196xf32> to vector<49x196xbf16>
    %c0_88 = arith.constant 0 : index
    %c0_89 = arith.constant 0 : index
    %188 = vector.load %arg16[%c0_88, %c0_89] : memref<196x196xbf16, #tpu.memory_space<vmem>>, vector<196x196xbf16>
    %cst_90 = arith.constant dense<0.000000e+00> : vector<49x196xf32>
    %189 = tpu.matmul %187, %188, %cst_90 {dimension_numbers = #tpu.dot_dimension_numbers<[1], [0], [0], [1], [0, 0, 1, 1], [], []>} : vector<49x196xbf16>, vector<196x196xbf16>, vector<49x196xf32> -> vector<49x196xf32>
    %190 = tpu.reciprocal %189 {approx = true} : vector<49x196xf32> -> vector<49x196xf32>
    %191 = arith.mulf %189, %190 : vector<49x196xf32>
    %cst_91 = arith.constant 2.000000e+00 : f32
    %192 = vector.broadcast %cst_91 : f32 to vector<49x196xf32>
    %193 = arith.subf %192, %191 : vector<49x196xf32>
    %194 = arith.mulf %190, %193 : vector<49x196xf32>
    %195 = arith.mulf %186, %194 : vector<49x196xf32>
    %c0_92 = arith.constant 0 : index
    %c0_93 = arith.constant 0 : index
    %196 = vector.load %arg15[%c0_92, %c0_93] : memref<196x196xbf16, #tpu.memory_space<vmem>>, vector<196x196xbf16>
    %197 = arith.truncf %195 : vector<49x196xf32> to vector<49x196xbf16>
    %198 = vector.extract_strided_slice %115 {offsets = [0, 32], sizes = [49, 4], strides = [1, 1]} : vector<49x64xf32> to vector<49x4xf32>
    %cst_94 = arith.constant dense<0.000000e+00> : vector<49x196xf32>
    %199 = tpu.matmul %198, %119, %cst_94 {dimension_numbers = #tpu.dot_dimension_numbers<[1], [0], [0], [1], [0, 0, 1, 1], [], []>} : vector<49x4xf32>, vector<4x196xf32>, vector<49x196xf32> -> vector<49x196xf32>
    %200 = arith.truncf %199 : vector<49x196xf32> to vector<49x196xbf16>
    %201 = arith.mulf %197, %200 : vector<49x196xbf16>
    %cst_95 = arith.constant dense<0.000000e+00> : vector<49x196xf32>
    %202 = tpu.matmul %201, %196, %cst_95 {dimension_numbers = #tpu.dot_dimension_numbers<[1], [0], [0], [1], [0, 0, 1, 1], [], []>} : vector<49x196xbf16>, vector<196x196xbf16>, vector<49x196xf32> -> vector<49x196xf32>
    %203 = vector.extract_strided_slice %106 {offsets = [0, 40], sizes = [49, 4], strides = [1, 1]} : vector<49x64xf32> to vector<49x4xf32>
    %cst_96 = arith.constant dense<0.000000e+00> : vector<49x196xf32>
    %204 = tpu.matmul %203, %119, %cst_96 {dimension_numbers = #tpu.dot_dimension_numbers<[1], [0], [0], [1], [0, 0, 1, 1], [], []>} : vector<49x4xf32>, vector<4x196xf32>, vector<49x196xf32> -> vector<49x196xf32>
    %205 = arith.mulf %202, %204 : vector<49x196xf32>
    %206 = arith.addf %195, %205 : vector<49x196xf32>
    %207 = vector.extract_strided_slice %115 {offsets = [0, 48], sizes = [49, 4], strides = [1, 1]} : vector<49x64xf32> to vector<49x4xf32>
    %cst_97 = arith.constant dense<0.000000e+00> : vector<49x196xf32>
    %208 = tpu.matmul %207, %119, %cst_97 {dimension_numbers = #tpu.dot_dimension_numbers<[1], [0], [0], [1], [0, 0, 1, 1], [], []>} : vector<49x4xf32>, vector<4x196xf32>, vector<49x196xf32> -> vector<49x196xf32>
    %209 = arith.mulf %208, %120 : vector<49x196xf32>
    %cst_98 = arith.constant dense<0.000000e+00> : vector<1x196xf32>
    %210 = tpu.matmul %121, %209, %cst_98 {dimension_numbers = #tpu.dot_dimension_numbers<[1], [0], [0], [1], [0, 0, 1, 1], [], []>} : vector<1x49xf32>, vector<49x196xf32>, vector<1x196xf32> -> vector<1x196xf32>
    %211 = arith.truncf %210 : vector<1x196xf32> to vector<1x196xbf16>
    %212 = vector.broadcast %211 : vector<1x196xbf16> to vector<49x196xbf16>
    %213 = arith.mulf %197, %212 : vector<49x196xbf16>
    %cst_99 = arith.constant dense<0.000000e+00> : vector<49x196xf32>
    %214 = tpu.matmul %213, %196, %cst_99 {dimension_numbers = #tpu.dot_dimension_numbers<[1], [0], [0], [1], [0, 0, 1, 1], [], []>} : vector<49x196xbf16>, vector<196x196xbf16>, vector<49x196xf32> -> vector<49x196xf32>
    %215 = vector.extract_strided_slice %106 {offsets = [0, 56], sizes = [49, 4], strides = [1, 1]} : vector<49x64xf32> to vector<49x4xf32>
    %cst_100 = arith.constant dense<0.000000e+00> : vector<49x196xf32>
    %216 = tpu.matmul %215, %119, %cst_100 {dimension_numbers = #tpu.dot_dimension_numbers<[1], [0], [0], [1], [0, 0, 1, 1], [], []>} : vector<49x4xf32>, vector<4x196xf32>, vector<49x196xf32> -> vector<49x196xf32>
    %217 = arith.mulf %216, %120 : vector<49x196xf32>
    %cst_101 = arith.constant dense<0.000000e+00> : vector<1x196xf32>
    %218 = tpu.matmul %121, %217, %cst_101 {dimension_numbers = #tpu.dot_dimension_numbers<[1], [0], [0], [1], [0, 0, 1, 1], [], []>} : vector<1x49xf32>, vector<49x196xf32>, vector<1x196xf32> -> vector<1x196xf32>
    %219 = vector.broadcast %218 : vector<1x196xf32> to vector<49x196xf32>
    %220 = arith.mulf %214, %219 : vector<49x196xf32>
    %221 = arith.addf %206, %220 : vector<49x196xf32>
    %222 = vector.extract_strided_slice %115 {offsets = [0, 36], sizes = [49, 4], strides = [1, 1]} : vector<49x64xf32> to vector<49x4xf32>
    %cst_102 = arith.constant dense<0.000000e+00> : vector<49x196xf32>
    %223 = tpu.matmul %222, %119, %cst_102 {dimension_numbers = #tpu.dot_dimension_numbers<[1], [0], [0], [1], [0, 0, 1, 1], [], []>} : vector<49x4xf32>, vector<4x196xf32>, vector<49x196xf32> -> vector<49x196xf32>
    %224 = arith.truncf %223 : vector<49x196xf32> to vector<49x196xbf16>
    %225 = arith.mulf %197, %224 : vector<49x196xbf16>
    %cst_103 = arith.constant dense<0.000000e+00> : vector<49x196xf32>
    %226 = tpu.matmul %225, %196, %cst_103 {dimension_numbers = #tpu.dot_dimension_numbers<[1], [0], [0], [1], [0, 0, 1, 1], [], []>} : vector<49x196xbf16>, vector<196x196xbf16>, vector<49x196xf32> -> vector<49x196xf32>
    %227 = vector.extract_strided_slice %106 {offsets = [0, 44], sizes = [49, 4], strides = [1, 1]} : vector<49x64xf32> to vector<49x4xf32>
    %cst_104 = arith.constant dense<0.000000e+00> : vector<49x196xf32>
    %228 = tpu.matmul %227, %119, %cst_104 {dimension_numbers = #tpu.dot_dimension_numbers<[1], [0], [0], [1], [0, 0, 1, 1], [], []>} : vector<49x4xf32>, vector<4x196xf32>, vector<49x196xf32> -> vector<49x196xf32>
    %229 = arith.mulf %226, %228 : vector<49x196xf32>
    %230 = arith.addf %221, %229 : vector<49x196xf32>
    %231 = vector.extract_strided_slice %115 {offsets = [0, 52], sizes = [49, 4], strides = [1, 1]} : vector<49x64xf32> to vector<49x4xf32>
    %cst_105 = arith.constant dense<0.000000e+00> : vector<49x196xf32>
    %232 = tpu.matmul %231, %119, %cst_105 {dimension_numbers = #tpu.dot_dimension_numbers<[1], [0], [0], [1], [0, 0, 1, 1], [], []>} : vector<49x4xf32>, vector<4x196xf32>, vector<49x196xf32> -> vector<49x196xf32>
    %233 = arith.mulf %232, %120 : vector<49x196xf32>
    %cst_106 = arith.constant dense<0.000000e+00> : vector<1x196xf32>
    %234 = tpu.matmul %121, %233, %cst_106 {dimension_numbers = #tpu.dot_dimension_numbers<[1], [0], [0], [1], [0, 0, 1, 1], [], []>} : vector<1x49xf32>, vector<49x196xf32>, vector<1x196xf32> -> vector<1x196xf32>
    %235 = arith.truncf %234 : vector<1x196xf32> to vector<1x196xbf16>
    %236 = vector.broadcast %235 : vector<1x196xbf16> to vector<49x196xbf16>
    %237 = arith.mulf %197, %236 : vector<49x196xbf16>
    %cst_107 = arith.constant dense<0.000000e+00> : vector<49x196xf32>
    %238 = tpu.matmul %237, %196, %cst_107 {dimension_numbers = #tpu.dot_dimension_numbers<[1], [0], [0], [1], [0, 0, 1, 1], [], []>} : vector<49x196xbf16>, vector<196x196xbf16>, vector<49x196xf32> -> vector<49x196xf32>
    %239 = vector.extract_strided_slice %106 {offsets = [0, 60], sizes = [49, 4], strides = [1, 1]} : vector<49x64xf32> to vector<49x4xf32>
    %cst_108 = arith.constant dense<0.000000e+00> : vector<49x196xf32>
    %240 = tpu.matmul %239, %119, %cst_108 {dimension_numbers = #tpu.dot_dimension_numbers<[1], [0], [0], [1], [0, 0, 1, 1], [], []>} : vector<49x4xf32>, vector<4x196xf32>, vector<49x196xf32> -> vector<49x196xf32>
    %241 = arith.mulf %240, %120 : vector<49x196xf32>
    %cst_109 = arith.constant dense<0.000000e+00> : vector<1x196xf32>
    %242 = tpu.matmul %121, %241, %cst_109 {dimension_numbers = #tpu.dot_dimension_numbers<[1], [0], [0], [1], [0, 0, 1, 1], [], []>} : vector<1x49xf32>, vector<49x196xf32>, vector<1x196xf32> -> vector<1x196xf32>
    %243 = vector.broadcast %242 : vector<1x196xf32> to vector<49x196xf32>
    %244 = arith.mulf %238, %243 : vector<49x196xf32>
    %245 = arith.addf %230, %244 : vector<49x196xf32>
    %246 = vector.extract_strided_slice %118 {offsets = [0, 8], sizes = [49, 4], strides = [1, 1]} : vector<49x16xf32> to vector<49x4xf32>
    %cst_110 = arith.constant dense<0.000000e+00> : vector<49x196xf32>
    %247 = tpu.matmul %246, %119, %cst_110 {dimension_numbers = #tpu.dot_dimension_numbers<[1], [0], [0], [1], [0, 0, 1, 1], [], []>} : vector<49x4xf32>, vector<4x196xf32>, vector<49x196xf32> -> vector<49x196xf32>
    %248 = arith.mulf %195, %247 : vector<49x196xf32>
    %249 = arith.addf %245, %248 : vector<49x196xf32>
    %250 = vector.extract_strided_slice %118 {offsets = [0, 12], sizes = [49, 4], strides = [1, 1]} : vector<49x16xf32> to vector<49x4xf32>
    %cst_111 = arith.constant dense<0.000000e+00> : vector<49x196xf32>
    %251 = tpu.matmul %250, %119, %cst_111 {dimension_numbers = #tpu.dot_dimension_numbers<[1], [0], [0], [1], [0, 0, 1, 1], [], []>} : vector<49x4xf32>, vector<4x196xf32>, vector<49x196xf32> -> vector<49x196xf32>
    %252 = arith.mulf %251, %120 : vector<49x196xf32>
    %cst_112 = arith.constant dense<0.000000e+00> : vector<1x196xf32>
    %253 = tpu.matmul %121, %252, %cst_112 {dimension_numbers = #tpu.dot_dimension_numbers<[1], [0], [0], [1], [0, 0, 1, 1], [], []>} : vector<1x49xf32>, vector<49x196xf32>, vector<1x196xf32> -> vector<1x196xf32>
    %254 = vector.broadcast %253 : vector<1x196xf32> to vector<49x196xf32>
    %255 = arith.mulf %195, %254 : vector<49x196xf32>
    %256 = arith.addf %249, %255 : vector<49x196xf32>
    %c0_113 = arith.constant 0 : index
    %c0_114 = arith.constant 0 : index
    %257 = vector.load %arg18[%c0_113, %c0_114] : memref<196x49xbf16, #tpu.memory_space<vmem>>, vector<196x49xbf16>
    %258 = arith.truncf %62 : vector<49x32xf32> to vector<49x32xbf16>
    %cst_115 = arith.constant dense<0.000000e+00> : vector<196x32xf32>
    %259 = tpu.matmul %257, %258, %cst_115 {dimension_numbers = #tpu.dot_dimension_numbers<[1], [0], [0], [1], [0, 0, 1, 1], [], []>} : vector<196x49xbf16>, vector<49x32xbf16>, vector<196x32xf32> -> vector<196x32xf32>
    %c0_116 = arith.constant 0 : index
    %c0_117 = arith.constant 0 : index
    %260 = vector.load %arg19[%c0_116, %c0_117] : memref<196x32xbf16, #tpu.memory_space<vmem>>, vector<196x32xbf16>
    %261 = arith.extf %260 : vector<196x32xbf16> to vector<196x32xf32>
    %262 = arith.mulf %259, %261 : vector<196x32xf32>
    %263 = arith.truncf %262 : vector<196x32xf32> to vector<196x32xbf16>
    %264 = arith.truncf %256 : vector<49x196xf32> to vector<49x196xbf16>
    %cst_118 = arith.constant dense<0.000000e+00> : vector<49x32xf32>
    %265 = tpu.matmul %264, %263, %cst_118 {dimension_numbers = #tpu.dot_dimension_numbers<[1], [0], [0], [1], [0, 0, 1, 1], [], []>} : vector<49x196xbf16>, vector<196x32xbf16>, vector<49x32xf32> -> vector<49x32xf32>
    %c0_119 = arith.constant 0 : index
    %c0_120 = arith.constant 0 : index
    %266 = vector.load %arg20[%c0_119, %c0_120] : memref<32x32xf32, #tpu.memory_space<vmem>>, vector<32x32xf32>
    %cst_121 = arith.constant dense<0.000000e+00> : vector<49x32xf32>
    %267 = tpu.matmul %265, %266, %cst_121 {dimension_numbers = #tpu.dot_dimension_numbers<[1], [0], [0], [1], [0, 0, 1, 1], [], []>} : vector<49x32xf32>, vector<32x32xf32>, vector<49x32xf32> -> vector<49x32xf32>
    %268 = arith.addf %1, %267 : vector<49x32xf32>
    %269 = vector.extract_strided_slice %2 {offsets = [5, 0], sizes = [1, 32], strides = [1, 1]} : vector<20x32xf32> to vector<1x32xf32>
    %270 = vector.broadcast %269 : vector<1x32xf32> to vector<49x32xf32>
    %271 = arith.addf %268, %270 : vector<49x32xf32>
    %c0_122 = arith.constant 0 : index
    %c0_123 = arith.constant 0 : index
    %272 = vector.load %arg21[%c0_122, %c0_123] : memref<504x49xbf16, #tpu.memory_space<vmem>>, vector<504x49xbf16>
    %273 = arith.truncf %271 : vector<49x32xf32> to vector<49x32xbf16>
    %cst_124 = arith.constant dense<0.000000e+00> : vector<504x32xf32>
    %274 = tpu.matmul %272, %273, %cst_124 {dimension_numbers = #tpu.dot_dimension_numbers<[1], [0], [0], [1], [0, 0, 1, 1], [], []>} : vector<504x49xbf16>, vector<49x32xbf16>, vector<504x32xf32> -> vector<504x32xf32>
    %275 = vector.extract_strided_slice %274 {offsets = [0, 0], sizes = [56, 32], strides = [1, 1]} : vector<504x32xf32> to vector<56x32xf32>
    %276 = vector.extract_strided_slice %2 {offsets = [11, 0], sizes = [1, 32], strides = [1, 1]} : vector<20x32xf32> to vector<1x32xf32>
    %277 = vector.broadcast %276 : vector<1x32xf32> to vector<56x32xf32>
    %278 = arith.mulf %275, %277 : vector<56x32xf32>
    %279 = vector.extract_strided_slice %274 {offsets = [56, 0], sizes = [56, 32], strides = [1, 1]} : vector<504x32xf32> to vector<56x32xf32>
    %280 = vector.extract_strided_slice %2 {offsets = [12, 0], sizes = [1, 32], strides = [1, 1]} : vector<20x32xf32> to vector<1x32xf32>
    %281 = vector.broadcast %280 : vector<1x32xf32> to vector<56x32xf32>
    %282 = arith.mulf %279, %281 : vector<56x32xf32>
    %283 = arith.addf %278, %282 : vector<56x32xf32>
    %284 = vector.extract_strided_slice %274 {offsets = [112, 0], sizes = [56, 32], strides = [1, 1]} : vector<504x32xf32> to vector<56x32xf32>
    %285 = vector.extract_strided_slice %2 {offsets = [13, 0], sizes = [1, 32], strides = [1, 1]} : vector<20x32xf32> to vector<1x32xf32>
    %286 = vector.broadcast %285 : vector<1x32xf32> to vector<56x32xf32>
    %287 = arith.mulf %284, %286 : vector<56x32xf32>
    %288 = arith.addf %283, %287 : vector<56x32xf32>
    %289 = vector.extract_strided_slice %274 {offsets = [168, 0], sizes = [56, 32], strides = [1, 1]} : vector<504x32xf32> to vector<56x32xf32>
    %290 = vector.extract_strided_slice %2 {offsets = [14, 0], sizes = [1, 32], strides = [1, 1]} : vector<20x32xf32> to vector<1x32xf32>
    %291 = vector.broadcast %290 : vector<1x32xf32> to vector<56x32xf32>
    %292 = arith.mulf %289, %291 : vector<56x32xf32>
    %293 = arith.addf %288, %292 : vector<56x32xf32>
    %294 = vector.extract_strided_slice %274 {offsets = [224, 0], sizes = [56, 32], strides = [1, 1]} : vector<504x32xf32> to vector<56x32xf32>
    %295 = vector.extract_strided_slice %2 {offsets = [15, 0], sizes = [1, 32], strides = [1, 1]} : vector<20x32xf32> to vector<1x32xf32>
    %296 = vector.broadcast %295 : vector<1x32xf32> to vector<56x32xf32>
    %297 = arith.mulf %294, %296 : vector<56x32xf32>
    %298 = arith.addf %293, %297 : vector<56x32xf32>
    %299 = vector.extract_strided_slice %274 {offsets = [280, 0], sizes = [56, 32], strides = [1, 1]} : vector<504x32xf32> to vector<56x32xf32>
    %300 = vector.extract_strided_slice %2 {offsets = [16, 0], sizes = [1, 32], strides = [1, 1]} : vector<20x32xf32> to vector<1x32xf32>
    %301 = vector.broadcast %300 : vector<1x32xf32> to vector<56x32xf32>
    %302 = arith.mulf %299, %301 : vector<56x32xf32>
    %303 = arith.addf %298, %302 : vector<56x32xf32>
    %304 = vector.extract_strided_slice %274 {offsets = [336, 0], sizes = [56, 32], strides = [1, 1]} : vector<504x32xf32> to vector<56x32xf32>
    %305 = vector.extract_strided_slice %2 {offsets = [17, 0], sizes = [1, 32], strides = [1, 1]} : vector<20x32xf32> to vector<1x32xf32>
    %306 = vector.broadcast %305 : vector<1x32xf32> to vector<56x32xf32>
    %307 = arith.mulf %304, %306 : vector<56x32xf32>
    %308 = arith.addf %303, %307 : vector<56x32xf32>
    %309 = vector.extract_strided_slice %274 {offsets = [392, 0], sizes = [56, 32], strides = [1, 1]} : vector<504x32xf32> to vector<56x32xf32>
    %310 = vector.extract_strided_slice %2 {offsets = [18, 0], sizes = [1, 32], strides = [1, 1]} : vector<20x32xf32> to vector<1x32xf32>
    %311 = vector.broadcast %310 : vector<1x32xf32> to vector<56x32xf32>
    %312 = arith.mulf %309, %311 : vector<56x32xf32>
    %313 = arith.addf %308, %312 : vector<56x32xf32>
    %314 = vector.extract_strided_slice %274 {offsets = [448, 0], sizes = [56, 32], strides = [1, 1]} : vector<504x32xf32> to vector<56x32xf32>
    %315 = vector.extract_strided_slice %2 {offsets = [19, 0], sizes = [1, 32], strides = [1, 1]} : vector<20x32xf32> to vector<1x32xf32>
    %316 = vector.broadcast %315 : vector<1x32xf32> to vector<56x32xf32>
    %317 = arith.mulf %314, %316 : vector<56x32xf32>
    %318 = arith.addf %313, %317 : vector<56x32xf32>
    %319 = vector.extract_strided_slice %318 {offsets = [0, 0], sizes = [49, 32], strides = [1, 1]} : vector<56x32xf32> to vector<49x32xf32>
    %320 = vector.extract_strided_slice %2 {offsets = [6, 0], sizes = [1, 32], strides = [1, 1]} : vector<20x32xf32> to vector<1x32xf32>
    %321 = vector.broadcast %320 : vector<1x32xf32> to vector<49x32xf32>
    %322 = arith.mulf %319, %321 : vector<49x32xf32>
    %323 = vector.extract_strided_slice %2 {offsets = [7, 0], sizes = [1, 32], strides = [1, 1]} : vector<20x32xf32> to vector<1x32xf32>
    %324 = vector.broadcast %323 : vector<1x32xf32> to vector<49x32xf32>
    %325 = arith.addf %322, %324 : vector<49x32xf32>
    %326 = vector.extract_strided_slice %2 {offsets = [8, 0], sizes = [1, 32], strides = [1, 1]} : vector<20x32xf32> to vector<1x32xf32>
    %327 = vector.extract_strided_slice %2 {offsets = [9, 0], sizes = [1, 32], strides = [1, 1]} : vector<20x32xf32> to vector<1x32xf32>
    %cst_125 = arith.constant dense<0.000000e+00> : vector<49xf32>
    %328 = vector.multi_reduction <add>, %325, %cst_125 [1] : vector<49x32xf32> to vector<49xf32>
    %329 = vector.shape_cast %328 : vector<49xf32> to vector<49x1xf32>
    %cst_126 = arith.constant 3.200000e+01 : f32
    %330 = vector.broadcast %cst_126 : f32 to vector<49x1xf32>
    %331 = arith.divf %329, %330 : vector<49x1xf32>
    %332 = vector.broadcast %331 : vector<49x1xf32> to vector<49x32xf32>
    %333 = arith.subf %325, %332 : vector<49x32xf32>
    %334 = arith.mulf %333, %333 : vector<49x32xf32>
    %cst_127 = arith.constant dense<0.000000e+00> : vector<49xf32>
    %335 = vector.multi_reduction <add>, %334, %cst_127 [1] : vector<49x32xf32> to vector<49xf32>
    %336 = vector.shape_cast %335 : vector<49xf32> to vector<49x1xf32>
    %cst_128 = arith.constant 3.200000e+01 : f32
    %337 = vector.broadcast %cst_128 : f32 to vector<49x1xf32>
    %338 = arith.divf %336, %337 : vector<49x1xf32>
    %cst_129 = arith.constant 9.99999974E-6 : f32
    %339 = vector.broadcast %cst_129 : f32 to vector<49x1xf32>
    %340 = arith.addf %338, %339 : vector<49x1xf32>
    %341 = math.rsqrt %340 : vector<49x1xf32>
    %342 = vector.broadcast %341 : vector<49x1xf32> to vector<49x32xf32>
    %343 = arith.mulf %333, %342 : vector<49x32xf32>
    %344 = vector.broadcast %326 : vector<1x32xf32> to vector<49x32xf32>
    %345 = arith.mulf %343, %344 : vector<49x32xf32>
    %346 = vector.broadcast %327 : vector<1x32xf32> to vector<49x32xf32>
    %347 = arith.addf %345, %346 : vector<49x32xf32>
    %c0_130 = arith.constant 0 : index
    %c0_131 = arith.constant 0 : index
    %348 = vector.load %arg22[%c0_130, %c0_131] : memref<32x128xf32, #tpu.memory_space<vmem>>, vector<32x128xf32>
    %cst_132 = arith.constant dense<0.000000e+00> : vector<49x128xf32>
    %349 = tpu.matmul %347, %348, %cst_132 {dimension_numbers = #tpu.dot_dimension_numbers<[1], [0], [0], [1], [0, 0, 1, 1], [], []>} : vector<49x32xf32>, vector<32x128xf32>, vector<49x128xf32> -> vector<49x128xf32>
    %c0_133 = arith.constant 0 : index
    %c0_134 = arith.constant 0 : index
    %350 = vector.load %arg23[%c0_133, %c0_134] : memref<1x128xf32, #tpu.memory_space<vmem>>, vector<1x128xf32>
    %351 = vector.broadcast %350 : vector<1x128xf32> to vector<49x128xf32>
    %352 = arith.addf %349, %351 : vector<49x128xf32>
    %cst_135 = arith.constant 0.707106769 : f32
    %353 = vector.broadcast %cst_135 : f32 to vector<49x128xf32>
    %354 = arith.mulf %352, %353 : vector<49x128xf32>
    %355 = math.absf %354 : vector<49x128xf32>
    %cst_136 = arith.constant 0.327591091 : f32
    %356 = vector.broadcast %cst_136 : f32 to vector<49x128xf32>
    %357 = arith.mulf %356, %355 : vector<49x128xf32>
    %cst_137 = arith.constant 1.000000e+00 : f32
    %358 = vector.broadcast %cst_137 : f32 to vector<49x128xf32>
    %359 = arith.addf %358, %357 : vector<49x128xf32>
    %cst_138 = arith.constant 1.000000e+00 : f32
    %360 = vector.broadcast %cst_138 : f32 to vector<49x128xf32>
    %361 = arith.divf %360, %359 : vector<49x128xf32>
    %cst_139 = arith.constant 1.06140542 : f32
    %362 = vector.broadcast %cst_139 : f32 to vector<49x128xf32>
    %363 = arith.mulf %362, %361 : vector<49x128xf32>
    %cst_140 = arith.constant 1.45315206 : f32
    %364 = vector.broadcast %cst_140 : f32 to vector<49x128xf32>
    %365 = arith.subf %363, %364 : vector<49x128xf32>
    %366 = arith.mulf %365, %361 : vector<49x128xf32>
    %cst_141 = arith.constant 1.42141378 : f32
    %367 = vector.broadcast %cst_141 : f32 to vector<49x128xf32>
    %368 = arith.addf %366, %367 : vector<49x128xf32>
    %369 = arith.mulf %368, %361 : vector<49x128xf32>
    %cst_142 = arith.constant 0.284496725 : f32
    %370 = vector.broadcast %cst_142 : f32 to vector<49x128xf32>
    %371 = arith.subf %369, %370 : vector<49x128xf32>
    %372 = arith.mulf %371, %361 : vector<49x128xf32>
    %cst_143 = arith.constant 0.254829586 : f32
    %373 = vector.broadcast %cst_143 : f32 to vector<49x128xf32>
    %374 = arith.addf %372, %373 : vector<49x128xf32>
    %375 = arith.mulf %374, %361 : vector<49x128xf32>
    %cst_144 = arith.constant 0.000000e+00 : f32
    %376 = vector.broadcast %cst_144 : f32 to vector<49x128xf32>
    %377 = arith.subf %376, %355 : vector<49x128xf32>
    %378 = arith.mulf %377, %355 : vector<49x128xf32>
    %379 = math.exp %378 : vector<49x128xf32>
    %380 = arith.mulf %375, %379 : vector<49x128xf32>
    %cst_145 = arith.constant 1.000000e+00 : f32
    %381 = vector.broadcast %cst_145 : f32 to vector<49x128xf32>
    %382 = arith.subf %381, %380 : vector<49x128xf32>
    %cst_146 = arith.constant 0.000000e+00 : f32
    %383 = vector.broadcast %cst_146 : f32 to vector<49x128xf32>
    %384 = arith.cmpf oge, %354, %383 : vector<49x128xf32>
    %cst_147 = arith.constant 0.000000e+00 : f32
    %385 = vector.broadcast %cst_147 : f32 to vector<49x128xf32>
    %386 = arith.subf %385, %382 : vector<49x128xf32>
    %387 = arith.select %384, %382, %386 : vector<49x128xi1>, vector<49x128xf32>
    %cst_148 = arith.constant 5.000000e-01 : f32
    %388 = vector.broadcast %cst_148 : f32 to vector<49x128xf32>
    %389 = arith.mulf %388, %352 : vector<49x128xf32>
    %cst_149 = arith.constant 1.000000e+00 : f32
    %390 = vector.broadcast %cst_149 : f32 to vector<49x128xf32>
    %391 = arith.addf %390, %387 : vector<49x128xf32>
    %392 = arith.mulf %389, %391 : vector<49x128xf32>
    %c0_150 = arith.constant 0 : index
    %c0_151 = arith.constant 0 : index
    %393 = vector.load %arg24[%c0_150, %c0_151] : memref<128x32xf32, #tpu.memory_space<vmem>>, vector<128x32xf32>
    %cst_152 = arith.constant dense<0.000000e+00> : vector<49x32xf32>
    %394 = tpu.matmul %392, %393, %cst_152 {dimension_numbers = #tpu.dot_dimension_numbers<[1], [0], [0], [1], [0, 0, 1, 1], [], []>} : vector<49x128xf32>, vector<128x32xf32>, vector<49x32xf32> -> vector<49x32xf32>
    %395 = arith.addf %325, %394 : vector<49x32xf32>
    %396 = vector.extract_strided_slice %2 {offsets = [10, 0], sizes = [1, 32], strides = [1, 1]} : vector<20x32xf32> to vector<1x32xf32>
    %397 = vector.broadcast %396 : vector<1x32xf32> to vector<49x32xf32>
    %398 = arith.addf %395, %397 : vector<49x32xf32>
    %c0_153 = arith.constant 0 : index
    %c0_154 = arith.constant 0 : index
    %c0_155 = arith.constant 0 : index
    %399 = vector.load %arg25[%c0_153, %c0_154, %c0_155] : memref<1x49x32xf32, #tpu.memory_space<vmem>>, vector<1x49x32xf32>
    %400 = vector.shape_cast %399 : vector<1x49x32xf32> to vector<49x32xf32>
    %401 = vector.shape_cast %398 : vector<49x32xf32> to vector<1x49x32xf32>
    tpu.vector_store %arg25[%c0_153, %c0_154, %c0_155], %401 {strides = array<i32>} : memref<1x49x32xf32, #tpu.memory_space<vmem>>, vector<1x49x32xf32>,
    return
  }
  func.func @transform_0(%arg0: i32) -> (i32, i32, i32) {
    %c0_i32 = arith.constant 0 : i32
    %c0_i32_0 = arith.constant 0 : i32
    %c0_i32_1 = arith.constant 0 : i32
    return %arg0, %c0_i32, %c0_i32_0 : i32, i32, i32
  }
  func.func @transform_1(%arg0: i32) -> (i32, i32) {
    %c0_i32 = arith.constant 0 : i32
    %c0_i32_0 = arith.constant 0 : i32
    %c0_i32_1 = arith.constant 0 : i32
    return %c0_i32, %c0_i32_0 : i32, i32
  }
  func.func @transform_2(%arg0: i32) -> (i32, i32) {
    %c0_i32 = arith.constant 0 : i32
    %c0_i32_0 = arith.constant 0 : i32
    %c0_i32_1 = arith.constant 0 : i32
    return %c0_i32, %c0_i32_0 : i32, i32
  }
  func.func @transform_3(%arg0: i32) -> (i32, i32) {
    %c0_i32 = arith.constant 0 : i32
    %c0_i32_0 = arith.constant 0 : i32
    %c0_i32_1 = arith.constant 0 : i32
    return %c0_i32, %c0_i32_0 : i32, i32
  }
  func.func @transform_4(%arg0: i32) -> (i32, i32) {
    %c0_i32 = arith.constant 0 : i32
    %c0_i32_0 = arith.constant 0 : i32
    %c0_i32_1 = arith.constant 0 : i32
    return %c0_i32, %c0_i32_0 : i32, i32
  }
  func.func @transform_5(%arg0: i32) -> (i32, i32) {
    %c0_i32 = arith.constant 0 : i32
    %c0_i32_0 = arith.constant 0 : i32
    %c0_i32_1 = arith.constant 0 : i32
    return %c0_i32, %c0_i32_0 : i32, i32
  }
  func.func @transform_6(%arg0: i32) -> (i32, i32) {
    %c0_i32 = arith.constant 0 : i32
    %c0_i32_0 = arith.constant 0 : i32
    %c0_i32_1 = arith.constant 0 : i32
    return %c0_i32, %c0_i32_0 : i32, i32
  }
  func.func @transform_7(%arg0: i32) -> (i32, i32) {
    %c0_i32 = arith.constant 0 : i32
    %c0_i32_0 = arith.constant 0 : i32
    %c0_i32_1 = arith.constant 0 : i32
    return %c0_i32, %c0_i32_0 : i32, i32
  }
  func.func @transform_8(%arg0: i32) -> (i32, i32) {
    %c0_i32 = arith.constant 0 : i32
    %c0_i32_0 = arith.constant 0 : i32
    %c0_i32_1 = arith.constant 0 : i32
    return %c0_i32, %c0_i32_0 : i32, i32
  }
  func.func @transform_9(%arg0: i32) -> (i32, i32) {
    %c0_i32 = arith.constant 0 : i32
    %c0_i32_0 = arith.constant 0 : i32
    %c0_i32_1 = arith.constant 0 : i32
    return %c0_i32, %c0_i32_0 : i32, i32
  }
  func.func @transform_10(%arg0: i32) -> (i32, i32) {
    %c0_i32 = arith.constant 0 : i32
    %c0_i32_0 = arith.constant 0 : i32
    %c0_i32_1 = arith.constant 0 : i32
    return %c0_i32, %c0_i32_0 : i32, i32
  }
  func.func @transform_11(%arg0: i32) -> (i32, i32) {
    %c0_i32 = arith.constant 0 : i32
    %c0_i32_0 = arith.constant 0 : i32
    %c0_i32_1 = arith.constant 0 : i32
    return %c0_i32, %c0_i32_0 : i32, i32
  }
  func.func @transform_12(%arg0: i32) -> (i32, i32) {
    %c0_i32 = arith.constant 0 : i32
    %c0_i32_0 = arith.constant 0 : i32
    %c0_i32_1 = arith.constant 0 : i32
    return %c0_i32, %c0_i32_0 : i32, i32
  }
  func.func @transform_13(%arg0: i32) -> (i32, i32) {
    %c0_i32 = arith.constant 0 : i32
    %c0_i32_0 = arith.constant 0 : i32
    %c0_i32_1 = arith.constant 0 : i32
    return %c0_i32, %c0_i32_0 : i32, i32
  }
  func.func @transform_14(%arg0: i32) -> (i32, i32) {
    %c0_i32 = arith.constant 0 : i32
    %c0_i32_0 = arith.constant 0 : i32
    %c0_i32_1 = arith.constant 0 : i32
    return %c0_i32, %c0_i32_0 : i32, i32
  }
  func.func @transform_15(%arg0: i32) -> (i32, i32) {
    %c0_i32 = arith.constant 0 : i32
    %c0_i32_0 = arith.constant 0 : i32
    %c0_i32_1 = arith.constant 0 : i32
    return %c0_i32, %c0_i32_0 : i32, i32
  }
  func.func @transform_16(%arg0: i32) -> (i32, i32) {
    %c0_i32 = arith.constant 0 : i32
    %c0_i32_0 = arith.constant 0 : i32
    %c0_i32_1 = arith.constant 0 : i32
    return %c0_i32, %c0_i32_0 : i32, i32
  }
  func.func @transform_17(%arg0: i32) -> (i32, i32) {
    %c0_i32 = arith.constant 0 : i32
    %c0_i32_0 = arith.constant 0 : i32
    %c0_i32_1 = arith.constant 0 : i32
    return %c0_i32, %c0_i32_0 : i32, i32
  }
  func.func @transform_18(%arg0: i32) -> (i32, i32) {
    %c0_i32 = arith.constant 0 : i32
    %c0_i32_0 = arith.constant 0 : i32
    %c0_i32_1 = arith.constant 0 : i32
    return %c0_i32, %c0_i32_0 : i32, i32
  }
  func.func @transform_19(%arg0: i32) -> (i32, i32) {
    %c0_i32 = arith.constant 0 : i32
    %c0_i32_0 = arith.constant 0 : i32
    %c0_i32_1 = arith.constant 0 : i32
    return %c0_i32, %c0_i32_0 : i32, i32
  }
  func.func @transform_20(%arg0: i32) -> (i32, i32) {
    %c0_i32 = arith.constant 0 : i32
    %c0_i32_0 = arith.constant 0 : i32
    %c0_i32_1 = arith.constant 0 : i32
    return %c0_i32, %c0_i32_0 : i32, i32
  }
  func.func @transform_21(%arg0: i32) -> (i32, i32) {
    %c0_i32 = arith.constant 0 : i32
    %c0_i32_0 = arith.constant 0 : i32
    %c0_i32_1 = arith.constant 0 : i32
    return %c0_i32, %c0_i32_0 : i32, i32
  }
  func.func @transform_22(%arg0: i32) -> (i32, i32) {
    %c0_i32 = arith.constant 0 : i32
    %c0_i32_0 = arith.constant 0 : i32
    %c0_i32_1 = arith.constant 0 : i32
    return %c0_i32, %c0_i32_0 : i32, i32
  }
  func.func @transform_23(%arg0: i32) -> (i32, i32) {
    %c0_i32 = arith.constant 0 : i32
    %c0_i32_0 = arith.constant 0 : i32
    %c0_i32_1 = arith.constant 0 : i32
    return %c0_i32, %c0_i32_0 : i32, i32
  }
  func.func @transform_24(%arg0: i32) -> (i32, i32, i32) {
    %c0_i32 = arith.constant 0 : i32
    %c0_i32_0 = arith.constant 0 : i32
    %c0_i32_1 = arith.constant 0 : i32
    return %arg0, %c0_i32, %c0_i32_0 : i32, i32, i32
  }
}

</mosaic_0001>

<llo_original>
// kernel: dcformer_block.1
$region0: #{dcformer_block.1}
  #allocation0 [shape = 'u32[]', space=smem, size = 0x4, offset = 0x4, fixed_abs, tag = 'smem constant byte address 0x4 - core index']
  #allocation1 [shape = 'u32[144,128]{1,0:T(1,128)}', space=vmem, size = 0x12000, scoped, tag = 'internal scratch']
  %s0 = inlined_call_operand.vmem [shape: f32[2,49,32], index: 0, kind: input, shape index: {}]
  %s1 = inlined_call_operand.hbm [shape: f32[20,32], index: 1, kind: input, shape index: {}]
  %s2 = inlined_call_operand.vmem [shape: f32[32,2], index: 2, kind: input, shape index: {}]
  %s3 = inlined_call_operand.hbm [shape: f32[32,32], index: 3, kind: input, shape index: {}]
  %s4 = inlined_call_operand.hbm [shape: f32[32,32], index: 4, kind: input, shape index: {}]
  %s5 = inlined_call_operand.hbm [shape: f32[32,32], index: 5, kind: input, shape index: {}]
  %s6 = inlined_call_operand.hbm [shape: f32[32,64], index: 6, kind: input, shape index: {}]
  %s7 = inlined_call_operand.vmem [shape: f32[64,64], index: 7, kind: input, shape index: {}]
  %s8 = inlined_call_operand.vmem [shape: f32[32,16], index: 8, kind: input, shape index: {}]
  %s9 = inlined_call_operand.hbm [shape: f32[32,32], index: 9, kind: input, shape index: {}]
  %s10 = inlined_call_operand.hbm [shape: f32[64,64], index: 10, kind: input, shape index: {}]
  %s11 = inlined_call_operand.hbm [shape: f32[4,196], index: 11, kind: input, shape index: {}]
  %s12 = inlined_call_operand.vmem [shape: f32[49,196], index: 12, kind: input, shape index: {}]
  %s13 = inlined_call_operand.vmem [shape: f32[196,196], index: 13, kind: input, shape index: {}]
  %s14 = inlined_call_operand.vmem [shape: bf16[196,196], index: 14, kind: input, shape index: {}]
  %s15 = inlined_call_operand.vmem [shape: bf16[196,196], index: 15, kind: input, shape index: {}]
  %s16 = inlined_call_operand.hbm [shape: f32[32,196], index: 16, kind: input, shape index: {}]
  %s17 = inlined_call_operand.vmem [shape: bf16[196,49], index: 17, kind: input, shape index: {}]
  %s18 = inlined_call_operand.vmem [shape: bf16[196,32], index: 18, kind: input, shape index: {}]
  %s19 = inlined_call_operand.hbm [shape: f32[32,32], index: 19, kind: input, shape index: {}]
  %s20 = inlined_call_operand.vmem [shape: bf16[504,49], index: 20, kind: input, shape index: {}]
  %s21 = inlined_call_operand.hbm [shape: f32[32,128], index: 21, kind: input, shape index: {}]
  %s22 = inlined_call_operand.vmem [shape: f32[1,128], index: 22, kind: input, shape index: {}]
  %s23 = inlined_call_operand.vmem [shape: f32[128,32], index: 23, kind: input, shape index: {}]
  %s24 = inlined_call_operand.vmem [shape: f32[2,49,32], index: 24, kind: output, shape index: {}]
  %s25 = sld [smem:[#allocation0]]
  $region173: #{dcformer_block.1} parent=0
    _
  %s27 = ssub.s32 1, %s25
  %s28 = scalar_select 0, %s27, %s25
  $region1: #{dcformer_block.1} parent=0
    #allocation2 [shape = 'u8[12288]{0}', space=vmem, size = 0x3000, scoped, tag = 'input window, operand 1, single buffered']
    #allocation3 [shape = 's32[2]{0}', space=sflag, size = 0x8, scoped, tag = 'scoped memory for dcformer_block.1']
    #allocation4 [shape = 'u8[16384]{0}', space=vmem, size = 0x4000, scoped, tag = 'input window, operand 3, single buffered']
    #allocation5 [shape = 's32[1]{0}', space=sflag, size = 0x4, scoped, tag = 'scoped memory for dcformer_block.1']
    #allocation6 [shape = 'u8[16384]{0}', space=vmem, size = 0x4000, scoped, tag = 'input window, operand 4, single buffered']
    #allocation7 [shape = 'u8[16384]{0}', space=vmem, size = 0x4000, scoped, tag = 'input window, operand 5, single buffered']
    #allocation8 [shape = 's32[1]{0}', space=sflag, size = 0x4, scoped, tag = 'scoped memory for dcformer_block.1']
    #allocation9 [shape = 'u8[16384]{0}', space=vmem, size = 0x4000, scoped, tag = 'input window, operand 6, single buffered']
    #allocation10 [shape = 'u8[16384]{0}', space=vmem, size = 0x4000, scoped, tag = 'input window, operand 9, single buffered']
    #allocation11 [shape = 's32[1]{0}', space=sflag, size = 0x4, scoped, tag = 'scoped memory for dcformer_block.1']
    #allocation12 [shape = 'u8[32768]{0}', space=vmem, size = 0x8000, scoped, tag = 'input window, operand 10, single buffered']
    #allocation13 [shape = 'u8[4096]{0}', space=vmem, size = 0x1000, scoped, tag = 'input window, operand 11, single buffered']
    #allocation14 [shape = 's32[1]{0}', space=sflag, size = 0x4, scoped, tag = 'scoped memory for dcformer_block.1']
    #allocation15 [shape = 'u8[32768]{0}', space=vmem, size = 0x8000, scoped, tag = 'input window, operand 16, single buffered']
    #allocation16 [shape = 'u8[16384]{0}', space=vmem, size = 0x4000, scoped, tag = 'input window, operand 19, single buffered']
    #allocation17 [shape = 's32[1]{0}', space=sflag, size = 0x4, scoped, tag = 'scoped memory for dcformer_block.1']
    #allocation18 [shape = 'u8[16384]{0}', space=vmem, size = 0x4000, scoped, tag = 'input window, operand 21, single buffered']
    %29 = vsyncpa [#allocation3], 0
    %30 = vsyncpa [#allocation5], 0
    %31 = vsyncpa [#allocation8], 0
    %32 = vsyncpa [#allocation11], 0
    %33 = vsyncpa [#allocation14], 0
    %34 = vsyncpa [#allocation17], 0
    loop: start=0, step=1, limit=4
    $region2: #{dcformer_block.1} parent=1 // loop_pre_header
      _
    $region3: #{dcformer_block.1} parent=1 // loop_header
      %s36 = sphi 0, %s40
      %p37 = scmp.ge.s32.totalorder %s36, 4
      %s46 = sphi 0, %s48
      %s49 = sphi 0, %s46
      %s50 = sphi 0, %s49
      %s66 = sphi 0, %s50
      %s70 = sphi 0, %s70
      %s72 = sphi 0, %s70
      %s73 = sphi 0, %s72
      %s87 = sphi 0, %s73
      %s91 = sphi 0, %s91
      %s93 = sphi 0, %s91
      %s94 = sphi 0, %s93
      %s108 = sphi 0, %s94
      %s112 = sphi 0, %s112
      %s114 = sphi 0, %s112
      %s115 = sphi 0, %s114
      %s129 = sphi 0, %s115
      %s133 = sphi 0, %s133
      %s135 = sphi 0, %s133
      %s136 = sphi 0, %s135
      %s150 = sphi 0, %s136
      %s154 = sphi 0, %s154
      %s156 = sphi 0, %s154
      %s157 = sphi 0, %s156
      %s171 = sphi 0, %s157
      %s175 = sphi 0, %s175
      %s177 = sphi 0, %s175
      %s178 = sphi 0, %s177
      %s192 = sphi 0, %s178
      %s196 = sphi 0, %s196
      %s198 = sphi 0, %s196
      %s199 = sphi 0, %s198
      %s213 = sphi 0, %s199
      %s217 = sphi 0, %s217
      %s219 = sphi 0, %s217
      %s220 = sphi 0, %s219
      %s234 = sphi 0, %s220
      %s238 = sphi 0, %s238
      %s240 = sphi 0, %s238
      %s241 = sphi 0, %s240
      %s255 = sphi 0, %s241
      %s259 = sphi 0, %s259
      %s261 = sphi 0, %s259
      %s262 = sphi 0, %s261
      %s276 = sphi 0, %s262
      %s280 = sphi 0, %s280
      %s282 = sphi 0, %s280
      %s283 = sphi 0, %s282
      %s297 = sphi 0, %s283
      %s301 = sphi 0, %s301
      %s303 = sphi 0, %s301
      %s304 = sphi 0, %s303
      %s318 = sphi 0, %s304
      %s322 = sphi 0, %s322
      %s324 = sphi 0, %s322
      %s325 = sphi 0, %s324
      %s339 = sphi 0, %s325
      %s343 = sphi 0, %s343
      %s345 = sphi 0, %s343
      %s346 = sphi 0, %s345
      %s360 = sphi 0, %s346
      %s364 = sphi 0, %s364
      %s366 = sphi 0, %s364
      %s367 = sphi 0, %s366
      %s381 = sphi 0, %s367
      %s385 = sphi 0, %s385
      %s387 = sphi 0, %s385
      %s388 = sphi 0, %s387
      %s402 = sphi 0, %s388
      %s406 = sphi 0, %s406
      %s408 = sphi 0, %s406
      %s409 = sphi 0, %s408
      %s423 = sphi 0, %s409
      %s427 = sphi 0, %s427
      %s429 = sphi 0, %s427
      %s430 = sphi 0, %s429
      %s444 = sphi 0, %s430
      %s448 = sphi 0, %s448
      %s450 = sphi 0, %s448
      %s451 = sphi 0, %s450
      %s465 = sphi 0, %s451
      %s469 = sphi 0, %s469
      %s471 = sphi 0, %s469
      %s472 = sphi 0, %s471
      %s486 = sphi 0, %s472
      %s490 = sphi 0, %s490
      %s492 = sphi 0, %s490
      %s493 = sphi 0, %s492
      %s507 = sphi 0, %s493
      %s511 = sphi 0, %s511
      %s513 = sphi 0, %s511
      %s514 = sphi 0, %s513
      %s528 = sphi 0, %s514
      %s532 = sphi 0, %s532
      %s534 = sphi 0, %s532
      %s535 = sphi 0, %s534
      %s549 = sphi 0, %s535
      %s555 = sphi 0, %s557
      %s558 = sphi 0, %s555
      %s559 = sphi 0, %s558
      %s575 = sphi 0, %s559
    $region4: #{dcformer_block.1} parent=1 // loop_header_branch
      %39 = sbr.rel (%p37) target = $region8
    $region5: #{dcformer_block.1} parent=1 // loop_body
      %s41 = ssub.s32 %s36, 1
      %s42 = ssub.s32 %s36, 2
      %s43 = sadd.s32 %s36, 1
      %s44 = ssub.s32 %s36, %s43
      %p45 = scmp.eq.s32.totalorder %s44, 0
      %s47 = sadd.s32 %s46, 1
      %s48 = scalar_select %p45, %s46, %s47
      %p51 = pneg %p45
      %p52 = scmp.eq.s32.totalorder %s36, 1
      %p53 = por %p51, %p52
      %p54 = scmp.ne.s32.totalorder %s46, %s49
      %p55 = scmp.eq.s32.totalorder %s36, 0
      %p56 = por %p54, %p55
      %p57 = scmp.ne.s32.totalorder %s46, %s49
      %p58 = scmp.eq.s32.totalorder %s41, 1
      %p59 = por %p57, %p58
      %p60 = scmp.ne.s32.totalorder %s49, %s50
      %p61 = scmp.eq.s32.totalorder %s41, 0
      %p62 = por %p60, %p61
      %p63 = scmp.ne.s32.totalorder %s49, %s50
      %p64 = scmp.eq.s32.totalorder %s42, 1
      %p65 = por %p63, %p64
      %p67 = scmp.ne.s32.totalorder %s50, %s66
      %p68 = scmp.eq.s32.totalorder %s42, 0
      %p69 = por %p67, %p68
      %s71 = sadd.s32 %s70, 1
      %p74 = scmp.eq.s32.totalorder %s36, 1
      %p75 = scmp.ne.s32.totalorder %s70, %s72
      %p76 = scmp.eq.s32.totalorder %s36, 0
      %p77 = por %p75, %p76
      %p78 = scmp.ne.s32.totalorder %s70, %s72
      %p79 = scmp.eq.s32.totalorder %s41, 1
      %p80 = por %p78, %p79
      %p81 = scmp.ne.s32.totalorder %s72, %s73
      %p82 = scmp.eq.s32.totalorder %s41, 0
      %p83 = por %p81, %p82
      %p84 = scmp.ne.s32.totalorder %s72, %s73
      %p85 = scmp.eq.s32.totalorder %s42, 1
      %p86 = por %p84, %p85
      %p88 = scmp.ne.s32.totalorder %s73, %s87
      %p89 = scmp.eq.s32.totalorder %s42, 0
      %p90 = por %p88, %p89
      %s92 = sadd.s32 %s91, 1
      %p95 = scmp.eq.s32.totalorder %s36, 1
      %p96 = scmp.ne.s32.totalorder %s91, %s93
      %p97 = scmp.eq.s32.totalorder %s36, 0
      %p98 = por %p96, %p97
      %p99 = scmp.ne.s32.totalorder %s91, %s93
      %p100 = scmp.eq.s32.totalorder %s41, 1
      %p101 = por %p99, %p100
      %p102 = scmp.ne.s32.totalorder %s93, %s94
      %p103 = scmp.eq.s32.totalorder %s41, 0
      %p104 = por %p102, %p103
      %p105 = scmp.ne.s32.totalorder %s93, %s94
      %p106 = scmp.eq.s32.totalorder %s42, 1
      %p107 = por %p105, %p106
      %p109 = scmp.ne.s32.totalorder %s94, %s108
      %p110 = scmp.eq.s32.totalorder %s42, 0
      %p111 = por %p109, %p110
      %s113 = sadd.s32 %s112, 1
      %p116 = scmp.eq.s32.totalorder %s36, 1
      %p117 = scmp.ne.s32.totalorder %s112, %s114
      %p118 = scmp.eq.s32.totalorder %s36, 0
      %p119 = por %p117, %p118
      %p120 = scmp.ne.s32.totalorder %s112, %s114
      %p121 = scmp.eq.s32.totalorder %s41, 1
      %p122 = por %p120, %p121
      %p123 = scmp.ne.s32.totalorder %s114, %s115
      %p124 = scmp.eq.s32.totalorder %s41, 0
      %p125 = por %p123, %p124
      %p126 = scmp.ne.s32.totalorder %s114, %s115
      %p127 = scmp.eq.s32.totalorder %s42, 1
      %p128 = por %p126, %p127
      %p130 = scmp.ne.s32.totalorder %s115, %s129
      %p131 = scmp.eq.s32.totalorder %s42, 0
      %p132 = por %p130, %p131
      %s134 = sadd.s32 %s133, 1
      %p137 = scmp.eq.s32.totalorder %s36, 1
      %p138 = scmp.ne.s32.totalorder %s133, %s135
      %p139 = scmp.eq.s32.totalorder %s36, 0
      %p140 = por %p138, %p139
      %p141 = scmp.ne.s32.totalorder %s133, %s135
      %p142 = scmp.eq.s32.totalorder %s41, 1
      %p143 = por %p141, %p142
      %p144 = scmp.ne.s32.totalorder %s135, %s136
      %p145 = scmp.eq.s32.totalorder %s41, 0
      %p146 = por %p144, %p145
      %p147 = scmp.ne.s32.totalorder %s135, %s136
      %p148 = scmp.eq.s32.totalorder %s42, 1
      %p149 = por %p147, %p148
      %p151 = scmp.ne.s32.totalorder %s136, %s150
      %p152 = scmp.eq.s32.totalorder %s42, 0
      %p153 = por %p151, %p152
      %s155 = sadd.s32 %s154, 1
      %p158 = scmp.eq.s32.totalorder %s36, 1
      %p159 = scmp.ne.s32.totalorder %s154, %s156
      %p160 = scmp.eq.s32.totalorder %s36, 0
      %p161 = por %p159, %p160
      %p162 = scmp.ne.s32.totalorder %s154, %s156
      %p163 = scmp.eq.s32.totalorder %s41, 1
      %p164 = por %p162, %p163
      %p165 = scmp.ne.s32.totalorder %s156, %s157
      %p166 = scmp.eq.s32.totalorder %s41, 0
      %p167 = por %p165, %p166
      %p168 = scmp.ne.s32.totalorder %s156, %s157
      %p169 = scmp.eq.s32.totalorder %s42, 1
      %p170 = por %p168, %p169
      %p172 = scmp.ne.s32.totalorder %s157, %s171
      %p173 = scmp.eq.s32.totalorder %s42, 0
      %p174 = por %p172, %p173
      %s176 = sadd.s32 %s175, 1
      %p179 = scmp.eq.s32.totalorder %s36, 1
      %p180 = scmp.ne.s32.totalorder %s175, %s177
      %p181 = scmp.eq.s32.totalorder %s36, 0
      %p182 = por %p180, %p181
      %p183 = scmp.ne.s32.totalorder %s175, %s177
      %p184 = scmp.eq.s32.totalorder %s41, 1
      %p185 = por %p183, %p184
      %p186 = scmp.ne.s32.totalorder %s177, %s178
      %p187 = scmp.eq.s32.totalorder %s41, 0
      %p188 = por %p186, %p187
      %p189 = scmp.ne.s32.totalorder %s177, %s178
      %p190 = scmp.eq.s32.totalorder %s42, 1
      %p191 = por %p189, %p190
      %p193 = scmp.ne.s32.totalorder %s178, %s192
      %p194 = scmp.eq.s32.totalorder %s42, 0
      %p195 = por %p193, %p194
      %s197 = sadd.s32 %s196, 1
      %p200 = scmp.eq.s32.totalorder %s36, 1
      %p201 = scmp.ne.s32.totalorder %s196, %s198
      %p202 = scmp.eq.s32.totalorder %s36, 0
      %p203 = por %p201, %p202
      %p204 = scmp.ne.s32.totalorder %s196, %s198
      %p205 = scmp.eq.s32.totalorder %s41, 1
      %p206 = por %p204, %p205
      %p207 = scmp.ne.s32.totalorder %s198, %s199
      %p208 = scmp.eq.s32.totalorder %s41, 0
      %p209 = por %p207, %p208
      %p210 = scmp.ne.s32.totalorder %s198, %s199
      %p211 = scmp.eq.s32.totalorder %s42, 1
      %p212 = por %p210, %p211
      %p214 = scmp.ne.s32.totalorder %s199, %s213
      %p215 = scmp.eq.s32.totalorder %s42, 0
      %p216 = por %p214, %p215
      %s218 = sadd.s32 %s217, 1
      %p221 = scmp.eq.s32.totalorder %s36, 1
      %p222 = scmp.ne.s32.totalorder %s217, %s219
      %p223 = scmp.eq.s32.totalorder %s36, 0
      %p224 = por %p222, %p223
      %p225 = scmp.ne.s32.totalorder %s217, %s219
      %p226 = scmp.eq.s32.totalorder %s41, 1
      %p227 = por %p225, %p226
      %p228 = scmp.ne.s32.totalorder %s219, %s220
      %p229 = scmp.eq.s32.totalorder %s41, 0
      %p230 = por %p228, %p229
      %p231 = scmp.ne.s32.totalorder %s219, %s220
      %p232 = scmp.eq.s32.totalorder %s42, 1
      %p233 = por %p231, %p232
      %p235 = scmp.ne.s32.totalorder %s220, %s234
      %p236 = scmp.eq.s32.totalorder %s42, 0
      %p237 = por %p235, %p236
      %s239 = sadd.s32 %s238, 1
      %p242 = scmp.eq.s32.totalorder %s36, 1
      %p243 = scmp.ne.s32.totalorder %s238, %s240
      %p244 = scmp.eq.s32.totalorder %s36, 0
      %p245 = por %p243, %p244
      %p246 = scmp.ne.s32.totalorder %s238, %s240
      %p247 = scmp.eq.s32.totalorder %s41, 1
      %p248 = por %p246, %p247
      %p249 = scmp.ne.s32.totalorder %s240, %s241
      %p250 = scmp.eq.s32.totalorder %s41, 0
      %p251 = por %p249, %p250
      %p252 = scmp.ne.s32.totalorder %s240, %s241
      %p253 = scmp.eq.s32.totalorder %s42, 1
      %p254 = por %p252, %p253
      %p256 = scmp.ne.s32.totalorder %s241, %s255
      %p257 = scmp.eq.s32.totalorder %s42, 0
      %p258 = por %p256, %p257
      %s260 = sadd.s32 %s259, 1
      %p263 = scmp.eq.s32.totalorder %s36, 1
      %p264 = scmp.ne.s32.totalorder %s259, %s261
      %p265 = scmp.eq.s32.totalorder %s36, 0
      %p266 = por %p264, %p265
      %p267 = scmp.ne.s32.totalorder %s259, %s261
      %p268 = scmp.eq.s32.totalorder %s41, 1
      %p269 = por %p267, %p268
      %p270 = scmp.ne.s32.totalorder %s261, %s262
      %p271 = scmp.eq.s32.totalorder %s41, 0
      %p272 = por %p270, %p271
      %p273 = scmp.ne.s32.totalorder %s261, %s262
      %p274 = scmp.eq.s32.totalorder %s42, 1
      %p275 = por %p273, %p274
      %p277 = scmp.ne.s32.totalorder %s262, %s276
      %p278 = scmp.eq.s32.totalorder %s42, 0
      %p279 = por %p277, %p278
      %s281 = sadd.s32 %s280, 1
      %p284 = scmp.eq.s32.totalorder %s36, 1
      %p285 = scmp.ne.s32.totalorder %s280, %s282
      %p286 = scmp.eq.s32.totalorder %s36, 0
      %p287 = por %p285, %p286
      %p288 = scmp.ne.s32.totalorder %s280, %s282
      %p289 = scmp.eq.s32.totalorder %s41, 1
      %p290 = por %p288, %p289
      %p291 = scmp.ne.s32.totalorder %s282, %s283
      %p292 = scmp.eq.s32.totalorder %s41, 0
      %p293 = por %p291, %p292
      %p294 = scmp.ne.s32.totalorder %s282, %s283
      %p295 = scmp.eq.s32.totalorder %s42, 1
      %p296 = por %p294, %p295
      %p298 = scmp.ne.s32.totalorder %s283, %s297
      %p299 = scmp.eq.s32.totalorder %s42, 0
      %p300 = por %p298, %p299
      %s302 = sadd.s32 %s301, 1
      %p305 = scmp.eq.s32.totalorder %s36, 1
      %p306 = scmp.ne.s32.totalorder %s301, %s303
      %p307 = scmp.eq.s32.totalorder %s36, 0
      %p308 = por %p306, %p307
      %p309 = scmp.ne.s32.totalorder %s301, %s303
      %p310 = scmp.eq.s32.totalorder %s41, 1
      %p311 = por %p309, %p310
      %p312 = scmp.ne.s32.totalorder %s303, %s304
      %p313 = scmp.eq.s32.totalorder %s41, 0
      %p314 = por %p312, %p313
      %p315 = scmp.ne.s32.totalorder %s303, %s304
      %p316 = scmp.eq.s32.totalorder %s42, 1
      %p317 = por %p315, %p316
      %p319 = scmp.ne.s32.totalorder %s304, %s318
      %p320 = scmp.eq.s32.totalorder %s42, 0
      %p321 = por %p319, %p320
      %s323 = sadd.s32 %s322, 1
      %p326 = scmp.eq.s32.totalorder %s36, 1
      %p327 = scmp.ne.s32.totalorder %s322, %s324
      %p328 = scmp.eq.s32.totalorder %s36, 0
      %p329 = por %p327, %p328
      %p330 = scmp.ne.s32.totalorder %s322, %s324
      %p331 = scmp.eq.s32.totalorder %s41, 1
      %p332 = por %p330, %p331
      %p333 = scmp.ne.s32.totalorder %s324, %s325
      %p334 = scmp.eq.s32.totalorder %s41, 0
      %p335 = por %p333, %p334
      %p336 = scmp.ne.s32.totalorder %s324, %s325
      %p337 = scmp.eq.s32.totalorder %s42, 1
      %p338 = por %p336, %p337
      %p340 = scmp.ne.s32.totalorder %s325, %s339
      %p341 = scmp.eq.s32.totalorder %s42, 0
      %p342 = por %p340, %p341
      %s344 = sadd.s32 %s343, 1
      %p347 = scmp.eq.s32.totalorder %s36, 1
      %p348 = scmp.ne.s32.totalorder %s343, %s345
      %p349 = scmp.eq.s32.totalorder %s36, 0
      %p350 = por %p348, %p349
      %p351 = scmp.ne.s32.totalorder %s343, %s345
      %p352 = scmp.eq.s32.totalorder %s41, 1
      %p353 = por %p351, %p352
      %p354 = scmp.ne.s32.totalorder %s345, %s346
      %p355 = scmp.eq.s32.totalorder %s41, 0
      %p356 = por %p354, %p355
      %p357 = scmp.ne.s32.totalorder %s345, %s346
      %p358 = scmp.eq.s32.totalorder %s42, 1
      %p359 = por %p357, %p358
      %p361 = scmp.ne.s32.totalorder %s346, %s360
      %p362 = scmp.eq.s32.totalorder %s42, 0
      %p363 = por %p361, %p362
      %s365 = sadd.s32 %s364, 1
      %p368 = scmp.eq.s32.totalorder %s36, 1
      %p369 = scmp.ne.s32.totalorder %s364, %s366
      %p370 = scmp.eq.s32.totalorder %s36, 0
      %p371 = por %p369, %p370
      %p372 = scmp.ne.s32.totalorder %s364, %s366
      %p373 = scmp.eq.s32.totalorder %s41, 1
      %p374 = por %p372, %p373
      %p375 = scmp.ne.s32.totalorder %s366, %s367
      %p376 = scmp.eq.s32.totalorder %s41, 0
      %p377 = por %p375, %p376
      %p378 = scmp.ne.s32.totalorder %s366, %s367
      %p379 = scmp.eq.s32.totalorder %s42, 1
      %p380 = por %p378, %p379
      %p382 = scmp.ne.s32.totalorder %s367, %s381
      %p383 = scmp.eq.s32.totalorder %s42, 0
      %p384 = por %p382, %p383
      %s386 = sadd.s32 %s385, 1
      %p389 = scmp.eq.s32.totalorder %s36, 1
      %p390 = scmp.ne.s32.totalorder %s385, %s387
      %p391 = scmp.eq.s32.totalorder %s36, 0
      %p392 = por %p390, %p391
      %p393 = scmp.ne.s32.totalorder %s385, %s387
      %p394 = scmp.eq.s32.totalorder %s41, 1
      %p395 = por %p393, %p394
      %p396 = scmp.ne.s32.totalorder %s387, %s388
      %p397 = scmp.eq.s32.totalorder %s41, 0
      %p398 = por %p396, %p397
      %p399 = scmp.ne.s32.totalorder %s387, %s388
      %p400 = scmp.eq.s32.totalorder %s42, 1
      %p401 = por %p399, %p400
      %p403 = scmp.ne.s32.totalorder %s388, %s402
      %p404 = scmp.eq.s32.totalorder %s42, 0
      %p405 = por %p403, %p404
      %s407 = sadd.s32 %s406, 1
      %p410 = scmp.eq.s32.totalorder %s36, 1
      %p411 = scmp.ne.s32.totalorder %s406, %s408
      %p412 = scmp.eq.s32.totalorder %s36, 0
      %p413 = por %p411, %p412
      %p414 = scmp.ne.s32.totalorder %s406, %s408
      %p415 = scmp.eq.s32.totalorder %s41, 1
      %p416 = por %p414, %p415
      %p417 = scmp.ne.s32.totalorder %s408, %s409
      %p418 = scmp.eq.s32.totalorder %s41, 0
      %p419 = por %p417, %p418
      %p420 = scmp.ne.s32.totalorder %s408, %s409
      %p421 = scmp.eq.s32.totalorder %s42, 1
      %p422 = por %p420, %p421
      %p424 = scmp.ne.s32.totalorder %s409, %s423
      %p425 = scmp.eq.s32.totalorder %s42, 0
      %p426 = por %p424, %p425
      %s428 = sadd.s32 %s427, 1
      %p431 = scmp.eq.s32.totalorder %s36, 1
      %p432 = scmp.ne.s32.totalorder %s427, %s429
      %p433 = scmp.eq.s32.totalorder %s36, 0
      %p434 = por %p432, %p433
      %p435 = scmp.ne.s32.totalorder %s427, %s429
      %p436 = scmp.eq.s32.totalorder %s41, 1
      %p437 = por %p435, %p436
      %p438 = scmp.ne.s32.totalorder %s429, %s430
      %p439 = scmp.eq.s32.totalorder %s41, 0
      %p440 = por %p438, %p439
      %p441 = scmp.ne.s32.totalorder %s429, %s430
      %p442 = scmp.eq.s32.totalorder %s42, 1
      %p443 = por %p441, %p442
      %p445 = scmp.ne.s32.totalorder %s430, %s444
      %p446 = scmp.eq.s32.totalorder %s42, 0
      %p447 = por %p445, %p446
      %s449 = sadd.s32 %s448, 1
      %p452 = scmp.eq.s32.totalorder %s36, 1
      %p453 = scmp.ne.s32.totalorder %s448, %s450
      %p454 = scmp.eq.s32.totalorder %s36, 0
      %p455 = por %p453, %p454
      %p456 = scmp.ne.s32.totalorder %s448, %s450
      %p457 = scmp.eq.s32.totalorder %s41, 1
      %p458 = por %p456, %p457
      %p459 = scmp.ne.s32.totalorder %s450, %s451
      %p460 = scmp.eq.s32.totalorder %s41, 0
      %p461 = por %p459, %p460
      %p462 = scmp.ne.s32.totalorder %s450, %s451
      %p463 = scmp.eq.s32.totalorder %s42, 1
      %p464 = por %p462, %p463
      %p466 = scmp.ne.s32.totalorder %s451, %s465
      %p467 = scmp.eq.s32.totalorder %s42, 0
      %p468 = por %p466, %p467
      %s470 = sadd.s32 %s469, 1
      %p473 = scmp.eq.s32.totalorder %s36, 1
      %p474 = scmp.ne.s32.totalorder %s469, %s471
      %p475 = scmp.eq.s32.totalorder %s36, 0
      %p476 = por %p474, %p475
      %p477 = scmp.ne.s32.totalorder %s469, %s471
      %p478 = scmp.eq.s32.totalorder %s41, 1
      %p479 = por %p477, %p478
      %p480 = scmp.ne.s32.totalorder %s471, %s472
      %p481 = scmp.eq.s32.totalorder %s41, 0
      %p482 = por %p480, %p481
      %p483 = scmp.ne.s32.totalorder %s471, %s472
      %p484 = scmp.eq.s32.totalorder %s42, 1
      %p485 = por %p483, %p484
      %p487 = scmp.ne.s32.totalorder %s472, %s486
      %p488 = scmp.eq.s32.totalorder %s42, 0
      %p489 = por %p487, %p488
      %s491 = sadd.s32 %s490, 1
      %p494 = scmp.eq.s32.totalorder %s36, 1
      %p495 = scmp.ne.s32.totalorder %s490, %s492
      %p496 = scmp.eq.s32.totalorder %s36, 0
      %p497 = por %p495, %p496
      %p498 = scmp.ne.s32.totalorder %s490, %s492
      %p499 = scmp.eq.s32.totalorder %s41, 1
      %p500 = por %p498, %p499
      %p501 = scmp.ne.s32.totalorder %s492, %s493
      %p502 = scmp.eq.s32.totalorder %s41, 0
      %p503 = por %p501, %p502
      %p504 = scmp.ne.s32.totalorder %s492, %s493
      %p505 = scmp.eq.s32.totalorder %s42, 1
      %p506 = por %p504, %p505
      %p508 = scmp.ne.s32.totalorder %s493, %s507
      %p509 = scmp.eq.s32.totalorder %s42, 0
      %p510 = por %p508, %p509
      %s512 = sadd.s32 %s511, 1
      %p515 = scmp.eq.s32.totalorder %s36, 1
      %p516 = scmp.ne.s32.totalorder %s511, %s513
      %p517 = scmp.eq.s32.totalorder %s36, 0
      %p518 = por %p516, %p517
      %p519 = scmp.ne.s32.totalorder %s511, %s513
      %p520 = scmp.eq.s32.totalorder %s41, 1
      %p521 = por %p519, %p520
      %p522 = scmp.ne.s32.totalorder %s513, %s514
      %p523 = scmp.eq.s32.totalorder %s41, 0
      %p524 = por %p522, %p523
      %p525 = scmp.ne.s32.totalorder %s513, %s514
      %p526 = scmp.eq.s32.totalorder %s42, 1
      %p527 = por %p525, %p526
      %p529 = scmp.ne.s32.totalorder %s514, %s528
      %p530 = scmp.eq.s32.totalorder %s42, 0
      %p531 = por %p529, %p530
      %s533 = sadd.s32 %s532, 1
      %p536 = scmp.eq.s32.totalorder %s36, 1
      %p537 = scmp.ne.s32.totalorder %s532, %s534
      %p538 = scmp.eq.s32.totalorder %s36, 0
      %p539 = por %p537, %p538
      %p540 = scmp.ne.s32.totalorder %s532, %s534
      %p541 = scmp.eq.s32.totalorder %s41, 1
      %p542 = por %p540, %p541
      %p543 = scmp.ne.s32.totalorder %s534, %s535
      %p544 = scmp.eq.s32.totalorder %s41, 0
      %p545 = por %p543, %p544
      %p546 = scmp.ne.s32.totalorder %s534, %s535
      %p547 = scmp.eq.s32.totalorder %s42, 1
      %p548 = por %p546, %p547
      %p550 = scmp.ne.s32.totalorder %s535, %s549
      %p551 = scmp.eq.s32.totalorder %s42, 0
      %p552 = por %p550, %p551
      %s553 = ssub.s32 %s36, %s43
      %p554 = scmp.eq.s32.totalorder %s553, 0
      %s556 = sadd.s32 %s555, 1
      %s557 = scalar_select %p554, %s555, %s556
      %p560 = pneg %p554
      %p561 = scmp.eq.s32.totalorder %s36, 1
      %p562 = por %p560, %p561
      %p563 = scmp.ne.s32.totalorder %s555, %s558
      %p564 = scmp.eq.s32.totalorder %s36, 0
      %p565 = por %p563, %p564
      %p566 = scmp.ne.s32.totalorder %s555, %s558
      %p567 = scmp.eq.s32.totalorder %s41, 1
      %p568 = por %p566, %p567
      %p569 = scmp.ne.s32.totalorder %s558, %s559
      %p570 = scmp.eq.s32.totalorder %s41, 0
      %p571 = por %p569, %p570
      %p572 = scmp.ne.s32.totalorder %s558, %s559
      %p573 = scmp.eq.s32.totalorder %s42, 1
      %p574 = por %p572, %p573
      %p576 = scmp.ne.s32.totalorder %s559, %s575
      %p577 = scmp.eq.s32.totalorder %s42, 0
      %p578 = por %p576, %p577
      %p579 = scmp.le.s32.totalorder 1, %s36
      %p580 = scmp.lt.s32.totalorder %s36, 3
      %p581 = pnand %p579, %p580
      %p582 = pneg %p581
      // Predicated region
      $region9: #{dcformer_block.1} parent=5 // pred_check
        _
      $region10: #{dcformer_block.1} parent=5 // pred_check_branch
        %584 = sbr.rel (%p581) target = $region12
      $region11: #{dcformer_block.1} parent=5 // pred_region
        %s585 = ssub.s32 %s36, 1
        // Predicated region
        $region13: #{dcformer_block.1} parent=11 // pred_check
          %p586 = pneg %p83
        $region14: #{dcformer_block.1} parent=11 // pred_check_branch
          %588 = sbr.rel (%p586) target = $region16
        $region15: #{dcformer_block.1} parent=11 // pred_region
          %s590 = ssub.s32 384, 384
          %591 = vsyncadd [#allocation3], %s590
          %s592 = sshll.u32 [#allocation2], 4
          %s593 = int_to_ptr.vmem [resolvable:$true] %s592
          %598 = dma.hbm_to_vmem [thread:$0]  %s1, 384, %s593, [#allocation3], 128, 128, 8
        $region16: #{dcformer_block.1} parent=11 // pred_fallthru
          _
        // Predicated region
        $region17: #{dcformer_block.1} parent=11 // pred_check
          %p599 = pneg %p104
        $region18: #{dcformer_block.1} parent=11 // pred_check_branch
          %601 = sbr.rel (%p599) target = $region20
        $region19: #{dcformer_block.1} parent=11 // pred_region
          _
        $region20: #{dcformer_block.1} parent=11 // pred_fallthru
          _
        // Predicated region
        $region21: #{dcformer_block.1} parent=11 // pred_check
          %p602 = pneg %p125
        $region22: #{dcformer_block.1} parent=11 // pred_check_branch
          %604 = sbr.rel (%p602) target = $region24
        $region23: #{dcformer_block.1} parent=11 // pred_region
          %s606 = ssub.s32 512, 512
          %607 = vsyncadd [#allocation5], %s606
          %s608 = sshll.u32 [#allocation4], 4
          %s609 = int_to_ptr.vmem [resolvable:$true] %s608
          %614 = dma.hbm_to_vmem [thread:$0]  %s3, 512, %s609, [#allocation5], 128, 128, 8
        $region24: #{dcformer_block.1} parent=11 // pred_fallthru
          _
        // Predicated region
        $region25: #{dcformer_block.1} parent=11 // pred_check
          %p615 = pneg %p146
        $region26: #{dcformer_block.1} parent=11 // pred_check_branch
          %617 = sbr.rel (%p615) target = $region28
        $region27: #{dcformer_block.1} parent=11 // pred_region
          %s619 = ssub.s32 512, 512
          %620 = vsyncadd [#allocation5], %s619
          %s621 = sshll.u32 [#allocation6], 4
          %s622 = int_to_ptr.vmem [resolvable:$true] %s621
          %627 = dma.hbm_to_vmem [thread:$0]  %s4, 512, %s622, [#allocation5], 128, 128, 8
        $region28: #{dcformer_block.1} parent=11 // pred_fallthru
          _
        // Predicated region
        $region29: #{dcformer_block.1} parent=11 // pred_check
          %p628 = pneg %p167
        $region30: #{dcformer_block.1} parent=11 // pred_check_branch
          %630 = sbr.rel (%p628) target = $region32
        $region31: #{dcformer_block.1} parent=11 // pred_region
          %s632 = ssub.s32 512, 512
          %633 = vsyncadd [#allocation8], %s632
          %s634 = sshll.u32 [#allocation7], 4
          %s635 = int_to_ptr.vmem [resolvable:$true] %s634
          %640 = dma.hbm_to_vmem [thread:$0]  %s5, 512, %s635, [#allocation8], 128, 128, 8
        $region32: #{dcformer_block.1} parent=11 // pred_fallthru
          _
        // Predicated region
        $region33: #{dcformer_block.1} parent=11 // pred_check
          %p641 = pneg %p188
        $region34: #{dcformer_block.1} parent=11 // pred_check_branch
          %643 = sbr.rel (%p641) target = $region36
        $region35: #{dcformer_block.1} parent=11 // pred_region
          %s645 = ssub.s32 512, 512
          %646 = vsyncadd [#allocation8], %s645
          %s647 = sshll.u32 [#allocation9], 4
          %s648 = int_to_ptr.vmem [resolvable:$true] %s647
          %653 = dma.hbm_to_vmem [thread:$0]  %s6, 512, %s648, [#allocation8], 128, 128, 8
        $region36: #{dcformer_block.1} parent=11 // pred_fallthru
          _
        // Predicated region
        $region37: #{dcformer_block.1} parent=11 // pred_check
          %p654 = pneg %p209
        $region38: #{dcformer_block.1} parent=11 // pred_check_branch
          %656 = sbr.rel (%p654) target = $region40
        $region39: #{dcformer_block.1} parent=11 // pred_region
          _
        $region40: #{dcformer_block.1} parent=11 // pred_fallthru
          _
        // Predicated region
        $region41: #{dcformer_block.1} parent=11 // pred_check
          %p657 = pneg %p230
        $region42: #{dcformer_block.1} parent=11 // pred_check_branch
          %659 = sbr.rel (%p657) target = $region44
        $region43: #{dcformer_block.1} parent=11 // pred_region
          _
        $region44: #{dcformer_block.1} parent=11 // pred_fallthru
          _
        // Predicated region
        $region45: #{dcformer_block.1} parent=11 // pred_check
          %p660 = pneg %p251
        $region46: #{dcformer_block.1} parent=11 // pred_check_branch
          %662 = sbr.rel (%p660) target = $region48
        $region47: #{dcformer_block.1} parent=11 // pred_region
          %s664 = ssub.s32 512, 512
          %665 = vsyncadd [#allocation11], %s664
          %s666 = sshll.u32 [#allocation10], 4
          %s667 = int_to_ptr.vmem [resolvable:$true] %s666
          %672 = dma.hbm_to_vmem [thread:$0]  %s9, 512, %s667, [#allocation11], 128, 128, 8
        $region48: #{dcformer_block.1} parent=11 // pred_fallthru
          _
        // Predicated region
        $region49: #{dcformer_block.1} parent=11 // pred_check
          %p673 = pneg %p272
        $region50: #{dcformer_block.1} parent=11 // pred_check_branch
          %675 = sbr.rel (%p673) target = $region52
        $region51: #{dcformer_block.1} parent=11 // pred_region
          %s677 = ssub.s32 1024, 1024
          %678 = vsyncadd [#allocation11], %s677
          %s679 = sshll.u32 [#allocation12], 4
          %s680 = int_to_ptr.vmem [resolvable:$true] %s679
          %685 = dma.hbm_to_vmem [thread:$0]  %s10, 1024, %s680, [#allocation11], 128, 128, 8
        $region52: #{dcformer_block.1} parent=11 // pred_fallthru
          _
        // Predicated region
        $region53: #{dcformer_block.1} parent=11 // pred_check
          %p686 = pneg %p293
        $region54: #{dcformer_block.1} parent=11 // pred_check_branch
          %688 = sbr.rel (%p686) target = $region56
        $region55: #{dcformer_block.1} parent=11 // pred_region
          %s690 = ssub.s32 128, 128
          %691 = vsyncadd [#allocation14], %s690
          %s693 = sshll.u32 [#allocation13], 4
          %s694 = int_to_ptr.vmem [resolvable:$true] %s693
          %696 = dma.hbm_to_vmem [thread:$0]  %s11, 128, %s694, [#allocation14]
        $region56: #{dcformer_block.1} parent=11 // pred_fallthru
          _
        // Predicated region
        $region57: #{dcformer_block.1} parent=11 // pred_check
          %p697 = pneg %p314
        $region58: #{dcformer_block.1} parent=11 // pred_check_branch
          %699 = sbr.rel (%p697) target = $region60
        $region59: #{dcformer_block.1} parent=11 // pred_region
          _
        $region60: #{dcformer_block.1} parent=11 // pred_fallthru
          _
        // Predicated region
        $region61: #{dcformer_block.1} parent=11 // pred_check
          %p700 = pneg %p335
        $region62: #{dcformer_block.1} parent=11 // pred_check_branch
          %702 = sbr.rel (%p700) target = $region64
        $region63: #{dcformer_block.1} parent=11 // pred_region
          _
        $region64: #{dcformer_block.1} parent=11 // pred_fallthru
          _
        // Predicated region
        $region65: #{dcformer_block.1} parent=11 // pred_check
          %p703 = pneg %p356
        $region66: #{dcformer_block.1} parent=11 // pred_check_branch
          %705 = sbr.rel (%p703) target = $region68
        $region67: #{dcformer_block.1} parent=11 // pred_region
          _
        $region68: #{dcformer_block.1} parent=11 // pred_fallthru
          _
        // Predicated region
        $region69: #{dcformer_block.1} parent=11 // pred_check
          %p706 = pneg %p377
        $region70: #{dcformer_block.1} parent=11 // pred_check_branch
          %708 = sbr.rel (%p706) target = $region72
        $region71: #{dcformer_block.1} parent=11 // pred_region
          _
        $region72: #{dcformer_block.1} parent=11 // pred_fallthru
          _
        // Predicated region
        $region73: #{dcformer_block.1} parent=11 // pred_check
          %p709 = pneg %p398
        $region74: #{dcformer_block.1} parent=11 // pred_check_branch
          %711 = sbr.rel (%p709) target = $region76
        $region75: #{dcformer_block.1} parent=11 // pred_region
          %s713 = ssub.s32 1024, 1024
          %714 = vsyncadd [#allocation14], %s713
          %s715 = sshll.u32 [#allocation15], 4
          %s716 = int_to_ptr.vmem [resolvable:$true] %s715
          %721 = dma.hbm_to_vmem [thread:$0]  %s16, 1024, %s716, [#allocation14], 256, 256, 16
        $region76: #{dcformer_block.1} parent=11 // pred_fallthru
          _
        // Predicated region
        $region77: #{dcformer_block.1} parent=11 // pred_check
          %p722 = pneg %p419
        $region78: #{dcformer_block.1} parent=11 // pred_check_branch
          %724 = sbr.rel (%p722) target = $region80
        $region79: #{dcformer_block.1} parent=11 // pred_region
          _
        $region80: #{dcformer_block.1} parent=11 // pred_fallthru
          _
        // Predicated region
        $region81: #{dcformer_block.1} parent=11 // pred_check
          %p725 = pneg %p440
        $region82: #{dcformer_block.1} parent=11 // pred_check_branch
          %727 = sbr.rel (%p725) target = $region84
        $region83: #{dcformer_block.1} parent=11 // pred_region
          _
        $region84: #{dcformer_block.1} parent=11 // pred_fallthru
          _
        // Predicated region
        $region85: #{dcformer_block.1} parent=11 // pred_check
          %p728 = pneg %p461
        $region86: #{dcformer_block.1} parent=11 // pred_check_branch
          %730 = sbr.rel (%p728) target = $region88
        $region87: #{dcformer_block.1} parent=11 // pred_region
          %s732 = ssub.s32 512, 512
          %733 = vsyncadd [#allocation17], %s732
          %s734 = sshll.u32 [#allocation16], 4
          %s735 = int_to_ptr.vmem [resolvable:$true] %s734
          %740 = dma.hbm_to_vmem [thread:$0]  %s19, 512, %s735, [#allocation17], 128, 128, 8
        $region88: #{dcformer_block.1} parent=11 // pred_fallthru
          _
        // Predicated region
        $region89: #{dcformer_block.1} parent=11 // pred_check
          %p741 = pneg %p482
        $region90: #{dcformer_block.1} parent=11 // pred_check_branch
          %743 = sbr.rel (%p741) target = $region92
        $region91: #{dcformer_block.1} parent=11 // pred_region
          _
        $region92: #{dcformer_block.1} parent=11 // pred_fallthru
          _
        // Predicated region
        $region93: #{dcformer_block.1} parent=11 // pred_check
          %p744 = pneg %p503
        $region94: #{dcformer_block.1} parent=11 // pred_check_branch
          %746 = sbr.rel (%p744) target = $region96
        $region95: #{dcformer_block.1} parent=11 // pred_region
          %s748 = ssub.s32 512, 512
          %749 = vsyncadd [#allocation17], %s748
          %s750 = sshll.u32 [#allocation18], 4
          %s751 = int_to_ptr.vmem [resolvable:$true] %s750
          %756 = dma.hbm_to_vmem [thread:$0]  %s21, 512, %s751, [#allocation17], 128, 128, 8
        $region96: #{dcformer_block.1} parent=11 // pred_fallthru
          _
        // Predicated region
        $region97: #{dcformer_block.1} parent=11 // pred_check
          %p757 = pneg %p524
        $region98: #{dcformer_block.1} parent=11 // pred_check_branch
          %759 = sbr.rel (%p757) target = $region100
        $region99: #{dcformer_block.1} parent=11 // pred_region
          _
        $region100: #{dcformer_block.1} parent=11 // pred_fallthru
          _
        // Predicated region
        $region101: #{dcformer_block.1} parent=11 // pred_check
          %p760 = pneg %p545
        $region102: #{dcformer_block.1} parent=11 // pred_check_branch
          %762 = sbr.rel (%p760) target = $region104
        $region103: #{dcformer_block.1} parent=11 // pred_region
          _
        $region104: #{dcformer_block.1} parent=11 // pred_fallthru
          _
      $region12: #{dcformer_block.1} parent=5 // pred_fallthru
        _
      %p763 = scmp.lt.s32.totalorder %s36, 2
      // Predicated region
      $region105: #{dcformer_block.1} parent=5 // pred_check
        %p764 = pneg %p763
      $region106: #{dcformer_block.1} parent=5 // pred_check_branch
        %766 = sbr.rel (%p764) target = $region108
      $region107: #{dcformer_block.1} parent=5 // pred_region
        // Predicated region
        $region109: #{dcformer_block.1} parent=107 // pred_check
          %p767 = pneg %p56
        $region110: #{dcformer_block.1} parent=107 // pred_check_branch
          %769 = sbr.rel (%p767) target = $region112
        $region111: #{dcformer_block.1} parent=107 // pred_region
          %p770 = scmp.lt.s32.totalorder %s36, 1
          %s771 = scalar_select %p770, %s36, 1
          %s772 = smul.addr %s771, 7
          %s773 = smul.addr %s772, 8
          %s774 = scalar_lea.vmem %s0, %s773
        $region112: #{dcformer_block.1} parent=107 // pred_fallthru
          _
      $region108: #{dcformer_block.1} parent=5 // pred_fallthru
        _
      %p775 = scmp.le.s32.totalorder 1, %s36
      %p776 = scmp.lt.s32.totalorder %s36, 3
      %p777 = pnand %p775, %p776
      %p778 = pneg %p777
      // Predicated region
      $region113: #{dcformer_block.1} parent=5 // pred_check
        _
      $region114: #{dcformer_block.1} parent=5 // pred_check_branch
        %780 = sbr.rel (%p777) target = $region116
      $region115: #{dcformer_block.1} parent=5 // pred_region
        %s781 = ssub.s32 %s36, 1
        // Predicated region
        $region117: #{dcformer_block.1} parent=115 // pred_check
          %p782 = pneg %p83
        $region118: #{dcformer_block.1} parent=115 // pred_check_branch
          %784 = sbr.rel (%p782) target = $region120
        $region119: #{dcformer_block.1} parent=115 // pred_region
          %785 = dma.done [#allocation3], 384
        $region120: #{dcformer_block.1} parent=115 // pred_fallthru
          _
        // Predicated region
        $region121: #{dcformer_block.1} parent=115 // pred_check
          %p786 = pneg %p125
        $region122: #{dcformer_block.1} parent=115 // pred_check_branch
          %788 = sbr.rel (%p786) target = $region124
        $region123: #{dcformer_block.1} parent=115 // pred_region
          %789 = dma.done [#allocation5], 512
        $region124: #{dcformer_block.1} parent=115 // pred_fallthru
          _
        // Predicated region
        $region125: #{dcformer_block.1} parent=115 // pred_check
          %p790 = pneg %p146
        $region126: #{dcformer_block.1} parent=115 // pred_check_branch
          %792 = sbr.rel (%p790) target = $region128
        $region127: #{dcformer_block.1} parent=115 // pred_region
          %793 = dma.done [#allocation5], 512
        $region128: #{dcformer_block.1} parent=115 // pred_fallthru
          _
        // Predicated region
        $region129: #{dcformer_block.1} parent=115 // pred_check
          %p794 = pneg %p167
        $region130: #{dcformer_block.1} parent=115 // pred_check_branch
          %796 = sbr.rel (%p794) target = $region132
        $region131: #{dcformer_block.1} parent=115 // pred_region
          %797 = dma.done [#allocation8], 512
        $region132: #{dcformer_block.1} parent=115 // pred_fallthru
          _
        // Predicated region
        $region133: #{dcformer_block.1} parent=115 // pred_check
          %p798 = pneg %p188
        $region134: #{dcformer_block.1} parent=115 // pred_check_branch
          %800 = sbr.rel (%p798) target = $region136
        $region135: #{dcformer_block.1} parent=115 // pred_region
          %801 = dma.done [#allocation8], 512
        $region136: #{dcformer_block.1} parent=115 // pred_fallthru
          _
        // Predicated region
        $region137: #{dcformer_block.1} parent=115 // pred_check
          %p802 = pneg %p251
        $region138: #{dcformer_block.1} parent=115 // pred_check_branch
          %804 = sbr.rel (%p802) target = $region140
        $region139: #{dcformer_block.1} parent=115 // pred_region
          %805 = dma.done [#allocation11], 512
        $region140: #{dcformer_block.1} parent=115 // pred_fallthru
          _
        // Predicated region
        $region141: #{dcformer_block.1} parent=115 // pred_check
          %p806 = pneg %p272
        $region142: #{dcformer_block.1} parent=115 // pred_check_branch
          %808 = sbr.rel (%p806) target = $region144
        $region143: #{dcformer_block.1} parent=115 // pred_region
          %809 = dma.done [#allocation11], 1024
        $region144: #{dcformer_block.1} parent=115 // pred_fallthru
          _
        // Predicated region
        $region145: #{dcformer_block.1} parent=115 // pred_check
          %p810 = pneg %p293
        $region146: #{dcformer_block.1} parent=115 // pred_check_branch
          %812 = sbr.rel (%p810) target = $region148
        $region147: #{dcformer_block.1} parent=115 // pred_region
          %813 = dma.done [#allocation14], 128
        $region148: #{dcformer_block.1} parent=115 // pred_fallthru
          _
        // Predicated region
        $region149: #{dcformer_block.1} parent=115 // pred_check
          %p814 = pneg %p398
        $region150: #{dcformer_block.1} parent=115 // pred_check_branch
          %816 = sbr.rel (%p814) target = $region152
        $region151: #{dcformer_block.1} parent=115 // pred_region
          %817 = dma.done [#allocation14], 1024
        $region152: #{dcformer_block.1} parent=115 // pred_fallthru
          _
        // Predicated region
        $region153: #{dcformer_block.1} parent=115 // pred_check
          %p818 = pneg %p461
        $region154: #{dcformer_block.1} parent=115 // pred_check_branch
          %820 = sbr.rel (%p818) target = $region156
        $region155: #{dcformer_block.1} parent=115 // pred_region
          %821 = dma.done [#allocation17], 512
        $region156: #{dcformer_block.1} parent=115 // pred_fallthru
          _
        // Predicated region
        $region157: #{dcformer_block.1} parent=115 // pred_check
          %p822 = pneg %p503
        $region158: #{dcformer_block.1} parent=115 // pred_check_branch
          %824 = sbr.rel (%p822) target = $region160
        $region159: #{dcformer_block.1} parent=115 // pred_region
          %825 = dma.done [#allocation17], 512
        $region160: #{dcformer_block.1} parent=115 // pred_fallthru
          _
        %p826 = scmp.lt.s32.totalorder %s41, 1
        %s827 = scalar_select %p826, %s41, 1
        %s828 = smul.addr %s827, 7
        %s829 = smul.addr %s828, 8
        %s830 = scalar_lea.vmem %s0, %s829
        %p831 = pneg %p62
        %p832 = pneg %p59
        %p833 = pneg %p83
        %p834 = pneg %p80
        %p835 = pneg %p104
        %p836 = pneg %p101
        %p837 = pneg %p125
        %p838 = pneg %p122
        %p839 = pneg %p146
        %p840 = pneg %p143
        %p841 = pneg %p167
        %p842 = pneg %p164
        %p843 = pneg %p188
        %p844 = pneg %p185
        %p845 = pneg %p209
        %p846 = pneg %p206
        %p847 = pneg %p230
        %p848 = pneg %p227
        %p849 = pneg %p251
        %p850 = pneg %p248
        %p851 = pneg %p272
        %p852 = pneg %p269
        %p853 = pneg %p293
        %p854 = pneg %p290
        %p855 = pneg %p314
        %p856 = pneg %p311
        %p857 = pneg %p335
        %p858 = pneg %p332
        %p859 = pneg %p356
        %p860 = pneg %p353
        %p861 = pneg %p377
        %p862 = pneg %p374
        %p863 = pneg %p398
        %p864 = pneg %p395
        %p865 = pneg %p419
        %p866 = pneg %p416
        %p867 = pneg %p440
        %p868 = pneg %p437
        %p869 = pneg %p461
        %p870 = pneg %p458
        %p871 = pneg %p482
        %p872 = pneg %p479
        %p873 = pneg %p503
        %p874 = pneg %p500
        %p875 = pneg %p524
        %p876 = pneg %p521
        %p877 = pneg %p545
        %p878 = pneg %p542
        %p879 = pneg %p571
        %p880 = pneg %p568
        %p881 = scmp.lt.s32.totalorder %s41, 1
        %s882 = scalar_select %p881, %s41, 1
        %s883 = smul.addr %s882, 7
        %s884 = smul.addr %s883, 8
        %s885 = scalar_lea.vmem %s24, %s884
        %p886 = scmp.lt.s32.totalorder %s41, 1
        %s887 = scalar_select %p886, %s41, 1
        %s888 = smul.addr %s887, 7
        %s889 = smul.addr %s888, 8
        %s890 = scalar_lea.vmem %s0, %s889
        %p891 = scmp.lt.s32.totalorder %s41, 1
        %s892 = scalar_select %p891, %s41, 1
        %s893 = smul.addr %s892, 7
        %s894 = smul.addr %s893, 8
        %s895 = scalar_lea.vmem %s24, %s894
        %v897 = vld [vmem:[%s890] sm:$0xff]
        %v898 = vld [vmem:[%s890 + $0x8] sm:$0xff]
        %v899 = vld [vmem:[%s890 + $0x10] sm:$0xff]
        %v900 = vld [vmem:[%s890 + $0x18] sm:$0xff]
        %v901 = vld [vmem:[%s890 + $0x20] sm:$0xff]
        %v902 = vld [vmem:[%s890 + $0x28] sm:$0xff]
        %v903 = vld [vmem:[%s890 + $0x30] sm:$0x1]
        %v904 = vld [vmem:[#allocation2] sm:$0xff]
        %v905 = vld [vmem:[#allocation2 + $0x8] sm:$0xff]
        %v906 = vld [vmem:[#allocation2 + $0x10] sm:$0xf]
        %vm907 = vcmask 261120
        %v908 = vsel %vm907, %v897, 0.0
        %909 = vadd.xlane.f32.xlu0 %v908
        %v910 = vpop.xlane.xlu0 %909
        %v911 = vsel %vm907, %v898, 0.0
        %912 = vadd.xlane.f32.xlu0 %v911
        %v913 = vpop.xlane.xlu0 %912
        %v914 = vsel %vm907, %v899, 0.0
        %915 = vadd.xlane.f32.xlu0 %v914
        %v916 = vpop.xlane.xlu0 %915
        %v917 = vsel %vm907, %v900, 0.0
        %918 = vadd.xlane.f32.xlu0 %v917
        %v919 = vpop.xlane.xlu0 %918
        %v920 = vsel %vm907, %v901, 0.0
        %921 = vadd.xlane.f32.xlu0 %v920
        %v922 = vpop.xlane.xlu0 %921
        %v923 = vsel %vm907, %v902, 0.0
        %924 = vadd.xlane.f32.xlu0 %v923
        %v925 = vpop.xlane.xlu0 %924
        %vm926 = vcmask 253952
        %v927 = vsel %vm926, %v903, 0.0
        %928 = vadd.xlane.f32.xlu0 %v927
        %v929 = vpop.xlane.xlu0 %928
        %v930 = vrcp.pop 32.0
        %v931 = vmul.f32 %v910, %v930
        %v932 = vmul.f32 %v913, %v930
        %v933 = vmul.f32 %v916, %v930
        %v934 = vmul.f32 %v919, %v930
        %v935 = vmul.f32 %v922, %v930
        %v936 = vmul.f32 %v925, %v930
        %v937 = vmul.f32 %v929, %v930
        %v938 = vsub.f32 %v897, %v931
        %v939 = vsub.f32 %v898, %v932
        %v940 = vsub.f32 %v899, %v933
        %v941 = vsub.f32 %v900, %v934
        %v942 = vsub.f32 %v901, %v935
        %v943 = vsub.f32 %v902, %v936
        %v944 = vsub.f32 %v903, %v937
        %v945 = vmul.f32 %v938, %v938
        %v946 = vmul.f32 %v939, %v939
        %v947 = vmul.f32 %v940, %v940
        %v948 = vmul.f32 %v941, %v941
        %v949 = vmul.f32 %v942, %v942
        %v950 = vmul.f32 %v943, %v943
        %v951 = vmul.f32 %v944, %v944
        %v952 = vsel %vm907, %v945, 0.0
        %953 = vadd.xlane.f32.xlu0 %v952
        %v954 = vpop.xlane.xlu0 %953
        %v955 = vsel %vm907, %v946, 0.0
        %956 = vadd.xlane.f32.xlu0 %v955
        %v957 = vpop.xlane.xlu0 %956
        %v958 = vsel %vm907, %v947, 0.0
        %959 = vadd.xlane.f32.xlu0 %v958
        %v960 = vpop.xlane.xlu0 %959
        %v961 = vsel %vm907, %v948, 0.0
        %962 = vadd.xlane.f32.xlu0 %v961
        %v963 = vpop.xlane.xlu0 %962
        %v964 = vsel %vm907, %v949, 0.0
        %965 = vadd.xlane.f32.xlu0 %v964
        %v966 = vpop.xlane.xlu0 %965
        %v967 = vsel %vm907, %v950, 0.0
        %968 = vadd.xlane.f32.xlu0 %v967
        %v969 = vpop.xlane.xlu0 %968
        %v970 = vsel %vm926, %v951, 0.0
        %971 = vadd.xlane.f32.xlu0 %v970
        %v972 = vpop.xlane.xlu0 %971
        %v973 = vmul.f32 %v954, %v930
        %v974 = vmul.f32 %v957, %v930
        %v975 = vmul.f32 %v960, %v930
        %v976 = vmul.f32 %v963, %v930
        %v977 = vmul.f32 %v966, %v930
        %v978 = vmul.f32 %v969, %v930
        %v979 = vmul.f32 %v972, %v930
        %v980 = vadd.f32 %v973, 1e-05
        %v981 = vadd.f32 %v974, 1e-05
        %v982 = vadd.f32 %v975, 1e-05
        %v983 = vadd.f32 %v976, 1e-05
        %v984 = vadd.f32 %v977, 1e-05
        %v985 = vadd.f32 %v978, 1e-05
        %v986 = vadd.f32 %v979, 1e-05
        %v987 = vrsqrt.pop %v980
        %v988 = vrsqrt.pop %v981
        %v989 = vrsqrt.pop %v982
        %v990 = vrsqrt.pop %v983
        %v991 = vrsqrt.pop %v984
        %v992 = vrsqrt.pop %v985
        %v993 = vrsqrt.pop %v986
        %v994 = vmul.f32 %v938, %v987
        %v995 = vmul.f32 %v939, %v988
        %v996 = vmul.f32 %v940, %v989
        %v997 = vmul.f32 %v941, %v990
        %v998 = vmul.f32 %v942, %v991
        %v999 = vmul.f32 %v943, %v992
        %v1000 = vmul.f32 %v944, %v993
        %v1001 = vlaneseq
        %v1002 = vshrl.u32 %v1001, 7
        %v1003 = vsub.s32 0, %v1002
        %v1004 = vrot.slane %v904, %v1003
        %v1005 = vmul.f32 %v994, %v1004
        %v1006 = vmul.f32 %v995, %v1004
        %v1007 = vmul.f32 %v996, %v1004
        %v1008 = vmul.f32 %v997, %v1004
        %v1009 = vmul.f32 %v998, %v1004
        %v1010 = vmul.f32 %v999, %v1004
        %v1011 = vmul.f32 %v1000, %v1004
        %v1012 = vlaneseq
        %v1013 = vshrl.u32 %v1012, 7
        %v1014 = vsub.s32 1, %v1013
        %v1015 = vrot.slane %v904, %v1014
        %v1016 = vadd.f32 %v1005, %v1015
        %v1017 = vadd.f32 %v1006, %v1015
        %v1018 = vadd.f32 %v1007, %v1015
        %v1019 = vadd.f32 %v1008, %v1015
        %v1020 = vadd.f32 %v1009, %v1015
        %v1021 = vadd.f32 %v1010, %v1015
        %v1022 = vadd.f32 %v1011, %v1015
        %v1023 = vld [vmem:[#allocation10] sm:$0xff]
        %v1024 = vld [vmem:[#allocation10 + $0x8] sm:$0xff]
        %v1025 = vld [vmem:[#allocation10 + $0x10] sm:$0xff]
        %v1026 = vld [vmem:[#allocation10 + $0x18] sm:$0xff]
        %v1027 = vld [vmem:[#allocation4] sm:$0xff]
        %v1028 = vld [vmem:[#allocation4 + $0x8] sm:$0xff]
        %v1029 = vld [vmem:[#allocation4 + $0x10] sm:$0xff]
        %v1030 = vld [vmem:[#allocation4 + $0x18] sm:$0xff]
        %v1031 = vlaneseq
        %v1032 = vshrl.u32 %v1031, 7
        %v1033 = vsub.s32 2, %v1032
        %v1034 = vrot.slane %v904, %v1033
        %v1036 = vsel %vm907, %v1016, 0
        %v1039 = vsel %vm907, %v1017, 0
        %v1042 = vsel %vm907, %v1018, 0
        %v1045 = vsel %vm907, %v1019, 0
        %v1048 = vsel %vm907, %v1020, 0
        %v1051 = vsel %vm907, %v1021, 0
        %v1054 = vsel %vm907, %v1022, 0
        %1056 = vmatprep.subr.mxu0 0.0
        %1057 = vmatpush1.msra.mxu0 0.0
        %1058 = vmatprep.subr.mxu0 0.0
        %1059 = vmatpush1.msra.mxu0 0.0
        %1060 = vmatprep.subr.mxu0 0.0
        %1061 = vmatpush1.msra.mxu0 0.0
        %1062 = vmatprep.subr.mxu0 0.0
        %1063 = vmatpush1.msra.mxu0 0.0
        %1064 = vmatprep.subr.mxu0 0.0
        %1065 = vmatpush1.msra.mxu0 0.0
        %1066 = vmatprep.subr.mxu0 0.0
        %1067 = vmatpush1.msra.mxu0 0.0
        %1068 = vmatprep.subr.mxu0 0.0
        %1069 = vmatpush1.msra.mxu0 0.0
        %1070 = vmatprep.subr.mxu0 0.0
        %1071 = vmatpush1.msra.mxu0 0.0
        %1072 = vmatprep.subr.mxu0 0.0
        %1073 = vmatpush1.msra.mxu0 0.0
        %1074 = vmatprep.subr.mxu0 0.0
        %1075 = vmatpush1.msra.mxu0 0.0
        %1076 = vmatprep.subr.mxu0 0.0
        %1077 = vmatpush1.msra.mxu0 0.0
        %1078 = vmatprep.subr.mxu0 0.0
        %1079 = vmatpush1.msra.mxu0 0.0
        %1080 = vmatprep.subr.mxu0 0.0
        %1081 = vmatpush1.msra.mxu0 %v1030
        %1082 = vmatprep.subr.mxu0 0.0
        %1083 = vmatpush1.msra.mxu0 %v1029
        %1084 = vmatprep.subr.mxu0 0.0
        %1085 = vmatpush1.msra.mxu0 %v1028
        %1086 = vmatprep.subr.mxu0 0.0
        %1087 = vmatpush1.msra.mxu0 %v1027
        %1088 = vmatprep.subr.mxu0 0.0
        %1089 = vmatpush2.msra.mxu0 0.0
        %1090 = vmatprep.subr.mxu0 0.0
        %1091 = vmatpush2.msra.mxu0 0.0
        %1092 = vmatprep.subr.mxu0 0.0
        %1093 = vmatpush2.msra.mxu0 0.0
        %1094 = vmatprep.subr.mxu0 0.0
        %1095 = vmatpush2.msra.mxu0 0.0
        %1096 = vmatprep.subr.mxu0 0.0
        %1097 = vmatpush2.msra.mxu0 0.0
        %1098 = vmatprep.subr.mxu0 0.0
        %1099 = vmatpush2.msra.mxu0 0.0
        %1100 = vmatprep.subr.mxu0 0.0
        %1101 = vmatpush2.msra.mxu0 0.0
        %1102 = vmatprep.subr.mxu0 0.0
        %1103 = vmatpush2.msra.mxu0 0.0
        %1104 = vmatprep.subr.mxu0 0.0
        %1105 = vmatpush2.msra.mxu0 0.0
        %1106 = vmatprep.subr.mxu0 0.0
        %1107 = vmatpush2.msra.mxu0 0.0
        %1108 = vmatprep.subr.mxu0 0.0
        %1109 = vmatpush2.msra.mxu0 0.0
        %1110 = vmatprep.subr.mxu0 0.0
        %1111 = vmatpush2.msra.mxu0 0.0
        %1112 = vmatprep.subr.mxu0 0.0
        %1113 = vmatpush2.msra.mxu0 0.0
        %1114 = vmatprep.subr.mxu0 0.0
        %1115 = vmatpush2.msra.mxu0 0.0
        %1116 = vmatprep.subr.mxu0 0.0
        %1117 = vmatpush2.msra.mxu0 0.0
        %1118 = vmatprep.subr.mxu0 0.0
        %1119 = vmatpush2.msra.mxu0 0.0
        %1120 = vmatprep.mubr.f32.mxu0 0.0
        %1121 = vmatmul.mubr.f32.gmra.mxu0 %v1036
        %v1122 = vpop.f32.mrf.mxu0
        %v1123 = vadd.f32 %v1034, %v1122
        %v1124 = vpop.f32.mrf.mxu0
        %1125 = vmatprep.mubr.f32.mxu0 0.0
        %1126 = vmatmul.mubr.f32.gmra.mxu0 %v1039
        %v1127 = vpop.f32.mrf.mxu0
        %v1128 = vadd.f32 %v1034, %v1127
        %v1129 = vpop.f32.mrf.mxu0
        %1130 = vmatprep.mubr.f32.mxu0 0.0
        %1131 = vmatmul.mubr.f32.gmra.mxu0 %v1042
        %v1132 = vpop.f32.mrf.mxu0
        %v1133 = vadd.f32 %v1034, %v1132
        %v1134 = vpop.f32.mrf.mxu0
        %1135 = vmatprep.mubr.f32.mxu0 0.0
        %1136 = vmatmul.mubr.f32.gmra.mxu0 %v1045
        %v1137 = vpop.f32.mrf.mxu0
        %v1138 = vadd.f32 %v1034, %v1137
        %v1139 = vpop.f32.mrf.mxu0
        %1140 = vmatprep.mubr.f32.mxu0 0.0
        %1141 = vmatmul.mubr.f32.gmra.mxu0 %v1048
        %v1142 = vpop.f32.mrf.mxu0
        %v1143 = vadd.f32 %v1034, %v1142
        %v1144 = vpop.f32.mrf.mxu0
        %1145 = vmatprep.mubr.f32.mxu0 0.0
        %1146 = vmatmul.mubr.f32.gmra.mxu0 %v1051
        %v1147 = vpop.f32.mrf.mxu0
        %v1148 = vadd.f32 %v1034, %v1147
        %v1149 = vpop.f32.mrf.mxu0
        %1150 = vmatprep.mubr.f32.mxu0 0.0
        %1151 = vmatmul.mubr.f32.gmra.mxu0 %v1054
        %v1152 = vpop.f32.mrf.mxu0
        %v1153 = vadd.f32 %v1034, %v1152
        %v1154 = vpop.f32.mrf.mxu0
        %1155 = vdwg.mxu0
        %v1156 = vmul.f32 %v1123, %v1123
        %v1157 = vmul.f32 %v1128, %v1128
        %v1158 = vmul.f32 %v1133, %v1133
        %v1159 = vmul.f32 %v1138, %v1138
        %v1160 = vmul.f32 %v1143, %v1143
        %v1161 = vmul.f32 %v1148, %v1148
        %v1162 = vmul.f32 %v1153, %v1153
        %v1164 = vsel %vm907, %v1156, 0
        %v1167 = vsel %vm907, %v1157, 0
        %v1170 = vsel %vm907, %v1158, 0
        %v1173 = vsel %vm907, %v1159, 0
        %v1176 = vsel %vm907, %v1160, 0
        %v1179 = vsel %vm907, %v1161, 0
        %v1182 = vsel %vm907, %v1162, 0
        %1184 = vmatprep.subr.mxu0 0.0
        %1185 = vmatpush1.msra.mxu0 0.0
        %1186 = vmatprep.subr.mxu0 0.0
        %1187 = vmatpush1.msra.mxu0 0.0
        %1188 = vmatprep.subr.mxu0 0.0
        %1189 = vmatpush1.msra.mxu0 0.0
        %1190 = vmatprep.subr.mxu0 0.0
        %1191 = vmatpush1.msra.mxu0 0.0
        %1192 = vmatprep.subr.mxu0 0.0
        %1193 = vmatpush1.msra.mxu0 0.0
        %1194 = vmatprep.subr.mxu0 0.0
        %1195 = vmatpush1.msra.mxu0 0.0
        %1196 = vmatprep.subr.mxu0 0.0
        %1197 = vmatpush1.msra.mxu0 0.0
        %1198 = vmatprep.subr.mxu0 0.0
        %1199 = vmatpush1.msra.mxu0 0.0
        %1200 = vmatprep.subr.mxu0 0.0
        %1201 = vmatpush1.msra.mxu0 0.0
        %1202 = vmatprep.subr.mxu0 0.0
        %1203 = vmatpush1.msra.mxu0 0.0
        %1204 = vmatprep.subr.mxu0 0.0
        %1205 = vmatpush1.msra.mxu0 0.0
        %1206 = vmatprep.subr.mxu0 0.0
        %1207 = vmatpush1.msra.mxu0 0.0
        %1208 = vmatprep.subr.mxu0 0.0
        %1209 = vmatpush1.msra.mxu0 %v1026
        %1210 = vmatprep.subr.mxu0 0.0
        %1211 = vmatpush1.msra.mxu0 %v1025
        %1212 = vmatprep.subr.mxu0 0.0
        %1213 = vmatpush1.msra.mxu0 %v1024
        %1214 = vmatprep.subr.mxu0 0.0
        %1215 = vmatpush1.msra.mxu0 %v1023
        %1216 = vmatprep.subr.mxu0 0.0
        %1217 = vmatpush2.msra.mxu0 0.0
        %1218 = vmatprep.subr.mxu0 0.0
        %1219 = vmatpush2.msra.mxu0 0.0
        %1220 = vmatprep.subr.mxu0 0.0
        %1221 = vmatpush2.msra.mxu0 0.0
        %1222 = vmatprep.subr.mxu0 0.0
        %1223 = vmatpush2.msra.mxu0 0.0
        %1224 = vmatprep.subr.mxu0 0.0
        %1225 = vmatpush2.msra.mxu0 0.0
        %1226 = vmatprep.subr.mxu0 0.0
        %1227 = vmatpush2.msra.mxu0 0.0
        %1228 = vmatprep.subr.mxu0 0.0
        %1229 = vmatpush2.msra.mxu0 0.0
        %1230 = vmatprep.subr.mxu0 0.0
        %1231 = vmatpush2.msra.mxu0 0.0
        %1232 = vmatprep.subr.mxu0 0.0
        %1233 = vmatpush2.msra.mxu0 0.0
        %1234 = vmatprep.subr.mxu0 0.0
        %1235 = vmatpush2.msra.mxu0 0.0
        %1236 = vmatprep.subr.mxu0 0.0
        %1237 = vmatpush2.msra.mxu0 0.0
        %1238 = vmatprep.subr.mxu0 0.0
        %1239 = vmatpush2.msra.mxu0 0.0
        %1240 = vmatprep.subr.mxu0 0.0
        %1241 = vmatpush2.msra.mxu0 0.0
        %1242 = vmatprep.subr.mxu0 0.0
        %1243 = vmatpush2.msra.mxu0 0.0
        %1244 = vmatprep.subr.mxu0 0.0
        %1245 = vmatpush2.msra.mxu0 0.0
        %1246 = vmatprep.subr.mxu0 0.0
        %1247 = vmatpush2.msra.mxu0 0.0
        %1248 = vmatprep.mubr.f32.mxu0 0.0
        %1249 = vmatmul.mubr.f32.gmra.mxu0 %v1164
        %v1250 = vpop.f32.mrf.mxu0
        %v1251 = vadd.f32 0.0, %v1250
        %v1252 = vpop.f32.mrf.mxu0
        %1253 = vmatprep.mubr.f32.mxu0 0.0
        %1254 = vmatmul.mubr.f32.gmra.mxu0 %v1167
        %v1255 = vpop.f32.mrf.mxu0
        %v1256 = vadd.f32 0.0, %v1255
        %v1257 = vpop.f32.mrf.mxu0
        %1258 = vmatprep.mubr.f32.mxu0 0.0
        %1259 = vmatmul.mubr.f32.gmra.mxu0 %v1170
        %v1260 = vpop.f32.mrf.mxu0
        %v1261 = vadd.f32 0.0, %v1260
        %v1262 = vpop.f32.mrf.mxu0
        %1263 = vmatprep.mubr.f32.mxu0 0.0
        %1264 = vmatmul.mubr.f32.gmra.mxu0 %v1173
        %v1265 = vpop.f32.mrf.mxu0
        %v1266 = vadd.f32 0.0, %v1265
        %v1267 = vpop.f32.mrf.mxu0
        %1268 = vmatprep.mubr.f32.mxu0 0.0
        %1269 = vmatmul.mubr.f32.gmra.mxu0 %v1176
        %v1270 = vpop.f32.mrf.mxu0
        %v1271 = vadd.f32 0.0, %v1270
        %v1272 = vpop.f32.mrf.mxu0
        %1273 = vmatprep.mubr.f32.mxu0 0.0
        %1274 = vmatmul.mubr.f32.gmra.mxu0 %v1179
        %v1275 = vpop.f32.mrf.mxu0
        %v1276 = vadd.f32 0.0, %v1275
        %v1277 = vpop.f32.mrf.mxu0
        %1278 = vmatprep.mubr.f32.mxu0 0.0
        %1279 = vmatmul.mubr.f32.gmra.mxu0 %v1182
        %v1280 = vpop.f32.mrf.mxu0
        %v1281 = vadd.f32 0.0, %v1280
        %v1282 = vpop.f32.mrf.mxu0
        %1283 = vdwg.mxu0
        %v1284 = vmul.f32 %v1251, 0.125
        %v1285 = vmul.f32 %v1256, 0.125
        %v1286 = vmul.f32 %v1261, 0.125
        %v1287 = vmul.f32 %v1266, 0.125
        %v1288 = vmul.f32 %v1271, 0.125
        %v1289 = vmul.f32 %v1276, 0.125
        %v1290 = vmul.f32 %v1281, 0.125
        %v1291 = vadd.f32 %v1284, 1e-06
        %v1292 = vadd.f32 %v1285, 1e-06
        %v1293 = vadd.f32 %v1286, 1e-06
        %v1294 = vadd.f32 %v1287, 1e-06
        %v1295 = vadd.f32 %v1288, 1e-06
        %v1296 = vadd.f32 %v1289, 1e-06
        %v1297 = vadd.f32 %v1290, 1e-06
        %v1298 = vrsqrt.pop %v1291
        %v1299 = vrsqrt.pop %v1292
        %v1300 = vrsqrt.pop %v1293
        %v1301 = vrsqrt.pop %v1294
        %v1302 = vrsqrt.pop %v1295
        %v1303 = vrsqrt.pop %v1296
        %v1304 = vrsqrt.pop %v1297
        %v1305 = vmul.f32 %v1123, %v1298
        %v1306 = vmul.f32 %v1128, %v1299
        %v1307 = vmul.f32 %v1133, %v1300
        %v1308 = vmul.f32 %v1138, %v1301
        %v1309 = vmul.f32 %v1143, %v1302
        %v1310 = vmul.f32 %v1148, %v1303
        %v1311 = vmul.f32 %v1153, %v1304
        %v1312 = vlaneseq
        %v1313 = vshrl.u32 %v1312, 7
        %v1314 = vsub.s32 4, %v1313
        %v1315 = vrot.slane %v904, %v1314
        %v1316 = vmul.f32 %v1305, %v1315
        %v1317 = vmul.f32 %v1306, %v1315
        %v1318 = vmul.f32 %v1307, %v1315
        %v1319 = vmul.f32 %v1308, %v1315
        %v1320 = vmul.f32 %v1309, %v1315
        %v1321 = vmul.f32 %v1310, %v1315
        %v1322 = vmul.f32 %v1311, %v1315
        %v1323 = vld [vmem:[#allocation6] sm:$0xff]
        %v1324 = vld [vmem:[#allocation6 + $0x8] sm:$0xff]
        %v1325 = vld [vmem:[#allocation6 + $0x10] sm:$0xff]
        %v1326 = vld [vmem:[#allocation6 + $0x18] sm:$0xff]
        %v1327 = vld [vmem:[%s2] sm:$0xff]
        %v1328 = vld [vmem:[%s2 + $0x8] sm:$0xff]
        %v1329 = vld [vmem:[%s2 + $0x10] sm:$0xff]
        %v1330 = vld [vmem:[%s2 + $0x18] sm:$0xff]
        %1332 = vset.pattern.permute.xlu0 0
        %1333 = vperm.xlu0 %1332, %v1327
        %v1334 = vpop.permute.xlu0 %1333
        %1337 = vset.pattern.permute.xlu0 0
        %1338 = vperm.xlu0 %1337, %v1328
        %v1339 = vpop.permute.xlu0 %1338
        %1342 = vset.pattern.permute.xlu0 0
        %1343 = vperm.xlu0 %1342, %v1329
        %v1344 = vpop.permute.xlu0 %1343
        %1347 = vset.pattern.permute.xlu0 0
        %1348 = vperm.xlu0 %1347, %v1330
        %v1349 = vpop.permute.xlu0 %1348
        %1351 = vxpose.xlu0.b32.start [1/16] %v1323, 128
        %1352 = vxpose.xlu0.b32.cont [2/16] %v1324, 128
        %1353 = vxpose.xlu0.b32.cont [3/16] %v1325, 128
        %1354 = vxpose.xlu0.b32.cont [4/16] %v1326, 128
        %1355 = vxpose.xlu0.b32.cont [5/16] 0.0, 128
        %1356 = vxpose.xlu0.b32.cont [6/16] 0.0, 128
        %1357 = vxpose.xlu0.b32.cont [7/16] 0.0, 128
        %1358 = vxpose.xlu0.b32.cont [8/16] 0.0, 128
        %1359 = vxpose.xlu0.b32.cont [9/16] 0.0, 128
        %1360 = vxpose.xlu0.b32.cont [10/16] 0.0, 128
        %1361 = vxpose.xlu0.b32.cont [11/16] 0.0, 128
        %1362 = vxpose.xlu0.b32.cont [12/16] 0.0, 128
        %1363 = vxpose.xlu0.b32.cont [13/16] 0.0, 128
        %1364 = vxpose.xlu0.b32.cont [14/16] 0.0, 128
        %1365 = vxpose.xlu0.b32.cont [15/16] 0.0, 128
        %1366 = vxpose.xlu0.b32.end [16/16] 0.0, 128
        %v1367 = vpop.trf.xlu0
        %v1368 = vpop.trf.xlu0
        %v1369 = vpop.trf.xlu0
        %v1370 = vpop.trf.xlu0
        %v1371 = vpop.trf.xlu0
        %v1372 = vpop.trf.xlu0
        %v1373 = vpop.trf.xlu0
        %v1374 = vpop.trf.xlu0
        %v1375 = vpop.trf.xlu0
        %v1376 = vpop.trf.xlu0
        %v1377 = vpop.trf.xlu0
        %v1378 = vpop.trf.xlu0
        %v1379 = vpop.trf.xlu0
        %v1380 = vpop.trf.xlu0
        %v1381 = vpop.trf.xlu0
        %v1382 = vpop.trf.xlu0
        %v1384 = vsel %vm907, %v1367, 0
        %v1387 = vsel %vm907, %v1368, 0
        %v1390 = vsel %vm907, %v1369, 0
        %v1393 = vsel %vm907, %v1370, 0
        %1395 = vmatprep.subr.mxu0 0.0
        %1396 = vmatpush1.xpose.msra.mxu0 0.0
        %1397 = vmatprep.subr.mxu0 0.0
        %1398 = vmatpush1.xpose.msra.mxu0 0.0
        %1399 = vmatprep.subr.mxu0 0.0
        %1400 = vmatpush1.xpose.msra.mxu0 0.0
        %1401 = vmatprep.subr.mxu0 0.0
        %1402 = vmatpush1.xpose.msra.mxu0 0.0
        %1403 = vmatprep.subr.mxu0 0.0
        %1404 = vmatpush1.xpose.msra.mxu0 0.0
        %1405 = vmatprep.subr.mxu0 0.0
        %1406 = vmatpush1.xpose.msra.mxu0 0.0
        %1407 = vmatprep.subr.mxu0 0.0
        %1408 = vmatpush1.xpose.msra.mxu0 0.0
        %1409 = vmatprep.subr.mxu0 0.0
        %1410 = vmatpush1.xpose.msra.mxu0 0.0
        %1411 = vmatprep.subr.mxu0 0.0
        %1412 = vmatpush1.xpose.msra.mxu0 0.0
        %1413 = vmatprep.subr.mxu0 0.0
        %1414 = vmatpush1.xpose.msra.mxu0 %v1054
        %1415 = vmatprep.subr.mxu0 0.0
        %1416 = vmatpush1.xpose.msra.mxu0 %v1051
        %1417 = vmatprep.subr.mxu0 0.0
        %1418 = vmatpush1.xpose.msra.mxu0 %v1048
        %1419 = vmatprep.subr.mxu0 0.0
        %1420 = vmatpush1.xpose.msra.mxu0 %v1045
        %1421 = vmatprep.subr.mxu0 0.0
        %1422 = vmatpush1.xpose.msra.mxu0 %v1042
        %1423 = vmatprep.subr.mxu0 0.0
        %1424 = vmatpush1.xpose.msra.mxu0 %v1039
        %1425 = vmatprep.subr.mxu0 0.0
        %1426 = vmatpush1.xpose.msra.mxu0 %v1036
        %1427 = vmatprep.subr.mxu0 0.0
        %1428 = vmatpush2.xpose.msra.mxu0 0.0
        %1429 = vmatprep.subr.mxu0 0.0
        %1430 = vmatpush2.xpose.msra.mxu0 0.0
        %1431 = vmatprep.subr.mxu0 0.0
        %1432 = vmatpush2.xpose.msra.mxu0 0.0
        %1433 = vmatprep.subr.mxu0 0.0
        %1434 = vmatpush2.xpose.msra.mxu0 0.0
        %1435 = vmatprep.subr.mxu0 0.0
        %1436 = vmatpush2.xpose.msra.mxu0 0.0
        %1437 = vmatprep.subr.mxu0 0.0
        %1438 = vmatpush2.xpose.msra.mxu0 0.0
        %1439 = vmatprep.subr.mxu0 0.0
        %1440 = vmatpush2.xpose.msra.mxu0 0.0
        %1441 = vmatprep.subr.mxu0 0.0
        %1442 = vmatpush2.xpose.msra.mxu0 0.0
        %1443 = vmatprep.subr.mxu0 0.0
        %1444 = vmatpush2.xpose.msra.mxu0 0.0
        %1445 = vmatprep.subr.mxu0 0.0
        %1446 = vmatpush2.xpose.msra.mxu0 0.0
        %1447 = vmatprep.subr.mxu0 0.0
        %1448 = vmatpush2.xpose.msra.mxu0 0.0
        %1449 = vmatprep.subr.mxu0 0.0
        %1450 = vmatpush2.xpose.msra.mxu0 0.0
        %1451 = vmatprep.subr.mxu0 0.0
        %1452 = vmatpush2.xpose.msra.mxu0 0.0
        %1453 = vmatprep.subr.mxu0 0.0
        %1454 = vmatpush2.xpose.msra.mxu0 0.0
        %1455 = vmatprep.subr.mxu0 0.0
        %1456 = vmatpush2.xpose.msra.mxu0 0.0
        %1457 = vmatprep.subr.mxu0 0.0
        %1458 = vmatpush2.xpose.msra.mxu0 0.0
        %1459 = vmatprep.mubr.f32.mxu0 0.0
        %1460 = vmatmul.mubr.f32.gmra.mxu0 %v1384
        %v1461 = vpop.f32.mrf.mxu0
        %v1462 = vadd.f32 %v1334, %v1461
        %v1463 = vpop.f32.mrf.mxu0
        %1464 = vmatprep.mubr.f32.mxu0 0.0
        %1465 = vmatmul.mubr.f32.gmra.mxu0 %v1387
        %v1466 = vpop.f32.mrf.mxu0
        %v1467 = vadd.f32 %v1339, %v1466
        %v1468 = vpop.f32.mrf.mxu0
        %1469 = vmatprep.mubr.f32.mxu0 0.0
        %1470 = vmatmul.mubr.f32.gmra.mxu0 %v1390
        %v1471 = vpop.f32.mrf.mxu0
        %v1472 = vadd.f32 %v1344, %v1471
        %v1473 = vpop.f32.mrf.mxu0
        %1474 = vmatprep.mubr.f32.mxu0 0.0
        %1475 = vmatmul.mubr.f32.gmra.mxu0 %v1393
        %v1476 = vpop.f32.mrf.mxu0
        %v1477 = vadd.f32 %v1349, %v1476
        %v1478 = vpop.f32.mrf.mxu0
        %1479 = vdwg.mxu0
        %v1480 = vmul.f32 %v1462, %v1462
        %v1481 = vmul.f32 %v1467, %v1467
        %v1482 = vmul.f32 %v1472, %v1472
        %v1483 = vmul.f32 %v1477, %v1477
        %v1485 = vsel %vm907, %v1023, 0
        %v1488 = vsel %vm907, %v1024, 0
        %v1491 = vsel %vm907, %v1025, 0
        %v1494 = vsel %vm907, %v1026, 0
        %1496 = vmatprep.subr.mxu0 0.0
        %1497 = vmatpush1.msra.mxu0 0.0
        %1498 = vmatprep.subr.mxu0 0.0
        %1499 = vmatpush1.msra.mxu0 0.0
        %1500 = vmatprep.subr.mxu0 0.0
        %1501 = vmatpush1.msra.mxu0 0.0
        %1502 = vmatprep.subr.mxu0 0.0
        %1503 = vmatpush1.msra.mxu0 0.0
        %1504 = vmatprep.subr.mxu0 0.0
        %1505 = vmatpush1.msra.mxu0 0.0
        %1506 = vmatprep.subr.mxu0 0.0
        %1507 = vmatpush1.msra.mxu0 0.0
        %1508 = vmatprep.subr.mxu0 0.0
        %1509 = vmatpush1.msra.mxu0 0.0
        %1510 = vmatprep.subr.mxu0 0.0
        %1511 = vmatpush1.msra.mxu0 0.0
        %1512 = vmatprep.subr.mxu0 0.0
        %1513 = vmatpush1.msra.mxu0 0.0
        %1514 = vmatprep.subr.mxu0 0.0
        %1515 = vmatpush1.msra.mxu0 0.0
        %1516 = vmatprep.subr.mxu0 0.0
        %1517 = vmatpush1.msra.mxu0 0.0
        %1518 = vmatprep.subr.mxu0 0.0
        %1519 = vmatpush1.msra.mxu0 0.0
        %1520 = vmatprep.subr.mxu0 0.0
        %1521 = vmatpush1.msra.mxu0 %v1483
        %1522 = vmatprep.subr.mxu0 0.0
        %1523 = vmatpush1.msra.mxu0 %v1482
        %1524 = vmatprep.subr.mxu0 0.0
        %1525 = vmatpush1.msra.mxu0 %v1481
        %1526 = vmatprep.subr.mxu0 0.0
        %1527 = vmatpush1.msra.mxu0 %v1480
        %1528 = vmatprep.subr.mxu0 0.0
        %1529 = vmatpush2.msra.mxu0 0.0
        %1530 = vmatprep.subr.mxu0 0.0
        %1531 = vmatpush2.msra.mxu0 0.0
        %1532 = vmatprep.subr.mxu0 0.0
        %1533 = vmatpush2.msra.mxu0 0.0
        %1534 = vmatprep.subr.mxu0 0.0
        %1535 = vmatpush2.msra.mxu0 0.0
        %1536 = vmatprep.subr.mxu0 0.0
        %1537 = vmatpush2.msra.mxu0 0.0
        %1538 = vmatprep.subr.mxu0 0.0
        %1539 = vmatpush2.msra.mxu0 0.0
        %1540 = vmatprep.subr.mxu0 0.0
        %1541 = vmatpush2.msra.mxu0 0.0
        %1542 = vmatprep.subr.mxu0 0.0
        %1543 = vmatpush2.msra.mxu0 0.0
        %1544 = vmatprep.subr.mxu0 0.0
        %1545 = vmatpush2.msra.mxu0 0.0
        %1546 = vmatprep.subr.mxu0 0.0
        %1547 = vmatpush2.msra.mxu0 0.0
        %1548 = vmatprep.subr.mxu0 0.0
        %1549 = vmatpush2.msra.mxu0 0.0
        %1550 = vmatprep.subr.mxu0 0.0
        %1551 = vmatpush2.msra.mxu0 0.0
        %1552 = vmatprep.subr.mxu0 0.0
        %1553 = vmatpush2.msra.mxu0 0.0
        %1554 = vmatprep.subr.mxu0 0.0
        %1555 = vmatpush2.msra.mxu0 0.0
        %1556 = vmatprep.subr.mxu0 0.0
        %1557 = vmatpush2.msra.mxu0 0.0
        %1558 = vmatprep.subr.mxu0 0.0
        %1559 = vmatpush2.msra.mxu0 0.0
        %1560 = vmatprep.mubr.f32.mxu0 0.0
        %1561 = vmatmul.mubr.f32.gmra.mxu0 %v1485
        %v1562 = vpop.f32.mrf.mxu0
        %v1563 = vadd.f32 0.0, %v1562
        %v1564 = vpop.f32.mrf.mxu0
        %1565 = vmatprep.mubr.f32.mxu0 0.0
        %1566 = vmatmul.mubr.f32.gmra.mxu0 %v1488
        %v1567 = vpop.f32.mrf.mxu0
        %v1568 = vadd.f32 0.0, %v1567
        %v1569 = vpop.f32.mrf.mxu0
        %1570 = vmatprep.mubr.f32.mxu0 0.0
        %1571 = vmatmul.mubr.f32.gmra.mxu0 %v1491
        %v1572 = vpop.f32.mrf.mxu0
        %v1573 = vadd.f32 0.0, %v1572
        %v1574 = vpop.f32.mrf.mxu0
        %1575 = vmatprep.mubr.f32.mxu0 0.0
        %1576 = vmatmul.mubr.f32.gmra.mxu0 %v1494
        %v1577 = vpop.f32.mrf.mxu0
        %v1578 = vadd.f32 0.0, %v1577
        %v1579 = vpop.f32.mrf.mxu0
        %1580 = vdwg.mxu0
        %v1581 = vmul.f32 %v1563, 0.125
        %v1582 = vmul.f32 %v1568, 0.125
        %v1583 = vmul.f32 %v1573, 0.125
        %v1584 = vmul.f32 %v1578, 0.125
        %v1585 = vadd.f32 %v1581, 1e-06
        %v1586 = vadd.f32 %v1582, 1e-06
        %v1587 = vadd.f32 %v1583, 1e-06
        %v1588 = vadd.f32 %v1584, 1e-06
        %v1589 = vrsqrt.pop %v1585
        %v1590 = vrsqrt.pop %v1586
        %v1591 = vrsqrt.pop %v1587
        %v1592 = vrsqrt.pop %v1588
        %v1593 = vmul.f32 %v1462, %v1589
        %v1594 = vmul.f32 %v1467, %v1590
        %v1595 = vmul.f32 %v1472, %v1591
        %v1596 = vmul.f32 %v1477, %v1592
        %1597 = vset.pattern.permute.xlu0 1
        %1598 = vperm.xlu0 %1597, %v1327
        %v1599 = vpop.permute.xlu0 %1598
        %1601 = vset.pattern.permute.xlu0 1
        %1602 = vperm.xlu0 %1601, %v1328
        %v1603 = vpop.permute.xlu0 %1602
        %1605 = vset.pattern.permute.xlu0 1
        %1606 = vperm.xlu0 %1605, %v1329
        %v1607 = vpop.permute.xlu0 %1606
        %1609 = vset.pattern.permute.xlu0 1
        %1610 = vperm.xlu0 %1609, %v1330
        %v1611 = vpop.permute.xlu0 %1610
        %v1613 = vmul.f32 %v1593, %v1599
        %v1614 = vmul.f32 %v1594, %v1603
        %v1615 = vmul.f32 %v1595, %v1607
        %v1616 = vmul.f32 %v1596, %v1611
        %v1617 = vld [vmem:[#allocation7] sm:$0xff]
        %v1618 = vld [vmem:[#allocation7 + $0x8] sm:$0xff]
        %v1619 = vld [vmem:[#allocation7 + $0x10] sm:$0xff]
        %v1620 = vld [vmem:[#allocation7 + $0x18] sm:$0xff]
        %v1621 = vlaneseq
        %v1622 = vshrl.u32 %v1621, 7
        %v1623 = vsub.s32 3, %v1622
        %v1624 = vrot.slane %v904, %v1623
        %1625 = vmatprep.subr.mxu0 0.0
        %1626 = vmatpush1.msra.mxu0 0.0
        %1627 = vmatprep.subr.mxu0 0.0
        %1628 = vmatpush1.msra.mxu0 0.0
        %1629 = vmatprep.subr.mxu0 0.0
        %1630 = vmatpush1.msra.mxu0 0.0
        %1631 = vmatprep.subr.mxu0 0.0
        %1632 = vmatpush1.msra.mxu0 0.0
        %1633 = vmatprep.subr.mxu0 0.0
        %1634 = vmatpush1.msra.mxu0 0.0
        %1635 = vmatprep.subr.mxu0 0.0
        %1636 = vmatpush1.msra.mxu0 0.0
        %1637 = vmatprep.subr.mxu0 0.0
        %1638 = vmatpush1.msra.mxu0 0.0
        %1639 = vmatprep.subr.mxu0 0.0
        %1640 = vmatpush1.msra.mxu0 0.0
        %1641 = vmatprep.subr.mxu0 0.0
        %1642 = vmatpush1.msra.mxu0 0.0
        %1643 = vmatprep.subr.mxu0 0.0
        %1644 = vmatpush1.msra.mxu0 0.0
        %1645 = vmatprep.subr.mxu0 0.0
        %1646 = vmatpush1.msra.mxu0 0.0
        %1647 = vmatprep.subr.mxu0 0.0
        %1648 = vmatpush1.msra.mxu0 0.0
        %1649 = vmatprep.subr.mxu0 0.0
        %1650 = vmatpush1.msra.mxu0 %v1620
        %1651 = vmatprep.subr.mxu0 0.0
        %1652 = vmatpush1.msra.mxu0 %v1619
        %1653 = vmatprep.subr.mxu0 0.0
        %1654 = vmatpush1.msra.mxu0 %v1618
        %1655 = vmatprep.subr.mxu0 0.0
        %1656 = vmatpush1.msra.mxu0 %v1617
        %1657 = vmatprep.subr.mxu0 0.0
        %1658 = vmatpush2.msra.mxu0 0.0
        %1659 = vmatprep.subr.mxu0 0.0
        %1660 = vmatpush2.msra.mxu0 0.0
        %1661 = vmatprep.subr.mxu0 0.0
        %1662 = vmatpush2.msra.mxu0 0.0
        %1663 = vmatprep.subr.mxu0 0.0
        %1664 = vmatpush2.msra.mxu0 0.0
        %1665 = vmatprep.subr.mxu0 0.0
        %1666 = vmatpush2.msra.mxu0 0.0
        %1667 = vmatprep.subr.mxu0 0.0
        %1668 = vmatpush2.msra.mxu0 0.0
        %1669 = vmatprep.subr.mxu0 0.0
        %1670 = vmatpush2.msra.mxu0 0.0
        %1671 = vmatprep.subr.mxu0 0.0
        %1672 = vmatpush2.msra.mxu0 0.0
        %1673 = vmatprep.subr.mxu0 0.0
        %1674 = vmatpush2.msra.mxu0 0.0
        %1675 = vmatprep.subr.mxu0 0.0
        %1676 = vmatpush2.msra.mxu0 0.0
        %1677 = vmatprep.subr.mxu0 0.0
        %1678 = vmatpush2.msra.mxu0 0.0
        %1679 = vmatprep.subr.mxu0 0.0
        %1680 = vmatpush2.msra.mxu0 0.0
        %1681 = vmatprep.subr.mxu0 0.0
        %1682 = vmatpush2.msra.mxu0 0.0
        %1683 = vmatprep.subr.mxu0 0.0
        %1684 = vmatpush2.msra.mxu0 0.0
        %1685 = vmatprep.subr.mxu0 0.0
        %1686 = vmatpush2.msra.mxu0 0.0
        %1687 = vmatprep.subr.mxu0 0.0
        %1688 = vmatpush2.msra.mxu0 0.0
        %1689 = vmatprep.mubr.f32.mxu0 0.0
        %1690 = vmatmul.mubr.f32.gmra.mxu0 %v1036
        %v1691 = vpop.f32.mrf.mxu0
        %v1692 = vadd.f32 %v1624, %v1691
        %v1693 = vpop.f32.mrf.mxu0
        %1694 = vmatprep.mubr.f32.mxu0 0.0
        %1695 = vmatmul.mubr.f32.gmra.mxu0 %v1039
        %v1696 = vpop.f32.mrf.mxu0
        %v1697 = vadd.f32 %v1624, %v1696
        %v1698 = vpop.f32.mrf.mxu0
        %1699 = vmatprep.mubr.f32.mxu0 0.0
        %1700 = vmatmul.mubr.f32.gmra.mxu0 %v1042
        %v1701 = vpop.f32.mrf.mxu0
        %v1702 = vadd.f32 %v1624, %v1701
        %v1703 = vpop.f32.mrf.mxu0
        %1704 = vmatprep.mubr.f32.mxu0 0.0
        %1705 = vmatmul.mubr.f32.gmra.mxu0 %v1045
        %v1706 = vpop.f32.mrf.mxu0
        %v1707 = vadd.f32 %v1624, %v1706
        %v1708 = vpop.f32.mrf.mxu0
        %1709 = vmatprep.mubr.f32.mxu0 0.0
        %1710 = vmatmul.mubr.f32.gmra.mxu0 %v1048
        %v1711 = vpop.f32.mrf.mxu0
        %v1712 = vadd.f32 %v1624, %v1711
        %v1713 = vpop.f32.mrf.mxu0
        %1714 = vmatprep.mubr.f32.mxu0 0.0
        %1715 = vmatmul.mubr.f32.gmra.mxu0 %v1051
        %v1716 = vpop.f32.mrf.mxu0
        %v1717 = vadd.f32 %v1624, %v1716
        %v1718 = vpop.f32.mrf.mxu0
        %1719 = vmatprep.mubr.f32.mxu0 0.0
        %1720 = vmatmul.mubr.f32.gmra.mxu0 %v1054
        %v1721 = vpop.f32.mrf.mxu0
        %v1722 = vadd.f32 %v1624, %v1721
        %v1723 = vpop.f32.mrf.mxu0
        %1724 = vdwg.mxu0
        %v1725 = vld [vmem:[#allocation9] sm:$0xff]
        %v1726 = vld [vmem:[#allocation9 + $0x8] sm:$0xff]
        %v1727 = vld [vmem:[#allocation9 + $0x10] sm:$0xff]
        %v1728 = vld [vmem:[#allocation9 + $0x18] sm:$0xff]
        %1729 = vmatprep.subr.mxu0 0.0
        %1730 = vmatpush1.msra.mxu0 0.0
        %1731 = vmatprep.subr.mxu0 0.0
        %1732 = vmatpush1.msra.mxu0 0.0
        %1733 = vmatprep.subr.mxu0 0.0
        %1734 = vmatpush1.msra.mxu0 0.0
        %1735 = vmatprep.subr.mxu0 0.0
        %1736 = vmatpush1.msra.mxu0 0.0
        %1737 = vmatprep.subr.mxu0 0.0
        %1738 = vmatpush1.msra.mxu0 0.0
        %1739 = vmatprep.subr.mxu0 0.0
        %1740 = vmatpush1.msra.mxu0 0.0
        %1741 = vmatprep.subr.mxu0 0.0
        %1742 = vmatpush1.msra.mxu0 0.0
        %1743 = vmatprep.subr.mxu0 0.0
        %1744 = vmatpush1.msra.mxu0 0.0
        %1745 = vmatprep.subr.mxu0 0.0
        %1746 = vmatpush1.msra.mxu0 0.0
        %1747 = vmatprep.subr.mxu0 0.0
        %1748 = vmatpush1.msra.mxu0 0.0
        %1749 = vmatprep.subr.mxu0 0.0
        %1750 = vmatpush1.msra.mxu0 0.0
        %1751 = vmatprep.subr.mxu0 0.0
        %1752 = vmatpush1.msra.mxu0 0.0
        %1753 = vmatprep.subr.mxu0 0.0
        %1754 = vmatpush1.msra.mxu0 %v1728
        %1755 = vmatprep.subr.mxu0 0.0
        %1756 = vmatpush1.msra.mxu0 %v1727
        %1757 = vmatprep.subr.mxu0 0.0
        %1758 = vmatpush1.msra.mxu0 %v1726
        %1759 = vmatprep.subr.mxu0 0.0
        %1760 = vmatpush1.msra.mxu0 %v1725
        %1761 = vmatprep.subr.mxu0 0.0
        %1762 = vmatpush2.msra.mxu0 0.0
        %1763 = vmatprep.subr.mxu0 0.0
        %1764 = vmatpush2.msra.mxu0 0.0
        %1765 = vmatprep.subr.mxu0 0.0
        %1766 = vmatpush2.msra.mxu0 0.0
        %1767 = vmatprep.subr.mxu0 0.0
        %1768 = vmatpush2.msra.mxu0 0.0
        %1769 = vmatprep.subr.mxu0 0.0
        %1770 = vmatpush2.msra.mxu0 0.0
        %1771 = vmatprep.subr.mxu0 0.0
        %1772 = vmatpush2.msra.mxu0 0.0
        %1773 = vmatprep.subr.mxu0 0.0
        %1774 = vmatpush2.msra.mxu0 0.0
        %1775 = vmatprep.subr.mxu0 0.0
        %1776 = vmatpush2.msra.mxu0 0.0
        %1777 = vmatprep.subr.mxu0 0.0
        %1778 = vmatpush2.msra.mxu0 0.0
        %1779 = vmatprep.subr.mxu0 0.0
        %1780 = vmatpush2.msra.mxu0 0.0
        %1781 = vmatprep.subr.mxu0 0.0
        %1782 = vmatpush2.msra.mxu0 0.0
        %1783 = vmatprep.subr.mxu0 0.0
        %1784 = vmatpush2.msra.mxu0 0.0
        %1785 = vmatprep.subr.mxu0 0.0
        %1786 = vmatpush2.msra.mxu0 0.0
        %1787 = vmatprep.subr.mxu0 0.0
        %1788 = vmatpush2.msra.mxu0 0.0
        %1789 = vmatprep.subr.mxu0 0.0
        %1790 = vmatpush2.msra.mxu0 0.0
        %1791 = vmatprep.subr.mxu0 0.0
        %1792 = vmatpush2.msra.mxu0 0.0
        %1793 = vmatprep.mubr.f32.mxu0 0.0
        %1794 = vmatmul.mubr.f32.gmra.mxu0 %v1036
        %v1795 = vpop.f32.mrf.mxu0
        %v1796 = vadd.f32 0.0, %v1795
        %v1797 = vpop.f32.mrf.mxu0
        %1798 = vmatprep.mubr.f32.mxu0 0.0
        %1799 = vmatmul.mubr.f32.gmra.mxu0 %v1039
        %v1800 = vpop.f32.mrf.mxu0
        %v1801 = vadd.f32 0.0, %v1800
        %v1802 = vpop.f32.mrf.mxu0
        %1803 = vmatprep.mubr.f32.mxu0 0.0
        %1804 = vmatmul.mubr.f32.gmra.mxu0 %v1042
        %v1805 = vpop.f32.mrf.mxu0
        %v1806 = vadd.f32 0.0, %v1805
        %v1807 = vpop.f32.mrf.mxu0
        %1808 = vmatprep.mubr.f32.mxu0 0.0
        %1809 = vmatmul.mubr.f32.gmra.mxu0 %v1045
        %v1810 = vpop.f32.mrf.mxu0
        %v1811 = vadd.f32 0.0, %v1810
        %v1812 = vpop.f32.mrf.mxu0
        %1813 = vmatprep.mubr.f32.mxu0 0.0
        %1814 = vmatmul.mubr.f32.gmra.mxu0 %v1048
        %v1815 = vpop.f32.mrf.mxu0
        %v1816 = vadd.f32 0.0, %v1815
        %v1817 = vpop.f32.mrf.mxu0
        %1818 = vmatprep.mubr.f32.mxu0 0.0
        %1819 = vmatmul.mubr.f32.gmra.mxu0 %v1051
        %v1820 = vpop.f32.mrf.mxu0
        %v1821 = vadd.f32 0.0, %v1820
        %v1822 = vpop.f32.mrf.mxu0
        %1823 = vmatprep.mubr.f32.mxu0 0.0
        %1824 = vmatmul.mubr.f32.gmra.mxu0 %v1054
        %v1825 = vpop.f32.mrf.mxu0
        %v1826 = vadd.f32 0.0, %v1825
        %v1827 = vpop.f32.mrf.mxu0
        %1828 = vdwg.mxu0
        %v1829 = vmul.f32 %v1796, 0.70710677
        %v1830 = vmul.f32 %v1801, 0.70710677
        %v1831 = vmul.f32 %v1806, 0.70710677
        %v1832 = vmul.f32 %v1811, 0.70710677
        %v1833 = vmul.f32 %v1816, 0.70710677
        %v1834 = vmul.f32 %v1821, 0.70710677
        %v1835 = vmul.f32 %v1826, 0.70710677
        %v1836 = vand.u32 2147483647, %v1829
        %v1837 = vand.u32 2147483647, %v1830
        %v1838 = vand.u32 2147483647, %v1831
        %v1839 = vand.u32 2147483647, %v1832
        %v1840 = vand.u32 2147483647, %v1833
        %v1841 = vand.u32 2147483647, %v1834
        %v1842 = vand.u32 2147483647, %v1835
        %v1843 = vmul.f32 %v1836, 0.3275911
        %v1844 = vmul.f32 %v1837, 0.3275911
        %v1845 = vmul.f32 %v1838, 0.3275911
        %v1846 = vmul.f32 %v1839, 0.3275911
        %v1847 = vmul.f32 %v1840, 0.3275911
        %v1848 = vmul.f32 %v1841, 0.3275911
        %v1849 = vmul.f32 %v1842, 0.3275911
        %v1850 = vadd.f32 %v1843, 1.0
        %v1851 = vadd.f32 %v1844, 1.0
        %v1852 = vadd.f32 %v1845, 1.0
        %v1853 = vadd.f32 %v1846, 1.0
        %v1854 = vadd.f32 %v1847, 1.0
        %v1855 = vadd.f32 %v1848, 1.0
        %v1856 = vadd.f32 %v1849, 1.0
        %v1857 = vrcp.pop %v1850
        %v1858 = vmul.f32 1.0, %v1857
        %v1859 = vrcp.pop %v1851
        %v1860 = vmul.f32 1.0, %v1859
        %v1861 = vrcp.pop %v1852
        %v1862 = vmul.f32 1.0, %v1861
        %v1863 = vrcp.pop %v1853
        %v1864 = vmul.f32 1.0, %v1863
        %v1865 = vrcp.pop %v1854
        %v1866 = vmul.f32 1.0, %v1865
        %v1867 = vrcp.pop %v1855
        %v1868 = vmul.f32 1.0, %v1867
        %v1869 = vrcp.pop %v1856
        %v1870 = vmul.f32 1.0, %v1869
        %v1871 = vmul.f32 %v1858, 1.0614054
        %v1872 = vmul.f32 %v1860, 1.0614054
        %v1873 = vmul.f32 %v1862, 1.0614054
        %v1874 = vmul.f32 %v1864, 1.0614054
        %v1875 = vmul.f32 %v1866, 1.0614054
        %v1876 = vmul.f32 %v1868, 1.0614054
        %v1877 = vmul.f32 %v1870, 1.0614054
        %v1878 = vsub.f32 %v1871, 1.4531521
        %v1879 = vsub.f32 %v1872, 1.4531521
        %v1880 = vsub.f32 %v1873, 1.4531521
        %v1881 = vsub.f32 %v1874, 1.4531521
        %v1882 = vsub.f32 %v1875, 1.4531521
        %v1883 = vsub.f32 %v1876, 1.4531521
        %v1884 = vsub.f32 %v1877, 1.4531521
        %v1885 = vmul.f32 %v1878, %v1858
        %v1886 = vmul.f32 %v1879, %v1860
        %v1887 = vmul.f32 %v1880, %v1862
        %v1888 = vmul.f32 %v1881, %v1864
        %v1889 = vmul.f32 %v1882, %v1866
        %v1890 = vmul.f32 %v1883, %v1868
        %v1891 = vmul.f32 %v1884, %v1870
        %v1892 = vadd.f32 %v1885, 1.4214138
        %v1893 = vadd.f32 %v1886, 1.4214138
        %v1894 = vadd.f32 %v1887, 1.4214138
        %v1895 = vadd.f32 %v1888, 1.4214138
        %v1896 = vadd.f32 %v1889, 1.4214138
        %v1897 = vadd.f32 %v1890, 1.4214138
        %v1898 = vadd.f32 %v1891, 1.4214138
        %v1899 = vmul.f32 %v1892, %v1858
        %v1900 = vmul.f32 %v1893, %v1860
        %v1901 = vmul.f32 %v1894, %v1862
        %v1902 = vmul.f32 %v1895, %v1864
        %v1903 = vmul.f32 %v1896, %v1866
        %v1904 = vmul.f32 %v1897, %v1868
        %v1905 = vmul.f32 %v1898, %v1870
        %v1906 = vsub.f32 %v1899, 0.28449672
        %v1907 = vsub.f32 %v1900, 0.28449672
        %v1908 = vsub.f32 %v1901, 0.28449672
        %v1909 = vsub.f32 %v1902, 0.28449672
        %v1910 = vsub.f32 %v1903, 0.28449672
        %v1911 = vsub.f32 %v1904, 0.28449672
        %v1912 = vsub.f32 %v1905, 0.28449672
        %v1913 = vmul.f32 %v1906, %v1858
        %v1914 = vmul.f32 %v1907, %v1860
        %v1915 = vmul.f32 %v1908, %v1862
        %v1916 = vmul.f32 %v1909, %v1864
        %v1917 = vmul.f32 %v1910, %v1866
        %v1918 = vmul.f32 %v1911, %v1868
        %v1919 = vmul.f32 %v1912, %v1870
        %v1920 = vadd.f32 %v1913, 0.2548296
        %v1921 = vadd.f32 %v1914, 0.2548296
        %v1922 = vadd.f32 %v1915, 0.2548296
        %v1923 = vadd.f32 %v1916, 0.2548296
        %v1924 = vadd.f32 %v1917, 0.2548296
        %v1925 = vadd.f32 %v1918, 0.2548296
        %v1926 = vadd.f32 %v1919, 0.2548296
        %v1927 = vmul.f32 %v1920, %v1858
        %v1928 = vmul.f32 %v1921, %v1860
        %v1929 = vmul.f32 %v1922, %v1862
        %v1930 = vmul.f32 %v1923, %v1864
        %v1931 = vmul.f32 %v1924, %v1866
        %v1932 = vmul.f32 %v1925, %v1868
        %v1933 = vmul.f32 %v1926, %v1870
        %v1934 = vsub.f32 0.0, %v1836
        %v1935 = vsub.f32 0.0, %v1837
        %v1936 = vsub.f32 0.0, %v1838
        %v1937 = vsub.f32 0.0, %v1839
        %v1938 = vsub.f32 0.0, %v1840
        %v1939 = vsub.f32 0.0, %v1841
        %v1940 = vsub.f32 0.0, %v1842
        %v1941 = vmul.f32 %v1934, %v1836
        %v1942 = vmul.f32 %v1935, %v1837
        %v1943 = vmul.f32 %v1936, %v1838
        %v1944 = vmul.f32 %v1937, %v1839
        %v1945 = vmul.f32 %v1938, %v1840
        %v1946 = vmul.f32 %v1939, %v1841
        %v1947 = vmul.f32 %v1940, %v1842
        %v1948 = vmul.f32 %v1941, 1.442695
        %v1949 = vpow.pop %v1948
        %v1950 = vmul.f32 %v1942, 1.442695
        %v1951 = vpow.pop %v1950
        %v1952 = vmul.f32 %v1943, 1.442695
        %v1953 = vpow.pop %v1952
        %v1954 = vmul.f32 %v1944, 1.442695
        %v1955 = vpow.pop %v1954
        %v1956 = vmul.f32 %v1945, 1.442695
        %v1957 = vpow.pop %v1956
        %v1958 = vmul.f32 %v1946, 1.442695
        %v1959 = vpow.pop %v1958
        %v1960 = vmul.f32 %v1947, 1.442695
        %v1961 = vpow.pop %v1960
        %v1962 = vmul.f32 %v1927, %v1949
        %v1963 = vmul.f32 %v1928, %v1951
        %v1964 = vmul.f32 %v1929, %v1953
        %v1965 = vmul.f32 %v1930, %v1955
        %v1966 = vmul.f32 %v1931, %v1957
        %v1967 = vmul.f32 %v1932, %v1959
        %v1968 = vmul.f32 %v1933, %v1961
        %v1969 = vsub.f32 1.0, %v1962
        %v1970 = vsub.f32 1.0, %v1963
        %v1971 = vsub.f32 1.0, %v1964
        %v1972 = vsub.f32 1.0, %v1965
        %v1973 = vsub.f32 1.0, %v1966
        %v1974 = vsub.f32 1.0, %v1967
        %v1975 = vsub.f32 1.0, %v1968
        %vm1976 = vcmp.ge.f32.partialorder %v1829, 0.0
        %vm1977 = vcmp.ge.f32.partialorder %v1830, 0.0
        %vm1978 = vcmp.ge.f32.partialorder %v1831, 0.0
        %vm1979 = vcmp.ge.f32.partialorder %v1832, 0.0
        %vm1980 = vcmp.ge.f32.partialorder %v1833, 0.0
        %vm1981 = vcmp.ge.f32.partialorder %v1834, 0.0
        %vm1982 = vcmp.ge.f32.partialorder %v1835, 0.0
        %v1983 = vsub.f32 0.0, %v1969
        %v1984 = vsub.f32 0.0, %v1970
        %v1985 = vsub.f32 0.0, %v1971
        %v1986 = vsub.f32 0.0, %v1972
        %v1987 = vsub.f32 0.0, %v1973
        %v1988 = vsub.f32 0.0, %v1974
        %v1989 = vsub.f32 0.0, %v1975
        %v1990 = vsel %vm1976, %v1969, %v1983
        %v1991 = vsel %vm1977, %v1970, %v1984
        %v1992 = vsel %vm1978, %v1971, %v1985
        %v1993 = vsel %vm1979, %v1972, %v1986
        %v1994 = vsel %vm1980, %v1973, %v1987
        %v1995 = vsel %vm1981, %v1974, %v1988
        %v1996 = vsel %vm1982, %v1975, %v1989
        %v1997 = vmul.f32 %v1796, 0.5
        %v1998 = vmul.f32 %v1801, 0.5
        %v1999 = vmul.f32 %v1806, 0.5
        %v2000 = vmul.f32 %v1811, 0.5
        %v2001 = vmul.f32 %v1816, 0.5
        %v2002 = vmul.f32 %v1821, 0.5
        %v2003 = vmul.f32 %v1826, 0.5
        %v2004 = vadd.f32 %v1990, 1.0
        %v2005 = vadd.f32 %v1991, 1.0
        %v2006 = vadd.f32 %v1992, 1.0
        %v2007 = vadd.f32 %v1993, 1.0
        %v2008 = vadd.f32 %v1994, 1.0
        %v2009 = vadd.f32 %v1995, 1.0
        %v2010 = vadd.f32 %v1996, 1.0
        %v2011 = vmul.f32 %v1997, %v2004
        %v2012 = vmul.f32 %v1998, %v2005
        %v2013 = vmul.f32 %v1999, %v2006
        %v2014 = vmul.f32 %v2000, %v2007
        %v2015 = vmul.f32 %v2001, %v2008
        %v2016 = vmul.f32 %v2002, %v2009
        %v2017 = vmul.f32 %v2003, %v2010
        %v2018 = vld [vmem:[%s7] sm:$0xff]
        %v2019 = vld [vmem:[%s7 + $0x8] sm:$0xff]
        %v2020 = vld [vmem:[%s7 + $0x10] sm:$0xff]
        %v2021 = vld [vmem:[%s7 + $0x18] sm:$0xff]
        %v2022 = vld [vmem:[%s7 + $0x20] sm:$0xff]
        %v2023 = vld [vmem:[%s7 + $0x28] sm:$0xff]
        %v2024 = vld [vmem:[%s7 + $0x30] sm:$0xff]
        %v2025 = vld [vmem:[%s7 + $0x38] sm:$0xff]
        %vm2026 = vcmask 523264
        %v2028 = vsel %vm2026, %v2011, 0
        %v2031 = vsel %vm2026, %v2012, 0
        %v2034 = vsel %vm2026, %v2013, 0
        %v2037 = vsel %vm2026, %v2014, 0
        %v2040 = vsel %vm2026, %v2015, 0
        %v2043 = vsel %vm2026, %v2016, 0
        %v2046 = vsel %vm2026, %v2017, 0
        %2048 = vmatprep.subr.mxu0 0.0
        %2049 = vmatpush1.msra.mxu0 0.0
        %2050 = vmatprep.subr.mxu0 0.0
        %2051 = vmatpush1.msra.mxu0 0.0
        %2052 = vmatprep.subr.mxu0 0.0
        %2053 = vmatpush1.msra.mxu0 0.0
        %2054 = vmatprep.subr.mxu0 0.0
        %2055 = vmatpush1.msra.mxu0 0.0
        %2056 = vmatprep.subr.mxu0 0.0
        %2057 = vmatpush1.msra.mxu0 0.0
        %2058 = vmatprep.subr.mxu0 0.0
        %2059 = vmatpush1.msra.mxu0 0.0
        %2060 = vmatprep.subr.mxu0 0.0
        %2061 = vmatpush1.msra.mxu0 0.0
        %2062 = vmatprep.subr.mxu0 0.0
        %2063 = vmatpush1.msra.mxu0 0.0
        %2064 = vmatprep.subr.mxu0 0.0
        %2065 = vmatpush1.msra.mxu0 %v2025
        %2066 = vmatprep.subr.mxu0 0.0
        %2067 = vmatpush1.msra.mxu0 %v2024
        %2068 = vmatprep.subr.mxu0 0.0
        %2069 = vmatpush1.msra.mxu0 %v2023
        %2070 = vmatprep.subr.mxu0 0.0
        %2071 = vmatpush1.msra.mxu0 %v2022
        %2072 = vmatprep.subr.mxu0 0.0
        %2073 = vmatpush1.msra.mxu0 %v2021
        %2074 = vmatprep.subr.mxu0 0.0
        %2075 = vmatpush1.msra.mxu0 %v2020
        %2076 = vmatprep.subr.mxu0 0.0
        %2077 = vmatpush1.msra.mxu0 %v2019
        %2078 = vmatprep.subr.mxu0 0.0
        %2079 = vmatpush1.msra.mxu0 %v2018
        %2080 = vmatprep.subr.mxu0 0.0
        %2081 = vmatpush2.msra.mxu0 0.0
        %2082 = vmatprep.subr.mxu0 0.0
        %2083 = vmatpush2.msra.mxu0 0.0
        %2084 = vmatprep.subr.mxu0 0.0
        %2085 = vmatpush2.msra.mxu0 0.0
        %2086 = vmatprep.subr.mxu0 0.0
        %2087 = vmatpush2.msra.mxu0 0.0
        %2088 = vmatprep.subr.mxu0 0.0
        %2089 = vmatpush2.msra.mxu0 0.0
        %2090 = vmatprep.subr.mxu0 0.0
        %2091 = vmatpush2.msra.mxu0 0.0
        %2092 = vmatprep.subr.mxu0 0.0
        %2093 = vmatpush2.msra.mxu0 0.0
        %2094 = vmatprep.subr.mxu0 0.0
        %2095 = vmatpush2.msra.mxu0 0.0
        %2096 = vmatprep.subr.mxu0 0.0
        %2097 = vmatpush2.msra.mxu0 0.0
        %2098 = vmatprep.subr.mxu0 0.0
        %2099 = vmatpush2.msra.mxu0 0.0
        %2100 = vmatprep.subr.mxu0 0.0
        %2101 = vmatpush2.msra.mxu0 0.0
        %2102 = vmatprep.subr.mxu0 0.0
        %2103 = vmatpush2.msra.mxu0 0.0
        %2104 = vmatprep.subr.mxu0 0.0
        %2105 = vmatpush2.msra.mxu0 0.0
        %2106 = vmatprep.subr.mxu0 0.0
        %2107 = vmatpush2.msra.mxu0 0.0
        %2108 = vmatprep.subr.mxu0 0.0
        %2109 = vmatpush2.msra.mxu0 0.0
        %2110 = vmatprep.subr.mxu0 0.0
        %2111 = vmatpush2.msra.mxu0 0.0
        %2112 = vmatprep.mubr.f32.mxu0 0.0
        %2113 = vmatmul.mubr.f32.gmra.mxu0 %v2028
        %v2114 = vpop.f32.mrf.mxu0
        %v2115 = vadd.f32 0.0, %v2114
        %v2116 = vpop.f32.mrf.mxu0
        %2117 = vmatprep.mubr.f32.mxu0 0.0
        %2118 = vmatmul.mubr.f32.gmra.mxu0 %v2031
        %v2119 = vpop.f32.mrf.mxu0
        %v2120 = vadd.f32 0.0, %v2119
        %v2121 = vpop.f32.mrf.mxu0
        %2122 = vmatprep.mubr.f32.mxu0 0.0
        %2123 = vmatmul.mubr.f32.gmra.mxu0 %v2034
        %v2124 = vpop.f32.mrf.mxu0
        %v2125 = vadd.f32 0.0, %v2124
        %v2126 = vpop.f32.mrf.mxu0
        %2127 = vmatprep.mubr.f32.mxu0 0.0
        %2128 = vmatmul.mubr.f32.gmra.mxu0 %v2037
        %v2129 = vpop.f32.mrf.mxu0
        %v2130 = vadd.f32 0.0, %v2129
        %v2131 = vpop.f32.mrf.mxu0
        %2132 = vmatprep.mubr.f32.mxu0 0.0
        %2133 = vmatmul.mubr.f32.gmra.mxu0 %v2040
        %v2134 = vpop.f32.mrf.mxu0
        %v2135 = vadd.f32 0.0, %v2134
        %v2136 = vpop.f32.mrf.mxu0
        %2137 = vmatprep.mubr.f32.mxu0 0.0
        %2138 = vmatmul.mubr.f32.gmra.mxu0 %v2043
        %v2139 = vpop.f32.mrf.mxu0
        %v2140 = vadd.f32 0.0, %v2139
        %v2141 = vpop.f32.mrf.mxu0
        %2142 = vmatprep.mubr.f32.mxu0 0.0
        %2143 = vmatmul.mubr.f32.gmra.mxu0 %v2046
        %v2144 = vpop.f32.mrf.mxu0
        %v2145 = vadd.f32 0.0, %v2144
        %v2146 = vpop.f32.mrf.mxu0
        %2147 = vdwg.mxu0
        %v2148 = vmul.f32 %v2115, %v2115
        %v2149 = vmul.f32 %v2120, %v2120
        %v2150 = vmul.f32 %v2125, %v2125
        %v2151 = vmul.f32 %v2130, %v2130
        %v2152 = vmul.f32 %v2135, %v2135
        %v2153 = vmul.f32 %v2140, %v2140
        %v2154 = vmul.f32 %v2145, %v2145
        %v2155 = vld [vmem:[#allocation12] sm:$0xff]
        %v2156 = vld [vmem:[#allocation12 + $0x8] sm:$0xff]
        %v2157 = vld [vmem:[#allocation12 + $0x10] sm:$0xff]
        %v2158 = vld [vmem:[#allocation12 + $0x18] sm:$0xff]
        %v2159 = vld [vmem:[#allocation12 + $0x20] sm:$0xff]
        %v2160 = vld [vmem:[#allocation12 + $0x28] sm:$0xff]
        %v2161 = vld [vmem:[#allocation12 + $0x30] sm:$0xff]
        %v2162 = vld [vmem:[#allocation12 + $0x38] sm:$0xff]
        %v2164 = vsel %vm2026, %v2148, 0
        %v2167 = vsel %vm2026, %v2149, 0
        %v2170 = vsel %vm2026, %v2150, 0
        %v2173 = vsel %vm2026, %v2151, 0
        %v2176 = vsel %vm2026, %v2152, 0
        %v2179 = vsel %vm2026, %v2153, 0
        %v2182 = vsel %vm2026, %v2154, 0
        %2184 = vmatprep.subr.mxu0 0.0
        %2185 = vmatpush1.msra.mxu0 0.0
        %2186 = vmatprep.subr.mxu0 0.0
        %2187 = vmatpush1.msra.mxu0 0.0
        %2188 = vmatprep.subr.mxu0 0.0
        %2189 = vmatpush1.msra.mxu0 0.0
        %2190 = vmatprep.subr.mxu0 0.0
        %2191 = vmatpush1.msra.mxu0 0.0
        %2192 = vmatprep.subr.mxu0 0.0
        %2193 = vmatpush1.msra.mxu0 0.0
        %2194 = vmatprep.subr.mxu0 0.0
        %2195 = vmatpush1.msra.mxu0 0.0
        %2196 = vmatprep.subr.mxu0 0.0
        %2197 = vmatpush1.msra.mxu0 0.0
        %2198 = vmatprep.subr.mxu0 0.0
        %2199 = vmatpush1.msra.mxu0 0.0
        %2200 = vmatprep.subr.mxu0 0.0
        %2201 = vmatpush1.msra.mxu0 %v2162
        %2202 = vmatprep.subr.mxu0 0.0
        %2203 = vmatpush1.msra.mxu0 %v2161
        %2204 = vmatprep.subr.mxu0 0.0
        %2205 = vmatpush1.msra.mxu0 %v2160
        %2206 = vmatprep.subr.mxu0 0.0
        %2207 = vmatpush1.msra.mxu0 %v2159
        %2208 = vmatprep.subr.mxu0 0.0
        %2209 = vmatpush1.msra.mxu0 %v2158
        %2210 = vmatprep.subr.mxu0 0.0
        %2211 = vmatpush1.msra.mxu0 %v2157
        %2212 = vmatprep.subr.mxu0 0.0
        %2213 = vmatpush1.msra.mxu0 %v2156
        %2214 = vmatprep.subr.mxu0 0.0
        %2215 = vmatpush1.msra.mxu0 %v2155
        %2216 = vmatprep.subr.mxu0 0.0
        %2217 = vmatpush2.msra.mxu0 0.0
        %2218 = vmatprep.subr.mxu0 0.0
        %2219 = vmatpush2.msra.mxu0 0.0
        %2220 = vmatprep.subr.mxu0 0.0
        %2221 = vmatpush2.msra.mxu0 0.0
        %2222 = vmatprep.subr.mxu0 0.0
        %2223 = vmatpush2.msra.mxu0 0.0
        %2224 = vmatprep.subr.mxu0 0.0
        %2225 = vmatpush2.msra.mxu0 0.0
        %2226 = vmatprep.subr.mxu0 0.0
        %2227 = vmatpush2.msra.mxu0 0.0
        %2228 = vmatprep.subr.mxu0 0.0
        %2229 = vmatpush2.msra.mxu0 0.0
        %2230 = vmatprep.subr.mxu0 0.0
        %2231 = vmatpush2.msra.mxu0 0.0
        %2232 = vmatprep.subr.mxu0 0.0
        %2233 = vmatpush2.msra.mxu0 0.0
        %2234 = vmatprep.subr.mxu0 0.0
        %2235 = vmatpush2.msra.mxu0 0.0
        %2236 = vmatprep.subr.mxu0 0.0
        %2237 = vmatpush2.msra.mxu0 0.0
        %2238 = vmatprep.subr.mxu0 0.0
        %2239 = vmatpush2.msra.mxu0 0.0
        %2240 = vmatprep.subr.mxu0 0.0
        %2241 = vmatpush2.msra.mxu0 0.0
        %2242 = vmatprep.subr.mxu0 0.0
        %2243 = vmatpush2.msra.mxu0 0.0
        %2244 = vmatprep.subr.mxu0 0.0
        %2245 = vmatpush2.msra.mxu0 0.0
        %2246 = vmatprep.subr.mxu0 0.0
        %2247 = vmatpush2.msra.mxu0 0.0
        %2248 = vmatprep.mubr.f32.mxu0 0.0
        %2249 = vmatmul.mubr.f32.gmra.mxu0 %v2164
        %v2250 = vpop.f32.mrf.mxu0
        %v2251 = vadd.f32 0.0, %v2250
        %v2252 = vpop.f32.mrf.mxu0
        %2253 = vmatprep.mubr.f32.mxu0 0.0
        %2254 = vmatmul.mubr.f32.gmra.mxu0 %v2167
        %v2255 = vpop.f32.mrf.mxu0
        %v2256 = vadd.f32 0.0, %v2255
        %v2257 = vpop.f32.mrf.mxu0
        %2258 = vmatprep.mubr.f32.mxu0 0.0
        %2259 = vmatmul.mubr.f32.gmra.mxu0 %v2170
        %v2260 = vpop.f32.mrf.mxu0
        %v2261 = vadd.f32 0.0, %v2260
        %v2262 = vpop.f32.mrf.mxu0
        %2263 = vmatprep.mubr.f32.mxu0 0.0
        %2264 = vmatmul.mubr.f32.gmra.mxu0 %v2173
        %v2265 = vpop.f32.mrf.mxu0
        %v2266 = vadd.f32 0.0, %v2265
        %v2267 = vpop.f32.mrf.mxu0
        %2268 = vmatprep.mubr.f32.mxu0 0.0
        %2269 = vmatmul.mubr.f32.gmra.mxu0 %v2176
        %v2270 = vpop.f32.mrf.mxu0
        %v2271 = vadd.f32 0.0, %v2270
        %v2272 = vpop.f32.mrf.mxu0
        %2273 = vmatprep.mubr.f32.mxu0 0.0
        %2274 = vmatmul.mubr.f32.gmra.mxu0 %v2179
        %v2275 = vpop.f32.mrf.mxu0
        %v2276 = vadd.f32 0.0, %v2275
        %v2277 = vpop.f32.mrf.mxu0
        %2278 = vmatprep.mubr.f32.mxu0 0.0
        %2279 = vmatmul.mubr.f32.gmra.mxu0 %v2182
        %v2280 = vpop.f32.mrf.mxu0
        %v2281 = vadd.f32 0.0, %v2280
        %v2282 = vpop.f32.mrf.mxu0
        %2283 = vdwg.mxu0
        %v2284 = vmul.f32 %v2251, 0.25
        %v2285 = vmul.f32 %v2256, 0.25
        %v2286 = vmul.f32 %v2261, 0.25
        %v2287 = vmul.f32 %v2266, 0.25
        %v2288 = vmul.f32 %v2271, 0.25
        %v2289 = vmul.f32 %v2276, 0.25
        %v2290 = vmul.f32 %v2281, 0.25
        %v2291 = vadd.f32 %v2284, 1e-06
        %v2292 = vadd.f32 %v2285, 1e-06
        %v2293 = vadd.f32 %v2286, 1e-06
        %v2294 = vadd.f32 %v2287, 1e-06
        %v2295 = vadd.f32 %v2288, 1e-06
        %v2296 = vadd.f32 %v2289, 1e-06
        %v2297 = vadd.f32 %v2290, 1e-06
        %v2298 = vrsqrt.pop %v2291
        %v2299 = vrsqrt.pop %v2292
        %v2300 = vrsqrt.pop %v2293
        %v2301 = vrsqrt.pop %v2294
        %v2302 = vrsqrt.pop %v2295
        %v2303 = vrsqrt.pop %v2296
        %v2304 = vrsqrt.pop %v2297
        %v2305 = vmul.f32 %v2115, %v2298
        %v2306 = vmul.f32 %v2120, %v2299
        %v2307 = vmul.f32 %v2125, %v2300
        %v2308 = vmul.f32 %v2130, %v2301
        %v2309 = vmul.f32 %v2135, %v2302
        %v2310 = vmul.f32 %v2140, %v2303
        %v2311 = vmul.f32 %v2145, %v2304
        %v2312 = vld [vmem:[%s8] sm:$0xff]
        %v2313 = vld [vmem:[%s8 + $0x8] sm:$0xff]
        %v2314 = vld [vmem:[%s8 + $0x10] sm:$0xff]
        %v2315 = vld [vmem:[%s8 + $0x18] sm:$0xff]
        %2316 = vmatprep.subr.mxu0 0.0
        %2317 = vmatpush1.msra.mxu0 0.0
        %2318 = vmatprep.subr.mxu0 0.0
        %2319 = vmatpush1.msra.mxu0 0.0
        %2320 = vmatprep.subr.mxu0 0.0
        %2321 = vmatpush1.msra.mxu0 0.0
        %2322 = vmatprep.subr.mxu0 0.0
        %2323 = vmatpush1.msra.mxu0 0.0
        %2324 = vmatprep.subr.mxu0 0.0
        %2325 = vmatpush1.msra.mxu0 0.0
        %2326 = vmatprep.subr.mxu0 0.0
        %2327 = vmatpush1.msra.mxu0 0.0
        %2328 = vmatprep.subr.mxu0 0.0
        %2329 = vmatpush1.msra.mxu0 0.0
        %2330 = vmatprep.subr.mxu0 0.0
        %2331 = vmatpush1.msra.mxu0 0.0
        %2332 = vmatprep.subr.mxu0 0.0
        %2333 = vmatpush1.msra.mxu0 0.0
        %2334 = vmatprep.subr.mxu0 0.0
        %2335 = vmatpush1.msra.mxu0 0.0
        %2336 = vmatprep.subr.mxu0 0.0
        %2337 = vmatpush1.msra.mxu0 0.0
        %2338 = vmatprep.subr.mxu0 0.0
        %2339 = vmatpush1.msra.mxu0 0.0
        %2340 = vmatprep.subr.mxu0 0.0
        %2341 = vmatpush1.msra.mxu0 %v2315
        %2342 = vmatprep.subr.mxu0 0.0
        %2343 = vmatpush1.msra.mxu0 %v2314
        %2344 = vmatprep.subr.mxu0 0.0
        %2345 = vmatpush1.msra.mxu0 %v2313
        %2346 = vmatprep.subr.mxu0 0.0
        %2347 = vmatpush1.msra.mxu0 %v2312
        %2348 = vmatprep.subr.mxu0 0.0
        %2349 = vmatpush2.msra.mxu0 0.0
        %2350 = vmatprep.subr.mxu0 0.0
        %2351 = vmatpush2.msra.mxu0 0.0
        %2352 = vmatprep.subr.mxu0 0.0
        %2353 = vmatpush2.msra.mxu0 0.0
        %2354 = vmatprep.subr.mxu0 0.0
        %2355 = vmatpush2.msra.mxu0 0.0
        %2356 = vmatprep.subr.mxu0 0.0
        %2357 = vmatpush2.msra.mxu0 0.0
        %2358 = vmatprep.subr.mxu0 0.0
        %2359 = vmatpush2.msra.mxu0 0.0
        %2360 = vmatprep.subr.mxu0 0.0
        %2361 = vmatpush2.msra.mxu0 0.0
        %2362 = vmatprep.subr.mxu0 0.0
        %2363 = vmatpush2.msra.mxu0 0.0
        %2364 = vmatprep.subr.mxu0 0.0
        %2365 = vmatpush2.msra.mxu0 0.0
        %2366 = vmatprep.subr.mxu0 0.0
        %2367 = vmatpush2.msra.mxu0 0.0
        %2368 = vmatprep.subr.mxu0 0.0
        %2369 = vmatpush2.msra.mxu0 0.0
        %2370 = vmatprep.subr.mxu0 0.0
        %2371 = vmatpush2.msra.mxu0 0.0
        %2372 = vmatprep.subr.mxu0 0.0
        %2373 = vmatpush2.msra.mxu0 0.0
        %2374 = vmatprep.subr.mxu0 0.0
        %2375 = vmatpush2.msra.mxu0 0.0
        %2376 = vmatprep.subr.mxu0 0.0
        %2377 = vmatpush2.msra.mxu0 0.0
        %2378 = vmatprep.subr.mxu0 0.0
        %2379 = vmatpush2.msra.mxu0 0.0
        %2380 = vmatprep.mubr.f32.mxu0 0.0
        %2381 = vmatmul.mubr.f32.gmra.mxu0 %v1036
        %v2382 = vpop.f32.mrf.mxu0
        %v2383 = vadd.f32 0.0, %v2382
        %v2384 = vpop.f32.mrf.mxu0
        %2385 = vmatprep.mubr.f32.mxu0 0.0
        %2386 = vmatmul.mubr.f32.gmra.mxu0 %v1039
        %v2387 = vpop.f32.mrf.mxu0
        %v2388 = vadd.f32 0.0, %v2387
        %v2389 = vpop.f32.mrf.mxu0
        %2390 = vmatprep.mubr.f32.mxu0 0.0
        %2391 = vmatmul.mubr.f32.gmra.mxu0 %v1042
        %v2392 = vpop.f32.mrf.mxu0
        %v2393 = vadd.f32 0.0, %v2392
        %v2394 = vpop.f32.mrf.mxu0
        %2395 = vmatprep.mubr.f32.mxu0 0.0
        %2396 = vmatmul.mubr.f32.gmra.mxu0 %v1045
        %v2397 = vpop.f32.mrf.mxu0
        %v2398 = vadd.f32 0.0, %v2397
        %v2399 = vpop.f32.mrf.mxu0
        %2400 = vmatprep.mubr.f32.mxu0 0.0
        %2401 = vmatmul.mubr.f32.gmra.mxu0 %v1048
        %v2402 = vpop.f32.mrf.mxu0
        %v2403 = vadd.f32 0.0, %v2402
        %v2404 = vpop.f32.mrf.mxu0
        %2405 = vmatprep.mubr.f32.mxu0 0.0
        %2406 = vmatmul.mubr.f32.gmra.mxu0 %v1051
        %v2407 = vpop.f32.mrf.mxu0
        %v2408 = vadd.f32 0.0, %v2407
        %v2409 = vpop.f32.mrf.mxu0
        %2410 = vmatprep.mubr.f32.mxu0 0.0
        %2411 = vmatmul.mubr.f32.gmra.mxu0 %v1054
        %v2412 = vpop.f32.mrf.mxu0
        %v2413 = vadd.f32 0.0, %v2412
        %v2414 = vpop.f32.mrf.mxu0
        %2415 = vdwg.mxu0
        %v2416 = vtanh.pop %v2383
        %v2417 = vtanh.pop %v2388
        %v2418 = vtanh.pop %v2393
        %v2419 = vtanh.pop %v2398
        %v2420 = vtanh.pop %v2403
        %v2421 = vtanh.pop %v2408
        %v2422 = vtanh.pop %v2413
        %v2423 = vld [vmem:[#allocation13] sm:$0xff]
        %v2424 = vld [vmem:[%s12] sm:$0xff]
        %v2425 = vld [vmem:[%s12 + $0x8] sm:$0xff]
        %v2426 = vld [vmem:[%s12 + $0x10] sm:$0xff]
        %v2427 = vld [vmem:[%s12 + $0x18] sm:$0xff]
        %v2428 = vld [vmem:[%s12 + $0x20] sm:$0xff]
        %v2429 = vld [vmem:[%s12 + $0x28] sm:$0xff]
        %v2430 = vld [vmem:[%s12 + $0x30] sm:$0xff]
        %v2431 = vld [vmem:[%s12 + $0x38] sm:$0xff]
        %v2432 = vld [vmem:[%s12 + $0x40] sm:$0xff]
        %v2433 = vld [vmem:[%s12 + $0x48] sm:$0xff]
        %v2434 = vld [vmem:[%s12 + $0x50] sm:$0xff]
        %v2435 = vld [vmem:[%s12 + $0x58] sm:$0xff]
        %v2436 = vld [vmem:[%s12 + $0x60] sm:$0x1]
        %v2437 = vld [vmem:[%s12 + $0x68] sm:$0x1]
        %vm2438 = vcmask 400384
        %v2440 = vsel %vm2438, %v1613, 0
        %v2443 = vsel %vm2438, %v1614, 0
        %v2446 = vsel %vm2438, %v1615, 0
        %v2449 = vsel %vm2438, %v1616, 0
        %vm2451 = vcmask 1040384
        %v2453 = vsel %vm2451, %v2436, 0
        %v2456 = vsel %vm2451, %v2437, 0
        %2458 = vmatprep.subr.mxu0 0.0
        %2459 = vmatpush1.msra.mxu0 0.0
        %2460 = vmatprep.subr.mxu0 0.0
        %2461 = vmatpush1.msra.mxu0 0.0
        %2462 = vmatprep.subr.mxu0 0.0
        %2463 = vmatpush1.msra.mxu0 0.0
        %2464 = vmatprep.subr.mxu0 0.0
        %2465 = vmatpush1.msra.mxu0 0.0
        %2466 = vmatprep.subr.mxu0 0.0
        %2467 = vmatpush1.msra.mxu0 0.0
        %2468 = vmatprep.subr.mxu0 0.0
        %2469 = vmatpush1.msra.mxu0 0.0
        %2470 = vmatprep.subr.mxu0 0.0
        %2471 = vmatpush1.msra.mxu0 0.0
        %2472 = vmatprep.subr.mxu0 0.0
        %2473 = vmatpush1.msra.mxu0 0.0
        %2474 = vmatprep.subr.mxu0 0.0
        %2475 = vmatpush1.msra.mxu0 0.0
        %2476 = vmatprep.subr.mxu0 %v2456
        %2477 = vmatpush1.msra.mxu0 %v2453
        %2478 = vmatprep.subr.mxu0 %v2435
        %2479 = vmatpush1.msra.mxu0 %v2434
        %2480 = vmatprep.subr.mxu0 %v2433
        %2481 = vmatpush1.msra.mxu0 %v2432
        %2482 = vmatprep.subr.mxu0 %v2431
        %2483 = vmatpush1.msra.mxu0 %v2430
        %2484 = vmatprep.subr.mxu0 %v2429
        %2485 = vmatpush1.msra.mxu0 %v2428
        %2486 = vmatprep.subr.mxu0 %v2427
        %2487 = vmatpush1.msra.mxu0 %v2426
        %2488 = vmatprep.subr.mxu0 %v2425
        %2489 = vmatpush1.msra.mxu0 %v2424
        %2490 = vmatprep.subr.mxu0 0.0
        %2491 = vmatpush2.msra.mxu0 0.0
        %2492 = vmatprep.subr.mxu0 0.0
        %2493 = vmatpush2.msra.mxu0 0.0
        %2494 = vmatprep.subr.mxu0 0.0
        %2495 = vmatpush2.msra.mxu0 0.0
        %2496 = vmatprep.subr.mxu0 0.0
        %2497 = vmatpush2.msra.mxu0 0.0
        %2498 = vmatprep.subr.mxu0 0.0
        %2499 = vmatpush2.msra.mxu0 0.0
        %2500 = vmatprep.subr.mxu0 0.0
        %2501 = vmatpush2.msra.mxu0 0.0
        %2502 = vmatprep.subr.mxu0 0.0
        %2503 = vmatpush2.msra.mxu0 0.0
        %2504 = vmatprep.subr.mxu0 0.0
        %2505 = vmatpush2.msra.mxu0 0.0
        %2506 = vmatprep.subr.mxu0 0.0
        %2507 = vmatpush2.msra.mxu0 0.0
        %2508 = vmatprep.subr.mxu0 0.0
        %2509 = vmatpush2.msra.mxu0 0.0
        %2510 = vmatprep.subr.mxu0 0.0
        %2511 = vmatpush2.msra.mxu0 0.0
        %2512 = vmatprep.subr.mxu0 0.0
        %2513 = vmatpush2.msra.mxu0 0.0
        %2514 = vmatprep.subr.mxu0 0.0
        %2515 = vmatpush2.msra.mxu0 0.0
        %2516 = vmatprep.subr.mxu0 0.0
        %2517 = vmatpush2.msra.mxu0 0.0
        %2518 = vmatprep.subr.mxu0 0.0
        %2519 = vmatpush2.msra.mxu0 0.0
        %2520 = vmatprep.subr.mxu0 0.0
        %2521 = vmatpush2.msra.mxu0 0.0
        %2522 = vmatprep.mubr.f32.mxu0 0.0
        %2523 = vmatmul.mubr.f32.gmra.mxu0 %v2440
        %v2524 = vpop.f32.mrf.mxu0
        %v2525 = vadd.f32 0.0, %v2524
        %v2526 = vpop.f32.mrf.mxu0
        %v2527 = vadd.f32 0.0, %v2526
        %2528 = vmatprep.mubr.f32.mxu0 0.0
        %2529 = vmatmul.mubr.f32.gmra.mxu0 %v2443
        %v2530 = vpop.f32.mrf.mxu0
        %v2531 = vadd.f32 0.0, %v2530
        %v2532 = vpop.f32.mrf.mxu0
        %v2533 = vadd.f32 0.0, %v2532
        %2534 = vmatprep.mubr.f32.mxu0 0.0
        %2535 = vmatmul.mubr.f32.gmra.mxu0 %v2446
        %v2536 = vpop.f32.mrf.mxu0
        %v2537 = vadd.f32 0.0, %v2536
        %v2538 = vpop.f32.mrf.mxu0
        %v2539 = vadd.f32 0.0, %v2538
        %2540 = vmatprep.mubr.f32.mxu0 0.0
        %2541 = vmatmul.mubr.f32.gmra.mxu0 %v2449
        %v2542 = vpop.f32.mrf.mxu0
        %v2543 = vadd.f32 0.0, %v2542
        %v2544 = vpop.f32.mrf.mxu0
        %v2545 = vadd.f32 0.0, %v2544
        %2546 = vdwg.mxu0
        %v2547 = vld [vmem:[#allocation15] sm:$0xff]
        %v2548 = vld [vmem:[#allocation15 + $0x8] sm:$0xff]
        %v2549 = vld [vmem:[#allocation15 + $0x10] sm:$0xff]
        %v2550 = vld [vmem:[#allocation15 + $0x18] sm:$0xff]
        %v2551 = vld [vmem:[#allocation15 + $0x20] sm:$0xff]
        %v2552 = vld [vmem:[#allocation15 + $0x28] sm:$0xff]
        %v2553 = vld [vmem:[#allocation15 + $0x30] sm:$0xff]
        %v2554 = vld [vmem:[#allocation15 + $0x38] sm:$0xff]
        %v2555 = vmul.f32 %v2525, %v2547
        %v2556 = vmul.f32 %v2527, %v2548
        %v2557 = vmul.f32 %v2531, %v2549
        %v2558 = vmul.f32 %v2533, %v2550
        %v2559 = vmul.f32 %v2537, %v2551
        %v2560 = vmul.f32 %v2539, %v2552
        %v2561 = vmul.f32 %v2543, %v2553
        %v2562 = vmul.f32 %v2545, %v2554
        %v2564 = vsel %vm907, %v1316, 0
        %v2567 = vsel %vm907, %v1317, 0
        %v2570 = vsel %vm907, %v1318, 0
        %v2573 = vsel %vm907, %v1319, 0
        %v2576 = vsel %vm907, %v1320, 0
        %v2579 = vsel %vm907, %v1321, 0
        %v2582 = vsel %vm907, %v1322, 0
        %2584 = vmatprep.subr.mxu0 0.0
        %2585 = vmatpush1.msra.mxu0 0.0
        %2586 = vmatprep.subr.mxu0 0.0
        %2587 = vmatpush1.msra.mxu0 0.0
        %2588 = vmatprep.subr.mxu0 0.0
        %2589 = vmatpush1.msra.mxu0 0.0
        %2590 = vmatprep.subr.mxu0 0.0
        %2591 = vmatpush1.msra.mxu0 0.0
        %2592 = vmatprep.subr.mxu0 0.0
        %2593 = vmatpush1.msra.mxu0 0.0
        %2594 = vmatprep.subr.mxu0 0.0
        %2595 = vmatpush1.msra.mxu0 0.0
        %2596 = vmatprep.subr.mxu0 0.0
        %2597 = vmatpush1.msra.mxu0 0.0
        %2598 = vmatprep.subr.mxu0 0.0
        %2599 = vmatpush1.msra.mxu0 0.0
        %2600 = vmatprep.subr.mxu0 0.0
        %2601 = vmatpush1.msra.mxu0 0.0
        %2602 = vmatprep.subr.mxu0 0.0
        %2603 = vmatpush1.msra.mxu0 0.0
        %2604 = vmatprep.subr.mxu0 0.0
        %2605 = vmatpush1.msra.mxu0 0.0
        %2606 = vmatprep.subr.mxu0 0.0
        %2607 = vmatpush1.msra.mxu0 0.0
        %2608 = vmatprep.subr.mxu0 %v2562
        %2609 = vmatpush1.msra.mxu0 %v2561
        %2610 = vmatprep.subr.mxu0 %v2560
        %2611 = vmatpush1.msra.mxu0 %v2559
        %2612 = vmatprep.subr.mxu0 %v2558
        %2613 = vmatpush1.msra.mxu0 %v2557
        %2614 = vmatprep.subr.mxu0 %v2556
        %2615 = vmatpush1.msra.mxu0 %v2555
        %2616 = vmatprep.subr.mxu0 0.0
        %2617 = vmatpush2.msra.mxu0 0.0
        %2618 = vmatprep.subr.mxu0 0.0
        %2619 = vmatpush2.msra.mxu0 0.0
        %2620 = vmatprep.subr.mxu0 0.0
        %2621 = vmatpush2.msra.mxu0 0.0
        %2622 = vmatprep.subr.mxu0 0.0
        %2623 = vmatpush2.msra.mxu0 0.0
        %2624 = vmatprep.subr.mxu0 0.0
        %2625 = vmatpush2.msra.mxu0 0.0
        %2626 = vmatprep.subr.mxu0 0.0
        %2627 = vmatpush2.msra.mxu0 0.0
        %2628 = vmatprep.subr.mxu0 0.0
        %2629 = vmatpush2.msra.mxu0 0.0
        %2630 = vmatprep.subr.mxu0 0.0
        %2631 = vmatpush2.msra.mxu0 0.0
        %2632 = vmatprep.subr.mxu0 0.0
        %2633 = vmatpush2.msra.mxu0 0.0
        %2634 = vmatprep.subr.mxu0 0.0
        %2635 = vmatpush2.msra.mxu0 0.0
        %2636 = vmatprep.subr.mxu0 0.0
        %2637 = vmatpush2.msra.mxu0 0.0
        %2638 = vmatprep.subr.mxu0 0.0
        %2639 = vmatpush2.msra.mxu0 0.0
        %2640 = vmatprep.subr.mxu0 0.0
        %2641 = vmatpush2.msra.mxu0 0.0
        %2642 = vmatprep.subr.mxu0 0.0
        %2643 = vmatpush2.msra.mxu0 0.0
        %2644 = vmatprep.subr.mxu0 0.0
        %2645 = vmatpush2.msra.mxu0 0.0
        %2646 = vmatprep.subr.mxu0 0.0
        %2647 = vmatpush2.msra.mxu0 0.0
        %2648 = vmatprep.mubr.f32.mxu0 0.0
        %2649 = vmatmul.mubr.f32.gmra.mxu0 %v2564
        %v2650 = vpop.f32.mrf.mxu0
        %v2651 = vadd.f32 0.0, %v2650
        %v2652 = vpop.f32.mrf.mxu0
        %v2653 = vadd.f32 0.0, %v2652
        %2654 = vmatprep.mubr.f32.mxu0 0.0
        %2655 = vmatmul.mubr.f32.gmra.mxu0 %v2567
        %v2656 = vpop.f32.mrf.mxu0
        %v2657 = vadd.f32 0.0, %v2656
        %v2658 = vpop.f32.mrf.mxu0
        %v2659 = vadd.f32 0.0, %v2658
        %2660 = vmatprep.mubr.f32.mxu0 0.0
        %2661 = vmatmul.mubr.f32.gmra.mxu0 %v2570
        %v2662 = vpop.f32.mrf.mxu0
        %v2663 = vadd.f32 0.0, %v2662
        %v2664 = vpop.f32.mrf.mxu0
        %v2665 = vadd.f32 0.0, %v2664
        %2666 = vmatprep.mubr.f32.mxu0 0.0
        %2667 = vmatmul.mubr.f32.gmra.mxu0 %v2573
        %v2668 = vpop.f32.mrf.mxu0
        %v2669 = vadd.f32 0.0, %v2668
        %v2670 = vpop.f32.mrf.mxu0
        %v2671 = vadd.f32 0.0, %v2670
        %2672 = vmatprep.mubr.f32.mxu0 0.0
        %2673 = vmatmul.mubr.f32.gmra.mxu0 %v2576
        %v2674 = vpop.f32.mrf.mxu0
        %v2675 = vadd.f32 0.0, %v2674
        %v2676 = vpop.f32.mrf.mxu0
        %v2677 = vadd.f32 0.0, %v2676
        %2678 = vmatprep.mubr.f32.mxu0 0.0
        %2679 = vmatmul.mubr.f32.gmra.mxu0 %v2579
        %v2680 = vpop.f32.mrf.mxu0
        %v2681 = vadd.f32 0.0, %v2680
        %v2682 = vpop.f32.mrf.mxu0
        %v2683 = vadd.f32 0.0, %v2682
        %2684 = vmatprep.mubr.f32.mxu0 0.0
        %2685 = vmatmul.mubr.f32.gmra.mxu0 %v2582
        %v2686 = vpop.f32.mrf.mxu0
        %v2687 = vadd.f32 0.0, %v2686
        %v2688 = vpop.f32.mrf.mxu0
        %v2689 = vadd.f32 0.0, %v2688
        %2690 = vdwg.mxu0
        %v2691 = vld [vmem:[%s13] sm:$0xff]
        %v2692 = vld [vmem:[%s13 + $0x8] sm:$0xff]
        %v2693 = vld [vmem:[%s13 + $0x10] sm:$0xff]
        %v2694 = vld [vmem:[%s13 + $0x18] sm:$0xff]
        %v2695 = vld [vmem:[%s13 + $0x20] sm:$0xff]
        %v2696 = vld [vmem:[%s13 + $0x28] sm:$0xff]
        %v2697 = vld [vmem:[%s13 + $0x30] sm:$0xff]
        %v2698 = vld [vmem:[%s13 + $0x38] sm:$0xff]
        %v2699 = vld [vmem:[%s13 + $0x40] sm:$0xff]
        %v2700 = vld [vmem:[%s13 + $0x48] sm:$0xff]
        %v2701 = vld [vmem:[%s13 + $0x50] sm:$0xff]
        %v2702 = vld [vmem:[%s13 + $0x58] sm:$0xff]
        %v2703 = vld [vmem:[%s13 + $0x60] sm:$0xff]
        %v2704 = vld [vmem:[%s13 + $0x68] sm:$0xff]
        %v2705 = vld [vmem:[%s13 + $0x70] sm:$0xff]
        %v2706 = vld [vmem:[%s13 + $0x78] sm:$0xff]
        %v2707 = vld [vmem:[%s13 + $0x80] sm:$0xff]
        %v2708 = vld [vmem:[%s13 + $0x88] sm:$0xff]
        %v2709 = vld [vmem:[%s13 + $0x90] sm:$0xff]
        %v2710 = vld [vmem:[%s13 + $0x98] sm:$0xff]
        %v2711 = vld [vmem:[%s13 + $0xa0] sm:$0xff]
        %v2712 = vld [vmem:[%s13 + $0xa8] sm:$0xff]
        %v2713 = vld [vmem:[%s13 + $0xb0] sm:$0xff]
        %v2714 = vld [vmem:[%s13 + $0xb8] sm:$0xff]
        %v2715 = vld [vmem:[%s13 + $0xc0] sm:$0xff]
        %v2716 = vld [vmem:[%s13 + $0xc8] sm:$0xff]
        %v2717 = vld [vmem:[%s13 + $0xd0] sm:$0xff]
        %v2718 = vld [vmem:[%s13 + $0xd8] sm:$0xff]
        %v2719 = vld [vmem:[%s13 + $0xe0] sm:$0xff]
        %v2720 = vld [vmem:[%s13 + $0xe8] sm:$0xff]
        %v2721 = vld [vmem:[%s13 + $0xf0] sm:$0xff]
        %v2722 = vld [vmem:[%s13 + $0xf8] sm:$0xff]
        %v2723 = vld [vmem:[%s13 + $0x100] sm:$0xff]
        %v2724 = vld [vmem:[%s13 + $0x108] sm:$0xff]
        %v2725 = vld [vmem:[%s13 + $0x110] sm:$0xff]
        %v2726 = vld [vmem:[%s13 + $0x118] sm:$0xff]
        %v2727 = vld [vmem:[%s13 + $0x120] sm:$0xff]
        %v2728 = vld [vmem:[%s13 + $0x128] sm:$0xff]
        %v2729 = vld [vmem:[%s13 + $0x130] sm:$0xff]
        %v2730 = vld [vmem:[%s13 + $0x138] sm:$0xff]
        %v2731 = vld [vmem:[%s13 + $0x140] sm:$0xff]
        %v2732 = vld [vmem:[%s13 + $0x148] sm:$0xff]
        %v2733 = vld [vmem:[%s13 + $0x150] sm:$0xff]
        %v2734 = vld [vmem:[%s13 + $0x158] sm:$0xff]
        %v2735 = vld [vmem:[%s13 + $0x160] sm:$0xff]
        %v2736 = vld [vmem:[%s13 + $0x168] sm:$0xff]
        %v2737 = vld [vmem:[%s13 + $0x170] sm:$0xff]
        %v2738 = vld [vmem:[%s13 + $0x178] sm:$0xff]
        %v2739 = vld [vmem:[%s13 + $0x180] sm:$0xf]
        %v2740 = vld [vmem:[%s13 + $0x188] sm:$0xf]
        %v2742 = vcombine.high %v2423, %v2423
        %vm2743 = vcmask 31744
        %v2745 = vsel %vm2743, %v2305, 0
        %v2748 = vsel %vm2743, %v2306, 0
        %v2751 = vsel %vm2743, %v2307, 0
        %v2754 = vsel %vm2743, %v2308, 0
        %v2757 = vsel %vm2743, %v2309, 0
        %v2760 = vsel %vm2743, %v2310, 0
        %v2763 = vsel %vm2743, %v2311, 0
        %vm2765 = vcmask 1043456
        %v2766 = vsel %vm2765, %v2423, 0
        %v2768 = vsel %vm2765, %v2742, 0
        %2770 = vmatprep.subr.mxu0 0.0
        %2771 = vmatpush1.msra.mxu0 0.0
        %2772 = vmatprep.subr.mxu0 0.0
        %2773 = vmatpush1.msra.mxu0 0.0
        %2774 = vmatprep.subr.mxu0 0.0
        %2775 = vmatpush1.msra.mxu0 0.0
        %2776 = vmatprep.subr.mxu0 0.0
        %2777 = vmatpush1.msra.mxu0 0.0
        %2778 = vmatprep.subr.mxu0 0.0
        %2779 = vmatpush1.msra.mxu0 0.0
        %2780 = vmatprep.subr.mxu0 0.0
        %2781 = vmatpush1.msra.mxu0 0.0
        %2782 = vmatprep.subr.mxu0 0.0
        %2783 = vmatpush1.msra.mxu0 0.0
        %2784 = vmatprep.subr.mxu0 0.0
        %2785 = vmatpush1.msra.mxu0 0.0
        %2786 = vmatprep.subr.mxu0 0.0
        %2787 = vmatpush1.msra.mxu0 0.0
        %2788 = vmatprep.subr.mxu0 0.0
        %2789 = vmatpush1.msra.mxu0 0.0
        %2790 = vmatprep.subr.mxu0 0.0
        %2791 = vmatpush1.msra.mxu0 0.0
        %2792 = vmatprep.subr.mxu0 0.0
        %2793 = vmatpush1.msra.mxu0 0.0
        %2794 = vmatprep.subr.mxu0 0.0
        %2795 = vmatpush1.msra.mxu0 0.0
        %2796 = vmatprep.subr.mxu0 0.0
        %2797 = vmatpush1.msra.mxu0 0.0
        %2798 = vmatprep.subr.mxu0 0.0
        %2799 = vmatpush1.msra.mxu0 0.0
        %2800 = vmatprep.subr.mxu0 %v2768
        %2801 = vmatpush1.msra.mxu0 %v2766
        %2802 = vmatprep.subr.mxu0 0.0
        %2803 = vmatpush2.msra.mxu0 0.0
        %2804 = vmatprep.subr.mxu0 0.0
        %2805 = vmatpush2.msra.mxu0 0.0
        %2806 = vmatprep.subr.mxu0 0.0
        %2807 = vmatpush2.msra.mxu0 0.0
        %2808 = vmatprep.subr.mxu0 0.0
        %2809 = vmatpush2.msra.mxu0 0.0
        %2810 = vmatprep.subr.mxu0 0.0
        %2811 = vmatpush2.msra.mxu0 0.0
        %2812 = vmatprep.subr.mxu0 0.0
        %2813 = vmatpush2.msra.mxu0 0.0
        %2814 = vmatprep.subr.mxu0 0.0
        %2815 = vmatpush2.msra.mxu0 0.0
        %2816 = vmatprep.subr.mxu0 0.0
        %2817 = vmatpush2.msra.mxu0 0.0
        %2818 = vmatprep.subr.mxu0 0.0
        %2819 = vmatpush2.msra.mxu0 0.0
        %2820 = vmatprep.subr.mxu0 0.0
        %2821 = vmatpush2.msra.mxu0 0.0
        %2822 = vmatprep.subr.mxu0 0.0
        %2823 = vmatpush2.msra.mxu0 0.0
        %2824 = vmatprep.subr.mxu0 0.0
        %2825 = vmatpush2.msra.mxu0 0.0
        %2826 = vmatprep.subr.mxu0 0.0
        %2827 = vmatpush2.msra.mxu0 0.0
        %2828 = vmatprep.subr.mxu0 0.0
        %2829 = vmatpush2.msra.mxu0 0.0
        %2830 = vmatprep.subr.mxu0 0.0
        %2831 = vmatpush2.msra.mxu0 0.0
        %2832 = vmatprep.subr.mxu0 0.0
        %2833 = vmatpush2.msra.mxu0 0.0
        %2834 = vmatprep.mubr.f32.mxu0 0.0
        %2835 = vmatmul.mubr.f32.gmra.mxu0 %v2745
        %v2836 = vpop.f32.mrf.mxu0
        %v2837 = vadd.f32 0.0, %v2836
        %v2838 = vpop.f32.mrf.mxu0
        %v2839 = vadd.f32 0.0, %v2838
        %2840 = vmatprep.mubr.f32.mxu0 0.0
        %2841 = vmatmul.mubr.f32.gmra.mxu0 %v2748
        %v2842 = vpop.f32.mrf.mxu0
        %v2843 = vadd.f32 0.0, %v2842
        %v2844 = vpop.f32.mrf.mxu0
        %v2845 = vadd.f32 0.0, %v2844
        %2846 = vmatprep.mubr.f32.mxu0 0.0
        %2847 = vmatmul.mubr.f32.gmra.mxu0 %v2751
        %v2848 = vpop.f32.mrf.mxu0
        %v2849 = vadd.f32 0.0, %v2848
        %v2850 = vpop.f32.mrf.mxu0
        %v2851 = vadd.f32 0.0, %v2850
        %2852 = vmatprep.mubr.f32.mxu0 0.0
        %2853 = vmatmul.mubr.f32.gmra.mxu0 %v2754
        %v2854 = vpop.f32.mrf.mxu0
        %v2855 = vadd.f32 0.0, %v2854
        %v2856 = vpop.f32.mrf.mxu0
        %v2857 = vadd.f32 0.0, %v2856
        %2858 = vmatprep.mubr.f32.mxu0 0.0
        %2859 = vmatmul.mubr.f32.gmra.mxu0 %v2757
        %v2860 = vpop.f32.mrf.mxu0
        %v2861 = vadd.f32 0.0, %v2860
        %v2862 = vpop.f32.mrf.mxu0
        %v2863 = vadd.f32 0.0, %v2862
        %2864 = vmatprep.mubr.f32.mxu0 0.0
        %2865 = vmatmul.mubr.f32.gmra.mxu0 %v2760
        %v2866 = vpop.f32.mrf.mxu0
        %v2867 = vadd.f32 0.0, %v2866
        %v2868 = vpop.f32.mrf.mxu0
        %v2869 = vadd.f32 0.0, %v2868
        %2870 = vmatprep.mubr.f32.mxu0 0.0
        %2871 = vmatmul.mubr.f32.gmra.mxu0 %v2763
        %v2872 = vpop.f32.mrf.mxu0
        %v2873 = vadd.f32 0.0, %v2872
        %v2874 = vpop.f32.mrf.mxu0
        %v2875 = vadd.f32 0.0, %v2874
        %2876 = vdwg.mxu0
        %v2877 = vmul.f32 %v2651, %v2837
        %v2878 = vmul.f32 %v2653, %v2839
        %v2879 = vmul.f32 %v2657, %v2843
        %v2880 = vmul.f32 %v2659, %v2845
        %v2881 = vmul.f32 %v2663, %v2849
        %v2882 = vmul.f32 %v2665, %v2851
        %v2883 = vmul.f32 %v2669, %v2855
        %v2884 = vmul.f32 %v2671, %v2857
        %v2885 = vmul.f32 %v2675, %v2861
        %v2886 = vmul.f32 %v2677, %v2863
        %v2887 = vmul.f32 %v2681, %v2867
        %v2888 = vmul.f32 %v2683, %v2869
        %v2889 = vmul.f32 %v2687, %v2873
        %v2890 = vmul.f32 %v2689, %v2875
        %vm2891 = vcmask 556032
        %v2893 = vsel %vm2891, %v2878, 0
        %v2896 = vsel %vm2891, %v2880, 0
        %v2899 = vsel %vm2891, %v2882, 0
        %v2902 = vsel %vm2891, %v2884, 0
        %v2905 = vsel %vm2891, %v2886, 0
        %v2908 = vsel %vm2891, %v2888, 0
        %v2911 = vsel %vm2891, %v2890, 0
        %v2914 = vsel %vm2765, %v2739, 0
        %v2917 = vsel %vm2765, %v2740, 0
        %2919 = vmatprep.subr.mxu0 %v2722
        %2920 = vmatpush1.msra.mxu0 %v2721
        %2921 = vmatprep.subr.mxu0 %v2720
        %2922 = vmatpush1.msra.mxu0 %v2719
        %2923 = vmatprep.subr.mxu0 %v2718
        %2924 = vmatpush1.msra.mxu0 %v2717
        %2925 = vmatprep.subr.mxu0 %v2716
        %2926 = vmatpush1.msra.mxu0 %v2715
        %2927 = vmatprep.subr.mxu0 %v2714
        %2928 = vmatpush1.msra.mxu0 %v2713
        %2929 = vmatprep.subr.mxu0 %v2712
        %2930 = vmatpush1.msra.mxu0 %v2711
        %2931 = vmatprep.subr.mxu0 %v2710
        %2932 = vmatpush1.msra.mxu0 %v2709
        %2933 = vmatprep.subr.mxu0 %v2708
        %2934 = vmatpush1.msra.mxu0 %v2707
        %2935 = vmatprep.subr.mxu0 %v2706
        %2936 = vmatpush1.msra.mxu0 %v2705
        %2937 = vmatprep.subr.mxu0 %v2704
        %2938 = vmatpush1.msra.mxu0 %v2703
        %2939 = vmatprep.subr.mxu0 %v2702
        %2940 = vmatpush1.msra.mxu0 %v2701
        %2941 = vmatprep.subr.mxu0 %v2700
        %2942 = vmatpush1.msra.mxu0 %v2699
        %2943 = vmatprep.subr.mxu0 %v2698
        %2944 = vmatpush1.msra.mxu0 %v2697
        %2945 = vmatprep.subr.mxu0 %v2696
        %2946 = vmatpush1.msra.mxu0 %v2695
        %2947 = vmatprep.subr.mxu0 %v2694
        %2948 = vmatpush1.msra.mxu0 %v2693
        %2949 = vmatprep.subr.mxu0 %v2692
        %2950 = vmatpush1.msra.mxu0 %v2691
        %2951 = vmatprep.subr.mxu0 0.0
        %2952 = vmatpush2.msra.mxu0 0.0
        %2953 = vmatprep.subr.mxu0 0.0
        %2954 = vmatpush2.msra.mxu0 0.0
        %2955 = vmatprep.subr.mxu0 0.0
        %2956 = vmatpush2.msra.mxu0 0.0
        %2957 = vmatprep.subr.mxu0 0.0
        %2958 = vmatpush2.msra.mxu0 0.0
        %2959 = vmatprep.subr.mxu0 0.0
        %2960 = vmatpush2.msra.mxu0 0.0
        %2961 = vmatprep.subr.mxu0 0.0
        %2962 = vmatpush2.msra.mxu0 0.0
        %2963 = vmatprep.subr.mxu0 0.0
        %2964 = vmatpush2.msra.mxu0 0.0
        %2965 = vmatprep.subr.mxu0 %v2917
        %2966 = vmatpush2.msra.mxu0 %v2914
        %2967 = vmatprep.subr.mxu0 %v2738
        %2968 = vmatpush2.msra.mxu0 %v2737
        %2969 = vmatprep.subr.mxu0 %v2736
        %2970 = vmatpush2.msra.mxu0 %v2735
        %2971 = vmatprep.subr.mxu0 %v2734
        %2972 = vmatpush2.msra.mxu0 %v2733
        %2973 = vmatprep.subr.mxu0 %v2732
        %2974 = vmatpush2.msra.mxu0 %v2731
        %2975 = vmatprep.subr.mxu0 %v2730
        %2976 = vmatpush2.msra.mxu0 %v2729
        %2977 = vmatprep.subr.mxu0 %v2728
        %2978 = vmatpush2.msra.mxu0 %v2727
        %2979 = vmatprep.subr.mxu0 %v2726
        %2980 = vmatpush2.msra.mxu0 %v2725
        %2981 = vmatprep.subr.mxu0 %v2724
        %2982 = vmatpush2.msra.mxu0 %v2723
        %2983 = vmatprep.mubr.f32.mxu0 %v2893
        %2984 = vmatmul.mubr.f32.gmra.mxu0 %v2877
        %v2985 = vpop.f32.mrf.mxu0
        %v2986 = vadd.f32 0.0, %v2985
        %v2987 = vpop.f32.mrf.mxu0
        %v2988 = vadd.f32 0.0, %v2987
        %2989 = vmatprep.mubr.f32.mxu0 %v2896
        %2990 = vmatmul.mubr.f32.gmra.mxu0 %v2879
        %v2991 = vpop.f32.mrf.mxu0
        %v2992 = vadd.f32 0.0, %v2991
        %v2993 = vpop.f32.mrf.mxu0
        %v2994 = vadd.f32 0.0, %v2993
        %2995 = vmatprep.mubr.f32.mxu0 %v2899
        %2996 = vmatmul.mubr.f32.gmra.mxu0 %v2881
        %v2997 = vpop.f32.mrf.mxu0
        %v2998 = vadd.f32 0.0, %v2997
        %v2999 = vpop.f32.mrf.mxu0
        %v3000 = vadd.f32 0.0, %v2999
        %3001 = vmatprep.mubr.f32.mxu0 %v2902
        %3002 = vmatmul.mubr.f32.gmra.mxu0 %v2883
        %v3003 = vpop.f32.mrf.mxu0
        %v3004 = vadd.f32 0.0, %v3003
        %v3005 = vpop.f32.mrf.mxu0
        %v3006 = vadd.f32 0.0, %v3005
        %3007 = vmatprep.mubr.f32.mxu0 %v2905
        %3008 = vmatmul.mubr.f32.gmra.mxu0 %v2885
        %v3009 = vpop.f32.mrf.mxu0
        %v3010 = vadd.f32 0.0, %v3009
        %v3011 = vpop.f32.mrf.mxu0
        %v3012 = vadd.f32 0.0, %v3011
        %3013 = vmatprep.mubr.f32.mxu0 %v2908
        %3014 = vmatmul.mubr.f32.gmra.mxu0 %v2887
        %v3015 = vpop.f32.mrf.mxu0
        %v3016 = vadd.f32 0.0, %v3015
        %v3017 = vpop.f32.mrf.mxu0
        %v3018 = vadd.f32 0.0, %v3017
        %3019 = vmatprep.mubr.f32.mxu0 %v2911
        %3020 = vmatmul.mubr.f32.gmra.mxu0 %v2889
        %v3021 = vpop.f32.mrf.mxu0
        %v3022 = vadd.f32 0.0, %v3021
        %v3023 = vpop.f32.mrf.mxu0
        %v3024 = vadd.f32 0.0, %v3023
        %3025 = vdwg.mxu0
        %3033 = vrot.lane.b32.xlu0 %v2115, 120
        %v3034 = vpop.permute.xlu0 %3033
        %3035 = vrot.lane.b32.xlu0 %v2120, 120
        %v3036 = vpop.permute.xlu0 %3035
        %3037 = vrot.lane.b32.xlu0 %v2125, 120
        %v3038 = vpop.permute.xlu0 %3037
        %3039 = vrot.lane.b32.xlu0 %v2130, 120
        %v3040 = vpop.permute.xlu0 %3039
        %3041 = vrot.lane.b32.xlu0 %v2135, 120
        %v3042 = vpop.permute.xlu0 %3041
        %3043 = vrot.lane.b32.xlu0 %v2140, 120
        %v3044 = vpop.permute.xlu0 %3043
        %3045 = vrot.lane.b32.xlu0 %v2145, 120
        %v3046 = vpop.permute.xlu0 %3045
        %v3047 = vsel %vm2743, %v3034, 0
        %v3049 = vsel %vm2743, %v3036, 0
        %v3051 = vsel %vm2743, %v3038, 0
        %v3053 = vsel %vm2743, %v3040, 0
        %v3055 = vsel %vm2743, %v3042, 0
        %v3057 = vsel %vm2743, %v3044, 0
        %v3059 = vsel %vm2743, %v3046, 0
        %3061 = vmatprep.subr.mxu0 0.0
        %3062 = vmatpush1.msra.mxu0 0.0
        %3063 = vmatprep.subr.mxu0 0.0
        %3064 = vmatpush1.msra.mxu0 0.0
        %3065 = vmatprep.subr.mxu0 0.0
        %3066 = vmatpush1.msra.mxu0 0.0
        %3067 = vmatprep.subr.mxu0 0.0
        %3068 = vmatpush1.msra.mxu0 0.0
        %3069 = vmatprep.subr.mxu0 0.0
        %3070 = vmatpush1.msra.mxu0 0.0
        %3071 = vmatprep.subr.mxu0 0.0
        %3072 = vmatpush1.msra.mxu0 0.0
        %3073 = vmatprep.subr.mxu0 0.0
        %3074 = vmatpush1.msra.mxu0 0.0
        %3075 = vmatprep.subr.mxu0 0.0
        %3076 = vmatpush1.msra.mxu0 0.0
        %3077 = vmatprep.subr.mxu0 0.0
        %3078 = vmatpush1.msra.mxu0 0.0
        %3079 = vmatprep.subr.mxu0 0.0
        %3080 = vmatpush1.msra.mxu0 0.0
        %3081 = vmatprep.subr.mxu0 0.0
        %3082 = vmatpush1.msra.mxu0 0.0
        %3083 = vmatprep.subr.mxu0 0.0
        %3084 = vmatpush1.msra.mxu0 0.0
        %3085 = vmatprep.subr.mxu0 0.0
        %3086 = vmatpush1.msra.mxu0 0.0
        %3087 = vmatprep.subr.mxu0 0.0
        %3088 = vmatpush1.msra.mxu0 0.0
        %3089 = vmatprep.subr.mxu0 0.0
        %3090 = vmatpush1.msra.mxu0 0.0
        %3091 = vmatprep.subr.mxu0 %v2768
        %3092 = vmatpush1.msra.mxu0 %v2766
        %3093 = vmatprep.subr.mxu0 0.0
        %3094 = vmatpush2.msra.mxu0 0.0
        %3095 = vmatprep.subr.mxu0 0.0
        %3096 = vmatpush2.msra.mxu0 0.0
        %3097 = vmatprep.subr.mxu0 0.0
        %3098 = vmatpush2.msra.mxu0 0.0
        %3099 = vmatprep.subr.mxu0 0.0
        %3100 = vmatpush2.msra.mxu0 0.0
        %3101 = vmatprep.subr.mxu0 0.0
        %3102 = vmatpush2.msra.mxu0 0.0
        %3103 = vmatprep.subr.mxu0 0.0
        %3104 = vmatpush2.msra.mxu0 0.0
        %3105 = vmatprep.subr.mxu0 0.0
        %3106 = vmatpush2.msra.mxu0 0.0
        %3107 = vmatprep.subr.mxu0 0.0
        %3108 = vmatpush2.msra.mxu0 0.0
        %3109 = vmatprep.subr.mxu0 0.0
        %3110 = vmatpush2.msra.mxu0 0.0
        %3111 = vmatprep.subr.mxu0 0.0
        %3112 = vmatpush2.msra.mxu0 0.0
        %3113 = vmatprep.subr.mxu0 0.0
        %3114 = vmatpush2.msra.mxu0 0.0
        %3115 = vmatprep.subr.mxu0 0.0
        %3116 = vmatpush2.msra.mxu0 0.0
        %3117 = vmatprep.subr.mxu0 0.0
        %3118 = vmatpush2.msra.mxu0 0.0
        %3119 = vmatprep.subr.mxu0 0.0
        %3120 = vmatpush2.msra.mxu0 0.0
        %3121 = vmatprep.subr.mxu0 0.0
        %3122 = vmatpush2.msra.mxu0 0.0
        %3123 = vmatprep.subr.mxu0 0.0
        %3124 = vmatpush2.msra.mxu0 0.0
        %3125 = vmatprep.mubr.f32.mxu0 0.0
        %3126 = vmatmul.mubr.f32.gmra.mxu0 %v3047
        %v3127 = vpop.f32.mrf.mxu0
        %v3128 = vadd.f32 0.0, %v3127
        %v3129 = vpop.f32.mrf.mxu0
        %v3130 = vadd.f32 0.0, %v3129
        %3131 = vmatprep.mubr.f32.mxu0 0.0
        %3132 = vmatmul.mubr.f32.gmra.mxu0 %v3049
        %v3133 = vpop.f32.mrf.mxu0
        %v3134 = vadd.f32 0.0, %v3133
        %v3135 = vpop.f32.mrf.mxu0
        %v3136 = vadd.f32 0.0, %v3135
        %3137 = vmatprep.mubr.f32.mxu0 0.0
        %3138 = vmatmul.mubr.f32.gmra.mxu0 %v3051
        %v3139 = vpop.f32.mrf.mxu0
        %v3140 = vadd.f32 0.0, %v3139
        %v3141 = vpop.f32.mrf.mxu0
        %v3142 = vadd.f32 0.0, %v3141
        %3143 = vmatprep.mubr.f32.mxu0 0.0
        %3144 = vmatmul.mubr.f32.gmra.mxu0 %v3053
        %v3145 = vpop.f32.mrf.mxu0
        %v3146 = vadd.f32 0.0, %v3145
        %v3147 = vpop.f32.mrf.mxu0
        %v3148 = vadd.f32 0.0, %v3147
        %3149 = vmatprep.mubr.f32.mxu0 0.0
        %3150 = vmatmul.mubr.f32.gmra.mxu0 %v3055
        %v3151 = vpop.f32.mrf.mxu0
        %v3152 = vadd.f32 0.0, %v3151
        %v3153 = vpop.f32.mrf.mxu0
        %v3154 = vadd.f32 0.0, %v3153
        %3155 = vmatprep.mubr.f32.mxu0 0.0
        %3156 = vmatmul.mubr.f32.gmra.mxu0 %v3057
        %v3157 = vpop.f32.mrf.mxu0
        %v3158 = vadd.f32 0.0, %v3157
        %v3159 = vpop.f32.mrf.mxu0
        %v3160 = vadd.f32 0.0, %v3159
        %3161 = vmatprep.mubr.f32.mxu0 0.0
        %3162 = vmatmul.mubr.f32.gmra.mxu0 %v3059
        %v3163 = vpop.f32.mrf.mxu0
        %v3164 = vadd.f32 0.0, %v3163
        %v3165 = vpop.f32.mrf.mxu0
        %v3166 = vadd.f32 0.0, %v3165
        %3167 = vdwg.mxu0
        %v3168 = vmul.f32 %v2986, %v3128
        %v3169 = vmul.f32 %v2988, %v3130
        %v3170 = vmul.f32 %v2992, %v3134
        %v3171 = vmul.f32 %v2994, %v3136
        %v3172 = vmul.f32 %v2998, %v3140
        %v3173 = vmul.f32 %v3000, %v3142
        %v3174 = vmul.f32 %v3004, %v3146
        %v3175 = vmul.f32 %v3006, %v3148
        %v3176 = vmul.f32 %v3010, %v3152
        %v3177 = vmul.f32 %v3012, %v3154
        %v3178 = vmul.f32 %v3016, %v3158
        %v3179 = vmul.f32 %v3018, %v3160
        %v3180 = vmul.f32 %v3022, %v3164
        %v3181 = vmul.f32 %v3024, %v3166
        %v3182 = vadd.f32 %v2651, %v3168
        %v3183 = vadd.f32 %v2653, %v3169
        %v3184 = vadd.f32 %v2657, %v3170
        %v3185 = vadd.f32 %v2659, %v3171
        %v3186 = vadd.f32 %v2663, %v3172
        %v3187 = vadd.f32 %v2665, %v3173
        %v3188 = vadd.f32 %v2669, %v3174
        %v3189 = vadd.f32 %v2671, %v3175
        %v3190 = vadd.f32 %v2675, %v3176
        %v3191 = vadd.f32 %v2677, %v3177
        %v3192 = vadd.f32 %v2681, %v3178
        %v3193 = vadd.f32 %v2683, %v3179
        %v3194 = vadd.f32 %v2687, %v3180
        %v3195 = vadd.f32 %v2689, %v3181
        %3196 = vrot.lane.b32.xlu0 %v2305, 112
        %v3197 = vpop.permute.xlu0 %3196
        %3198 = vrot.lane.b32.xlu0 %v2306, 112
        %v3199 = vpop.permute.xlu0 %3198
        %3200 = vrot.lane.b32.xlu0 %v2307, 112
        %v3201 = vpop.permute.xlu0 %3200
        %3202 = vrot.lane.b32.xlu0 %v2308, 112
        %v3203 = vpop.permute.xlu0 %3202
        %3204 = vrot.lane.b32.xlu0 %v2309, 112
        %v3205 = vpop.permute.xlu0 %3204
        %3206 = vrot.lane.b32.xlu0 %v2310, 112
        %v3207 = vpop.permute.xlu0 %3206
        %3208 = vrot.lane.b32.xlu0 %v2311, 112
        %v3209 = vpop.permute.xlu0 %3208
        %v3210 = vsel %vm2743, %v3197, 0
        %v3212 = vsel %vm2743, %v3199, 0
        %v3214 = vsel %vm2743, %v3201, 0
        %v3216 = vsel %vm2743, %v3203, 0
        %v3218 = vsel %vm2743, %v3205, 0
        %v3220 = vsel %vm2743, %v3207, 0
        %v3222 = vsel %vm2743, %v3209, 0
        %3224 = vmatprep.subr.mxu0 0.0
        %3225 = vmatpush1.msra.mxu0 0.0
        %3226 = vmatprep.subr.mxu0 0.0
        %3227 = vmatpush1.msra.mxu0 0.0
        %3228 = vmatprep.subr.mxu0 0.0
        %3229 = vmatpush1.msra.mxu0 0.0
        %3230 = vmatprep.subr.mxu0 0.0
        %3231 = vmatpush1.msra.mxu0 0.0
        %3232 = vmatprep.subr.mxu0 0.0
        %3233 = vmatpush1.msra.mxu0 0.0
        %3234 = vmatprep.subr.mxu0 0.0
        %3235 = vmatpush1.msra.mxu0 0.0
        %3236 = vmatprep.subr.mxu0 0.0
        %3237 = vmatpush1.msra.mxu0 0.0
        %3238 = vmatprep.subr.mxu0 0.0
        %3239 = vmatpush1.msra.mxu0 0.0
        %3240 = vmatprep.subr.mxu0 0.0
        %3241 = vmatpush1.msra.mxu0 0.0
        %3242 = vmatprep.subr.mxu0 0.0
        %3243 = vmatpush1.msra.mxu0 0.0
        %3244 = vmatprep.subr.mxu0 0.0
        %3245 = vmatpush1.msra.mxu0 0.0
        %3246 = vmatprep.subr.mxu0 0.0
        %3247 = vmatpush1.msra.mxu0 0.0
        %3248 = vmatprep.subr.mxu0 0.0
        %3249 = vmatpush1.msra.mxu0 0.0
        %3250 = vmatprep.subr.mxu0 0.0
        %3251 = vmatpush1.msra.mxu0 0.0
        %3252 = vmatprep.subr.mxu0 0.0
        %3253 = vmatpush1.msra.mxu0 0.0
        %3254 = vmatprep.subr.mxu0 %v2768
        %3255 = vmatpush1.msra.mxu0 %v2766
        %3256 = vmatprep.subr.mxu0 0.0
        %3257 = vmatpush2.msra.mxu0 0.0
        %3258 = vmatprep.subr.mxu0 0.0
        %3259 = vmatpush2.msra.mxu0 0.0
        %3260 = vmatprep.subr.mxu0 0.0
        %3261 = vmatpush2.msra.mxu0 0.0
        %3262 = vmatprep.subr.mxu0 0.0
        %3263 = vmatpush2.msra.mxu0 0.0
        %3264 = vmatprep.subr.mxu0 0.0
        %3265 = vmatpush2.msra.mxu0 0.0
        %3266 = vmatprep.subr.mxu0 0.0
        %3267 = vmatpush2.msra.mxu0 0.0
        %3268 = vmatprep.subr.mxu0 0.0
        %3269 = vmatpush2.msra.mxu0 0.0
        %3270 = vmatprep.subr.mxu0 0.0
        %3271 = vmatpush2.msra.mxu0 0.0
        %3272 = vmatprep.subr.mxu0 0.0
        %3273 = vmatpush2.msra.mxu0 0.0
        %3274 = vmatprep.subr.mxu0 0.0
        %3275 = vmatpush2.msra.mxu0 0.0
        %3276 = vmatprep.subr.mxu0 0.0
        %3277 = vmatpush2.msra.mxu0 0.0
        %3278 = vmatprep.subr.mxu0 0.0
        %3279 = vmatpush2.msra.mxu0 0.0
        %3280 = vmatprep.subr.mxu0 0.0
        %3281 = vmatpush2.msra.mxu0 0.0
        %3282 = vmatprep.subr.mxu0 0.0
        %3283 = vmatpush2.msra.mxu0 0.0
        %3284 = vmatprep.subr.mxu0 0.0
        %3285 = vmatpush2.msra.mxu0 0.0
        %3286 = vmatprep.subr.mxu0 0.0
        %3287 = vmatpush2.msra.mxu0 0.0
        %3288 = vmatprep.mubr.f32.mxu0 0.0
        %3289 = vmatmul.mubr.f32.gmra.mxu0 %v3210
        %v3290 = vpop.f32.mrf.mxu0
        %v3291 = vadd.f32 0.0, %v3290
        %v3292 = vpop.f32.mrf.mxu0
        %v3293 = vadd.f32 0.0, %v3292
        %3294 = vmatprep.mubr.f32.mxu0 0.0
        %3295 = vmatmul.mubr.f32.gmra.mxu0 %v3212
        %v3296 = vpop.f32.mrf.mxu0
        %v3297 = vadd.f32 0.0, %v3296
        %v3298 = vpop.f32.mrf.mxu0
        %v3299 = vadd.f32 0.0, %v3298
        %3300 = vmatprep.mubr.f32.mxu0 0.0
        %3301 = vmatmul.mubr.f32.gmra.mxu0 %v3214
        %v3302 = vpop.f32.mrf.mxu0
        %v3303 = vadd.f32 0.0, %v3302
        %v3304 = vpop.f32.mrf.mxu0
        %v3305 = vadd.f32 0.0, %v3304
        %3306 = vmatprep.mubr.f32.mxu0 0.0
        %3307 = vmatmul.mubr.f32.gmra.mxu0 %v3216
        %v3308 = vpop.f32.mrf.mxu0
        %v3309 = vadd.f32 0.0, %v3308
        %v3310 = vpop.f32.mrf.mxu0
        %v3311 = vadd.f32 0.0, %v3310
        %3312 = vmatprep.mubr.f32.mxu0 0.0
        %3313 = vmatmul.mubr.f32.gmra.mxu0 %v3218
        %v3314 = vpop.f32.mrf.mxu0
        %v3315 = vadd.f32 0.0, %v3314
        %v3316 = vpop.f32.mrf.mxu0
        %v3317 = vadd.f32 0.0, %v3316
        %3318 = vmatprep.mubr.f32.mxu0 0.0
        %3319 = vmatmul.mubr.f32.gmra.mxu0 %v3220
        %v3320 = vpop.f32.mrf.mxu0
        %v3321 = vadd.f32 0.0, %v3320
        %v3322 = vpop.f32.mrf.mxu0
        %v3323 = vadd.f32 0.0, %v3322
        %3324 = vmatprep.mubr.f32.mxu0 0.0
        %3325 = vmatmul.mubr.f32.gmra.mxu0 %v3222
        %v3326 = vpop.f32.mrf.mxu0
        %v3327 = vadd.f32 0.0, %v3326
        %v3328 = vpop.f32.mrf.mxu0
        %v3329 = vadd.f32 0.0, %v3328
        %3330 = vdwg.mxu0
        %v3331 = vmul.f32 %v3291, %v2424
        %v3332 = vmul.f32 %v3293, %v2425
        %v3333 = vmul.f32 %v3297, %v2426
        %v3334 = vmul.f32 %v3299, %v2427
        %v3335 = vmul.f32 %v3303, %v2428
        %v3336 = vmul.f32 %v3305, %v2429
        %v3337 = vmul.f32 %v3309, %v2430
        %v3338 = vmul.f32 %v3311, %v2431
        %v3339 = vmul.f32 %v3315, %v2432
        %v3340 = vmul.f32 %v3317, %v2433
        %v3341 = vmul.f32 %v3321, %v2434
        %v3342 = vmul.f32 %v3323, %v2435
        %v3343 = vmul.f32 %v3327, %v2436
        %v3344 = vmul.f32 %v3329, %v2437
        %v3346 = vsel %vm2438, 1.0, 0
        %v3349 = vsel %vm2451, %v3343, 0
        %v3352 = vsel %vm2451, %v3344, 0
        %3354 = vmatprep.subr.mxu0 0.0
        %3355 = vmatpush1.msra.mxu0 0.0
        %3356 = vmatprep.subr.mxu0 0.0
        %3357 = vmatpush1.msra.mxu0 0.0
        %3358 = vmatprep.subr.mxu0 0.0
        %3359 = vmatpush1.msra.mxu0 0.0
        %3360 = vmatprep.subr.mxu0 0.0
        %3361 = vmatpush1.msra.mxu0 0.0
        %3362 = vmatprep.subr.mxu0 0.0
        %3363 = vmatpush1.msra.mxu0 0.0
        %3364 = vmatprep.subr.mxu0 0.0
        %3365 = vmatpush1.msra.mxu0 0.0
        %3366 = vmatprep.subr.mxu0 0.0
        %3367 = vmatpush1.msra.mxu0 0.0
        %3368 = vmatprep.subr.mxu0 0.0
        %3369 = vmatpush1.msra.mxu0 0.0
        %3370 = vmatprep.subr.mxu0 0.0
        %3371 = vmatpush1.msra.mxu0 0.0
        %3372 = vmatprep.subr.mxu0 %v3352
        %3373 = vmatpush1.msra.mxu0 %v3349
        %3374 = vmatprep.subr.mxu0 %v3342
        %3375 = vmatpush1.msra.mxu0 %v3341
        %3376 = vmatprep.subr.mxu0 %v3340
        %3377 = vmatpush1.msra.mxu0 %v3339
        %3378 = vmatprep.subr.mxu0 %v3338
        %3379 = vmatpush1.msra.mxu0 %v3337
        %3380 = vmatprep.subr.mxu0 %v3336
        %3381 = vmatpush1.msra.mxu0 %v3335
        %3382 = vmatprep.subr.mxu0 %v3334
        %3383 = vmatpush1.msra.mxu0 %v3333
        %3384 = vmatprep.subr.mxu0 %v3332
        %3385 = vmatpush1.msra.mxu0 %v3331
        %3386 = vmatprep.subr.mxu0 0.0
        %3387 = vmatpush2.msra.mxu0 0.0
        %3388 = vmatprep.subr.mxu0 0.0
        %3389 = vmatpush2.msra.mxu0 0.0
        %3390 = vmatprep.subr.mxu0 0.0
        %3391 = vmatpush2.msra.mxu0 0.0
        %3392 = vmatprep.subr.mxu0 0.0
        %3393 = vmatpush2.msra.mxu0 0.0
        %3394 = vmatprep.subr.mxu0 0.0
        %3395 = vmatpush2.msra.mxu0 0.0
        %3396 = vmatprep.subr.mxu0 0.0
        %3397 = vmatpush2.msra.mxu0 0.0
        %3398 = vmatprep.subr.mxu0 0.0
        %3399 = vmatpush2.msra.mxu0 0.0
        %3400 = vmatprep.subr.mxu0 0.0
        %3401 = vmatpush2.msra.mxu0 0.0
        %3402 = vmatprep.subr.mxu0 0.0
        %3403 = vmatpush2.msra.mxu0 0.0
        %3404 = vmatprep.subr.mxu0 0.0
        %3405 = vmatpush2.msra.mxu0 0.0
        %3406 = vmatprep.subr.mxu0 0.0
        %3407 = vmatpush2.msra.mxu0 0.0
        %3408 = vmatprep.subr.mxu0 0.0
        %3409 = vmatpush2.msra.mxu0 0.0
        %3410 = vmatprep.subr.mxu0 0.0
        %3411 = vmatpush2.msra.mxu0 0.0
        %3412 = vmatprep.subr.mxu0 0.0
        %3413 = vmatpush2.msra.mxu0 0.0
        %3414 = vmatprep.subr.mxu0 0.0
        %3415 = vmatpush2.msra.mxu0 0.0
        %3416 = vmatprep.subr.mxu0 0.0
        %3417 = vmatpush2.msra.mxu0 0.0
        %3418 = vmatprep.mubr.f32.mxu0 0.0
        %3419 = vmatmul.mubr.f32.gmra.mxu0 %v3346
        %v3420 = vpop.f32.mrf.mxu0
        %v3421 = vadd.f32 0.0, %v3420
        %v3422 = vpop.f32.mrf.mxu0
        %v3423 = vadd.f32 0.0, %v3422
        %3424 = vdwg.mxu0
        %v3425 = vlaneseq
        %v3426 = vshrl.u32 %v3425, 7
        %v3427 = vsub.s32 0, %v3426
        %v3428 = vrot.slane %v3421, %v3427
        %v3429 = vlaneseq
        %v3430 = vshrl.u32 %v3429, 7
        %v3431 = vsub.s32 0, %v3430
        %v3432 = vrot.slane %v3423, %v3431
        %v3433 = vmul.f32 %v2651, %v3428
        %v3434 = vmul.f32 %v2653, %v3432
        %v3435 = vmul.f32 %v2657, %v3428
        %v3436 = vmul.f32 %v2659, %v3432
        %v3437 = vmul.f32 %v2663, %v3428
        %v3438 = vmul.f32 %v2665, %v3432
        %v3439 = vmul.f32 %v2669, %v3428
        %v3440 = vmul.f32 %v2671, %v3432
        %v3441 = vmul.f32 %v2675, %v3428
        %v3442 = vmul.f32 %v2677, %v3432
        %v3443 = vmul.f32 %v2681, %v3428
        %v3444 = vmul.f32 %v2683, %v3432
        %v3445 = vmul.f32 %v2687, %v3428
        %v3446 = vmul.f32 %v2689, %v3432
        %v3448 = vsel %vm2891, %v3434, 0
        %v3451 = vsel %vm2891, %v3436, 0
        %v3454 = vsel %vm2891, %v3438, 0
        %v3457 = vsel %vm2891, %v3440, 0
        %v3460 = vsel %vm2891, %v3442, 0
        %v3463 = vsel %vm2891, %v3444, 0
        %v3466 = vsel %vm2891, %v3446, 0
        %3468 = vmatprep.subr.mxu0 %v2722
        %3469 = vmatpush1.msra.mxu0 %v2721
        %3470 = vmatprep.subr.mxu0 %v2720
        %3471 = vmatpush1.msra.mxu0 %v2719
        %3472 = vmatprep.subr.mxu0 %v2718
        %3473 = vmatpush1.msra.mxu0 %v2717
        %3474 = vmatprep.subr.mxu0 %v2716
        %3475 = vmatpush1.msra.mxu0 %v2715
        %3476 = vmatprep.subr.mxu0 %v2714
        %3477 = vmatpush1.msra.mxu0 %v2713
        %3478 = vmatprep.subr.mxu0 %v2712
        %3479 = vmatpush1.msra.mxu0 %v2711
        %3480 = vmatprep.subr.mxu0 %v2710
        %3481 = vmatpush1.msra.mxu0 %v2709
        %3482 = vmatprep.subr.mxu0 %v2708
        %3483 = vmatpush1.msra.mxu0 %v2707
        %3484 = vmatprep.subr.mxu0 %v2706
        %3485 = vmatpush1.msra.mxu0 %v2705
        %3486 = vmatprep.subr.mxu0 %v2704
        %3487 = vmatpush1.msra.mxu0 %v2703
        %3488 = vmatprep.subr.mxu0 %v2702
        %3489 = vmatpush1.msra.mxu0 %v2701
        %3490 = vmatprep.subr.mxu0 %v2700
        %3491 = vmatpush1.msra.mxu0 %v2699
        %3492 = vmatprep.subr.mxu0 %v2698
        %3493 = vmatpush1.msra.mxu0 %v2697
        %3494 = vmatprep.subr.mxu0 %v2696
        %3495 = vmatpush1.msra.mxu0 %v2695
        %3496 = vmatprep.subr.mxu0 %v2694
        %3497 = vmatpush1.msra.mxu0 %v2693
        %3498 = vmatprep.subr.mxu0 %v2692
        %3499 = vmatpush1.msra.mxu0 %v2691
        %3500 = vmatprep.subr.mxu0 0.0
        %3501 = vmatpush2.msra.mxu0 0.0
        %3502 = vmatprep.subr.mxu0 0.0
        %3503 = vmatpush2.msra.mxu0 0.0
        %3504 = vmatprep.subr.mxu0 0.0
        %3505 = vmatpush2.msra.mxu0 0.0
        %3506 = vmatprep.subr.mxu0 0.0
        %3507 = vmatpush2.msra.mxu0 0.0
        %3508 = vmatprep.subr.mxu0 0.0
        %3509 = vmatpush2.msra.mxu0 0.0
        %3510 = vmatprep.subr.mxu0 0.0
        %3511 = vmatpush2.msra.mxu0 0.0
        %3512 = vmatprep.subr.mxu0 0.0
        %3513 = vmatpush2.msra.mxu0 0.0
        %3514 = vmatprep.subr.mxu0 %v2917
        %3515 = vmatpush2.msra.mxu0 %v2914
        %3516 = vmatprep.subr.mxu0 %v2738
        %3517 = vmatpush2.msra.mxu0 %v2737
        %3518 = vmatprep.subr.mxu0 %v2736
        %3519 = vmatpush2.msra.mxu0 %v2735
        %3520 = vmatprep.subr.mxu0 %v2734
        %3521 = vmatpush2.msra.mxu0 %v2733
        %3522 = vmatprep.subr.mxu0 %v2732
        %3523 = vmatpush2.msra.mxu0 %v2731
        %3524 = vmatprep.subr.mxu0 %v2730
        %3525 = vmatpush2.msra.mxu0 %v2729
        %3526 = vmatprep.subr.mxu0 %v2728
        %3527 = vmatpush2.msra.mxu0 %v2727
        %3528 = vmatprep.subr.mxu0 %v2726
        %3529 = vmatpush2.msra.mxu0 %v2725
        %3530 = vmatprep.subr.mxu0 %v2724
        %3531 = vmatpush2.msra.mxu0 %v2723
        %3532 = vmatprep.mubr.f32.mxu0 %v3448
        %3533 = vmatmul.mubr.f32.gmra.mxu0 %v3433
        %v3534 = vpop.f32.mrf.mxu0
        %v3535 = vadd.f32 0.0, %v3534
        %v3536 = vpop.f32.mrf.mxu0
        %v3537 = vadd.f32 0.0, %v3536
        %3538 = vmatprep.mubr.f32.mxu0 %v3451
        %3539 = vmatmul.mubr.f32.gmra.mxu0 %v3435
        %v3540 = vpop.f32.mrf.mxu0
        %v3541 = vadd.f32 0.0, %v3540
        %v3542 = vpop.f32.mrf.mxu0
        %v3543 = vadd.f32 0.0, %v3542
        %3544 = vmatprep.mubr.f32.mxu0 %v3454
        %3545 = vmatmul.mubr.f32.gmra.mxu0 %v3437
        %v3546 = vpop.f32.mrf.mxu0
        %v3547 = vadd.f32 0.0, %v3546
        %v3548 = vpop.f32.mrf.mxu0
        %v3549 = vadd.f32 0.0, %v3548
        %3550 = vmatprep.mubr.f32.mxu0 %v3457
        %3551 = vmatmul.mubr.f32.gmra.mxu0 %v3439
        %v3552 = vpop.f32.mrf.mxu0
        %v3553 = vadd.f32 0.0, %v3552
        %v3554 = vpop.f32.mrf.mxu0
        %v3555 = vadd.f32 0.0, %v3554
        %3556 = vmatprep.mubr.f32.mxu0 %v3460
        %3557 = vmatmul.mubr.f32.gmra.mxu0 %v3441
        %v3558 = vpop.f32.mrf.mxu0
        %v3559 = vadd.f32 0.0, %v3558
        %v3560 = vpop.f32.mrf.mxu0
        %v3561 = vadd.f32 0.0, %v3560
        %3562 = vmatprep.mubr.f32.mxu0 %v3463
        %3563 = vmatmul.mubr.f32.gmra.mxu0 %v3443
        %v3564 = vpop.f32.mrf.mxu0
        %v3565 = vadd.f32 0.0, %v3564
        %v3566 = vpop.f32.mrf.mxu0
        %v3567 = vadd.f32 0.0, %v3566
        %3568 = vmatprep.mubr.f32.mxu0 %v3466
        %3569 = vmatmul.mubr.f32.gmra.mxu0 %v3445
        %v3570 = vpop.f32.mrf.mxu0
        %v3571 = vadd.f32 0.0, %v3570
        %v3572 = vpop.f32.mrf.mxu0
        %v3573 = vadd.f32 0.0, %v3572
        %3574 = vdwg.mxu0
        %3575 = vrot.lane.b32.xlu0 %v2115, 104
        %v3576 = vpop.permute.xlu0 %3575
        %3577 = vrot.lane.b32.xlu0 %v2120, 104
        %v3578 = vpop.permute.xlu0 %3577
        %3579 = vrot.lane.b32.xlu0 %v2125, 104
        %v3580 = vpop.permute.xlu0 %3579
        %3581 = vrot.lane.b32.xlu0 %v2130, 104
        %v3582 = vpop.permute.xlu0 %3581
        %3583 = vrot.lane.b32.xlu0 %v2135, 104
        %v3584 = vpop.permute.xlu0 %3583
        %3585 = vrot.lane.b32.xlu0 %v2140, 104
        %v3586 = vpop.permute.xlu0 %3585
        %3587 = vrot.lane.b32.xlu0 %v2145, 104
        %v3588 = vpop.permute.xlu0 %3587
        %v3589 = vsel %vm2743, %v3576, 0
        %v3591 = vsel %vm2743, %v3578, 0
        %v3593 = vsel %vm2743, %v3580, 0
        %v3595 = vsel %vm2743, %v3582, 0
        %v3597 = vsel %vm2743, %v3584, 0
        %v3599 = vsel %vm2743, %v3586, 0
        %v3601 = vsel %vm2743, %v3588, 0
        %3603 = vmatprep.subr.mxu0 0.0
        %3604 = vmatpush1.msra.mxu0 0.0
        %3605 = vmatprep.subr.mxu0 0.0
        %3606 = vmatpush1.msra.mxu0 0.0
        %3607 = vmatprep.subr.mxu0 0.0
        %3608 = vmatpush1.msra.mxu0 0.0
        %3609 = vmatprep.subr.mxu0 0.0
        %3610 = vmatpush1.msra.mxu0 0.0
        %3611 = vmatprep.subr.mxu0 0.0
        %3612 = vmatpush1.msra.mxu0 0.0
        %3613 = vmatprep.subr.mxu0 0.0
        %3614 = vmatpush1.msra.mxu0 0.0
        %3615 = vmatprep.subr.mxu0 0.0
        %3616 = vmatpush1.msra.mxu0 0.0
        %3617 = vmatprep.subr.mxu0 0.0
        %3618 = vmatpush1.msra.mxu0 0.0
        %3619 = vmatprep.subr.mxu0 0.0
        %3620 = vmatpush1.msra.mxu0 0.0
        %3621 = vmatprep.subr.mxu0 0.0
        %3622 = vmatpush1.msra.mxu0 0.0
        %3623 = vmatprep.subr.mxu0 0.0
        %3624 = vmatpush1.msra.mxu0 0.0
        %3625 = vmatprep.subr.mxu0 0.0
        %3626 = vmatpush1.msra.mxu0 0.0
        %3627 = vmatprep.subr.mxu0 0.0
        %3628 = vmatpush1.msra.mxu0 0.0
        %3629 = vmatprep.subr.mxu0 0.0
        %3630 = vmatpush1.msra.mxu0 0.0
        %3631 = vmatprep.subr.mxu0 0.0
        %3632 = vmatpush1.msra.mxu0 0.0
        %3633 = vmatprep.subr.mxu0 %v2768
        %3634 = vmatpush1.msra.mxu0 %v2766
        %3635 = vmatprep.subr.mxu0 0.0
        %3636 = vmatpush2.msra.mxu0 0.0
        %3637 = vmatprep.subr.mxu0 0.0
        %3638 = vmatpush2.msra.mxu0 0.0
        %3639 = vmatprep.subr.mxu0 0.0
        %3640 = vmatpush2.msra.mxu0 0.0
        %3641 = vmatprep.subr.mxu0 0.0
        %3642 = vmatpush2.msra.mxu0 0.0
        %3643 = vmatprep.subr.mxu0 0.0
        %3644 = vmatpush2.msra.mxu0 0.0
        %3645 = vmatprep.subr.mxu0 0.0
        %3646 = vmatpush2.msra.mxu0 0.0
        %3647 = vmatprep.subr.mxu0 0.0
        %3648 = vmatpush2.msra.mxu0 0.0
        %3649 = vmatprep.subr.mxu0 0.0
        %3650 = vmatpush2.msra.mxu0 0.0
        %3651 = vmatprep.subr.mxu0 0.0
        %3652 = vmatpush2.msra.mxu0 0.0
        %3653 = vmatprep.subr.mxu0 0.0
        %3654 = vmatpush2.msra.mxu0 0.0
        %3655 = vmatprep.subr.mxu0 0.0
        %3656 = vmatpush2.msra.mxu0 0.0
        %3657 = vmatprep.subr.mxu0 0.0
        %3658 = vmatpush2.msra.mxu0 0.0
        %3659 = vmatprep.subr.mxu0 0.0
        %3660 = vmatpush2.msra.mxu0 0.0
        %3661 = vmatprep.subr.mxu0 0.0
        %3662 = vmatpush2.msra.mxu0 0.0
        %3663 = vmatprep.subr.mxu0 0.0
        %3664 = vmatpush2.msra.mxu0 0.0
        %3665 = vmatprep.subr.mxu0 0.0
        %3666 = vmatpush2.msra.mxu0 0.0
        %3667 = vmatprep.mubr.f32.mxu0 0.0
        %3668 = vmatmul.mubr.f32.gmra.mxu0 %v3589
        %v3669 = vpop.f32.mrf.mxu0
        %v3670 = vadd.f32 0.0, %v3669
        %v3671 = vpop.f32.mrf.mxu0
        %v3672 = vadd.f32 0.0, %v3671
        %3673 = vmatprep.mubr.f32.mxu0 0.0
        %3674 = vmatmul.mubr.f32.gmra.mxu0 %v3591
        %v3675 = vpop.f32.mrf.mxu0
        %v3676 = vadd.f32 0.0, %v3675
        %v3677 = vpop.f32.mrf.mxu0
        %v3678 = vadd.f32 0.0, %v3677
        %3679 = vmatprep.mubr.f32.mxu0 0.0
        %3680 = vmatmul.mubr.f32.gmra.mxu0 %v3593
        %v3681 = vpop.f32.mrf.mxu0
        %v3682 = vadd.f32 0.0, %v3681
        %v3683 = vpop.f32.mrf.mxu0
        %v3684 = vadd.f32 0.0, %v3683
        %3685 = vmatprep.mubr.f32.mxu0 0.0
        %3686 = vmatmul.mubr.f32.gmra.mxu0 %v3595
        %v3687 = vpop.f32.mrf.mxu0
        %v3688 = vadd.f32 0.0, %v3687
        %v3689 = vpop.f32.mrf.mxu0
        %v3690 = vadd.f32 0.0, %v3689
        %3691 = vmatprep.mubr.f32.mxu0 0.0
        %3692 = vmatmul.mubr.f32.gmra.mxu0 %v3597
        %v3693 = vpop.f32.mrf.mxu0
        %v3694 = vadd.f32 0.0, %v3693
        %v3695 = vpop.f32.mrf.mxu0
        %v3696 = vadd.f32 0.0, %v3695
        %3697 = vmatprep.mubr.f32.mxu0 0.0
        %3698 = vmatmul.mubr.f32.gmra.mxu0 %v3599
        %v3699 = vpop.f32.mrf.mxu0
        %v3700 = vadd.f32 0.0, %v3699
        %v3701 = vpop.f32.mrf.mxu0
        %v3702 = vadd.f32 0.0, %v3701
        %3703 = vmatprep.mubr.f32.mxu0 0.0
        %3704 = vmatmul.mubr.f32.gmra.mxu0 %v3601
        %v3705 = vpop.f32.mrf.mxu0
        %v3706 = vadd.f32 0.0, %v3705
        %v3707 = vpop.f32.mrf.mxu0
        %v3708 = vadd.f32 0.0, %v3707
        %3709 = vdwg.mxu0
        %v3710 = vmul.f32 %v3670, %v2424
        %v3711 = vmul.f32 %v3672, %v2425
        %v3712 = vmul.f32 %v3676, %v2426
        %v3713 = vmul.f32 %v3678, %v2427
        %v3714 = vmul.f32 %v3682, %v2428
        %v3715 = vmul.f32 %v3684, %v2429
        %v3716 = vmul.f32 %v3688, %v2430
        %v3717 = vmul.f32 %v3690, %v2431
        %v3718 = vmul.f32 %v3694, %v2432
        %v3719 = vmul.f32 %v3696, %v2433
        %v3720 = vmul.f32 %v3700, %v2434
        %v3721 = vmul.f32 %v3702, %v2435
        %v3722 = vmul.f32 %v3706, %v2436
        %v3723 = vmul.f32 %v3708, %v2437
        %v3725 = vsel %vm2451, %v3722, 0
        %v3728 = vsel %vm2451, %v3723, 0
        %3730 = vmatprep.subr.mxu0 0.0
        %3731 = vmatpush1.msra.mxu0 0.0
        %3732 = vmatprep.subr.mxu0 0.0
        %3733 = vmatpush1.msra.mxu0 0.0
        %3734 = vmatprep.subr.mxu0 0.0
        %3735 = vmatpush1.msra.mxu0 0.0
        %3736 = vmatprep.subr.mxu0 0.0
        %3737 = vmatpush1.msra.mxu0 0.0
        %3738 = vmatprep.subr.mxu0 0.0
        %3739 = vmatpush1.msra.mxu0 0.0
        %3740 = vmatprep.subr.mxu0 0.0
        %3741 = vmatpush1.msra.mxu0 0.0
        %3742 = vmatprep.subr.mxu0 0.0
        %3743 = vmatpush1.msra.mxu0 0.0
        %3744 = vmatprep.subr.mxu0 0.0
        %3745 = vmatpush1.msra.mxu0 0.0
        %3746 = vmatprep.subr.mxu0 0.0
        %3747 = vmatpush1.msra.mxu0 0.0
        %3748 = vmatprep.subr.mxu0 %v3728
        %3749 = vmatpush1.msra.mxu0 %v3725
        %3750 = vmatprep.subr.mxu0 %v3721
        %3751 = vmatpush1.msra.mxu0 %v3720
        %3752 = vmatprep.subr.mxu0 %v3719
        %3753 = vmatpush1.msra.mxu0 %v3718
        %3754 = vmatprep.subr.mxu0 %v3717
        %3755 = vmatpush1.msra.mxu0 %v3716
        %3756 = vmatprep.subr.mxu0 %v3715
        %3757 = vmatpush1.msra.mxu0 %v3714
        %3758 = vmatprep.subr.mxu0 %v3713
        %3759 = vmatpush1.msra.mxu0 %v3712
        %3760 = vmatprep.subr.mxu0 %v3711
        %3761 = vmatpush1.msra.mxu0 %v3710
        %3762 = vmatprep.subr.mxu0 0.0
        %3763 = vmatpush2.msra.mxu0 0.0
        %3764 = vmatprep.subr.mxu0 0.0
        %3765 = vmatpush2.msra.mxu0 0.0
        %3766 = vmatprep.subr.mxu0 0.0
        %3767 = vmatpush2.msra.mxu0 0.0
        %3768 = vmatprep.subr.mxu0 0.0
        %3769 = vmatpush2.msra.mxu0 0.0
        %3770 = vmatprep.subr.mxu0 0.0
        %3771 = vmatpush2.msra.mxu0 0.0
        %3772 = vmatprep.subr.mxu0 0.0
        %3773 = vmatpush2.msra.mxu0 0.0
        %3774 = vmatprep.subr.mxu0 0.0
        %3775 = vmatpush2.msra.mxu0 0.0
        %3776 = vmatprep.subr.mxu0 0.0
        %3777 = vmatpush2.msra.mxu0 0.0
        %3778 = vmatprep.subr.mxu0 0.0
        %3779 = vmatpush2.msra.mxu0 0.0
        %3780 = vmatprep.subr.mxu0 0.0
        %3781 = vmatpush2.msra.mxu0 0.0
        %3782 = vmatprep.subr.mxu0 0.0
        %3783 = vmatpush2.msra.mxu0 0.0
        %3784 = vmatprep.subr.mxu0 0.0
        %3785 = vmatpush2.msra.mxu0 0.0
        %3786 = vmatprep.subr.mxu0 0.0
        %3787 = vmatpush2.msra.mxu0 0.0
        %3788 = vmatprep.subr.mxu0 0.0
        %3789 = vmatpush2.msra.mxu0 0.0
        %3790 = vmatprep.subr.mxu0 0.0
        %3791 = vmatpush2.msra.mxu0 0.0
        %3792 = vmatprep.subr.mxu0 0.0
        %3793 = vmatpush2.msra.mxu0 0.0
        %3794 = vmatprep.mubr.f32.mxu0 0.0
        %3795 = vmatmul.mubr.f32.gmra.mxu0 %v3346
        %v3796 = vpop.f32.mrf.mxu0
        %v3797 = vadd.f32 0.0, %v3796
        %v3798 = vpop.f32.mrf.mxu0
        %v3799 = vadd.f32 0.0, %v3798
        %3800 = vdwg.mxu0
        %v3801 = vlaneseq
        %v3802 = vshrl.u32 %v3801, 7
        %v3803 = vsub.s32 0, %v3802
        %v3804 = vrot.slane %v3797, %v3803
        %v3805 = vlaneseq
        %v3806 = vshrl.u32 %v3805, 7
        %v3807 = vsub.s32 0, %v3806
        %v3808 = vrot.slane %v3799, %v3807
        %v3809 = vmul.f32 %v3535, %v3804
        %v3810 = vmul.f32 %v3537, %v3808
        %v3811 = vmul.f32 %v3541, %v3804
        %v3812 = vmul.f32 %v3543, %v3808
        %v3813 = vmul.f32 %v3547, %v3804
        %v3814 = vmul.f32 %v3549, %v3808
        %v3815 = vmul.f32 %v3553, %v3804
        %v3816 = vmul.f32 %v3555, %v3808
        %v3817 = vmul.f32 %v3559, %v3804
        %v3818 = vmul.f32 %v3561, %v3808
        %v3819 = vmul.f32 %v3565, %v3804
        %v3820 = vmul.f32 %v3567, %v3808
        %v3821 = vmul.f32 %v3571, %v3804
        %v3822 = vmul.f32 %v3573, %v3808
        %v3823 = vadd.f32 %v3182, %v3809
        %v3824 = vadd.f32 %v3183, %v3810
        %v3825 = vadd.f32 %v3184, %v3811
        %v3826 = vadd.f32 %v3185, %v3812
        %v3827 = vadd.f32 %v3186, %v3813
        %v3828 = vadd.f32 %v3187, %v3814
        %v3829 = vadd.f32 %v3188, %v3815
        %v3830 = vadd.f32 %v3189, %v3816
        %v3831 = vadd.f32 %v3190, %v3817
        %v3832 = vadd.f32 %v3191, %v3818
        %v3833 = vadd.f32 %v3192, %v3819
        %v3834 = vadd.f32 %v3193, %v3820
        %v3835 = vadd.f32 %v3194, %v3821
        %v3836 = vadd.f32 %v3195, %v3822
        %3837 = vrot.lane.b32.xlu0 %v2305, 124
        %v3838 = vpop.permute.xlu0 %3837
        %3839 = vrot.lane.b32.xlu0 %v2306, 124
        %v3840 = vpop.permute.xlu0 %3839
        %3841 = vrot.lane.b32.xlu0 %v2307, 124
        %v3842 = vpop.permute.xlu0 %3841
        %3843 = vrot.lane.b32.xlu0 %v2308, 124
        %v3844 = vpop.permute.xlu0 %3843
        %3845 = vrot.lane.b32.xlu0 %v2309, 124
        %v3846 = vpop.permute.xlu0 %3845
        %3847 = vrot.lane.b32.xlu0 %v2310, 124
        %v3848 = vpop.permute.xlu0 %3847
        %3849 = vrot.lane.b32.xlu0 %v2311, 124
        %v3850 = vpop.permute.xlu0 %3849
        %v3851 = vsel %vm2743, %v3838, 0
        %v3853 = vsel %vm2743, %v3840, 0
        %v3855 = vsel %vm2743, %v3842, 0
        %v3857 = vsel %vm2743, %v3844, 0
        %v3859 = vsel %vm2743, %v3846, 0
        %v3861 = vsel %vm2743, %v3848, 0
        %v3863 = vsel %vm2743, %v3850, 0
        %3865 = vmatprep.subr.mxu0 0.0
        %3866 = vmatpush1.msra.mxu0 0.0
        %3867 = vmatprep.subr.mxu0 0.0
        %3868 = vmatpush1.msra.mxu0 0.0
        %3869 = vmatprep.subr.mxu0 0.0
        %3870 = vmatpush1.msra.mxu0 0.0
        %3871 = vmatprep.subr.mxu0 0.0
        %3872 = vmatpush1.msra.mxu0 0.0
        %3873 = vmatprep.subr.mxu0 0.0
        %3874 = vmatpush1.msra.mxu0 0.0
        %3875 = vmatprep.subr.mxu0 0.0
        %3876 = vmatpush1.msra.mxu0 0.0
        %3877 = vmatprep.subr.mxu0 0.0
        %3878 = vmatpush1.msra.mxu0 0.0
        %3879 = vmatprep.subr.mxu0 0.0
        %3880 = vmatpush1.msra.mxu0 0.0
        %3881 = vmatprep.subr.mxu0 0.0
        %3882 = vmatpush1.msra.mxu0 0.0
        %3883 = vmatprep.subr.mxu0 0.0
        %3884 = vmatpush1.msra.mxu0 0.0
        %3885 = vmatprep.subr.mxu0 0.0
        %3886 = vmatpush1.msra.mxu0 0.0
        %3887 = vmatprep.subr.mxu0 0.0
        %3888 = vmatpush1.msra.mxu0 0.0
        %3889 = vmatprep.subr.mxu0 0.0
        %3890 = vmatpush1.msra.mxu0 0.0
        %3891 = vmatprep.subr.mxu0 0.0
        %3892 = vmatpush1.msra.mxu0 0.0
        %3893 = vmatprep.subr.mxu0 0.0
        %3894 = vmatpush1.msra.mxu0 0.0
        %3895 = vmatprep.subr.mxu0 %v2768
        %3896 = vmatpush1.msra.mxu0 %v2766
        %3897 = vmatprep.subr.mxu0 0.0
        %3898 = vmatpush2.msra.mxu0 0.0
        %3899 = vmatprep.subr.mxu0 0.0
        %3900 = vmatpush2.msra.mxu0 0.0
        %3901 = vmatprep.subr.mxu0 0.0
        %3902 = vmatpush2.msra.mxu0 0.0
        %3903 = vmatprep.subr.mxu0 0.0
        %3904 = vmatpush2.msra.mxu0 0.0
        %3905 = vmatprep.subr.mxu0 0.0
        %3906 = vmatpush2.msra.mxu0 0.0
        %3907 = vmatprep.subr.mxu0 0.0
        %3908 = vmatpush2.msra.mxu0 0.0
        %3909 = vmatprep.subr.mxu0 0.0
        %3910 = vmatpush2.msra.mxu0 0.0
        %3911 = vmatprep.subr.mxu0 0.0
        %3912 = vmatpush2.msra.mxu0 0.0
        %3913 = vmatprep.subr.mxu0 0.0
        %3914 = vmatpush2.msra.mxu0 0.0
        %3915 = vmatprep.subr.mxu0 0.0
        %3916 = vmatpush2.msra.mxu0 0.0
        %3917 = vmatprep.subr.mxu0 0.0
        %3918 = vmatpush2.msra.mxu0 0.0
        %3919 = vmatprep.subr.mxu0 0.0
        %3920 = vmatpush2.msra.mxu0 0.0
        %3921 = vmatprep.subr.mxu0 0.0
        %3922 = vmatpush2.msra.mxu0 0.0
        %3923 = vmatprep.subr.mxu0 0.0
        %3924 = vmatpush2.msra.mxu0 0.0
        %3925 = vmatprep.subr.mxu0 0.0
        %3926 = vmatpush2.msra.mxu0 0.0
        %3927 = vmatprep.subr.mxu0 0.0
        %3928 = vmatpush2.msra.mxu0 0.0
        %3929 = vmatprep.mubr.f32.mxu0 0.0
        %3930 = vmatmul.mubr.f32.gmra.mxu0 %v3851
        %v3931 = vpop.f32.mrf.mxu0
        %v3932 = vadd.f32 0.0, %v3931
        %v3933 = vpop.f32.mrf.mxu0
        %v3934 = vadd.f32 0.0, %v3933
        %3935 = vmatprep.mubr.f32.mxu0 0.0
        %3936 = vmatmul.mubr.f32.gmra.mxu0 %v3853
        %v3937 = vpop.f32.mrf.mxu0
        %v3938 = vadd.f32 0.0, %v3937
        %v3939 = vpop.f32.mrf.mxu0
        %v3940 = vadd.f32 0.0, %v3939
        %3941 = vmatprep.mubr.f32.mxu0 0.0
        %3942 = vmatmul.mubr.f32.gmra.mxu0 %v3855
        %v3943 = vpop.f32.mrf.mxu0
        %v3944 = vadd.f32 0.0, %v3943
        %v3945 = vpop.f32.mrf.mxu0
        %v3946 = vadd.f32 0.0, %v3945
        %3947 = vmatprep.mubr.f32.mxu0 0.0
        %3948 = vmatmul.mubr.f32.gmra.mxu0 %v3857
        %v3949 = vpop.f32.mrf.mxu0
        %v3950 = vadd.f32 0.0, %v3949
        %v3951 = vpop.f32.mrf.mxu0
        %v3952 = vadd.f32 0.0, %v3951
        %3953 = vmatprep.mubr.f32.mxu0 0.0
        %3954 = vmatmul.mubr.f32.gmra.mxu0 %v3859
        %v3955 = vpop.f32.mrf.mxu0
        %v3956 = vadd.f32 0.0, %v3955
        %v3957 = vpop.f32.mrf.mxu0
        %v3958 = vadd.f32 0.0, %v3957
        %3959 = vmatprep.mubr.f32.mxu0 0.0
        %3960 = vmatmul.mubr.f32.gmra.mxu0 %v3861
        %v3961 = vpop.f32.mrf.mxu0
        %v3962 = vadd.f32 0.0, %v3961
        %v3963 = vpop.f32.mrf.mxu0
        %v3964 = vadd.f32 0.0, %v3963
        %3965 = vmatprep.mubr.f32.mxu0 0.0
        %3966 = vmatmul.mubr.f32.gmra.mxu0 %v3863
        %v3967 = vpop.f32.mrf.mxu0
        %v3968 = vadd.f32 0.0, %v3967
        %v3969 = vpop.f32.mrf.mxu0
        %v3970 = vadd.f32 0.0, %v3969
        %3971 = vdwg.mxu0
        %v3972 = vmul.f32 %v2651, %v3932
        %v3973 = vmul.f32 %v2653, %v3934
        %v3974 = vmul.f32 %v2657, %v3938
        %v3975 = vmul.f32 %v2659, %v3940
        %v3976 = vmul.f32 %v2663, %v3944
        %v3977 = vmul.f32 %v2665, %v3946
        %v3978 = vmul.f32 %v2669, %v3950
        %v3979 = vmul.f32 %v2671, %v3952
        %v3980 = vmul.f32 %v2675, %v3956
        %v3981 = vmul.f32 %v2677, %v3958
        %v3982 = vmul.f32 %v2681, %v3962
        %v3983 = vmul.f32 %v2683, %v3964
        %v3984 = vmul.f32 %v2687, %v3968
        %v3985 = vmul.f32 %v2689, %v3970
        %v3987 = vsel %vm2891, %v3973, 0
        %v3990 = vsel %vm2891, %v3975, 0
        %v3993 = vsel %vm2891, %v3977, 0
        %v3996 = vsel %vm2891, %v3979, 0
        %v3999 = vsel %vm2891, %v3981, 0
        %v4002 = vsel %vm2891, %v3983, 0
        %v4005 = vsel %vm2891, %v3985, 0
        %4007 = vmatprep.subr.mxu0 %v2722
        %4008 = vmatpush1.msra.mxu0 %v2721
        %4009 = vmatprep.subr.mxu0 %v2720
        %4010 = vmatpush1.msra.mxu0 %v2719
        %4011 = vmatprep.subr.mxu0 %v2718
        %4012 = vmatpush1.msra.mxu0 %v2717
        %4013 = vmatprep.subr.mxu0 %v2716
        %4014 = vmatpush1.msra.mxu0 %v2715
        %4015 = vmatprep.subr.mxu0 %v2714
        %4016 = vmatpush1.msra.mxu0 %v2713
        %4017 = vmatprep.subr.mxu0 %v2712
        %4018 = vmatpush1.msra.mxu0 %v2711
        %4019 = vmatprep.subr.mxu0 %v2710
        %4020 = vmatpush1.msra.mxu0 %v2709
        %4021 = vmatprep.subr.mxu0 %v2708
        %4022 = vmatpush1.msra.mxu0 %v2707
        %4023 = vmatprep.subr.mxu0 %v2706
        %4024 = vmatpush1.msra.mxu0 %v2705
        %4025 = vmatprep.subr.mxu0 %v2704
        %4026 = vmatpush1.msra.mxu0 %v2703
        %4027 = vmatprep.subr.mxu0 %v2702
        %4028 = vmatpush1.msra.mxu0 %v2701
        %4029 = vmatprep.subr.mxu0 %v2700
        %4030 = vmatpush1.msra.mxu0 %v2699
        %4031 = vmatprep.subr.mxu0 %v2698
        %4032 = vmatpush1.msra.mxu0 %v2697
        %4033 = vmatprep.subr.mxu0 %v2696
        %4034 = vmatpush1.msra.mxu0 %v2695
        %4035 = vmatprep.subr.mxu0 %v2694
        %4036 = vmatpush1.msra.mxu0 %v2693
        %4037 = vmatprep.subr.mxu0 %v2692
        %4038 = vmatpush1.msra.mxu0 %v2691
        %4039 = vmatprep.subr.mxu0 0.0
        %4040 = vmatpush2.msra.mxu0 0.0
        %4041 = vmatprep.subr.mxu0 0.0
        %4042 = vmatpush2.msra.mxu0 0.0
        %4043 = vmatprep.subr.mxu0 0.0
        %4044 = vmatpush2.msra.mxu0 0.0
        %4045 = vmatprep.subr.mxu0 0.0
        %4046 = vmatpush2.msra.mxu0 0.0
        %4047 = vmatprep.subr.mxu0 0.0
        %4048 = vmatpush2.msra.mxu0 0.0
        %4049 = vmatprep.subr.mxu0 0.0
        %4050 = vmatpush2.msra.mxu0 0.0
        %4051 = vmatprep.subr.mxu0 0.0
        %4052 = vmatpush2.msra.mxu0 0.0
        %4053 = vmatprep.subr.mxu0 %v2917
        %4054 = vmatpush2.msra.mxu0 %v2914
        %4055 = vmatprep.subr.mxu0 %v2738
        %4056 = vmatpush2.msra.mxu0 %v2737
        %4057 = vmatprep.subr.mxu0 %v2736
        %4058 = vmatpush2.msra.mxu0 %v2735
        %4059 = vmatprep.subr.mxu0 %v2734
        %4060 = vmatpush2.msra.mxu0 %v2733
        %4061 = vmatprep.subr.mxu0 %v2732
        %4062 = vmatpush2.msra.mxu0 %v2731
        %4063 = vmatprep.subr.mxu0 %v2730
        %4064 = vmatpush2.msra.mxu0 %v2729
        %4065 = vmatprep.subr.mxu0 %v2728
        %4066 = vmatpush2.msra.mxu0 %v2727
        %4067 = vmatprep.subr.mxu0 %v2726
        %4068 = vmatpush2.msra.mxu0 %v2725
        %4069 = vmatprep.subr.mxu0 %v2724
        %4070 = vmatpush2.msra.mxu0 %v2723
        %4071 = vmatprep.mubr.f32.mxu0 %v3987
        %4072 = vmatmul.mubr.f32.gmra.mxu0 %v3972
        %v4073 = vpop.f32.mrf.mxu0
        %v4074 = vadd.f32 0.0, %v4073
        %v4075 = vpop.f32.mrf.mxu0
        %v4076 = vadd.f32 0.0, %v4075
        %4077 = vmatprep.mubr.f32.mxu0 %v3990
        %4078 = vmatmul.mubr.f32.gmra.mxu0 %v3974
        %v4079 = vpop.f32.mrf.mxu0
        %v4080 = vadd.f32 0.0, %v4079
        %v4081 = vpop.f32.mrf.mxu0
        %v4082 = vadd.f32 0.0, %v4081
        %4083 = vmatprep.mubr.f32.mxu0 %v3993
        %4084 = vmatmul.mubr.f32.gmra.mxu0 %v3976
        %v4085 = vpop.f32.mrf.mxu0
        %v4086 = vadd.f32 0.0, %v4085
        %v4087 = vpop.f32.mrf.mxu0
        %v4088 = vadd.f32 0.0, %v4087
        %4089 = vmatprep.mubr.f32.mxu0 %v3996
        %4090 = vmatmul.mubr.f32.gmra.mxu0 %v3978
        %v4091 = vpop.f32.mrf.mxu0
        %v4092 = vadd.f32 0.0, %v4091
        %v4093 = vpop.f32.mrf.mxu0
        %v4094 = vadd.f32 0.0, %v4093
        %4095 = vmatprep.mubr.f32.mxu0 %v3999
        %4096 = vmatmul.mubr.f32.gmra.mxu0 %v3980
        %v4097 = vpop.f32.mrf.mxu0
        %v4098 = vadd.f32 0.0, %v4097
        %v4099 = vpop.f32.mrf.mxu0
        %v4100 = vadd.f32 0.0, %v4099
        %4101 = vmatprep.mubr.f32.mxu0 %v4002
        %4102 = vmatmul.mubr.f32.gmra.mxu0 %v3982
        %v4103 = vpop.f32.mrf.mxu0
        %v4104 = vadd.f32 0.0, %v4103
        %v4105 = vpop.f32.mrf.mxu0
        %v4106 = vadd.f32 0.0, %v4105
        %4107 = vmatprep.mubr.f32.mxu0 %v4005
        %4108 = vmatmul.mubr.f32.gmra.mxu0 %v3984
        %v4109 = vpop.f32.mrf.mxu0
        %v4110 = vadd.f32 0.0, %v4109
        %v4111 = vpop.f32.mrf.mxu0
        %v4112 = vadd.f32 0.0, %v4111
        %4113 = vdwg.mxu0
        %4114 = vrot.lane.b32.xlu0 %v2115, 116
        %v4115 = vpop.permute.xlu0 %4114
        %4116 = vrot.lane.b32.xlu0 %v2120, 116
        %v4117 = vpop.permute.xlu0 %4116
        %4118 = vrot.lane.b32.xlu0 %v2125, 116
        %v4119 = vpop.permute.xlu0 %4118
        %4120 = vrot.lane.b32.xlu0 %v2130, 116
        %v4121 = vpop.permute.xlu0 %4120
        %4122 = vrot.lane.b32.xlu0 %v2135, 116
        %v4123 = vpop.permute.xlu0 %4122
        %4124 = vrot.lane.b32.xlu0 %v2140, 116
        %v4125 = vpop.permute.xlu0 %4124
        %4126 = vrot.lane.b32.xlu0 %v2145, 116
        %v4127 = vpop.permute.xlu0 %4126
        %v4128 = vsel %vm2743, %v4115, 0
        %v4130 = vsel %vm2743, %v4117, 0
        %v4132 = vsel %vm2743, %v4119, 0
        %v4134 = vsel %vm2743, %v4121, 0
        %v4136 = vsel %vm2743, %v4123, 0
        %v4138 = vsel %vm2743, %v4125, 0
        %v4140 = vsel %vm2743, %v4127, 0
        %4142 = vmatprep.subr.mxu0 0.0
        %4143 = vmatpush1.msra.mxu0 0.0
        %4144 = vmatprep.subr.mxu0 0.0
        %4145 = vmatpush1.msra.mxu0 0.0
        %4146 = vmatprep.subr.mxu0 0.0
        %4147 = vmatpush1.msra.mxu0 0.0
        %4148 = vmatprep.subr.mxu0 0.0
        %4149 = vmatpush1.msra.mxu0 0.0
        %4150 = vmatprep.subr.mxu0 0.0
        %4151 = vmatpush1.msra.mxu0 0.0
        %4152 = vmatprep.subr.mxu0 0.0
        %4153 = vmatpush1.msra.mxu0 0.0
        %4154 = vmatprep.subr.mxu0 0.0
        %4155 = vmatpush1.msra.mxu0 0.0
        %4156 = vmatprep.subr.mxu0 0.0
        %4157 = vmatpush1.msra.mxu0 0.0
        %4158 = vmatprep.subr.mxu0 0.0
        %4159 = vmatpush1.msra.mxu0 0.0
        %4160 = vmatprep.subr.mxu0 0.0
        %4161 = vmatpush1.msra.mxu0 0.0
        %4162 = vmatprep.subr.mxu0 0.0
        %4163 = vmatpush1.msra.mxu0 0.0
        %4164 = vmatprep.subr.mxu0 0.0
        %4165 = vmatpush1.msra.mxu0 0.0
        %4166 = vmatprep.subr.mxu0 0.0
        %4167 = vmatpush1.msra.mxu0 0.0
        %4168 = vmatprep.subr.mxu0 0.0
        %4169 = vmatpush1.msra.mxu0 0.0
        %4170 = vmatprep.subr.mxu0 0.0
        %4171 = vmatpush1.msra.mxu0 0.0
        %4172 = vmatprep.subr.mxu0 %v2768
        %4173 = vmatpush1.msra.mxu0 %v2766
        %4174 = vmatprep.subr.mxu0 0.0
        %4175 = vmatpush2.msra.mxu0 0.0
        %4176 = vmatprep.subr.mxu0 0.0
        %4177 = vmatpush2.msra.mxu0 0.0
        %4178 = vmatprep.subr.mxu0 0.0
        %4179 = vmatpush2.msra.mxu0 0.0
        %4180 = vmatprep.subr.mxu0 0.0
        %4181 = vmatpush2.msra.mxu0 0.0
        %4182 = vmatprep.subr.mxu0 0.0
        %4183 = vmatpush2.msra.mxu0 0.0
        %4184 = vmatprep.subr.mxu0 0.0
        %4185 = vmatpush2.msra.mxu0 0.0
        %4186 = vmatprep.subr.mxu0 0.0
        %4187 = vmatpush2.msra.mxu0 0.0
        %4188 = vmatprep.subr.mxu0 0.0
        %4189 = vmatpush2.msra.mxu0 0.0
        %4190 = vmatprep.subr.mxu0 0.0
        %4191 = vmatpush2.msra.mxu0 0.0
        %4192 = vmatprep.subr.mxu0 0.0
        %4193 = vmatpush2.msra.mxu0 0.0
        %4194 = vmatprep.subr.mxu0 0.0
        %4195 = vmatpush2.msra.mxu0 0.0
        %4196 = vmatprep.subr.mxu0 0.0
        %4197 = vmatpush2.msra.mxu0 0.0
        %4198 = vmatprep.subr.mxu0 0.0
        %4199 = vmatpush2.msra.mxu0 0.0
        %4200 = vmatprep.subr.mxu0 0.0
        %4201 = vmatpush2.msra.mxu0 0.0
        %4202 = vmatprep.subr.mxu0 0.0
        %4203 = vmatpush2.msra.mxu0 0.0
        %4204 = vmatprep.subr.mxu0 0.0
        %4205 = vmatpush2.msra.mxu0 0.0
        %4206 = vmatprep.mubr.f32.mxu0 0.0
        %4207 = vmatmul.mubr.f32.gmra.mxu0 %v4128
        %v4208 = vpop.f32.mrf.mxu0
        %v4209 = vadd.f32 0.0, %v4208
        %v4210 = vpop.f32.mrf.mxu0
        %v4211 = vadd.f32 0.0, %v4210
        %4212 = vmatprep.mubr.f32.mxu0 0.0
        %4213 = vmatmul.mubr.f32.gmra.mxu0 %v4130
        %v4214 = vpop.f32.mrf.mxu0
        %v4215 = vadd.f32 0.0, %v4214
        %v4216 = vpop.f32.mrf.mxu0
        %v4217 = vadd.f32 0.0, %v4216
        %4218 = vmatprep.mubr.f32.mxu0 0.0
        %4219 = vmatmul.mubr.f32.gmra.mxu0 %v4132
        %v4220 = vpop.f32.mrf.mxu0
        %v4221 = vadd.f32 0.0, %v4220
        %v4222 = vpop.f32.mrf.mxu0
        %v4223 = vadd.f32 0.0, %v4222
        %4224 = vmatprep.mubr.f32.mxu0 0.0
        %4225 = vmatmul.mubr.f32.gmra.mxu0 %v4134
        %v4226 = vpop.f32.mrf.mxu0
        %v4227 = vadd.f32 0.0, %v4226
        %v4228 = vpop.f32.mrf.mxu0
        %v4229 = vadd.f32 0.0, %v4228
        %4230 = vmatprep.mubr.f32.mxu0 0.0
        %4231 = vmatmul.mubr.f32.gmra.mxu0 %v4136
        %v4232 = vpop.f32.mrf.mxu0
        %v4233 = vadd.f32 0.0, %v4232
        %v4234 = vpop.f32.mrf.mxu0
        %v4235 = vadd.f32 0.0, %v4234
        %4236 = vmatprep.mubr.f32.mxu0 0.0
        %4237 = vmatmul.mubr.f32.gmra.mxu0 %v4138
        %v4238 = vpop.f32.mrf.mxu0
        %v4239 = vadd.f32 0.0, %v4238
        %v4240 = vpop.f32.mrf.mxu0
        %v4241 = vadd.f32 0.0, %v4240
        %4242 = vmatprep.mubr.f32.mxu0 0.0
        %4243 = vmatmul.mubr.f32.gmra.mxu0 %v4140
        %v4244 = vpop.f32.mrf.mxu0
        %v4245 = vadd.f32 0.0, %v4244
        %v4246 = vpop.f32.mrf.mxu0
        %v4247 = vadd.f32 0.0, %v4246
        %4248 = vdwg.mxu0
        %v4249 = vmul.f32 %v4074, %v4209
        %v4250 = vmul.f32 %v4076, %v4211
        %v4251 = vmul.f32 %v4080, %v4215
        %v4252 = vmul.f32 %v4082, %v4217
        %v4253 = vmul.f32 %v4086, %v4221
        %v4254 = vmul.f32 %v4088, %v4223
        %v4255 = vmul.f32 %v4092, %v4227
        %v4256 = vmul.f32 %v4094, %v4229
        %v4257 = vmul.f32 %v4098, %v4233
        %v4258 = vmul.f32 %v4100, %v4235
        %v4259 = vmul.f32 %v4104, %v4239
        %v4260 = vmul.f32 %v4106, %v4241
        %v4261 = vmul.f32 %v4110, %v4245
        %v4262 = vmul.f32 %v4112, %v4247
        %v4263 = vadd.f32 %v3823, %v4249
        %v4264 = vadd.f32 %v3824, %v4250
        %v4265 = vadd.f32 %v3825, %v4251
        %v4266 = vadd.f32 %v3826, %v4252
        %v4267 = vadd.f32 %v3827, %v4253
        %v4268 = vadd.f32 %v3828, %v4254
        %v4269 = vadd.f32 %v3829, %v4255
        %v4270 = vadd.f32 %v3830, %v4256
        %v4271 = vadd.f32 %v3831, %v4257
        %v4272 = vadd.f32 %v3832, %v4258
        %v4273 = vadd.f32 %v3833, %v4259
        %v4274 = vadd.f32 %v3834, %v4260
        %v4275 = vadd.f32 %v3835, %v4261
        %v4276 = vadd.f32 %v3836, %v4262
        %4277 = vrot.lane.b32.xlu0 %v2305, 108
        %v4278 = vpop.permute.xlu0 %4277
        %4279 = vrot.lane.b32.xlu0 %v2306, 108
        %v4280 = vpop.permute.xlu0 %4279
        %4281 = vrot.lane.b32.xlu0 %v2307, 108
        %v4282 = vpop.permute.xlu0 %4281
        %4283 = vrot.lane.b32.xlu0 %v2308, 108
        %v4284 = vpop.permute.xlu0 %4283
        %4285 = vrot.lane.b32.xlu0 %v2309, 108
        %v4286 = vpop.permute.xlu0 %4285
        %4287 = vrot.lane.b32.xlu0 %v2310, 108
        %v4288 = vpop.permute.xlu0 %4287
        %4289 = vrot.lane.b32.xlu0 %v2311, 108
        %v4290 = vpop.permute.xlu0 %4289
        %v4291 = vsel %vm2743, %v4278, 0
        %v4293 = vsel %vm2743, %v4280, 0
        %v4295 = vsel %vm2743, %v4282, 0
        %v4297 = vsel %vm2743, %v4284, 0
        %v4299 = vsel %vm2743, %v4286, 0
        %v4301 = vsel %vm2743, %v4288, 0
        %v4303 = vsel %vm2743, %v4290, 0
        %4305 = vmatprep.subr.mxu0 0.0
        %4306 = vmatpush1.msra.mxu0 0.0
        %4307 = vmatprep.subr.mxu0 0.0
        %4308 = vmatpush1.msra.mxu0 0.0
        %4309 = vmatprep.subr.mxu0 0.0
        %4310 = vmatpush1.msra.mxu0 0.0
        %4311 = vmatprep.subr.mxu0 0.0
        %4312 = vmatpush1.msra.mxu0 0.0
        %4313 = vmatprep.subr.mxu0 0.0
        %4314 = vmatpush1.msra.mxu0 0.0
        %4315 = vmatprep.subr.mxu0 0.0
        %4316 = vmatpush1.msra.mxu0 0.0
        %4317 = vmatprep.subr.mxu0 0.0
        %4318 = vmatpush1.msra.mxu0 0.0
        %4319 = vmatprep.subr.mxu0 0.0
        %4320 = vmatpush1.msra.mxu0 0.0
        %4321 = vmatprep.subr.mxu0 0.0
        %4322 = vmatpush1.msra.mxu0 0.0
        %4323 = vmatprep.subr.mxu0 0.0
        %4324 = vmatpush1.msra.mxu0 0.0
        %4325 = vmatprep.subr.mxu0 0.0
        %4326 = vmatpush1.msra.mxu0 0.0
        %4327 = vmatprep.subr.mxu0 0.0
        %4328 = vmatpush1.msra.mxu0 0.0
        %4329 = vmatprep.subr.mxu0 0.0
        %4330 = vmatpush1.msra.mxu0 0.0
        %4331 = vmatprep.subr.mxu0 0.0
        %4332 = vmatpush1.msra.mxu0 0.0
        %4333 = vmatprep.subr.mxu0 0.0
        %4334 = vmatpush1.msra.mxu0 0.0
        %4335 = vmatprep.subr.mxu0 %v2768
        %4336 = vmatpush1.msra.mxu0 %v2766
        %4337 = vmatprep.subr.mxu0 0.0
        %4338 = vmatpush2.msra.mxu0 0.0
        %4339 = vmatprep.subr.mxu0 0.0
        %4340 = vmatpush2.msra.mxu0 0.0
        %4341 = vmatprep.subr.mxu0 0.0
        %4342 = vmatpush2.msra.mxu0 0.0
        %4343 = vmatprep.subr.mxu0 0.0
        %4344 = vmatpush2.msra.mxu0 0.0
        %4345 = vmatprep.subr.mxu0 0.0
        %4346 = vmatpush2.msra.mxu0 0.0
        %4347 = vmatprep.subr.mxu0 0.0
        %4348 = vmatpush2.msra.mxu0 0.0
        %4349 = vmatprep.subr.mxu0 0.0
        %4350 = vmatpush2.msra.mxu0 0.0
        %4351 = vmatprep.subr.mxu0 0.0
        %4352 = vmatpush2.msra.mxu0 0.0
        %4353 = vmatprep.subr.mxu0 0.0
        %4354 = vmatpush2.msra.mxu0 0.0
        %4355 = vmatprep.subr.mxu0 0.0
        %4356 = vmatpush2.msra.mxu0 0.0
        %4357 = vmatprep.subr.mxu0 0.0
        %4358 = vmatpush2.msra.mxu0 0.0
        %4359 = vmatprep.subr.mxu0 0.0
        %4360 = vmatpush2.msra.mxu0 0.0
        %4361 = vmatprep.subr.mxu0 0.0
        %4362 = vmatpush2.msra.mxu0 0.0
        %4363 = vmatprep.subr.mxu0 0.0
        %4364 = vmatpush2.msra.mxu0 0.0
        %4365 = vmatprep.subr.mxu0 0.0
        %4366 = vmatpush2.msra.mxu0 0.0
        %4367 = vmatprep.subr.mxu0 0.0
        %4368 = vmatpush2.msra.mxu0 0.0
        %4369 = vmatprep.mubr.f32.mxu0 0.0
        %4370 = vmatmul.mubr.f32.gmra.mxu0 %v4291
        %v4371 = vpop.f32.mrf.mxu0
        %v4372 = vadd.f32 0.0, %v4371
        %v4373 = vpop.f32.mrf.mxu0
        %v4374 = vadd.f32 0.0, %v4373
        %4375 = vmatprep.mubr.f32.mxu0 0.0
        %4376 = vmatmul.mubr.f32.gmra.mxu0 %v4293
        %v4377 = vpop.f32.mrf.mxu0
        %v4378 = vadd.f32 0.0, %v4377
        %v4379 = vpop.f32.mrf.mxu0
        %v4380 = vadd.f32 0.0, %v4379
        %4381 = vmatprep.mubr.f32.mxu0 0.0
        %4382 = vmatmul.mubr.f32.gmra.mxu0 %v4295
        %v4383 = vpop.f32.mrf.mxu0
        %v4384 = vadd.f32 0.0, %v4383
        %v4385 = vpop.f32.mrf.mxu0
        %v4386 = vadd.f32 0.0, %v4385
        %4387 = vmatprep.mubr.f32.mxu0 0.0
        %4388 = vmatmul.mubr.f32.gmra.mxu0 %v4297
        %v4389 = vpop.f32.mrf.mxu0
        %v4390 = vadd.f32 0.0, %v4389
        %v4391 = vpop.f32.mrf.mxu0
        %v4392 = vadd.f32 0.0, %v4391
        %4393 = vmatprep.mubr.f32.mxu0 0.0
        %4394 = vmatmul.mubr.f32.gmra.mxu0 %v4299
        %v4395 = vpop.f32.mrf.mxu0
        %v4396 = vadd.f32 0.0, %v4395
        %v4397 = vpop.f32.mrf.mxu0
        %v4398 = vadd.f32 0.0, %v4397
        %4399 = vmatprep.mubr.f32.mxu0 0.0
        %4400 = vmatmul.mubr.f32.gmra.mxu0 %v4301
        %v4401 = vpop.f32.mrf.mxu0
        %v4402 = vadd.f32 0.0, %v4401
        %v4403 = vpop.f32.mrf.mxu0
        %v4404 = vadd.f32 0.0, %v4403
        %4405 = vmatprep.mubr.f32.mxu0 0.0
        %4406 = vmatmul.mubr.f32.gmra.mxu0 %v4303
        %v4407 = vpop.f32.mrf.mxu0
        %v4408 = vadd.f32 0.0, %v4407
        %v4409 = vpop.f32.mrf.mxu0
        %v4410 = vadd.f32 0.0, %v4409
        %4411 = vdwg.mxu0
        %v4412 = vmul.f32 %v4372, %v2424
        %v4413 = vmul.f32 %v4374, %v2425
        %v4414 = vmul.f32 %v4378, %v2426
        %v4415 = vmul.f32 %v4380, %v2427
        %v4416 = vmul.f32 %v4384, %v2428
        %v4417 = vmul.f32 %v4386, %v2429
        %v4418 = vmul.f32 %v4390, %v2430
        %v4419 = vmul.f32 %v4392, %v2431
        %v4420 = vmul.f32 %v4396, %v2432
        %v4421 = vmul.f32 %v4398, %v2433
        %v4422 = vmul.f32 %v4402, %v2434
        %v4423 = vmul.f32 %v4404, %v2435
        %v4424 = vmul.f32 %v4408, %v2436
        %v4425 = vmul.f32 %v4410, %v2437
        %v4427 = vsel %vm2451, %v4424, 0
        %v4430 = vsel %vm2451, %v4425, 0
        %4432 = vmatprep.subr.mxu0 0.0
        %4433 = vmatpush1.msra.mxu0 0.0
        %4434 = vmatprep.subr.mxu0 0.0
        %4435 = vmatpush1.msra.mxu0 0.0
        %4436 = vmatprep.subr.mxu0 0.0
        %4437 = vmatpush1.msra.mxu0 0.0
        %4438 = vmatprep.subr.mxu0 0.0
        %4439 = vmatpush1.msra.mxu0 0.0
        %4440 = vmatprep.subr.mxu0 0.0
        %4441 = vmatpush1.msra.mxu0 0.0
        %4442 = vmatprep.subr.mxu0 0.0
        %4443 = vmatpush1.msra.mxu0 0.0
        %4444 = vmatprep.subr.mxu0 0.0
        %4445 = vmatpush1.msra.mxu0 0.0
        %4446 = vmatprep.subr.mxu0 0.0
        %4447 = vmatpush1.msra.mxu0 0.0
        %4448 = vmatprep.subr.mxu0 0.0
        %4449 = vmatpush1.msra.mxu0 0.0
        %4450 = vmatprep.subr.mxu0 %v4430
        %4451 = vmatpush1.msra.mxu0 %v4427
        %4452 = vmatprep.subr.mxu0 %v4423
        %4453 = vmatpush1.msra.mxu0 %v4422
        %4454 = vmatprep.subr.mxu0 %v4421
        %4455 = vmatpush1.msra.mxu0 %v4420
        %4456 = vmatprep.subr.mxu0 %v4419
        %4457 = vmatpush1.msra.mxu0 %v4418
        %4458 = vmatprep.subr.mxu0 %v4417
        %4459 = vmatpush1.msra.mxu0 %v4416
        %4460 = vmatprep.subr.mxu0 %v4415
        %4461 = vmatpush1.msra.mxu0 %v4414
        %4462 = vmatprep.subr.mxu0 %v4413
        %4463 = vmatpush1.msra.mxu0 %v4412
        %4464 = vmatprep.subr.mxu0 0.0
        %4465 = vmatpush2.msra.mxu0 0.0
        %4466 = vmatprep.subr.mxu0 0.0
        %4467 = vmatpush2.msra.mxu0 0.0
        %4468 = vmatprep.subr.mxu0 0.0
        %4469 = vmatpush2.msra.mxu0 0.0
        %4470 = vmatprep.subr.mxu0 0.0
        %4471 = vmatpush2.msra.mxu0 0.0
        %4472 = vmatprep.subr.mxu0 0.0
        %4473 = vmatpush2.msra.mxu0 0.0
        %4474 = vmatprep.subr.mxu0 0.0
        %4475 = vmatpush2.msra.mxu0 0.0
        %4476 = vmatprep.subr.mxu0 0.0
        %4477 = vmatpush2.msra.mxu0 0.0
        %4478 = vmatprep.subr.mxu0 0.0
        %4479 = vmatpush2.msra.mxu0 0.0
        %4480 = vmatprep.subr.mxu0 0.0
        %4481 = vmatpush2.msra.mxu0 0.0
        %4482 = vmatprep.subr.mxu0 0.0
        %4483 = vmatpush2.msra.mxu0 0.0
        %4484 = vmatprep.subr.mxu0 0.0
        %4485 = vmatpush2.msra.mxu0 0.0
        %4486 = vmatprep.subr.mxu0 0.0
        %4487 = vmatpush2.msra.mxu0 0.0
        %4488 = vmatprep.subr.mxu0 0.0
        %4489 = vmatpush2.msra.mxu0 0.0
        %4490 = vmatprep.subr.mxu0 0.0
        %4491 = vmatpush2.msra.mxu0 0.0
        %4492 = vmatprep.subr.mxu0 0.0
        %4493 = vmatpush2.msra.mxu0 0.0
        %4494 = vmatprep.subr.mxu0 0.0
        %4495 = vmatpush2.msra.mxu0 0.0
        %4496 = vmatprep.mubr.f32.mxu0 0.0
        %4497 = vmatmul.mubr.f32.gmra.mxu0 %v3346
        %v4498 = vpop.f32.mrf.mxu0
        %v4499 = vadd.f32 0.0, %v4498
        %v4500 = vpop.f32.mrf.mxu0
        %v4501 = vadd.f32 0.0, %v4500
        %4502 = vdwg.mxu0
        %v4503 = vlaneseq
        %v4504 = vshrl.u32 %v4503, 7
        %v4505 = vsub.s32 0, %v4504
        %v4506 = vrot.slane %v4499, %v4505
        %v4507 = vlaneseq
        %v4508 = vshrl.u32 %v4507, 7
        %v4509 = vsub.s32 0, %v4508
        %v4510 = vrot.slane %v4501, %v4509
        %v4511 = vmul.f32 %v2651, %v4506
        %v4512 = vmul.f32 %v2653, %v4510
        %v4513 = vmul.f32 %v2657, %v4506
        %v4514 = vmul.f32 %v2659, %v4510
        %v4515 = vmul.f32 %v2663, %v4506
        %v4516 = vmul.f32 %v2665, %v4510
        %v4517 = vmul.f32 %v2669, %v4506
        %v4518 = vmul.f32 %v2671, %v4510
        %v4519 = vmul.f32 %v2675, %v4506
        %v4520 = vmul.f32 %v2677, %v4510
        %v4521 = vmul.f32 %v2681, %v4506
        %v4522 = vmul.f32 %v2683, %v4510
        %v4523 = vmul.f32 %v2687, %v4506
        %v4524 = vmul.f32 %v2689, %v4510
        %v4526 = vsel %vm2891, %v4512, 0
        %v4529 = vsel %vm2891, %v4514, 0
        %v4532 = vsel %vm2891, %v4516, 0
        %v4535 = vsel %vm2891, %v4518, 0
        %v4538 = vsel %vm2891, %v4520, 0
        %v4541 = vsel %vm2891, %v4522, 0
        %v4544 = vsel %vm2891, %v4524, 0
        %4546 = vmatprep.subr.mxu0 %v2722
        %4547 = vmatpush1.msra.mxu0 %v2721
        %4548 = vmatprep.subr.mxu0 %v2720
        %4549 = vmatpush1.msra.mxu0 %v2719
        %4550 = vmatprep.subr.mxu0 %v2718
        %4551 = vmatpush1.msra.mxu0 %v2717
        %4552 = vmatprep.subr.mxu0 %v2716
        %4553 = vmatpush1.msra.mxu0 %v2715
        %4554 = vmatprep.subr.mxu0 %v2714
        %4555 = vmatpush1.msra.mxu0 %v2713
        %4556 = vmatprep.subr.mxu0 %v2712
        %4557 = vmatpush1.msra.mxu0 %v2711
        %4558 = vmatprep.subr.mxu0 %v2710
        %4559 = vmatpush1.msra.mxu0 %v2709
        %4560 = vmatprep.subr.mxu0 %v2708
        %4561 = vmatpush1.msra.mxu0 %v2707
        %4562 = vmatprep.subr.mxu0 %v2706
        %4563 = vmatpush1.msra.mxu0 %v2705
        %4564 = vmatprep.subr.mxu0 %v2704
        %4565 = vmatpush1.msra.mxu0 %v2703
        %4566 = vmatprep.subr.mxu0 %v2702
        %4567 = vmatpush1.msra.mxu0 %v2701
        %4568 = vmatprep.subr.mxu0 %v2700
        %4569 = vmatpush1.msra.mxu0 %v2699
        %4570 = vmatprep.subr.mxu0 %v2698
        %4571 = vmatpush1.msra.mxu0 %v2697
        %4572 = vmatprep.subr.mxu0 %v2696
        %4573 = vmatpush1.msra.mxu0 %v2695
        %4574 = vmatprep.subr.mxu0 %v2694
        %4575 = vmatpush1.msra.mxu0 %v2693
        %4576 = vmatprep.subr.mxu0 %v2692
        %4577 = vmatpush1.msra.mxu0 %v2691
        %4578 = vmatprep.subr.mxu0 0.0
        %4579 = vmatpush2.msra.mxu0 0.0
        %4580 = vmatprep.subr.mxu0 0.0
        %4581 = vmatpush2.msra.mxu0 0.0
        %4582 = vmatprep.subr.mxu0 0.0
        %4583 = vmatpush2.msra.mxu0 0.0
        %4584 = vmatprep.subr.mxu0 0.0
        %4585 = vmatpush2.msra.mxu0 0.0
        %4586 = vmatprep.subr.mxu0 0.0
        %4587 = vmatpush2.msra.mxu0 0.0
        %4588 = vmatprep.subr.mxu0 0.0
        %4589 = vmatpush2.msra.mxu0 0.0
        %4590 = vmatprep.subr.mxu0 0.0
        %4591 = vmatpush2.msra.mxu0 0.0
        %4592 = vmatprep.subr.mxu0 %v2917
        %4593 = vmatpush2.msra.mxu0 %v2914
        %4594 = vmatprep.subr.mxu0 %v2738
        %4595 = vmatpush2.msra.mxu0 %v2737
        %4596 = vmatprep.subr.mxu0 %v2736
        %4597 = vmatpush2.msra.mxu0 %v2735
        %4598 = vmatprep.subr.mxu0 %v2734
        %4599 = vmatpush2.msra.mxu0 %v2733
        %4600 = vmatprep.subr.mxu0 %v2732
        %4601 = vmatpush2.msra.mxu0 %v2731
        %4602 = vmatprep.subr.mxu0 %v2730
        %4603 = vmatpush2.msra.mxu0 %v2729
        %4604 = vmatprep.subr.mxu0 %v2728
        %4605 = vmatpush2.msra.mxu0 %v2727
        %4606 = vmatprep.subr.mxu0 %v2726
        %4607 = vmatpush2.msra.mxu0 %v2725
        %4608 = vmatprep.subr.mxu0 %v2724
        %4609 = vmatpush2.msra.mxu0 %v2723
        %4610 = vmatprep.mubr.f32.mxu0 %v4526
        %4611 = vmatmul.mubr.f32.gmra.mxu0 %v4511
        %v4612 = vpop.f32.mrf.mxu0
        %v4613 = vadd.f32 0.0, %v4612
        %v4614 = vpop.f32.mrf.mxu0
        %v4615 = vadd.f32 0.0, %v4614
        %4616 = vmatprep.mubr.f32.mxu0 %v4529
        %4617 = vmatmul.mubr.f32.gmra.mxu0 %v4513
        %v4618 = vpop.f32.mrf.mxu0
        %v4619 = vadd.f32 0.0, %v4618
        %v4620 = vpop.f32.mrf.mxu0
        %v4621 = vadd.f32 0.0, %v4620
        %4622 = vmatprep.mubr.f32.mxu0 %v4532
        %4623 = vmatmul.mubr.f32.gmra.mxu0 %v4515
        %v4624 = vpop.f32.mrf.mxu0
        %v4625 = vadd.f32 0.0, %v4624
        %v4626 = vpop.f32.mrf.mxu0
        %v4627 = vadd.f32 0.0, %v4626
        %4628 = vmatprep.mubr.f32.mxu0 %v4535
        %4629 = vmatmul.mubr.f32.gmra.mxu0 %v4517
        %v4630 = vpop.f32.mrf.mxu0
        %v4631 = vadd.f32 0.0, %v4630
        %v4632 = vpop.f32.mrf.mxu0
        %v4633 = vadd.f32 0.0, %v4632
        %4634 = vmatprep.mubr.f32.mxu0 %v4538
        %4635 = vmatmul.mubr.f32.gmra.mxu0 %v4519
        %v4636 = vpop.f32.mrf.mxu0
        %v4637 = vadd.f32 0.0, %v4636
        %v4638 = vpop.f32.mrf.mxu0
        %v4639 = vadd.f32 0.0, %v4638
        %4640 = vmatprep.mubr.f32.mxu0 %v4541
        %4641 = vmatmul.mubr.f32.gmra.mxu0 %v4521
        %v4642 = vpop.f32.mrf.mxu0
        %v4643 = vadd.f32 0.0, %v4642
        %v4644 = vpop.f32.mrf.mxu0
        %v4645 = vadd.f32 0.0, %v4644
        %4646 = vmatprep.mubr.f32.mxu0 %v4544
        %4647 = vmatmul.mubr.f32.gmra.mxu0 %v4523
        %v4648 = vpop.f32.mrf.mxu0
        %v4649 = vadd.f32 0.0, %v4648
        %v4650 = vpop.f32.mrf.mxu0
        %v4651 = vadd.f32 0.0, %v4650
        %4652 = vdwg.mxu0
        %4653 = vrot.lane.b32.xlu0 %v2115, 100
        %v4654 = vpop.permute.xlu0 %4653
        %4655 = vrot.lane.b32.xlu0 %v2120, 100
        %v4656 = vpop.permute.xlu0 %4655
        %4657 = vrot.lane.b32.xlu0 %v2125, 100
        %v4658 = vpop.permute.xlu0 %4657
        %4659 = vrot.lane.b32.xlu0 %v2130, 100
        %v4660 = vpop.permute.xlu0 %4659
        %4661 = vrot.lane.b32.xlu0 %v2135, 100
        %v4662 = vpop.permute.xlu0 %4661
        %4663 = vrot.lane.b32.xlu0 %v2140, 100
        %v4664 = vpop.permute.xlu0 %4663
        %4665 = vrot.lane.b32.xlu0 %v2145, 100
        %v4666 = vpop.permute.xlu0 %4665
        %v4667 = vsel %vm2743, %v4654, 0
        %v4669 = vsel %vm2743, %v4656, 0
        %v4671 = vsel %vm2743, %v4658, 0
        %v4673 = vsel %vm2743, %v4660, 0
        %v4675 = vsel %vm2743, %v4662, 0
        %v4677 = vsel %vm2743, %v4664, 0
        %v4679 = vsel %vm2743, %v4666, 0
        %4681 = vmatprep.subr.mxu0 0.0
        %4682 = vmatpush1.msra.mxu0 0.0
        %4683 = vmatprep.subr.mxu0 0.0
        %4684 = vmatpush1.msra.mxu0 0.0
        %4685 = vmatprep.subr.mxu0 0.0
        %4686 = vmatpush1.msra.mxu0 0.0
        %4687 = vmatprep.subr.mxu0 0.0
        %4688 = vmatpush1.msra.mxu0 0.0
        %4689 = vmatprep.subr.mxu0 0.0
        %4690 = vmatpush1.msra.mxu0 0.0
        %4691 = vmatprep.subr.mxu0 0.0
        %4692 = vmatpush1.msra.mxu0 0.0
        %4693 = vmatprep.subr.mxu0 0.0
        %4694 = vmatpush1.msra.mxu0 0.0
        %4695 = vmatprep.subr.mxu0 0.0
        %4696 = vmatpush1.msra.mxu0 0.0
        %4697 = vmatprep.subr.mxu0 0.0
        %4698 = vmatpush1.msra.mxu0 0.0
        %4699 = vmatprep.subr.mxu0 0.0
        %4700 = vmatpush1.msra.mxu0 0.0
        %4701 = vmatprep.subr.mxu0 0.0
        %4702 = vmatpush1.msra.mxu0 0.0
        %4703 = vmatprep.subr.mxu0 0.0
        %4704 = vmatpush1.msra.mxu0 0.0
        %4705 = vmatprep.subr.mxu0 0.0
        %4706 = vmatpush1.msra.mxu0 0.0
        %4707 = vmatprep.subr.mxu0 0.0
        %4708 = vmatpush1.msra.mxu0 0.0
        %4709 = vmatprep.subr.mxu0 0.0
        %4710 = vmatpush1.msra.mxu0 0.0
        %4711 = vmatprep.subr.mxu0 %v2768
        %4712 = vmatpush1.msra.mxu0 %v2766
        %4713 = vmatprep.subr.mxu0 0.0
        %4714 = vmatpush2.msra.mxu0 0.0
        %4715 = vmatprep.subr.mxu0 0.0
        %4716 = vmatpush2.msra.mxu0 0.0
        %4717 = vmatprep.subr.mxu0 0.0
        %4718 = vmatpush2.msra.mxu0 0.0
        %4719 = vmatprep.subr.mxu0 0.0
        %4720 = vmatpush2.msra.mxu0 0.0
        %4721 = vmatprep.subr.mxu0 0.0
        %4722 = vmatpush2.msra.mxu0 0.0
        %4723 = vmatprep.subr.mxu0 0.0
        %4724 = vmatpush2.msra.mxu0 0.0
        %4725 = vmatprep.subr.mxu0 0.0
        %4726 = vmatpush2.msra.mxu0 0.0
        %4727 = vmatprep.subr.mxu0 0.0
        %4728 = vmatpush2.msra.mxu0 0.0
        %4729 = vmatprep.subr.mxu0 0.0
        %4730 = vmatpush2.msra.mxu0 0.0
        %4731 = vmatprep.subr.mxu0 0.0
        %4732 = vmatpush2.msra.mxu0 0.0
        %4733 = vmatprep.subr.mxu0 0.0
        %4734 = vmatpush2.msra.mxu0 0.0
        %4735 = vmatprep.subr.mxu0 0.0
        %4736 = vmatpush2.msra.mxu0 0.0
        %4737 = vmatprep.subr.mxu0 0.0
        %4738 = vmatpush2.msra.mxu0 0.0
        %4739 = vmatprep.subr.mxu0 0.0
        %4740 = vmatpush2.msra.mxu0 0.0
        %4741 = vmatprep.subr.mxu0 0.0
        %4742 = vmatpush2.msra.mxu0 0.0
        %4743 = vmatprep.subr.mxu0 0.0
        %4744 = vmatpush2.msra.mxu0 0.0
        %4745 = vmatprep.mubr.f32.mxu0 0.0
        %4746 = vmatmul.mubr.f32.gmra.mxu0 %v4667
        %v4747 = vpop.f32.mrf.mxu0
        %v4748 = vadd.f32 0.0, %v4747
        %v4749 = vpop.f32.mrf.mxu0
        %v4750 = vadd.f32 0.0, %v4749
        %4751 = vmatprep.mubr.f32.mxu0 0.0
        %4752 = vmatmul.mubr.f32.gmra.mxu0 %v4669
        %v4753 = vpop.f32.mrf.mxu0
        %v4754 = vadd.f32 0.0, %v4753
        %v4755 = vpop.f32.mrf.mxu0
        %v4756 = vadd.f32 0.0, %v4755
        %4757 = vmatprep.mubr.f32.mxu0 0.0
        %4758 = vmatmul.mubr.f32.gmra.mxu0 %v4671
        %v4759 = vpop.f32.mrf.mxu0
        %v4760 = vadd.f32 0.0, %v4759
        %v4761 = vpop.f32.mrf.mxu0
        %v4762 = vadd.f32 0.0, %v4761
        %4763 = vmatprep.mubr.f32.mxu0 0.0
        %4764 = vmatmul.mubr.f32.gmra.mxu0 %v4673
        %v4765 = vpop.f32.mrf.mxu0
        %v4766 = vadd.f32 0.0, %v4765
        %v4767 = vpop.f32.mrf.mxu0
        %v4768 = vadd.f32 0.0, %v4767
        %4769 = vmatprep.mubr.f32.mxu0 0.0
        %4770 = vmatmul.mubr.f32.gmra.mxu0 %v4675
        %v4771 = vpop.f32.mrf.mxu0
        %v4772 = vadd.f32 0.0, %v4771
        %v4773 = vpop.f32.mrf.mxu0
        %v4774 = vadd.f32 0.0, %v4773
        %4775 = vmatprep.mubr.f32.mxu0 0.0
        %4776 = vmatmul.mubr.f32.gmra.mxu0 %v4677
        %v4777 = vpop.f32.mrf.mxu0
        %v4778 = vadd.f32 0.0, %v4777
        %v4779 = vpop.f32.mrf.mxu0
        %v4780 = vadd.f32 0.0, %v4779
        %4781 = vmatprep.mubr.f32.mxu0 0.0
        %4782 = vmatmul.mubr.f32.gmra.mxu0 %v4679
        %v4783 = vpop.f32.mrf.mxu0
        %v4784 = vadd.f32 0.0, %v4783
        %v4785 = vpop.f32.mrf.mxu0
        %v4786 = vadd.f32 0.0, %v4785
        %4787 = vdwg.mxu0
        %v4788 = vmul.f32 %v4748, %v2424
        %v4789 = vmul.f32 %v4750, %v2425
        %v4790 = vmul.f32 %v4754, %v2426
        %v4791 = vmul.f32 %v4756, %v2427
        %v4792 = vmul.f32 %v4760, %v2428
        %v4793 = vmul.f32 %v4762, %v2429
        %v4794 = vmul.f32 %v4766, %v2430
        %v4795 = vmul.f32 %v4768, %v2431
        %v4796 = vmul.f32 %v4772, %v2432
        %v4797 = vmul.f32 %v4774, %v2433
        %v4798 = vmul.f32 %v4778, %v2434
        %v4799 = vmul.f32 %v4780, %v2435
        %v4800 = vmul.f32 %v4784, %v2436
        %v4801 = vmul.f32 %v4786, %v2437
        %v4803 = vsel %vm2451, %v4800, 0
        %v4806 = vsel %vm2451, %v4801, 0
        %4808 = vmatprep.subr.mxu0 0.0
        %4809 = vmatpush1.msra.mxu0 0.0
        %4810 = vmatprep.subr.mxu0 0.0
        %4811 = vmatpush1.msra.mxu0 0.0
        %4812 = vmatprep.subr.mxu0 0.0
        %4813 = vmatpush1.msra.mxu0 0.0
        %4814 = vmatprep.subr.mxu0 0.0
        %4815 = vmatpush1.msra.mxu0 0.0
        %4816 = vmatprep.subr.mxu0 0.0
        %4817 = vmatpush1.msra.mxu0 0.0
        %4818 = vmatprep.subr.mxu0 0.0
        %4819 = vmatpush1.msra.mxu0 0.0
        %4820 = vmatprep.subr.mxu0 0.0
        %4821 = vmatpush1.msra.mxu0 0.0
        %4822 = vmatprep.subr.mxu0 0.0
        %4823 = vmatpush1.msra.mxu0 0.0
        %4824 = vmatprep.subr.mxu0 0.0
        %4825 = vmatpush1.msra.mxu0 0.0
        %4826 = vmatprep.subr.mxu0 %v4806
        %4827 = vmatpush1.msra.mxu0 %v4803
        %4828 = vmatprep.subr.mxu0 %v4799
        %4829 = vmatpush1.msra.mxu0 %v4798
        %4830 = vmatprep.subr.mxu0 %v4797
        %4831 = vmatpush1.msra.mxu0 %v4796
        %4832 = vmatprep.subr.mxu0 %v4795
        %4833 = vmatpush1.msra.mxu0 %v4794
        %4834 = vmatprep.subr.mxu0 %v4793
        %4835 = vmatpush1.msra.mxu0 %v4792
        %4836 = vmatprep.subr.mxu0 %v4791
        %4837 = vmatpush1.msra.mxu0 %v4790
        %4838 = vmatprep.subr.mxu0 %v4789
        %4839 = vmatpush1.msra.mxu0 %v4788
        %4840 = vmatprep.subr.mxu0 0.0
        %4841 = vmatpush2.msra.mxu0 0.0
        %4842 = vmatprep.subr.mxu0 0.0
        %4843 = vmatpush2.msra.mxu0 0.0
        %4844 = vmatprep.subr.mxu0 0.0
        %4845 = vmatpush2.msra.mxu0 0.0
        %4846 = vmatprep.subr.mxu0 0.0
        %4847 = vmatpush2.msra.mxu0 0.0
        %4848 = vmatprep.subr.mxu0 0.0
        %4849 = vmatpush2.msra.mxu0 0.0
        %4850 = vmatprep.subr.mxu0 0.0
        %4851 = vmatpush2.msra.mxu0 0.0
        %4852 = vmatprep.subr.mxu0 0.0
        %4853 = vmatpush2.msra.mxu0 0.0
        %4854 = vmatprep.subr.mxu0 0.0
        %4855 = vmatpush2.msra.mxu0 0.0
        %4856 = vmatprep.subr.mxu0 0.0
        %4857 = vmatpush2.msra.mxu0 0.0
        %4858 = vmatprep.subr.mxu0 0.0
        %4859 = vmatpush2.msra.mxu0 0.0
        %4860 = vmatprep.subr.mxu0 0.0
        %4861 = vmatpush2.msra.mxu0 0.0
        %4862 = vmatprep.subr.mxu0 0.0
        %4863 = vmatpush2.msra.mxu0 0.0
        %4864 = vmatprep.subr.mxu0 0.0
        %4865 = vmatpush2.msra.mxu0 0.0
        %4866 = vmatprep.subr.mxu0 0.0
        %4867 = vmatpush2.msra.mxu0 0.0
        %4868 = vmatprep.subr.mxu0 0.0
        %4869 = vmatpush2.msra.mxu0 0.0
        %4870 = vmatprep.subr.mxu0 0.0
        %4871 = vmatpush2.msra.mxu0 0.0
        %4872 = vmatprep.mubr.f32.mxu0 0.0
        %4873 = vmatmul.mubr.f32.gmra.mxu0 %v3346
        %v4874 = vpop.f32.mrf.mxu0
        %v4875 = vadd.f32 0.0, %v4874
        %v4876 = vpop.f32.mrf.mxu0
        %v4877 = vadd.f32 0.0, %v4876
        %4878 = vdwg.mxu0
        %v4879 = vlaneseq
        %v4880 = vshrl.u32 %v4879, 7
        %v4881 = vsub.s32 0, %v4880
        %v4882 = vrot.slane %v4875, %v4881
        %v4883 = vlaneseq
        %v4884 = vshrl.u32 %v4883, 7
        %v4885 = vsub.s32 0, %v4884
        %v4886 = vrot.slane %v4877, %v4885
        %v4887 = vmul.f32 %v4613, %v4882
        %v4888 = vmul.f32 %v4615, %v4886
        %v4889 = vmul.f32 %v4619, %v4882
        %v4890 = vmul.f32 %v4621, %v4886
        %v4891 = vmul.f32 %v4625, %v4882
        %v4892 = vmul.f32 %v4627, %v4886
        %v4893 = vmul.f32 %v4631, %v4882
        %v4894 = vmul.f32 %v4633, %v4886
        %v4895 = vmul.f32 %v4637, %v4882
        %v4896 = vmul.f32 %v4639, %v4886
        %v4897 = vmul.f32 %v4643, %v4882
        %v4898 = vmul.f32 %v4645, %v4886
        %v4899 = vmul.f32 %v4649, %v4882
        %v4900 = vmul.f32 %v4651, %v4886
        %v4901 = vadd.f32 %v4263, %v4887
        %v4902 = vadd.f32 %v4264, %v4888
        %v4903 = vadd.f32 %v4265, %v4889
        %v4904 = vadd.f32 %v4266, %v4890
        %v4905 = vadd.f32 %v4267, %v4891
        %v4906 = vadd.f32 %v4268, %v4892
        %v4907 = vadd.f32 %v4269, %v4893
        %v4908 = vadd.f32 %v4270, %v4894
        %v4909 = vadd.f32 %v4271, %v4895
        %v4910 = vadd.f32 %v4272, %v4896
        %v4911 = vadd.f32 %v4273, %v4897
        %v4912 = vadd.f32 %v4274, %v4898
        %v4913 = vadd.f32 %v4275, %v4899
        %v4914 = vadd.f32 %v4276, %v4900
        %v4916 = vsel %vm2743, %v2416, 0
        %v4919 = vsel %vm2743, %v2417, 0
        %v4922 = vsel %vm2743, %v2418, 0
        %v4925 = vsel %vm2743, %v2419, 0
        %v4928 = vsel %vm2743, %v2420, 0
        %v4931 = vsel %vm2743, %v2421, 0
        %v4934 = vsel %vm2743, %v2422, 0
        %4936 = vmatprep.subr.mxu0 0.0
        %4937 = vmatpush1.msra.mxu0 0.0
        %4938 = vmatprep.subr.mxu0 0.0
        %4939 = vmatpush1.msra.mxu0 0.0
        %4940 = vmatprep.subr.mxu0 0.0
        %4941 = vmatpush1.msra.mxu0 0.0
        %4942 = vmatprep.subr.mxu0 0.0
        %4943 = vmatpush1.msra.mxu0 0.0
        %4944 = vmatprep.subr.mxu0 0.0
        %4945 = vmatpush1.msra.mxu0 0.0
        %4946 = vmatprep.subr.mxu0 0.0
        %4947 = vmatpush1.msra.mxu0 0.0
        %4948 = vmatprep.subr.mxu0 0.0
        %4949 = vmatpush1.msra.mxu0 0.0
        %4950 = vmatprep.subr.mxu0 0.0
        %4951 = vmatpush1.msra.mxu0 0.0
        %4952 = vmatprep.subr.mxu0 0.0
        %4953 = vmatpush1.msra.mxu0 0.0
        %4954 = vmatprep.subr.mxu0 0.0
        %4955 = vmatpush1.msra.mxu0 0.0
        %4956 = vmatprep.subr.mxu0 0.0
        %4957 = vmatpush1.msra.mxu0 0.0
        %4958 = vmatprep.subr.mxu0 0.0
        %4959 = vmatpush1.msra.mxu0 0.0
        %4960 = vmatprep.subr.mxu0 0.0
        %4961 = vmatpush1.msra.mxu0 0.0
        %4962 = vmatprep.subr.mxu0 0.0
        %4963 = vmatpush1.msra.mxu0 0.0
        %4964 = vmatprep.subr.mxu0 0.0
        %4965 = vmatpush1.msra.mxu0 0.0
        %4966 = vmatprep.subr.mxu0 %v2768
        %4967 = vmatpush1.msra.mxu0 %v2766
        %4968 = vmatprep.subr.mxu0 0.0
        %4969 = vmatpush2.msra.mxu0 0.0
        %4970 = vmatprep.subr.mxu0 0.0
        %4971 = vmatpush2.msra.mxu0 0.0
        %4972 = vmatprep.subr.mxu0 0.0
        %4973 = vmatpush2.msra.mxu0 0.0
        %4974 = vmatprep.subr.mxu0 0.0
        %4975 = vmatpush2.msra.mxu0 0.0
        %4976 = vmatprep.subr.mxu0 0.0
        %4977 = vmatpush2.msra.mxu0 0.0
        %4978 = vmatprep.subr.mxu0 0.0
        %4979 = vmatpush2.msra.mxu0 0.0
        %4980 = vmatprep.subr.mxu0 0.0
        %4981 = vmatpush2.msra.mxu0 0.0
        %4982 = vmatprep.subr.mxu0 0.0
        %4983 = vmatpush2.msra.mxu0 0.0
        %4984 = vmatprep.subr.mxu0 0.0
        %4985 = vmatpush2.msra.mxu0 0.0
        %4986 = vmatprep.subr.mxu0 0.0
        %4987 = vmatpush2.msra.mxu0 0.0
        %4988 = vmatprep.subr.mxu0 0.0
        %4989 = vmatpush2.msra.mxu0 0.0
        %4990 = vmatprep.subr.mxu0 0.0
        %4991 = vmatpush2.msra.mxu0 0.0
        %4992 = vmatprep.subr.mxu0 0.0
        %4993 = vmatpush2.msra.mxu0 0.0
        %4994 = vmatprep.subr.mxu0 0.0
        %4995 = vmatpush2.msra.mxu0 0.0
        %4996 = vmatprep.subr.mxu0 0.0
        %4997 = vmatpush2.msra.mxu0 0.0
        %4998 = vmatprep.subr.mxu0 0.0
        %4999 = vmatpush2.msra.mxu0 0.0
        %5000 = vmatprep.mubr.f32.mxu0 0.0
        %5001 = vmatmul.mubr.f32.gmra.mxu0 %v4916
        %v5002 = vpop.f32.mrf.mxu0
        %v5003 = vadd.f32 0.0, %v5002
        %v5004 = vpop.f32.mrf.mxu0
        %v5005 = vadd.f32 0.0, %v5004
        %5006 = vmatprep.mubr.f32.mxu0 0.0
        %5007 = vmatmul.mubr.f32.gmra.mxu0 %v4919
        %v5008 = vpop.f32.mrf.mxu0
        %v5009 = vadd.f32 0.0, %v5008
        %v5010 = vpop.f32.mrf.mxu0
        %v5011 = vadd.f32 0.0, %v5010
        %5012 = vmatprep.mubr.f32.mxu0 0.0
        %5013 = vmatmul.mubr.f32.gmra.mxu0 %v4922
        %v5014 = vpop.f32.mrf.mxu0
        %v5015 = vadd.f32 0.0, %v5014
        %v5016 = vpop.f32.mrf.mxu0
        %v5017 = vadd.f32 0.0, %v5016
        %5018 = vmatprep.mubr.f32.mxu0 0.0
        %5019 = vmatmul.mubr.f32.gmra.mxu0 %v4925
        %v5020 = vpop.f32.mrf.mxu0
        %v5021 = vadd.f32 0.0, %v5020
        %v5022 = vpop.f32.mrf.mxu0
        %v5023 = vadd.f32 0.0, %v5022
        %5024 = vmatprep.mubr.f32.mxu0 0.0
        %5025 = vmatmul.mubr.f32.gmra.mxu0 %v4928
        %v5026 = vpop.f32.mrf.mxu0
        %v5027 = vadd.f32 0.0, %v5026
        %v5028 = vpop.f32.mrf.mxu0
        %v5029 = vadd.f32 0.0, %v5028
        %5030 = vmatprep.mubr.f32.mxu0 0.0
        %5031 = vmatmul.mubr.f32.gmra.mxu0 %v4931
        %v5032 = vpop.f32.mrf.mxu0
        %v5033 = vadd.f32 0.0, %v5032
        %v5034 = vpop.f32.mrf.mxu0
        %v5035 = vadd.f32 0.0, %v5034
        %5036 = vmatprep.mubr.f32.mxu0 0.0
        %5037 = vmatmul.mubr.f32.gmra.mxu0 %v4934
        %v5038 = vpop.f32.mrf.mxu0
        %v5039 = vadd.f32 0.0, %v5038
        %v5040 = vpop.f32.mrf.mxu0
        %v5041 = vadd.f32 0.0, %v5040
        %5042 = vdwg.mxu0
        %v5043 = vmul.f32 %v2651, %v5003
        %v5044 = vmul.f32 %v2653, %v5005
        %v5045 = vmul.f32 %v2657, %v5009
        %v5046 = vmul.f32 %v2659, %v5011
        %v5047 = vmul.f32 %v2663, %v5015
        %v5048 = vmul.f32 %v2665, %v5017
        %v5049 = vmul.f32 %v2669, %v5021
        %v5050 = vmul.f32 %v2671, %v5023
        %v5051 = vmul.f32 %v2675, %v5027
        %v5052 = vmul.f32 %v2677, %v5029
        %v5053 = vmul.f32 %v2681, %v5033
        %v5054 = vmul.f32 %v2683, %v5035
        %v5055 = vmul.f32 %v2687, %v5039
        %v5056 = vmul.f32 %v2689, %v5041
        %v5057 = vadd.f32 %v4901, %v5043
        %v5058 = vadd.f32 %v4902, %v5044
        %v5059 = vadd.f32 %v4903, %v5045
        %v5060 = vadd.f32 %v4904, %v5046
        %v5061 = vadd.f32 %v4905, %v5047
        %v5062 = vadd.f32 %v4906, %v5048
        %v5063 = vadd.f32 %v4907, %v5049
        %v5064 = vadd.f32 %v4908, %v5050
        %v5065 = vadd.f32 %v4909, %v5051
        %v5066 = vadd.f32 %v4910, %v5052
        %v5067 = vadd.f32 %v4911, %v5053
        %v5068 = vadd.f32 %v4912, %v5054
        %v5069 = vadd.f32 %v4913, %v5055
        %v5070 = vadd.f32 %v4914, %v5056
        %5071 = vrot.lane.b32.xlu0 %v2416, 124
        %v5072 = vpop.permute.xlu0 %5071
        %5073 = vrot.lane.b32.xlu0 %v2417, 124
        %v5074 = vpop.permute.xlu0 %5073
        %5075 = vrot.lane.b32.xlu0 %v2418, 124
        %v5076 = vpop.permute.xlu0 %5075
        %5077 = vrot.lane.b32.xlu0 %v2419, 124
        %v5078 = vpop.permute.xlu0 %5077
        %5079 = vrot.lane.b32.xlu0 %v2420, 124
        %v5080 = vpop.permute.xlu0 %5079
        %5081 = vrot.lane.b32.xlu0 %v2421, 124
        %v5082 = vpop.permute.xlu0 %5081
        %5083 = vrot.lane.b32.xlu0 %v2422, 124
        %v5084 = vpop.permute.xlu0 %5083
        %v5085 = vsel %vm2743, %v5072, 0
        %v5087 = vsel %vm2743, %v5074, 0
        %v5089 = vsel %vm2743, %v5076, 0
        %v5091 = vsel %vm2743, %v5078, 0
        %v5093 = vsel %vm2743, %v5080, 0
        %v5095 = vsel %vm2743, %v5082, 0
        %v5097 = vsel %vm2743, %v5084, 0
        %5099 = vmatprep.subr.mxu0 0.0
        %5100 = vmatpush1.msra.mxu0 0.0
        %5101 = vmatprep.subr.mxu0 0.0
        %5102 = vmatpush1.msra.mxu0 0.0
        %5103 = vmatprep.subr.mxu0 0.0
        %5104 = vmatpush1.msra.mxu0 0.0
        %5105 = vmatprep.subr.mxu0 0.0
        %5106 = vmatpush1.msra.mxu0 0.0
        %5107 = vmatprep.subr.mxu0 0.0
        %5108 = vmatpush1.msra.mxu0 0.0
        %5109 = vmatprep.subr.mxu0 0.0
        %5110 = vmatpush1.msra.mxu0 0.0
        %5111 = vmatprep.subr.mxu0 0.0
        %5112 = vmatpush1.msra.mxu0 0.0
        %5113 = vmatprep.subr.mxu0 0.0
        %5114 = vmatpush1.msra.mxu0 0.0
        %5115 = vmatprep.subr.mxu0 0.0
        %5116 = vmatpush1.msra.mxu0 0.0
        %5117 = vmatprep.subr.mxu0 0.0
        %5118 = vmatpush1.msra.mxu0 0.0
        %5119 = vmatprep.subr.mxu0 0.0
        %5120 = vmatpush1.msra.mxu0 0.0
        %5121 = vmatprep.subr.mxu0 0.0
        %5122 = vmatpush1.msra.mxu0 0.0
        %5123 = vmatprep.subr.mxu0 0.0
        %5124 = vmatpush1.msra.mxu0 0.0
        %5125 = vmatprep.subr.mxu0 0.0
        %5126 = vmatpush1.msra.mxu0 0.0
        %5127 = vmatprep.subr.mxu0 0.0
        %5128 = vmatpush1.msra.mxu0 0.0
        %5129 = vmatprep.subr.mxu0 %v2768
        %5130 = vmatpush1.msra.mxu0 %v2766
        %5131 = vmatprep.subr.mxu0 0.0
        %5132 = vmatpush2.msra.mxu0 0.0
        %5133 = vmatprep.subr.mxu0 0.0
        %5134 = vmatpush2.msra.mxu0 0.0
        %5135 = vmatprep.subr.mxu0 0.0
        %5136 = vmatpush2.msra.mxu0 0.0
        %5137 = vmatprep.subr.mxu0 0.0
        %5138 = vmatpush2.msra.mxu0 0.0
        %5139 = vmatprep.subr.mxu0 0.0
        %5140 = vmatpush2.msra.mxu0 0.0
        %5141 = vmatprep.subr.mxu0 0.0
        %5142 = vmatpush2.msra.mxu0 0.0
        %5143 = vmatprep.subr.mxu0 0.0
        %5144 = vmatpush2.msra.mxu0 0.0
        %5145 = vmatprep.subr.mxu0 0.0
        %5146 = vmatpush2.msra.mxu0 0.0
        %5147 = vmatprep.subr.mxu0 0.0
        %5148 = vmatpush2.msra.mxu0 0.0
        %5149 = vmatprep.subr.mxu0 0.0
        %5150 = vmatpush2.msra.mxu0 0.0
        %5151 = vmatprep.subr.mxu0 0.0
        %5152 = vmatpush2.msra.mxu0 0.0
        %5153 = vmatprep.subr.mxu0 0.0
        %5154 = vmatpush2.msra.mxu0 0.0
        %5155 = vmatprep.subr.mxu0 0.0
        %5156 = vmatpush2.msra.mxu0 0.0
        %5157 = vmatprep.subr.mxu0 0.0
        %5158 = vmatpush2.msra.mxu0 0.0
        %5159 = vmatprep.subr.mxu0 0.0
        %5160 = vmatpush2.msra.mxu0 0.0
        %5161 = vmatprep.subr.mxu0 0.0
        %5162 = vmatpush2.msra.mxu0 0.0
        %5163 = vmatprep.mubr.f32.mxu0 0.0
        %5164 = vmatmul.mubr.f32.gmra.mxu0 %v5085
        %v5165 = vpop.f32.mrf.mxu0
        %v5166 = vadd.f32 0.0, %v5165
        %v5167 = vpop.f32.mrf.mxu0
        %v5168 = vadd.f32 0.0, %v5167
        %5169 = vmatprep.mubr.f32.mxu0 0.0
        %5170 = vmatmul.mubr.f32.gmra.mxu0 %v5087
        %v5171 = vpop.f32.mrf.mxu0
        %v5172 = vadd.f32 0.0, %v5171
        %v5173 = vpop.f32.mrf.mxu0
        %v5174 = vadd.f32 0.0, %v5173
        %5175 = vmatprep.mubr.f32.mxu0 0.0
        %5176 = vmatmul.mubr.f32.gmra.mxu0 %v5089
        %v5177 = vpop.f32.mrf.mxu0
        %v5178 = vadd.f32 0.0, %v5177
        %v5179 = vpop.f32.mrf.mxu0
        %v5180 = vadd.f32 0.0, %v5179
        %5181 = vmatprep.mubr.f32.mxu0 0.0
        %5182 = vmatmul.mubr.f32.gmra.mxu0 %v5091
        %v5183 = vpop.f32.mrf.mxu0
        %v5184 = vadd.f32 0.0, %v5183
        %v5185 = vpop.f32.mrf.mxu0
        %v5186 = vadd.f32 0.0, %v5185
        %5187 = vmatprep.mubr.f32.mxu0 0.0
        %5188 = vmatmul.mubr.f32.gmra.mxu0 %v5093
        %v5189 = vpop.f32.mrf.mxu0
        %v5190 = vadd.f32 0.0, %v5189
        %v5191 = vpop.f32.mrf.mxu0
        %v5192 = vadd.f32 0.0, %v5191
        %5193 = vmatprep.mubr.f32.mxu0 0.0
        %5194 = vmatmul.mubr.f32.gmra.mxu0 %v5095
        %v5195 = vpop.f32.mrf.mxu0
        %v5196 = vadd.f32 0.0, %v5195
        %v5197 = vpop.f32.mrf.mxu0
        %v5198 = vadd.f32 0.0, %v5197
        %5199 = vmatprep.mubr.f32.mxu0 0.0
        %5200 = vmatmul.mubr.f32.gmra.mxu0 %v5097
        %v5201 = vpop.f32.mrf.mxu0
        %v5202 = vadd.f32 0.0, %v5201
        %v5203 = vpop.f32.mrf.mxu0
        %v5204 = vadd.f32 0.0, %v5203
        %5205 = vdwg.mxu0
        %v5206 = vmul.f32 %v5166, %v2424
        %v5207 = vmul.f32 %v5168, %v2425
        %v5208 = vmul.f32 %v5172, %v2426
        %v5209 = vmul.f32 %v5174, %v2427
        %v5210 = vmul.f32 %v5178, %v2428
        %v5211 = vmul.f32 %v5180, %v2429
        %v5212 = vmul.f32 %v5184, %v2430
        %v5213 = vmul.f32 %v5186, %v2431
        %v5214 = vmul.f32 %v5190, %v2432
        %v5215 = vmul.f32 %v5192, %v2433
        %v5216 = vmul.f32 %v5196, %v2434
        %v5217 = vmul.f32 %v5198, %v2435
        %v5218 = vmul.f32 %v5202, %v2436
        %v5219 = vmul.f32 %v5204, %v2437
        %v5221 = vsel %vm2451, %v5218, 0
        %v5224 = vsel %vm2451, %v5219, 0
        %5226 = vmatprep.subr.mxu0 0.0
        %5227 = vmatpush1.msra.mxu0 0.0
        %5228 = vmatprep.subr.mxu0 0.0
        %5229 = vmatpush1.msra.mxu0 0.0
        %5230 = vmatprep.subr.mxu0 0.0
        %5231 = vmatpush1.msra.mxu0 0.0
        %5232 = vmatprep.subr.mxu0 0.0
        %5233 = vmatpush1.msra.mxu0 0.0
        %5234 = vmatprep.subr.mxu0 0.0
        %5235 = vmatpush1.msra.mxu0 0.0
        %5236 = vmatprep.subr.mxu0 0.0
        %5237 = vmatpush1.msra.mxu0 0.0
        %5238 = vmatprep.subr.mxu0 0.0
        %5239 = vmatpush1.msra.mxu0 0.0
        %5240 = vmatprep.subr.mxu0 0.0
        %5241 = vmatpush1.msra.mxu0 0.0
        %5242 = vmatprep.subr.mxu0 0.0
        %5243 = vmatpush1.msra.mxu0 0.0
        %5244 = vmatprep.subr.mxu0 %v5224
        %5245 = vmatpush1.msra.mxu0 %v5221
        %5246 = vmatprep.subr.mxu0 %v5217
        %5247 = vmatpush1.msra.mxu0 %v5216
        %5248 = vmatprep.subr.mxu0 %v5215
        %5249 = vmatpush1.msra.mxu0 %v5214
        %5250 = vmatprep.subr.mxu0 %v5213
        %5251 = vmatpush1.msra.mxu0 %v5212
        %5252 = vmatprep.subr.mxu0 %v5211
        %5253 = vmatpush1.msra.mxu0 %v5210
        %5254 = vmatprep.subr.mxu0 %v5209
        %5255 = vmatpush1.msra.mxu0 %v5208
        %5256 = vmatprep.subr.mxu0 %v5207
        %5257 = vmatpush1.msra.mxu0 %v5206
        %5258 = vmatprep.subr.mxu0 0.0
        %5259 = vmatpush2.msra.mxu0 0.0
        %5260 = vmatprep.subr.mxu0 0.0
        %5261 = vmatpush2.msra.mxu0 0.0
        %5262 = vmatprep.subr.mxu0 0.0
        %5263 = vmatpush2.msra.mxu0 0.0
        %5264 = vmatprep.subr.mxu0 0.0
        %5265 = vmatpush2.msra.mxu0 0.0
        %5266 = vmatprep.subr.mxu0 0.0
        %5267 = vmatpush2.msra.mxu0 0.0
        %5268 = vmatprep.subr.mxu0 0.0
        %5269 = vmatpush2.msra.mxu0 0.0
        %5270 = vmatprep.subr.mxu0 0.0
        %5271 = vmatpush2.msra.mxu0 0.0
        %5272 = vmatprep.subr.mxu0 0.0
        %5273 = vmatpush2.msra.mxu0 0.0
        %5274 = vmatprep.subr.mxu0 0.0
        %5275 = vmatpush2.msra.mxu0 0.0
        %5276 = vmatprep.subr.mxu0 0.0
        %5277 = vmatpush2.msra.mxu0 0.0
        %5278 = vmatprep.subr.mxu0 0.0
        %5279 = vmatpush2.msra.mxu0 0.0
        %5280 = vmatprep.subr.mxu0 0.0
        %5281 = vmatpush2.msra.mxu0 0.0
        %5282 = vmatprep.subr.mxu0 0.0
        %5283 = vmatpush2.msra.mxu0 0.0
        %5284 = vmatprep.subr.mxu0 0.0
        %5285 = vmatpush2.msra.mxu0 0.0
        %5286 = vmatprep.subr.mxu0 0.0
        %5287 = vmatpush2.msra.mxu0 0.0
        %5288 = vmatprep.subr.mxu0 0.0
        %5289 = vmatpush2.msra.mxu0 0.0
        %5290 = vmatprep.mubr.f32.mxu0 0.0
        %5291 = vmatmul.mubr.f32.gmra.mxu0 %v3346
        %v5292 = vpop.f32.mrf.mxu0
        %v5293 = vadd.f32 0.0, %v5292
        %v5294 = vpop.f32.mrf.mxu0
        %v5295 = vadd.f32 0.0, %v5294
        %5296 = vdwg.mxu0
        %v5297 = vlaneseq
        %v5298 = vshrl.u32 %v5297, 7
        %v5299 = vsub.s32 0, %v5298
        %v5300 = vrot.slane %v5293, %v5299
        %v5301 = vlaneseq
        %v5302 = vshrl.u32 %v5301, 7
        %v5303 = vsub.s32 0, %v5302
        %v5304 = vrot.slane %v5295, %v5303
        %v5305 = vmul.f32 %v2651, %v5300
        %v5306 = vmul.f32 %v2653, %v5304
        %v5307 = vmul.f32 %v2657, %v5300
        %v5308 = vmul.f32 %v2659, %v5304
        %v5309 = vmul.f32 %v2663, %v5300
        %v5310 = vmul.f32 %v2665, %v5304
        %v5311 = vmul.f32 %v2669, %v5300
        %v5312 = vmul.f32 %v2671, %v5304
        %v5313 = vmul.f32 %v2675, %v5300
        %v5314 = vmul.f32 %v2677, %v5304
        %v5315 = vmul.f32 %v2681, %v5300
        %v5316 = vmul.f32 %v2683, %v5304
        %v5317 = vmul.f32 %v2687, %v5300
        %v5318 = vmul.f32 %v2689, %v5304
        %v5319 = vadd.f32 %v5057, %v5305
        %v5320 = vadd.f32 %v5058, %v5306
        %v5321 = vadd.f32 %v5059, %v5307
        %v5322 = vadd.f32 %v5060, %v5308
        %v5323 = vadd.f32 %v5061, %v5309
        %v5324 = vadd.f32 %v5062, %v5310
        %v5325 = vadd.f32 %v5063, %v5311
        %v5326 = vadd.f32 %v5064, %v5312
        %v5327 = vadd.f32 %v5065, %v5313
        %v5328 = vadd.f32 %v5066, %v5314
        %v5329 = vadd.f32 %v5067, %v5315
        %v5330 = vadd.f32 %v5068, %v5316
        %v5331 = vadd.f32 %v5069, %v5317
        %v5332 = vadd.f32 %v5070, %v5318
        %v5333 = vsel %vm2891, %v5320, -inf
        %v5334 = vmax.f32 %v5319, %v5333
        %5335 = vmax.xlane.f32.xlu0 %v5334
        %v5336 = vpop.xlane.xlu0 %5335
        %v5337 = vsel %vm2891, %v5322, -inf
        %v5338 = vmax.f32 %v5321, %v5337
        %5339 = vmax.xlane.f32.xlu0 %v5338
        %v5340 = vpop.xlane.xlu0 %5339
        %v5341 = vsel %vm2891, %v5324, -inf
        %v5342 = vmax.f32 %v5323, %v5341
        %5343 = vmax.xlane.f32.xlu0 %v5342
        %v5344 = vpop.xlane.xlu0 %5343
        %v5345 = vsel %vm2891, %v5326, -inf
        %v5346 = vmax.f32 %v5325, %v5345
        %5347 = vmax.xlane.f32.xlu0 %v5346
        %v5348 = vpop.xlane.xlu0 %5347
        %v5349 = vsel %vm2891, %v5328, -inf
        %v5350 = vmax.f32 %v5327, %v5349
        %5351 = vmax.xlane.f32.xlu0 %v5350
        %v5352 = vpop.xlane.xlu0 %5351
        %v5353 = vsel %vm2891, %v5330, -inf
        %v5354 = vmax.f32 %v5329, %v5353
        %5355 = vmax.xlane.f32.xlu0 %v5354
        %v5356 = vpop.xlane.xlu0 %5355
        %v5357 = vsel %vm2451, %v5331, -inf
        %vm5358 = vcmask 548864
        %v5359 = vsel %vm5358, %v5332, -inf
        %v5360 = vmax.f32 %v5357, %v5359
        %5361 = vmax.xlane.f32.xlu0 %v5360
        %v5362 = vpop.xlane.xlu0 %5361
        %v5363 = vsub.f32 %v5319, %v5336
        %v5364 = vsub.f32 %v5320, %v5336
        %v5365 = vsub.f32 %v5321, %v5340
        %v5366 = vsub.f32 %v5322, %v5340
        %v5367 = vsub.f32 %v5323, %v5344
        %v5368 = vsub.f32 %v5324, %v5344
        %v5369 = vsub.f32 %v5325, %v5348
        %v5370 = vsub.f32 %v5326, %v5348
        %v5371 = vsub.f32 %v5327, %v5352
        %v5372 = vsub.f32 %v5328, %v5352
        %v5373 = vsub.f32 %v5329, %v5356
        %v5374 = vsub.f32 %v5330, %v5356
        %v5375 = vsub.f32 %v5331, %v5362
        %v5376 = vsub.f32 %v5332, %v5362
        %v5377 = vmul.f32 %v5363, 1.442695
        %v5378 = vpow.pop %v5377
        %v5379 = vmul.f32 %v5364, 1.442695
        %v5380 = vpow.pop %v5379
        %v5381 = vmul.f32 %v5365, 1.442695
        %v5382 = vpow.pop %v5381
        %v5383 = vmul.f32 %v5366, 1.442695
        %v5384 = vpow.pop %v5383
        %v5385 = vmul.f32 %v5367, 1.442695
        %v5386 = vpow.pop %v5385
        %v5387 = vmul.f32 %v5368, 1.442695
        %v5388 = vpow.pop %v5387
        %v5389 = vmul.f32 %v5369, 1.442695
        %v5390 = vpow.pop %v5389
        %v5391 = vmul.f32 %v5370, 1.442695
        %v5392 = vpow.pop %v5391
        %v5393 = vmul.f32 %v5371, 1.442695
        %v5394 = vpow.pop %v5393
        %v5395 = vmul.f32 %v5372, 1.442695
        %v5396 = vpow.pop %v5395
        %v5397 = vmul.f32 %v5373, 1.442695
        %v5398 = vpow.pop %v5397
        %v5399 = vmul.f32 %v5374, 1.442695
        %v5400 = vpow.pop %v5399
        %v5401 = vmul.f32 %v5375, 1.442695
        %v5402 = vpow.pop %v5401
        %v5403 = vmul.f32 %v5376, 1.442695
        %v5404 = vpow.pop %v5403
        %v5405 = vpack.c.bf16 %v5382, %v5378
        %v5406 = vpack.c.bf16 %v5384, %v5380
        %v5407 = vpack.c.bf16 %v5390, %v5386
        %v5408 = vpack.c.bf16 %v5392, %v5388
        %v5409 = vpack.c.bf16 %v5398, %v5394
        %v5410 = vpack.c.bf16 %v5400, %v5396
        %v5411 = vpack.c.bf16 %v5402, %v5402
        %v5412 = vpack.c.bf16 %v5404, %v5404
        %v5413 = vld [vmem:[%s15] sm:$0xff]
        %v5414 = vld [vmem:[%s15 + $0x8] sm:$0xff]
        %v5415 = vld [vmem:[%s15 + $0x10] sm:$0xff]
        %v5416 = vld [vmem:[%s15 + $0x18] sm:$0xff]
        %v5417 = vld [vmem:[%s15 + $0x20] sm:$0xff]
        %v5418 = vld [vmem:[%s15 + $0x28] sm:$0xff]
        %v5419 = vld [vmem:[%s15 + $0x30] sm:$0xff]
        %v5420 = vld [vmem:[%s15 + $0x38] sm:$0xff]
        %v5421 = vld [vmem:[%s15 + $0x40] sm:$0xff]
        %v5422 = vld [vmem:[%s15 + $0x48] sm:$0xff]
        %v5423 = vld [vmem:[%s15 + $0x50] sm:$0xff]
        %v5424 = vld [vmem:[%s15 + $0x58] sm:$0xff]
        %v5425 = vld [vmem:[%s15 + $0x60] sm:$0xff]
        %v5426 = vld [vmem:[%s15 + $0x68] sm:$0xff]
        %v5427 = vld [vmem:[%s15 + $0x70] sm:$0xff]
        %v5428 = vld [vmem:[%s15 + $0x78] sm:$0xff]
        %v5429 = vld [vmem:[%s15 + $0x80] sm:$0xff]
        %v5430 = vld [vmem:[%s15 + $0x88] sm:$0xff]
        %v5431 = vld [vmem:[%s15 + $0x90] sm:$0xff]
        %v5432 = vld [vmem:[%s15 + $0x98] sm:$0xff]
        %v5433 = vld [vmem:[%s15 + $0xa0] sm:$0xff]
        %v5434 = vld [vmem:[%s15 + $0xa8] sm:$0xff]
        %v5435 = vld [vmem:[%s15 + $0xb0] sm:$0xff]
        %v5436 = vld [vmem:[%s15 + $0xb8] sm:$0xff]
        %v5437 = vld [vmem:[%s15 + $0xc0] sm:$0x33]
        %v5463 = vunpack.c.l.b16 %v5413
        %v5464 = vunpack.c.h.b16 %v5413
        %v5465 = vunpack.c.l.b16 %v5414
        %v5466 = vunpack.c.h.b16 %v5414
        %v5467 = vunpack.c.l.b16 %v5415
        %v5468 = vunpack.c.h.b16 %v5415
        %v5469 = vunpack.c.l.b16 %v5416
        %v5470 = vunpack.c.h.b16 %v5416
        %v5471 = vunpack.c.l.b16 %v5417
        %v5472 = vunpack.c.h.b16 %v5417
        %v5473 = vunpack.c.l.b16 %v5418
        %v5474 = vunpack.c.h.b16 %v5418
        %v5475 = vunpack.c.l.b16 %v5419
        %v5476 = vunpack.c.h.b16 %v5419
        %v5477 = vunpack.c.l.b16 %v5420
        %v5478 = vunpack.c.h.b16 %v5420
        %v5479 = vunpack.c.l.b16 %v5421
        %v5480 = vunpack.c.h.b16 %v5421
        %v5481 = vunpack.c.l.b16 %v5422
        %v5482 = vunpack.c.h.b16 %v5422
        %v5483 = vunpack.c.l.b16 %v5423
        %v5484 = vunpack.c.h.b16 %v5423
        %v5485 = vunpack.c.l.b16 %v5424
        %v5486 = vunpack.c.h.b16 %v5424
        %v5487 = vunpack.c.l.b16 %v5425
        %v5488 = vunpack.c.h.b16 %v5425
        %v5489 = vunpack.c.l.b16 %v5426
        %v5490 = vunpack.c.h.b16 %v5426
        %v5491 = vunpack.c.l.b16 %v5427
        %v5492 = vunpack.c.h.b16 %v5427
        %v5493 = vunpack.c.l.b16 %v5428
        %v5494 = vunpack.c.h.b16 %v5428
        %v5495 = vunpack.c.l.b16 %v5429
        %v5496 = vunpack.c.h.b16 %v5429
        %v5497 = vunpack.c.l.b16 %v5430
        %v5498 = vunpack.c.h.b16 %v5430
        %v5499 = vunpack.c.l.b16 %v5431
        %v5500 = vunpack.c.h.b16 %v5431
        %v5501 = vunpack.c.l.b16 %v5432
        %v5502 = vunpack.c.h.b16 %v5432
        %v5503 = vunpack.c.l.b16 %v5433
        %v5504 = vunpack.c.h.b16 %v5433
        %v5505 = vunpack.c.l.b16 %v5434
        %v5506 = vunpack.c.h.b16 %v5434
        %v5507 = vunpack.c.l.b16 %v5435
        %v5508 = vunpack.c.h.b16 %v5435
        %v5509 = vunpack.c.l.b16 %v5436
        %v5510 = vunpack.c.h.b16 %v5436
        %v5511 = vunpack.c.l.b16 %v5437
        %v5512 = vunpack.c.h.b16 %v5437
        %v5513 = vpack.c.b16 %v5465, %v5463
        %v5514 = vpack.c.b16 %v5466, %v5464
        %v5515 = vpack.c.b16 %v5469, %v5467
        %v5516 = vpack.c.b16 %v5470, %v5468
        %v5517 = vpack.c.b16 %v5473, %v5471
        %v5518 = vpack.c.b16 %v5474, %v5472
        %v5519 = vpack.c.b16 %v5477, %v5475
        %v5520 = vpack.c.b16 %v5478, %v5476
        %v5521 = vpack.c.b16 %v5481, %v5479
        %v5522 = vpack.c.b16 %v5482, %v5480
        %v5523 = vpack.c.b16 %v5485, %v5483
        %v5524 = vpack.c.b16 %v5486, %v5484
        %v5525 = vpack.c.b16 %v5489, %v5487
        %v5526 = vpack.c.b16 %v5490, %v5488
        %v5527 = vpack.c.b16 %v5493, %v5491
        %v5528 = vpack.c.b16 %v5494, %v5492
        %v5529 = vpack.c.b16 %v5497, %v5495
        %v5530 = vpack.c.b16 %v5498, %v5496
        %v5531 = vpack.c.b16 %v5501, %v5499
        %v5532 = vpack.c.b16 %v5502, %v5500
        %v5533 = vpack.c.b16 %v5505, %v5503
        %v5534 = vpack.c.b16 %v5506, %v5504
        %v5535 = vpack.c.b16 %v5509, %v5507
        %v5536 = vpack.c.b16 %v5510, %v5508
        %v5537 = vpack.c.b16 %v5511, %v5511
        %v5538 = vpack.c.b16 %v5512, %v5512
        %v5564 = vsel %vm2891, %v5406, 0
        %v5567 = vsel %vm2891, %v5408, 0
        %v5570 = vsel %vm2891, %v5410, 0
        %v5573 = vsel %vm2891, %v5412, 0
        %vm5575 = vcmask 1041408
        %v5577 = vsel %vm5575, %v5537, 0
        %v5580 = vsel %vm5575, %v5538, 0
        %5582 = vmatprep.subr.bf16.mxu0 %v5528
        %5583 = vmatpush1.bf16.msra.mxu0 %v5527
        %5584 = vmatprep.subr.bf16.mxu0 %v5526
        %5585 = vmatpush1.bf16.msra.mxu0 %v5525
        %5586 = vmatprep.subr.bf16.mxu0 %v5524
        %5587 = vmatpush1.bf16.msra.mxu0 %v5523
        %5588 = vmatprep.subr.bf16.mxu0 %v5522
        %5589 = vmatpush1.bf16.msra.mxu0 %v5521
        %5590 = vmatprep.subr.bf16.mxu0 %v5520
        %5591 = vmatpush1.bf16.msra.mxu0 %v5519
        %5592 = vmatprep.subr.bf16.mxu0 %v5518
        %5593 = vmatpush1.bf16.msra.mxu0 %v5517
        %5594 = vmatprep.subr.bf16.mxu0 %v5516
        %5595 = vmatpush1.bf16.msra.mxu0 %v5515
        %5596 = vmatprep.subr.bf16.mxu0 %v5514
        %5597 = vmatpush1.bf16.msra.mxu0 %v5513
        %5598 = vmatprep.subr.bf16.mxu0 0
        %5599 = vmatpush2.bf16.msra.mxu0 0
        %5600 = vmatprep.subr.bf16.mxu0 0
        %5601 = vmatpush2.bf16.msra.mxu0 0
        %5602 = vmatprep.subr.bf16.mxu0 0
        %5603 = vmatpush2.bf16.msra.mxu0 0
        %5604 = vmatprep.subr.bf16.mxu0 %v5580
        %5605 = vmatpush2.bf16.msra.mxu0 %v5577
        %5606 = vmatprep.subr.bf16.mxu0 %v5536
        %5607 = vmatpush2.bf16.msra.mxu0 %v5535
        %5608 = vmatprep.subr.bf16.mxu0 %v5534
        %5609 = vmatpush2.bf16.msra.mxu0 %v5533
        %5610 = vmatprep.subr.bf16.mxu0 %v5532
        %5611 = vmatpush2.bf16.msra.mxu0 %v5531
        %5612 = vmatprep.subr.bf16.mxu0 %v5530
        %5613 = vmatpush2.bf16.msra.mxu0 %v5529
        %5614 = vmatprep.mubr.bf16.mxu0 %v5564
        %5615 = vmatmul.mubr.bf16.gmra.mxu0 %v5405
        %v5616 = vpop.f32.mrf.mxu0
        %v5617 = vadd.f32 0.0, %v5616
        %v5618 = vpop.f32.mrf.mxu0
        %v5619 = vadd.f32 0.0, %v5618
        %v5620 = vpop.f32.mrf.mxu0
        %v5621 = vadd.f32 0.0, %v5620
        %v5622 = vpop.f32.mrf.mxu0
        %v5623 = vadd.f32 0.0, %v5622
        %5624 = vmatprep.mubr.bf16.mxu0 %v5567
        %5625 = vmatmul.mubr.bf16.gmra.mxu0 %v5407
        %v5626 = vpop.f32.mrf.mxu0
        %v5627 = vadd.f32 0.0, %v5626
        %v5628 = vpop.f32.mrf.mxu0
        %v5629 = vadd.f32 0.0, %v5628
        %v5630 = vpop.f32.mrf.mxu0
        %v5631 = vadd.f32 0.0, %v5630
        %v5632 = vpop.f32.mrf.mxu0
        %v5633 = vadd.f32 0.0, %v5632
        %5634 = vmatprep.mubr.bf16.mxu0 %v5570
        %5635 = vmatmul.mubr.bf16.gmra.mxu0 %v5409
        %v5636 = vpop.f32.mrf.mxu0
        %v5637 = vadd.f32 0.0, %v5636
        %v5638 = vpop.f32.mrf.mxu0
        %v5639 = vadd.f32 0.0, %v5638
        %v5640 = vpop.f32.mrf.mxu0
        %v5641 = vadd.f32 0.0, %v5640
        %v5642 = vpop.f32.mrf.mxu0
        %v5643 = vadd.f32 0.0, %v5642
        %5644 = vmatprep.mubr.bf16.mxu0 %v5573
        %5645 = vmatmul.mubr.bf16.gmra.mxu0 %v5411
        %v5646 = vpop.f32.mrf.mxu0
        %v5647 = vadd.f32 0.0, %v5646
        %v5648 = vpop.f32.mrf.mxu0
        %v5649 = vadd.f32 0.0, %v5648
        %v5650 = vpop.f32.mrf.mxu0
        %v5651 = vpop.f32.mrf.mxu0
        %5652 = vdwg.mxu0
        %v5653 = vrcp.pop %v5617
        %v5654 = vrcp.pop %v5619
        %v5655 = vrcp.pop %v5621
        %v5656 = vrcp.pop %v5623
        %v5657 = vrcp.pop %v5627
        %v5658 = vrcp.pop %v5629
        %v5659 = vrcp.pop %v5631
        %v5660 = vrcp.pop %v5633
        %v5661 = vrcp.pop %v5637
        %v5662 = vrcp.pop %v5639
        %v5663 = vrcp.pop %v5641
        %v5664 = vrcp.pop %v5643
        %v5665 = vrcp.pop %v5647
        %v5666 = vrcp.pop %v5649
        %v5667 = vmul.f32 %v5617, %v5653
        %v5668 = vmul.f32 %v5619, %v5654
        %v5669 = vmul.f32 %v5621, %v5655
        %v5670 = vmul.f32 %v5623, %v5656
        %v5671 = vmul.f32 %v5627, %v5657
        %v5672 = vmul.f32 %v5629, %v5658
        %v5673 = vmul.f32 %v5631, %v5659
        %v5674 = vmul.f32 %v5633, %v5660
        %v5675 = vmul.f32 %v5637, %v5661
        %v5676 = vmul.f32 %v5639, %v5662
        %v5677 = vmul.f32 %v5641, %v5663
        %v5678 = vmul.f32 %v5643, %v5664
        %v5679 = vmul.f32 %v5647, %v5665
        %v5680 = vmul.f32 %v5649, %v5666
        %v5681 = vsub.f32 2.0, %v5667
        %v5682 = vsub.f32 2.0, %v5668
        %v5683 = vsub.f32 2.0, %v5669
        %v5684 = vsub.f32 2.0, %v5670
        %v5685 = vsub.f32 2.0, %v5671
        %v5686 = vsub.f32 2.0, %v5672
        %v5687 = vsub.f32 2.0, %v5673
        %v5688 = vsub.f32 2.0, %v5674
        %v5689 = vsub.f32 2.0, %v5675
        %v5690 = vsub.f32 2.0, %v5676
        %v5691 = vsub.f32 2.0, %v5677
        %v5692 = vsub.f32 2.0, %v5678
        %v5693 = vsub.f32 2.0, %v5679
        %v5694 = vsub.f32 2.0, %v5680
        %v5695 = vmul.f32 %v5653, %v5681
        %v5696 = vmul.f32 %v5654, %v5682
        %v5697 = vmul.f32 %v5655, %v5683
        %v5698 = vmul.f32 %v5656, %v5684
        %v5699 = vmul.f32 %v5657, %v5685
        %v5700 = vmul.f32 %v5658, %v5686
        %v5701 = vmul.f32 %v5659, %v5687
        %v5702 = vmul.f32 %v5660, %v5688
        %v5703 = vmul.f32 %v5661, %v5689
        %v5704 = vmul.f32 %v5662, %v5690
        %v5705 = vmul.f32 %v5663, %v5691
        %v5706 = vmul.f32 %v5664, %v5692
        %v5707 = vmul.f32 %v5665, %v5693
        %v5708 = vmul.f32 %v5666, %v5694
        %v5709 = vmul.f32 %v5378, %v5695
        %v5710 = vmul.f32 %v5380, %v5696
        %v5711 = vmul.f32 %v5382, %v5697
        %v5712 = vmul.f32 %v5384, %v5698
        %v5713 = vmul.f32 %v5386, %v5699
        %v5714 = vmul.f32 %v5388, %v5700
        %v5715 = vmul.f32 %v5390, %v5701
        %v5716 = vmul.f32 %v5392, %v5702
        %v5717 = vmul.f32 %v5394, %v5703
        %v5718 = vmul.f32 %v5396, %v5704
        %v5719 = vmul.f32 %v5398, %v5705
        %v5720 = vmul.f32 %v5400, %v5706
        %v5721 = vmul.f32 %v5402, %v5707
        %v5722 = vmul.f32 %v5404, %v5708
        %v5723 = vld [vmem:[%s14] sm:$0xff]
        %v5724 = vld [vmem:[%s14 + $0x8] sm:$0xff]
        %v5725 = vld [vmem:[%s14 + $0x10] sm:$0xff]
        %v5726 = vld [vmem:[%s14 + $0x18] sm:$0xff]
        %v5727 = vld [vmem:[%s14 + $0x20] sm:$0xff]
        %v5728 = vld [vmem:[%s14 + $0x28] sm:$0xff]
        %v5729 = vld [vmem:[%s14 + $0x30] sm:$0xff]
        %v5730 = vld [vmem:[%s14 + $0x38] sm:$0xff]
        %v5731 = vld [vmem:[%s14 + $0x40] sm:$0xff]
        %v5732 = vld [vmem:[%s14 + $0x48] sm:$0xff]
        %v5733 = vld [vmem:[%s14 + $0x50] sm:$0xff]
        %v5734 = vld [vmem:[%s14 + $0x58] sm:$0xff]
        %v5735 = vld [vmem:[%s14 + $0x60] sm:$0xff]
        %v5736 = vld [vmem:[%s14 + $0x68] sm:$0xff]
        %v5737 = vld [vmem:[%s14 + $0x70] sm:$0xff]
        %v5738 = vld [vmem:[%s14 + $0x78] sm:$0xff]
        %v5739 = vld [vmem:[%s14 + $0x80] sm:$0xff]
        %v5740 = vld [vmem:[%s14 + $0x88] sm:$0xff]
        %v5741 = vld [vmem:[%s14 + $0x90] sm:$0xff]
        %v5742 = vld [vmem:[%s14 + $0x98] sm:$0xff]
        %v5743 = vld [vmem:[%s14 + $0xa0] sm:$0xff]
        %v5744 = vld [vmem:[%s14 + $0xa8] sm:$0xff]
        %v5745 = vld [vmem:[%s14 + $0xb0] sm:$0xff]
        %v5746 = vld [vmem:[%s14 + $0xb8] sm:$0xff]
        %v5747 = vld [vmem:[%s14 + $0xc0] sm:$0x33]
        %v5748 = vpack.c.bf16 %v5711, %v5709
        %v5749 = vpack.c.bf16 %v5712, %v5710
        %v5750 = vpack.c.bf16 %v5715, %v5713
        %v5751 = vpack.c.bf16 %v5716, %v5714
        %v5752 = vpack.c.bf16 %v5719, %v5717
        %v5753 = vpack.c.bf16 %v5720, %v5718
        %v5754 = vpack.c.bf16 %v5721, %v5721
        %v5755 = vpack.c.bf16 %v5722, %v5722
        %5756 = vrot.lane.b32.xlu0 %v2305, 96
        %v5757 = vpop.permute.xlu0 %5756
        %5758 = vrot.lane.b32.xlu0 %v2306, 96
        %v5759 = vpop.permute.xlu0 %5758
        %5760 = vrot.lane.b32.xlu0 %v2307, 96
        %v5761 = vpop.permute.xlu0 %5760
        %5762 = vrot.lane.b32.xlu0 %v2308, 96
        %v5763 = vpop.permute.xlu0 %5762
        %5764 = vrot.lane.b32.xlu0 %v2309, 96
        %v5765 = vpop.permute.xlu0 %5764
        %5766 = vrot.lane.b32.xlu0 %v2310, 96
        %v5767 = vpop.permute.xlu0 %5766
        %5768 = vrot.lane.b32.xlu0 %v2311, 96
        %v5769 = vpop.permute.xlu0 %5768
        %v5770 = vsel %vm2743, %v5757, 0
        %v5772 = vsel %vm2743, %v5759, 0
        %v5774 = vsel %vm2743, %v5761, 0
        %v5776 = vsel %vm2743, %v5763, 0
        %v5778 = vsel %vm2743, %v5765, 0
        %v5780 = vsel %vm2743, %v5767, 0
        %v5782 = vsel %vm2743, %v5769, 0
        %5784 = vmatprep.subr.mxu0 0.0
        %5785 = vmatpush1.msra.mxu0 0.0
        %5786 = vmatprep.subr.mxu0 0.0
        %5787 = vmatpush1.msra.mxu0 0.0
        %5788 = vmatprep.subr.mxu0 0.0
        %5789 = vmatpush1.msra.mxu0 0.0
        %5790 = vmatprep.subr.mxu0 0.0
        %5791 = vmatpush1.msra.mxu0 0.0
        %5792 = vmatprep.subr.mxu0 0.0
        %5793 = vmatpush1.msra.mxu0 0.0
        %5794 = vmatprep.subr.mxu0 0.0
        %5795 = vmatpush1.msra.mxu0 0.0
        %5796 = vmatprep.subr.mxu0 0.0
        %5797 = vmatpush1.msra.mxu0 0.0
        %5798 = vmatprep.subr.mxu0 0.0
        %5799 = vmatpush1.msra.mxu0 0.0
        %5800 = vmatprep.subr.mxu0 0.0
        %5801 = vmatpush1.msra.mxu0 0.0
        %5802 = vmatprep.subr.mxu0 0.0
        %5803 = vmatpush1.msra.mxu0 0.0
        %5804 = vmatprep.subr.mxu0 0.0
        %5805 = vmatpush1.msra.mxu0 0.0
        %5806 = vmatprep.subr.mxu0 0.0
        %5807 = vmatpush1.msra.mxu0 0.0
        %5808 = vmatprep.subr.mxu0 0.0
        %5809 = vmatpush1.msra.mxu0 0.0
        %5810 = vmatprep.subr.mxu0 0.0
        %5811 = vmatpush1.msra.mxu0 0.0
        %5812 = vmatprep.subr.mxu0 0.0
        %5813 = vmatpush1.msra.mxu0 0.0
        %5814 = vmatprep.subr.mxu0 %v2768
        %5815 = vmatpush1.msra.mxu0 %v2766
        %5816 = vmatprep.subr.mxu0 0.0
        %5817 = vmatpush2.msra.mxu0 0.0
        %5818 = vmatprep.subr.mxu0 0.0
        %5819 = vmatpush2.msra.mxu0 0.0
        %5820 = vmatprep.subr.mxu0 0.0
        %5821 = vmatpush2.msra.mxu0 0.0
        %5822 = vmatprep.subr.mxu0 0.0
        %5823 = vmatpush2.msra.mxu0 0.0
        %5824 = vmatprep.subr.mxu0 0.0
        %5825 = vmatpush2.msra.mxu0 0.0
        %5826 = vmatprep.subr.mxu0 0.0
        %5827 = vmatpush2.msra.mxu0 0.0
        %5828 = vmatprep.subr.mxu0 0.0
        %5829 = vmatpush2.msra.mxu0 0.0
        %5830 = vmatprep.subr.mxu0 0.0
        %5831 = vmatpush2.msra.mxu0 0.0
        %5832 = vmatprep.subr.mxu0 0.0
        %5833 = vmatpush2.msra.mxu0 0.0
        %5834 = vmatprep.subr.mxu0 0.0
        %5835 = vmatpush2.msra.mxu0 0.0
        %5836 = vmatprep.subr.mxu0 0.0
        %5837 = vmatpush2.msra.mxu0 0.0
        %5838 = vmatprep.subr.mxu0 0.0
        %5839 = vmatpush2.msra.mxu0 0.0
        %5840 = vmatprep.subr.mxu0 0.0
        %5841 = vmatpush2.msra.mxu0 0.0
        %5842 = vmatprep.subr.mxu0 0.0
        %5843 = vmatpush2.msra.mxu0 0.0
        %5844 = vmatprep.subr.mxu0 0.0
        %5845 = vmatpush2.msra.mxu0 0.0
        %5846 = vmatprep.subr.mxu0 0.0
        %5847 = vmatpush2.msra.mxu0 0.0
        %5848 = vmatprep.mubr.f32.mxu0 0.0
        %5849 = vmatmul.mubr.f32.gmra.mxu0 %v5770
        %v5850 = vpop.f32.mrf.mxu0
        %v5851 = vadd.f32 0.0, %v5850
        %v5852 = vpop.f32.mrf.mxu0
        %v5853 = vadd.f32 0.0, %v5852
        %5854 = vmatprep.mubr.f32.mxu0 0.0
        %5855 = vmatmul.mubr.f32.gmra.mxu0 %v5772
        %v5856 = vpop.f32.mrf.mxu0
        %v5857 = vadd.f32 0.0, %v5856
        %v5858 = vpop.f32.mrf.mxu0
        %v5859 = vadd.f32 0.0, %v5858
        %5860 = vmatprep.mubr.f32.mxu0 0.0
        %5861 = vmatmul.mubr.f32.gmra.mxu0 %v5774
        %v5862 = vpop.f32.mrf.mxu0
        %v5863 = vadd.f32 0.0, %v5862
        %v5864 = vpop.f32.mrf.mxu0
        %v5865 = vadd.f32 0.0, %v5864
        %5866 = vmatprep.mubr.f32.mxu0 0.0
        %5867 = vmatmul.mubr.f32.gmra.mxu0 %v5776
        %v5868 = vpop.f32.mrf.mxu0
        %v5869 = vadd.f32 0.0, %v5868
        %v5870 = vpop.f32.mrf.mxu0
        %v5871 = vadd.f32 0.0, %v5870
        %5872 = vmatprep.mubr.f32.mxu0 0.0
        %5873 = vmatmul.mubr.f32.gmra.mxu0 %v5778
        %v5874 = vpop.f32.mrf.mxu0
        %v5875 = vadd.f32 0.0, %v5874
        %v5876 = vpop.f32.mrf.mxu0
        %v5877 = vadd.f32 0.0, %v5876
        %5878 = vmatprep.mubr.f32.mxu0 0.0
        %5879 = vmatmul.mubr.f32.gmra.mxu0 %v5780
        %v5880 = vpop.f32.mrf.mxu0
        %v5881 = vadd.f32 0.0, %v5880
        %v5882 = vpop.f32.mrf.mxu0
        %v5883 = vadd.f32 0.0, %v5882
        %5884 = vmatprep.mubr.f32.mxu0 0.0
        %5885 = vmatmul.mubr.f32.gmra.mxu0 %v5782
        %v5886 = vpop.f32.mrf.mxu0
        %v5887 = vadd.f32 0.0, %v5886
        %v5888 = vpop.f32.mrf.mxu0
        %v5889 = vadd.f32 0.0, %v5888
        %5890 = vdwg.mxu0
        %v5891 = vpack.c.bf16 %v5857, %v5851
        %v5892 = vpack.c.bf16 %v5859, %v5853
        %v5893 = vpack.c.bf16 %v5869, %v5863
        %v5894 = vpack.c.bf16 %v5871, %v5865
        %v5895 = vpack.c.bf16 %v5881, %v5875
        %v5896 = vpack.c.bf16 %v5883, %v5877
        %v5897 = vpack.c.bf16 %v5887, %v5887
        %v5898 = vpack.c.bf16 %v5889, %v5889
        %v5899 = vmul.bf16 %v5748, %v5891
        %v5900 = vmul.bf16 %v5749, %v5892
        %v5901 = vmul.bf16 %v5750, %v5893
        %v5902 = vmul.bf16 %v5751, %v5894
        %v5903 = vmul.bf16 %v5752, %v5895
        %v5904 = vmul.bf16 %v5753, %v5896
        %v5905 = vmul.bf16 %v5754, %v5897
        %v5906 = vmul.bf16 %v5755, %v5898
        %v5932 = vunpack.c.l.b16 %v5723
        %v5933 = vunpack.c.h.b16 %v5723
        %v5934 = vunpack.c.l.b16 %v5724
        %v5935 = vunpack.c.h.b16 %v5724
        %v5936 = vunpack.c.l.b16 %v5725
        %v5937 = vunpack.c.h.b16 %v5725
        %v5938 = vunpack.c.l.b16 %v5726
        %v5939 = vunpack.c.h.b16 %v5726
        %v5940 = vunpack.c.l.b16 %v5727
        %v5941 = vunpack.c.h.b16 %v5727
        %v5942 = vunpack.c.l.b16 %v5728
        %v5943 = vunpack.c.h.b16 %v5728
        %v5944 = vunpack.c.l.b16 %v5729
        %v5945 = vunpack.c.h.b16 %v5729
        %v5946 = vunpack.c.l.b16 %v5730
        %v5947 = vunpack.c.h.b16 %v5730
        %v5948 = vunpack.c.l.b16 %v5731
        %v5949 = vunpack.c.h.b16 %v5731
        %v5950 = vunpack.c.l.b16 %v5732
        %v5951 = vunpack.c.h.b16 %v5732
        %v5952 = vunpack.c.l.b16 %v5733
        %v5953 = vunpack.c.h.b16 %v5733
        %v5954 = vunpack.c.l.b16 %v5734
        %v5955 = vunpack.c.h.b16 %v5734
        %v5956 = vunpack.c.l.b16 %v5735
        %v5957 = vunpack.c.h.b16 %v5735
        %v5958 = vunpack.c.l.b16 %v5736
        %v5959 = vunpack.c.h.b16 %v5736
        %v5960 = vunpack.c.l.b16 %v5737
        %v5961 = vunpack.c.h.b16 %v5737
        %v5962 = vunpack.c.l.b16 %v5738
        %v5963 = vunpack.c.h.b16 %v5738
        %v5964 = vunpack.c.l.b16 %v5739
        %v5965 = vunpack.c.h.b16 %v5739
        %v5966 = vunpack.c.l.b16 %v5740
        %v5967 = vunpack.c.h.b16 %v5740
        %v5968 = vunpack.c.l.b16 %v5741
        %v5969 = vunpack.c.h.b16 %v5741
        %v5970 = vunpack.c.l.b16 %v5742
        %v5971 = vunpack.c.h.b16 %v5742
        %v5972 = vunpack.c.l.b16 %v5743
        %v5973 = vunpack.c.h.b16 %v5743
        %v5974 = vunpack.c.l.b16 %v5744
        %v5975 = vunpack.c.h.b16 %v5744
        %v5976 = vunpack.c.l.b16 %v5745
        %v5977 = vunpack.c.h.b16 %v5745
        %v5978 = vunpack.c.l.b16 %v5746
        %v5979 = vunpack.c.h.b16 %v5746
        %v5980 = vunpack.c.l.b16 %v5747
        %v5981 = vunpack.c.h.b16 %v5747
        %v5982 = vpack.c.b16 %v5934, %v5932
        %v5983 = vpack.c.b16 %v5935, %v5933
        %v5984 = vpack.c.b16 %v5938, %v5936
        %v5985 = vpack.c.b16 %v5939, %v5937
        %v5986 = vpack.c.b16 %v5942, %v5940
        %v5987 = vpack.c.b16 %v5943, %v5941
        %v5988 = vpack.c.b16 %v5946, %v5944
        %v5989 = vpack.c.b16 %v5947, %v5945
        %v5990 = vpack.c.b16 %v5950, %v5948
        %v5991 = vpack.c.b16 %v5951, %v5949
        %v5992 = vpack.c.b16 %v5954, %v5952
        %v5993 = vpack.c.b16 %v5955, %v5953
        %v5994 = vpack.c.b16 %v5958, %v5956
        %v5995 = vpack.c.b16 %v5959, %v5957
        %v5996 = vpack.c.b16 %v5962, %v5960
        %v5997 = vpack.c.b16 %v5963, %v5961
        %v5998 = vpack.c.b16 %v5966, %v5964
        %v5999 = vpack.c.b16 %v5967, %v5965
        %v6000 = vpack.c.b16 %v5970, %v5968
        %v6001 = vpack.c.b16 %v5971, %v5969
        %v6002 = vpack.c.b16 %v5974, %v5972
        %v6003 = vpack.c.b16 %v5975, %v5973
        %v6004 = vpack.c.b16 %v5978, %v5976
        %v6005 = vpack.c.b16 %v5979, %v5977
        %v6006 = vpack.c.b16 %v5980, %v5980
        %v6007 = vpack.c.b16 %v5981, %v5981
        %v6033 = vsel %vm2891, %v5900, 0
        %v6036 = vsel %vm2891, %v5902, 0
        %v6039 = vsel %vm2891, %v5904, 0
        %v6042 = vsel %vm2891, %v5906, 0
        %v6045 = vsel %vm5575, %v6006, 0
        %v6048 = vsel %vm5575, %v6007, 0
        %6050 = vmatprep.subr.bf16.mxu0 %v5997
        %6051 = vmatpush1.bf16.msra.mxu0 %v5996
        %6052 = vmatprep.subr.bf16.mxu0 %v5995
        %6053 = vmatpush1.bf16.msra.mxu0 %v5994
        %6054 = vmatprep.subr.bf16.mxu0 %v5993
        %6055 = vmatpush1.bf16.msra.mxu0 %v5992
        %6056 = vmatprep.subr.bf16.mxu0 %v5991
        %6057 = vmatpush1.bf16.msra.mxu0 %v5990
        %6058 = vmatprep.subr.bf16.mxu0 %v5989
        %6059 = vmatpush1.bf16.msra.mxu0 %v5988
        %6060 = vmatprep.subr.bf16.mxu0 %v5987
        %6061 = vmatpush1.bf16.msra.mxu0 %v5986
        %6062 = vmatprep.subr.bf16.mxu0 %v5985
        %6063 = vmatpush1.bf16.msra.mxu0 %v5984
        %6064 = vmatprep.subr.bf16.mxu0 %v5983
        %6065 = vmatpush1.bf16.msra.mxu0 %v5982
        %6066 = vmatprep.subr.bf16.mxu0 0
        %6067 = vmatpush2.bf16.msra.mxu0 0
        %6068 = vmatprep.subr.bf16.mxu0 0
        %6069 = vmatpush2.bf16.msra.mxu0 0
        %6070 = vmatprep.subr.bf16.mxu0 0
        %6071 = vmatpush2.bf16.msra.mxu0 0
        %6072 = vmatprep.subr.bf16.mxu0 %v6048
        %6073 = vmatpush2.bf16.msra.mxu0 %v6045
        %6074 = vmatprep.subr.bf16.mxu0 %v6005
        %6075 = vmatpush2.bf16.msra.mxu0 %v6004
        %6076 = vmatprep.subr.bf16.mxu0 %v6003
        %6077 = vmatpush2.bf16.msra.mxu0 %v6002
        %6078 = vmatprep.subr.bf16.mxu0 %v6001
        %6079 = vmatpush2.bf16.msra.mxu0 %v6000
        %6080 = vmatprep.subr.bf16.mxu0 %v5999
        %6081 = vmatpush2.bf16.msra.mxu0 %v5998
        %6082 = vmatprep.mubr.bf16.mxu0 %v6033
        %6083 = vmatmul.mubr.bf16.gmra.mxu0 %v5899
        %v6084 = vpop.f32.mrf.mxu0
        %v6085 = vadd.f32 0.0, %v6084
        %v6086 = vpop.f32.mrf.mxu0
        %v6087 = vadd.f32 0.0, %v6086
        %v6088 = vpop.f32.mrf.mxu0
        %v6089 = vadd.f32 0.0, %v6088
        %v6090 = vpop.f32.mrf.mxu0
        %v6091 = vadd.f32 0.0, %v6090
        %6092 = vmatprep.mubr.bf16.mxu0 %v6036
        %6093 = vmatmul.mubr.bf16.gmra.mxu0 %v5901
        %v6094 = vpop.f32.mrf.mxu0
        %v6095 = vadd.f32 0.0, %v6094
        %v6096 = vpop.f32.mrf.mxu0
        %v6097 = vadd.f32 0.0, %v6096
        %v6098 = vpop.f32.mrf.mxu0
        %v6099 = vadd.f32 0.0, %v6098
        %v6100 = vpop.f32.mrf.mxu0
        %v6101 = vadd.f32 0.0, %v6100
        %6102 = vmatprep.mubr.bf16.mxu0 %v6039
        %6103 = vmatmul.mubr.bf16.gmra.mxu0 %v5903
        %v6104 = vpop.f32.mrf.mxu0
        %v6105 = vadd.f32 0.0, %v6104
        %v6106 = vpop.f32.mrf.mxu0
        %v6107 = vadd.f32 0.0, %v6106
        %v6108 = vpop.f32.mrf.mxu0
        %v6109 = vadd.f32 0.0, %v6108
        %v6110 = vpop.f32.mrf.mxu0
        %v6111 = vadd.f32 0.0, %v6110
        %6112 = vmatprep.mubr.bf16.mxu0 %v6042
        %6113 = vmatmul.mubr.bf16.gmra.mxu0 %v5905
        %v6114 = vpop.f32.mrf.mxu0
        %v6115 = vadd.f32 0.0, %v6114
        %v6116 = vpop.f32.mrf.mxu0
        %v6117 = vadd.f32 0.0, %v6116
        %v6118 = vpop.f32.mrf.mxu0
        %v6119 = vpop.f32.mrf.mxu0
        %6120 = vdwg.mxu0
        %6121 = vrot.lane.b32.xlu0 %v2115, 88
        %v6122 = vpop.permute.xlu0 %6121
        %6123 = vrot.lane.b32.xlu0 %v2120, 88
        %v6124 = vpop.permute.xlu0 %6123
        %6125 = vrot.lane.b32.xlu0 %v2125, 88
        %v6126 = vpop.permute.xlu0 %6125
        %6127 = vrot.lane.b32.xlu0 %v2130, 88
        %v6128 = vpop.permute.xlu0 %6127
        %6129 = vrot.lane.b32.xlu0 %v2135, 88
        %v6130 = vpop.permute.xlu0 %6129
        %6131 = vrot.lane.b32.xlu0 %v2140, 88
        %v6132 = vpop.permute.xlu0 %6131
        %6133 = vrot.lane.b32.xlu0 %v2145, 88
        %v6134 = vpop.permute.xlu0 %6133
        %v6135 = vsel %vm2743, %v6122, 0
        %v6137 = vsel %vm2743, %v6124, 0
        %v6139 = vsel %vm2743, %v6126, 0
        %v6141 = vsel %vm2743, %v6128, 0
        %v6143 = vsel %vm2743, %v6130, 0
        %v6145 = vsel %vm2743, %v6132, 0
        %v6147 = vsel %vm2743, %v6134, 0
        %6149 = vmatprep.subr.mxu0 0.0
        %6150 = vmatpush1.msra.mxu0 0.0
        %6151 = vmatprep.subr.mxu0 0.0
        %6152 = vmatpush1.msra.mxu0 0.0
        %6153 = vmatprep.subr.mxu0 0.0
        %6154 = vmatpush1.msra.mxu0 0.0
        %6155 = vmatprep.subr.mxu0 0.0
        %6156 = vmatpush1.msra.mxu0 0.0
        %6157 = vmatprep.subr.mxu0 0.0
        %6158 = vmatpush1.msra.mxu0 0.0
        %6159 = vmatprep.subr.mxu0 0.0
        %6160 = vmatpush1.msra.mxu0 0.0
        %6161 = vmatprep.subr.mxu0 0.0
        %6162 = vmatpush1.msra.mxu0 0.0
        %6163 = vmatprep.subr.mxu0 0.0
        %6164 = vmatpush1.msra.mxu0 0.0
        %6165 = vmatprep.subr.mxu0 0.0
        %6166 = vmatpush1.msra.mxu0 0.0
        %6167 = vmatprep.subr.mxu0 0.0
        %6168 = vmatpush1.msra.mxu0 0.0
        %6169 = vmatprep.subr.mxu0 0.0
        %6170 = vmatpush1.msra.mxu0 0.0
        %6171 = vmatprep.subr.mxu0 0.0
        %6172 = vmatpush1.msra.mxu0 0.0
        %6173 = vmatprep.subr.mxu0 0.0
        %6174 = vmatpush1.msra.mxu0 0.0
        %6175 = vmatprep.subr.mxu0 0.0
        %6176 = vmatpush1.msra.mxu0 0.0
        %6177 = vmatprep.subr.mxu0 0.0
        %6178 = vmatpush1.msra.mxu0 0.0
        %6179 = vmatprep.subr.mxu0 %v2768
        %6180 = vmatpush1.msra.mxu0 %v2766
        %6181 = vmatprep.subr.mxu0 0.0
        %6182 = vmatpush2.msra.mxu0 0.0
        %6183 = vmatprep.subr.mxu0 0.0
        %6184 = vmatpush2.msra.mxu0 0.0
        %6185 = vmatprep.subr.mxu0 0.0
        %6186 = vmatpush2.msra.mxu0 0.0
        %6187 = vmatprep.subr.mxu0 0.0
        %6188 = vmatpush2.msra.mxu0 0.0
        %6189 = vmatprep.subr.mxu0 0.0
        %6190 = vmatpush2.msra.mxu0 0.0
        %6191 = vmatprep.subr.mxu0 0.0
        %6192 = vmatpush2.msra.mxu0 0.0
        %6193 = vmatprep.subr.mxu0 0.0
        %6194 = vmatpush2.msra.mxu0 0.0
        %6195 = vmatprep.subr.mxu0 0.0
        %6196 = vmatpush2.msra.mxu0 0.0
        %6197 = vmatprep.subr.mxu0 0.0
        %6198 = vmatpush2.msra.mxu0 0.0
        %6199 = vmatprep.subr.mxu0 0.0
        %6200 = vmatpush2.msra.mxu0 0.0
        %6201 = vmatprep.subr.mxu0 0.0
        %6202 = vmatpush2.msra.mxu0 0.0
        %6203 = vmatprep.subr.mxu0 0.0
        %6204 = vmatpush2.msra.mxu0 0.0
        %6205 = vmatprep.subr.mxu0 0.0
        %6206 = vmatpush2.msra.mxu0 0.0
        %6207 = vmatprep.subr.mxu0 0.0
        %6208 = vmatpush2.msra.mxu0 0.0
        %6209 = vmatprep.subr.mxu0 0.0
        %6210 = vmatpush2.msra.mxu0 0.0
        %6211 = vmatprep.subr.mxu0 0.0
        %6212 = vmatpush2.msra.mxu0 0.0
        %6213 = vmatprep.mubr.f32.mxu0 0.0
        %6214 = vmatmul.mubr.f32.gmra.mxu0 %v6135
        %v6215 = vpop.f32.mrf.mxu0
        %v6216 = vadd.f32 0.0, %v6215
        %v6217 = vpop.f32.mrf.mxu0
        %v6218 = vadd.f32 0.0, %v6217
        %6219 = vmatprep.mubr.f32.mxu0 0.0
        %6220 = vmatmul.mubr.f32.gmra.mxu0 %v6137
        %v6221 = vpop.f32.mrf.mxu0
        %v6222 = vadd.f32 0.0, %v6221
        %v6223 = vpop.f32.mrf.mxu0
        %v6224 = vadd.f32 0.0, %v6223
        %6225 = vmatprep.mubr.f32.mxu0 0.0
        %6226 = vmatmul.mubr.f32.gmra.mxu0 %v6139
        %v6227 = vpop.f32.mrf.mxu0
        %v6228 = vadd.f32 0.0, %v6227
        %v6229 = vpop.f32.mrf.mxu0
        %v6230 = vadd.f32 0.0, %v6229
        %6231 = vmatprep.mubr.f32.mxu0 0.0
        %6232 = vmatmul.mubr.f32.gmra.mxu0 %v6141
        %v6233 = vpop.f32.mrf.mxu0
        %v6234 = vadd.f32 0.0, %v6233
        %v6235 = vpop.f32.mrf.mxu0
        %v6236 = vadd.f32 0.0, %v6235
        %6237 = vmatprep.mubr.f32.mxu0 0.0
        %6238 = vmatmul.mubr.f32.gmra.mxu0 %v6143
        %v6239 = vpop.f32.mrf.mxu0
        %v6240 = vadd.f32 0.0, %v6239
        %v6241 = vpop.f32.mrf.mxu0
        %v6242 = vadd.f32 0.0, %v6241
        %6243 = vmatprep.mubr.f32.mxu0 0.0
        %6244 = vmatmul.mubr.f32.gmra.mxu0 %v6145
        %v6245 = vpop.f32.mrf.mxu0
        %v6246 = vadd.f32 0.0, %v6245
        %v6247 = vpop.f32.mrf.mxu0
        %v6248 = vadd.f32 0.0, %v6247
        %6249 = vmatprep.mubr.f32.mxu0 0.0
        %6250 = vmatmul.mubr.f32.gmra.mxu0 %v6147
        %v6251 = vpop.f32.mrf.mxu0
        %v6252 = vadd.f32 0.0, %v6251
        %v6253 = vpop.f32.mrf.mxu0
        %v6254 = vadd.f32 0.0, %v6253
        %6255 = vdwg.mxu0
        %v6256 = vmul.f32 %v6085, %v6216
        %v6257 = vmul.f32 %v6087, %v6218
        %v6258 = vmul.f32 %v6089, %v6222
        %v6259 = vmul.f32 %v6091, %v6224
        %v6260 = vmul.f32 %v6095, %v6228
        %v6261 = vmul.f32 %v6097, %v6230
        %v6262 = vmul.f32 %v6099, %v6234
        %v6263 = vmul.f32 %v6101, %v6236
        %v6264 = vmul.f32 %v6105, %v6240
        %v6265 = vmul.f32 %v6107, %v6242
        %v6266 = vmul.f32 %v6109, %v6246
        %v6267 = vmul.f32 %v6111, %v6248
        %v6268 = vmul.f32 %v6115, %v6252
        %v6269 = vmul.f32 %v6117, %v6254
        %v6270 = vadd.f32 %v5709, %v6256
        %v6271 = vadd.f32 %v5710, %v6257
        %v6272 = vadd.f32 %v5711, %v6258
        %v6273 = vadd.f32 %v5712, %v6259
        %v6274 = vadd.f32 %v5713, %v6260
        %v6275 = vadd.f32 %v5714, %v6261
        %v6276 = vadd.f32 %v5715, %v6262
        %v6277 = vadd.f32 %v5716, %v6263
        %v6278 = vadd.f32 %v5717, %v6264
        %v6279 = vadd.f32 %v5718, %v6265
        %v6280 = vadd.f32 %v5719, %v6266
        %v6281 = vadd.f32 %v5720, %v6267
        %v6282 = vadd.f32 %v5721, %v6268
        %v6283 = vadd.f32 %v5722, %v6269
        %6284 = vrot.lane.b32.xlu0 %v2305, 80
        %v6285 = vpop.permute.xlu0 %6284
        %6286 = vrot.lane.b32.xlu0 %v2306, 80
        %v6287 = vpop.permute.xlu0 %6286
        %6288 = vrot.lane.b32.xlu0 %v2307, 80
        %v6289 = vpop.permute.xlu0 %6288
        %6290 = vrot.lane.b32.xlu0 %v2308, 80
        %v6291 = vpop.permute.xlu0 %6290
        %6292 = vrot.lane.b32.xlu0 %v2309, 80
        %v6293 = vpop.permute.xlu0 %6292
        %6294 = vrot.lane.b32.xlu0 %v2310, 80
        %v6295 = vpop.permute.xlu0 %6294
        %6296 = vrot.lane.b32.xlu0 %v2311, 80
        %v6297 = vpop.permute.xlu0 %6296
        %v6298 = vsel %vm2743, %v6285, 0
        %v6300 = vsel %vm2743, %v6287, 0
        %v6302 = vsel %vm2743, %v6289, 0
        %v6304 = vsel %vm2743, %v6291, 0
        %v6306 = vsel %vm2743, %v6293, 0
        %v6308 = vsel %vm2743, %v6295, 0
        %v6310 = vsel %vm2743, %v6297, 0
        %6312 = vmatprep.subr.mxu0 0.0
        %6313 = vmatpush1.msra.mxu0 0.0
        %6314 = vmatprep.subr.mxu0 0.0
        %6315 = vmatpush1.msra.mxu0 0.0
        %6316 = vmatprep.subr.mxu0 0.0
        %6317 = vmatpush1.msra.mxu0 0.0
        %6318 = vmatprep.subr.mxu0 0.0
        %6319 = vmatpush1.msra.mxu0 0.0
        %6320 = vmatprep.subr.mxu0 0.0
        %6321 = vmatpush1.msra.mxu0 0.0
        %6322 = vmatprep.subr.mxu0 0.0
        %6323 = vmatpush1.msra.mxu0 0.0
        %6324 = vmatprep.subr.mxu0 0.0
        %6325 = vmatpush1.msra.mxu0 0.0
        %6326 = vmatprep.subr.mxu0 0.0
        %6327 = vmatpush1.msra.mxu0 0.0
        %6328 = vmatprep.subr.mxu0 0.0
        %6329 = vmatpush1.msra.mxu0 0.0
        %6330 = vmatprep.subr.mxu0 0.0
        %6331 = vmatpush1.msra.mxu0 0.0
        %6332 = vmatprep.subr.mxu0 0.0
        %6333 = vmatpush1.msra.mxu0 0.0
        %6334 = vmatprep.subr.mxu0 0.0
        %6335 = vmatpush1.msra.mxu0 0.0
        %6336 = vmatprep.subr.mxu0 0.0
        %6337 = vmatpush1.msra.mxu0 0.0
        %6338 = vmatprep.subr.mxu0 0.0
        %6339 = vmatpush1.msra.mxu0 0.0
        %6340 = vmatprep.subr.mxu0 0.0
        %6341 = vmatpush1.msra.mxu0 0.0
        %6342 = vmatprep.subr.mxu0 %v2768
        %6343 = vmatpush1.msra.mxu0 %v2766
        %6344 = vmatprep.subr.mxu0 0.0
        %6345 = vmatpush2.msra.mxu0 0.0
        %6346 = vmatprep.subr.mxu0 0.0
        %6347 = vmatpush2.msra.mxu0 0.0
        %6348 = vmatprep.subr.mxu0 0.0
        %6349 = vmatpush2.msra.mxu0 0.0
        %6350 = vmatprep.subr.mxu0 0.0
        %6351 = vmatpush2.msra.mxu0 0.0
        %6352 = vmatprep.subr.mxu0 0.0
        %6353 = vmatpush2.msra.mxu0 0.0
        %6354 = vmatprep.subr.mxu0 0.0
        %6355 = vmatpush2.msra.mxu0 0.0
        %6356 = vmatprep.subr.mxu0 0.0
        %6357 = vmatpush2.msra.mxu0 0.0
        %6358 = vmatprep.subr.mxu0 0.0
        %6359 = vmatpush2.msra.mxu0 0.0
        %6360 = vmatprep.subr.mxu0 0.0
        %6361 = vmatpush2.msra.mxu0 0.0
        %6362 = vmatprep.subr.mxu0 0.0
        %6363 = vmatpush2.msra.mxu0 0.0
        %6364 = vmatprep.subr.mxu0 0.0
        %6365 = vmatpush2.msra.mxu0 0.0
        %6366 = vmatprep.subr.mxu0 0.0
        %6367 = vmatpush2.msra.mxu0 0.0
        %6368 = vmatprep.subr.mxu0 0.0
        %6369 = vmatpush2.msra.mxu0 0.0
        %6370 = vmatprep.subr.mxu0 0.0
        %6371 = vmatpush2.msra.mxu0 0.0
        %6372 = vmatprep.subr.mxu0 0.0
        %6373 = vmatpush2.msra.mxu0 0.0
        %6374 = vmatprep.subr.mxu0 0.0
        %6375 = vmatpush2.msra.mxu0 0.0
        %6376 = vmatprep.mubr.f32.mxu0 0.0
        %6377 = vmatmul.mubr.f32.gmra.mxu0 %v6298
        %v6378 = vpop.f32.mrf.mxu0
        %v6379 = vadd.f32 0.0, %v6378
        %v6380 = vpop.f32.mrf.mxu0
        %v6381 = vadd.f32 0.0, %v6380
        %6382 = vmatprep.mubr.f32.mxu0 0.0
        %6383 = vmatmul.mubr.f32.gmra.mxu0 %v6300
        %v6384 = vpop.f32.mrf.mxu0
        %v6385 = vadd.f32 0.0, %v6384
        %v6386 = vpop.f32.mrf.mxu0
        %v6387 = vadd.f32 0.0, %v6386
        %6388 = vmatprep.mubr.f32.mxu0 0.0
        %6389 = vmatmul.mubr.f32.gmra.mxu0 %v6302
        %v6390 = vpop.f32.mrf.mxu0
        %v6391 = vadd.f32 0.0, %v6390
        %v6392 = vpop.f32.mrf.mxu0
        %v6393 = vadd.f32 0.0, %v6392
        %6394 = vmatprep.mubr.f32.mxu0 0.0
        %6395 = vmatmul.mubr.f32.gmra.mxu0 %v6304
        %v6396 = vpop.f32.mrf.mxu0
        %v6397 = vadd.f32 0.0, %v6396
        %v6398 = vpop.f32.mrf.mxu0
        %v6399 = vadd.f32 0.0, %v6398
        %6400 = vmatprep.mubr.f32.mxu0 0.0
        %6401 = vmatmul.mubr.f32.gmra.mxu0 %v6306
        %v6402 = vpop.f32.mrf.mxu0
        %v6403 = vadd.f32 0.0, %v6402
        %v6404 = vpop.f32.mrf.mxu0
        %v6405 = vadd.f32 0.0, %v6404
        %6406 = vmatprep.mubr.f32.mxu0 0.0
        %6407 = vmatmul.mubr.f32.gmra.mxu0 %v6308
        %v6408 = vpop.f32.mrf.mxu0
        %v6409 = vadd.f32 0.0, %v6408
        %v6410 = vpop.f32.mrf.mxu0
        %v6411 = vadd.f32 0.0, %v6410
        %6412 = vmatprep.mubr.f32.mxu0 0.0
        %6413 = vmatmul.mubr.f32.gmra.mxu0 %v6310
        %v6414 = vpop.f32.mrf.mxu0
        %v6415 = vadd.f32 0.0, %v6414
        %v6416 = vpop.f32.mrf.mxu0
        %v6417 = vadd.f32 0.0, %v6416
        %6418 = vdwg.mxu0
        %v6419 = vmul.f32 %v6379, %v2424
        %v6420 = vmul.f32 %v6381, %v2425
        %v6421 = vmul.f32 %v6385, %v2426
        %v6422 = vmul.f32 %v6387, %v2427
        %v6423 = vmul.f32 %v6391, %v2428
        %v6424 = vmul.f32 %v6393, %v2429
        %v6425 = vmul.f32 %v6397, %v2430
        %v6426 = vmul.f32 %v6399, %v2431
        %v6427 = vmul.f32 %v6403, %v2432
        %v6428 = vmul.f32 %v6405, %v2433
        %v6429 = vmul.f32 %v6409, %v2434
        %v6430 = vmul.f32 %v6411, %v2435
        %v6431 = vmul.f32 %v6415, %v2436
        %v6432 = vmul.f32 %v6417, %v2437
        %v6434 = vsel %vm2451, %v6431, 0
        %v6437 = vsel %vm2451, %v6432, 0
        %6439 = vmatprep.subr.mxu0 0.0
        %6440 = vmatpush1.msra.mxu0 0.0
        %6441 = vmatprep.subr.mxu0 0.0
        %6442 = vmatpush1.msra.mxu0 0.0
        %6443 = vmatprep.subr.mxu0 0.0
        %6444 = vmatpush1.msra.mxu0 0.0
        %6445 = vmatprep.subr.mxu0 0.0
        %6446 = vmatpush1.msra.mxu0 0.0
        %6447 = vmatprep.subr.mxu0 0.0
        %6448 = vmatpush1.msra.mxu0 0.0
        %6449 = vmatprep.subr.mxu0 0.0
        %6450 = vmatpush1.msra.mxu0 0.0
        %6451 = vmatprep.subr.mxu0 0.0
        %6452 = vmatpush1.msra.mxu0 0.0
        %6453 = vmatprep.subr.mxu0 0.0
        %6454 = vmatpush1.msra.mxu0 0.0
        %6455 = vmatprep.subr.mxu0 0.0
        %6456 = vmatpush1.msra.mxu0 0.0
        %6457 = vmatprep.subr.mxu0 %v6437
        %6458 = vmatpush1.msra.mxu0 %v6434
        %6459 = vmatprep.subr.mxu0 %v6430
        %6460 = vmatpush1.msra.mxu0 %v6429
        %6461 = vmatprep.subr.mxu0 %v6428
        %6462 = vmatpush1.msra.mxu0 %v6427
        %6463 = vmatprep.subr.mxu0 %v6426
        %6464 = vmatpush1.msra.mxu0 %v6425
        %6465 = vmatprep.subr.mxu0 %v6424
        %6466 = vmatpush1.msra.mxu0 %v6423
        %6467 = vmatprep.subr.mxu0 %v6422
        %6468 = vmatpush1.msra.mxu0 %v6421
        %6469 = vmatprep.subr.mxu0 %v6420
        %6470 = vmatpush1.msra.mxu0 %v6419
        %6471 = vmatprep.subr.mxu0 0.0
        %6472 = vmatpush2.msra.mxu0 0.0
        %6473 = vmatprep.subr.mxu0 0.0
        %6474 = vmatpush2.msra.mxu0 0.0
        %6475 = vmatprep.subr.mxu0 0.0
        %6476 = vmatpush2.msra.mxu0 0.0
        %6477 = vmatprep.subr.mxu0 0.0
        %6478 = vmatpush2.msra.mxu0 0.0
        %6479 = vmatprep.subr.mxu0 0.0
        %6480 = vmatpush2.msra.mxu0 0.0
        %6481 = vmatprep.subr.mxu0 0.0
        %6482 = vmatpush2.msra.mxu0 0.0
        %6483 = vmatprep.subr.mxu0 0.0
        %6484 = vmatpush2.msra.mxu0 0.0
        %6485 = vmatprep.subr.mxu0 0.0
        %6486 = vmatpush2.msra.mxu0 0.0
        %6487 = vmatprep.subr.mxu0 0.0
        %6488 = vmatpush2.msra.mxu0 0.0
        %6489 = vmatprep.subr.mxu0 0.0
        %6490 = vmatpush2.msra.mxu0 0.0
        %6491 = vmatprep.subr.mxu0 0.0
        %6492 = vmatpush2.msra.mxu0 0.0
        %6493 = vmatprep.subr.mxu0 0.0
        %6494 = vmatpush2.msra.mxu0 0.0
        %6495 = vmatprep.subr.mxu0 0.0
        %6496 = vmatpush2.msra.mxu0 0.0
        %6497 = vmatprep.subr.mxu0 0.0
        %6498 = vmatpush2.msra.mxu0 0.0
        %6499 = vmatprep.subr.mxu0 0.0
        %6500 = vmatpush2.msra.mxu0 0.0
        %6501 = vmatprep.subr.mxu0 0.0
        %6502 = vmatpush2.msra.mxu0 0.0
        %6503 = vmatprep.mubr.f32.mxu0 0.0
        %6504 = vmatmul.mubr.f32.gmra.mxu0 %v3346
        %v6505 = vpop.f32.mrf.mxu0
        %v6506 = vadd.f32 0.0, %v6505
        %v6507 = vpop.f32.mrf.mxu0
        %v6508 = vadd.f32 0.0, %v6507
        %6509 = vdwg.mxu0
        %v6510 = vpack.c.bf16 %v6506, %v6506
        %v6511 = vpack.c.bf16 %v6508, %v6508
        %v6513 = vpack.i.b16 %v6510, %v6510
        %v6515 = vlaneseq
        %v6516 = vshrl.u32 %v6515, 7
        %v6517 = vsub.s32 0, %v6516
        %v6518 = vrot.slane %v6513, %v6517
        %v6520 = vpack.i.b16 %v6511, %v6511
        %v6522 = vlaneseq
        %v6523 = vshrl.u32 %v6522, 7
        %v6524 = vsub.s32 0, %v6523
        %v6525 = vrot.slane %v6520, %v6524
        %v6526 = vmul.bf16 %v5748, %v6518
        %v6527 = vmul.bf16 %v5749, %v6525
        %v6528 = vmul.bf16 %v5750, %v6518
        %v6529 = vmul.bf16 %v5751, %v6525
        %v6530 = vmul.bf16 %v5752, %v6518
        %v6531 = vmul.bf16 %v5753, %v6525
        %v6532 = vmul.bf16 %v5754, %v6518
        %v6533 = vmul.bf16 %v5755, %v6525
        %v6535 = vsel %vm2891, %v6527, 0
        %v6538 = vsel %vm2891, %v6529, 0
        %v6541 = vsel %vm2891, %v6531, 0
        %v6544 = vsel %vm2891, %v6533, 0
        %6546 = vmatprep.subr.bf16.mxu0 %v5997
        %6547 = vmatpush1.bf16.msra.mxu0 %v5996
        %6548 = vmatprep.subr.bf16.mxu0 %v5995
        %6549 = vmatpush1.bf16.msra.mxu0 %v5994
        %6550 = vmatprep.subr.bf16.mxu0 %v5993
        %6551 = vmatpush1.bf16.msra.mxu0 %v5992
        %6552 = vmatprep.subr.bf16.mxu0 %v5991
        %6553 = vmatpush1.bf16.msra.mxu0 %v5990
        %6554 = vmatprep.subr.bf16.mxu0 %v5989
        %6555 = vmatpush1.bf16.msra.mxu0 %v5988
        %6556 = vmatprep.subr.bf16.mxu0 %v5987
        %6557 = vmatpush1.bf16.msra.mxu0 %v5986
        %6558 = vmatprep.subr.bf16.mxu0 %v5985
        %6559 = vmatpush1.bf16.msra.mxu0 %v5984
        %6560 = vmatprep.subr.bf16.mxu0 %v5983
        %6561 = vmatpush1.bf16.msra.mxu0 %v5982
        %6562 = vmatprep.subr.bf16.mxu0 0
        %6563 = vmatpush2.bf16.msra.mxu0 0
        %6564 = vmatprep.subr.bf16.mxu0 0
        %6565 = vmatpush2.bf16.msra.mxu0 0
        %6566 = vmatprep.subr.bf16.mxu0 0
        %6567 = vmatpush2.bf16.msra.mxu0 0
        %6568 = vmatprep.subr.bf16.mxu0 %v6048
        %6569 = vmatpush2.bf16.msra.mxu0 %v6045
        %6570 = vmatprep.subr.bf16.mxu0 %v6005
        %6571 = vmatpush2.bf16.msra.mxu0 %v6004
        %6572 = vmatprep.subr.bf16.mxu0 %v6003
        %6573 = vmatpush2.bf16.msra.mxu0 %v6002
        %6574 = vmatprep.subr.bf16.mxu0 %v6001
        %6575 = vmatpush2.bf16.msra.mxu0 %v6000
        %6576 = vmatprep.subr.bf16.mxu0 %v5999
        %6577 = vmatpush2.bf16.msra.mxu0 %v5998
        %6578 = vmatprep.mubr.bf16.mxu0 %v6535
        %6579 = vmatmul.mubr.bf16.gmra.mxu0 %v6526
        %v6580 = vpop.f32.mrf.mxu0
        %v6581 = vadd.f32 0.0, %v6580
        %v6582 = vpop.f32.mrf.mxu0
        %v6583 = vadd.f32 0.0, %v6582
        %v6584 = vpop.f32.mrf.mxu0
        %v6585 = vadd.f32 0.0, %v6584
        %v6586 = vpop.f32.mrf.mxu0
        %v6587 = vadd.f32 0.0, %v6586
        %6588 = vmatprep.mubr.bf16.mxu0 %v6538
        %6589 = vmatmul.mubr.bf16.gmra.mxu0 %v6528
        %v6590 = vpop.f32.mrf.mxu0
        %v6591 = vadd.f32 0.0, %v6590
        %v6592 = vpop.f32.mrf.mxu0
        %v6593 = vadd.f32 0.0, %v6592
        %v6594 = vpop.f32.mrf.mxu0
        %v6595 = vadd.f32 0.0, %v6594
        %v6596 = vpop.f32.mrf.mxu0
        %v6597 = vadd.f32 0.0, %v6596
        %6598 = vmatprep.mubr.bf16.mxu0 %v6541
        %6599 = vmatmul.mubr.bf16.gmra.mxu0 %v6530
        %v6600 = vpop.f32.mrf.mxu0
        %v6601 = vadd.f32 0.0, %v6600
        %v6602 = vpop.f32.mrf.mxu0
        %v6603 = vadd.f32 0.0, %v6602
        %v6604 = vpop.f32.mrf.mxu0
        %v6605 = vadd.f32 0.0, %v6604
        %v6606 = vpop.f32.mrf.mxu0
        %v6607 = vadd.f32 0.0, %v6606
        %6608 = vmatprep.mubr.bf16.mxu0 %v6544
        %6609 = vmatmul.mubr.bf16.gmra.mxu0 %v6532
        %v6610 = vpop.f32.mrf.mxu0
        %v6611 = vadd.f32 0.0, %v6610
        %v6612 = vpop.f32.mrf.mxu0
        %v6613 = vadd.f32 0.0, %v6612
        %v6614 = vpop.f32.mrf.mxu0
        %v6615 = vpop.f32.mrf.mxu0
        %6616 = vdwg.mxu0
        %6617 = vrot.lane.b32.xlu0 %v2115, 72
        %v6618 = vpop.permute.xlu0 %6617
        %6619 = vrot.lane.b32.xlu0 %v2120, 72
        %v6620 = vpop.permute.xlu0 %6619
        %6621 = vrot.lane.b32.xlu0 %v2125, 72
        %v6622 = vpop.permute.xlu0 %6621
        %6623 = vrot.lane.b32.xlu0 %v2130, 72
        %v6624 = vpop.permute.xlu0 %6623
        %6625 = vrot.lane.b32.xlu0 %v2135, 72
        %v6626 = vpop.permute.xlu0 %6625
        %6627 = vrot.lane.b32.xlu0 %v2140, 72
        %v6628 = vpop.permute.xlu0 %6627
        %6629 = vrot.lane.b32.xlu0 %v2145, 72
        %v6630 = vpop.permute.xlu0 %6629
        %v6631 = vsel %vm2743, %v6618, 0
        %v6633 = vsel %vm2743, %v6620, 0
        %v6635 = vsel %vm2743, %v6622, 0
        %v6637 = vsel %vm2743, %v6624, 0
        %v6639 = vsel %vm2743, %v6626, 0
        %v6641 = vsel %vm2743, %v6628, 0
        %v6643 = vsel %vm2743, %v6630, 0
        %6645 = vmatprep.subr.mxu0 0.0
        %6646 = vmatpush1.msra.mxu0 0.0
        %6647 = vmatprep.subr.mxu0 0.0
        %6648 = vmatpush1.msra.mxu0 0.0
        %6649 = vmatprep.subr.mxu0 0.0
        %6650 = vmatpush1.msra.mxu0 0.0
        %6651 = vmatprep.subr.mxu0 0.0
        %6652 = vmatpush1.msra.mxu0 0.0
        %6653 = vmatprep.subr.mxu0 0.0
        %6654 = vmatpush1.msra.mxu0 0.0
        %6655 = vmatprep.subr.mxu0 0.0
        %6656 = vmatpush1.msra.mxu0 0.0
        %6657 = vmatprep.subr.mxu0 0.0
        %6658 = vmatpush1.msra.mxu0 0.0
        %6659 = vmatprep.subr.mxu0 0.0
        %6660 = vmatpush1.msra.mxu0 0.0
        %6661 = vmatprep.subr.mxu0 0.0
        %6662 = vmatpush1.msra.mxu0 0.0
        %6663 = vmatprep.subr.mxu0 0.0
        %6664 = vmatpush1.msra.mxu0 0.0
        %6665 = vmatprep.subr.mxu0 0.0
        %6666 = vmatpush1.msra.mxu0 0.0
        %6667 = vmatprep.subr.mxu0 0.0
        %6668 = vmatpush1.msra.mxu0 0.0
        %6669 = vmatprep.subr.mxu0 0.0
        %6670 = vmatpush1.msra.mxu0 0.0
        %6671 = vmatprep.subr.mxu0 0.0
        %6672 = vmatpush1.msra.mxu0 0.0
        %6673 = vmatprep.subr.mxu0 0.0
        %6674 = vmatpush1.msra.mxu0 0.0
        %6675 = vmatprep.subr.mxu0 %v2768
        %6676 = vmatpush1.msra.mxu0 %v2766
        %6677 = vmatprep.subr.mxu0 0.0
        %6678 = vmatpush2.msra.mxu0 0.0
        %6679 = vmatprep.subr.mxu0 0.0
        %6680 = vmatpush2.msra.mxu0 0.0
        %6681 = vmatprep.subr.mxu0 0.0
        %6682 = vmatpush2.msra.mxu0 0.0
        %6683 = vmatprep.subr.mxu0 0.0
        %6684 = vmatpush2.msra.mxu0 0.0
        %6685 = vmatprep.subr.mxu0 0.0
        %6686 = vmatpush2.msra.mxu0 0.0
        %6687 = vmatprep.subr.mxu0 0.0
        %6688 = vmatpush2.msra.mxu0 0.0
        %6689 = vmatprep.subr.mxu0 0.0
        %6690 = vmatpush2.msra.mxu0 0.0
        %6691 = vmatprep.subr.mxu0 0.0
        %6692 = vmatpush2.msra.mxu0 0.0
        %6693 = vmatprep.subr.mxu0 0.0
        %6694 = vmatpush2.msra.mxu0 0.0
        %6695 = vmatprep.subr.mxu0 0.0
        %6696 = vmatpush2.msra.mxu0 0.0
        %6697 = vmatprep.subr.mxu0 0.0
        %6698 = vmatpush2.msra.mxu0 0.0
        %6699 = vmatprep.subr.mxu0 0.0
        %6700 = vmatpush2.msra.mxu0 0.0
        %6701 = vmatprep.subr.mxu0 0.0
        %6702 = vmatpush2.msra.mxu0 0.0
        %6703 = vmatprep.subr.mxu0 0.0
        %6704 = vmatpush2.msra.mxu0 0.0
        %6705 = vmatprep.subr.mxu0 0.0
        %6706 = vmatpush2.msra.mxu0 0.0
        %6707 = vmatprep.subr.mxu0 0.0
        %6708 = vmatpush2.msra.mxu0 0.0
        %6709 = vmatprep.mubr.f32.mxu0 0.0
        %6710 = vmatmul.mubr.f32.gmra.mxu0 %v6631
        %v6711 = vpop.f32.mrf.mxu0
        %v6712 = vadd.f32 0.0, %v6711
        %v6713 = vpop.f32.mrf.mxu0
        %v6714 = vadd.f32 0.0, %v6713
        %6715 = vmatprep.mubr.f32.mxu0 0.0
        %6716 = vmatmul.mubr.f32.gmra.mxu0 %v6633
        %v6717 = vpop.f32.mrf.mxu0
        %v6718 = vadd.f32 0.0, %v6717
        %v6719 = vpop.f32.mrf.mxu0
        %v6720 = vadd.f32 0.0, %v6719
        %6721 = vmatprep.mubr.f32.mxu0 0.0
        %6722 = vmatmul.mubr.f32.gmra.mxu0 %v6635
        %v6723 = vpop.f32.mrf.mxu0
        %v6724 = vadd.f32 0.0, %v6723
        %v6725 = vpop.f32.mrf.mxu0
        %v6726 = vadd.f32 0.0, %v6725
        %6727 = vmatprep.mubr.f32.mxu0 0.0
        %6728 = vmatmul.mubr.f32.gmra.mxu0 %v6637
        %v6729 = vpop.f32.mrf.mxu0
        %v6730 = vadd.f32 0.0, %v6729
        %v6731 = vpop.f32.mrf.mxu0
        %v6732 = vadd.f32 0.0, %v6731
        %6733 = vmatprep.mubr.f32.mxu0 0.0
        %6734 = vmatmul.mubr.f32.gmra.mxu0 %v6639
        %v6735 = vpop.f32.mrf.mxu0
        %v6736 = vadd.f32 0.0, %v6735
        %v6737 = vpop.f32.mrf.mxu0
        %v6738 = vadd.f32 0.0, %v6737
        %6739 = vmatprep.mubr.f32.mxu0 0.0
        %6740 = vmatmul.mubr.f32.gmra.mxu0 %v6641
        %v6741 = vpop.f32.mrf.mxu0
        %v6742 = vadd.f32 0.0, %v6741
        %v6743 = vpop.f32.mrf.mxu0
        %v6744 = vadd.f32 0.0, %v6743
        %6745 = vmatprep.mubr.f32.mxu0 0.0
        %6746 = vmatmul.mubr.f32.gmra.mxu0 %v6643
        %v6747 = vpop.f32.mrf.mxu0
        %v6748 = vadd.f32 0.0, %v6747
        %v6749 = vpop.f32.mrf.mxu0
        %v6750 = vadd.f32 0.0, %v6749
        %6751 = vdwg.mxu0
        %v6752 = vmul.f32 %v6712, %v2424
        %v6753 = vmul.f32 %v6714, %v2425
        %v6754 = vmul.f32 %v6718, %v2426
        %v6755 = vmul.f32 %v6720, %v2427
        %v6756 = vmul.f32 %v6724, %v2428
        %v6757 = vmul.f32 %v6726, %v2429
        %v6758 = vmul.f32 %v6730, %v2430
        %v6759 = vmul.f32 %v6732, %v2431
        %v6760 = vmul.f32 %v6736, %v2432
        %v6761 = vmul.f32 %v6738, %v2433
        %v6762 = vmul.f32 %v6742, %v2434
        %v6763 = vmul.f32 %v6744, %v2435
        %v6764 = vmul.f32 %v6748, %v2436
        %v6765 = vmul.f32 %v6750, %v2437
        %v6767 = vsel %vm2451, %v6764, 0
        %v6770 = vsel %vm2451, %v6765, 0
        %6772 = vmatprep.subr.mxu0 0.0
        %6773 = vmatpush1.msra.mxu0 0.0
        %6774 = vmatprep.subr.mxu0 0.0
        %6775 = vmatpush1.msra.mxu0 0.0
        %6776 = vmatprep.subr.mxu0 0.0
        %6777 = vmatpush1.msra.mxu0 0.0
        %6778 = vmatprep.subr.mxu0 0.0
        %6779 = vmatpush1.msra.mxu0 0.0
        %6780 = vmatprep.subr.mxu0 0.0
        %6781 = vmatpush1.msra.mxu0 0.0
        %6782 = vmatprep.subr.mxu0 0.0
        %6783 = vmatpush1.msra.mxu0 0.0
        %6784 = vmatprep.subr.mxu0 0.0
        %6785 = vmatpush1.msra.mxu0 0.0
        %6786 = vmatprep.subr.mxu0 0.0
        %6787 = vmatpush1.msra.mxu0 0.0
        %6788 = vmatprep.subr.mxu0 0.0
        %6789 = vmatpush1.msra.mxu0 0.0
        %6790 = vmatprep.subr.mxu0 %v6770
        %6791 = vmatpush1.msra.mxu0 %v6767
        %6792 = vmatprep.subr.mxu0 %v6763
        %6793 = vmatpush1.msra.mxu0 %v6762
        %6794 = vmatprep.subr.mxu0 %v6761
        %6795 = vmatpush1.msra.mxu0 %v6760
        %6796 = vmatprep.subr.mxu0 %v6759
        %6797 = vmatpush1.msra.mxu0 %v6758
        %6798 = vmatprep.subr.mxu0 %v6757
        %6799 = vmatpush1.msra.mxu0 %v6756
        %6800 = vmatprep.subr.mxu0 %v6755
        %6801 = vmatpush1.msra.mxu0 %v6754
        %6802 = vmatprep.subr.mxu0 %v6753
        %6803 = vmatpush1.msra.mxu0 %v6752
        %6804 = vmatprep.subr.mxu0 0.0
        %6805 = vmatpush2.msra.mxu0 0.0
        %6806 = vmatprep.subr.mxu0 0.0
        %6807 = vmatpush2.msra.mxu0 0.0
        %6808 = vmatprep.subr.mxu0 0.0
        %6809 = vmatpush2.msra.mxu0 0.0
        %6810 = vmatprep.subr.mxu0 0.0
        %6811 = vmatpush2.msra.mxu0 0.0
        %6812 = vmatprep.subr.mxu0 0.0
        %6813 = vmatpush2.msra.mxu0 0.0
        %6814 = vmatprep.subr.mxu0 0.0
        %6815 = vmatpush2.msra.mxu0 0.0
        %6816 = vmatprep.subr.mxu0 0.0
        %6817 = vmatpush2.msra.mxu0 0.0
        %6818 = vmatprep.subr.mxu0 0.0
        %6819 = vmatpush2.msra.mxu0 0.0
        %6820 = vmatprep.subr.mxu0 0.0
        %6821 = vmatpush2.msra.mxu0 0.0
        %6822 = vmatprep.subr.mxu0 0.0
        %6823 = vmatpush2.msra.mxu0 0.0
        %6824 = vmatprep.subr.mxu0 0.0
        %6825 = vmatpush2.msra.mxu0 0.0
        %6826 = vmatprep.subr.mxu0 0.0
        %6827 = vmatpush2.msra.mxu0 0.0
        %6828 = vmatprep.subr.mxu0 0.0
        %6829 = vmatpush2.msra.mxu0 0.0
        %6830 = vmatprep.subr.mxu0 0.0
        %6831 = vmatpush2.msra.mxu0 0.0
        %6832 = vmatprep.subr.mxu0 0.0
        %6833 = vmatpush2.msra.mxu0 0.0
        %6834 = vmatprep.subr.mxu0 0.0
        %6835 = vmatpush2.msra.mxu0 0.0
        %6836 = vmatprep.mubr.f32.mxu0 0.0
        %6837 = vmatmul.mubr.f32.gmra.mxu0 %v3346
        %v6838 = vpop.f32.mrf.mxu0
        %v6839 = vadd.f32 0.0, %v6838
        %v6840 = vpop.f32.mrf.mxu0
        %v6841 = vadd.f32 0.0, %v6840
        %6842 = vdwg.mxu0
        %v6843 = vlaneseq
        %v6844 = vshrl.u32 %v6843, 7
        %v6845 = vsub.s32 0, %v6844
        %v6846 = vrot.slane %v6839, %v6845
        %v6847 = vlaneseq
        %v6848 = vshrl.u32 %v6847, 7
        %v6849 = vsub.s32 0, %v6848
        %v6850 = vrot.slane %v6841, %v6849
        %v6851 = vmul.f32 %v6581, %v6846
        %v6852 = vmul.f32 %v6583, %v6850
        %v6853 = vmul.f32 %v6585, %v6846
        %v6854 = vmul.f32 %v6587, %v6850
        %v6855 = vmul.f32 %v6591, %v6846
        %v6856 = vmul.f32 %v6593, %v6850
        %v6857 = vmul.f32 %v6595, %v6846
        %v6858 = vmul.f32 %v6597, %v6850
        %v6859 = vmul.f32 %v6601, %v6846
        %v6860 = vmul.f32 %v6603, %v6850
        %v6861 = vmul.f32 %v6605, %v6846
        %v6862 = vmul.f32 %v6607, %v6850
        %v6863 = vmul.f32 %v6611, %v6846
        %v6864 = vmul.f32 %v6613, %v6850
        %v6865 = vadd.f32 %v6270, %v6851
        %v6866 = vadd.f32 %v6271, %v6852
        %v6867 = vadd.f32 %v6272, %v6853
        %v6868 = vadd.f32 %v6273, %v6854
        %v6869 = vadd.f32 %v6274, %v6855
        %v6870 = vadd.f32 %v6275, %v6856
        %v6871 = vadd.f32 %v6276, %v6857
        %v6872 = vadd.f32 %v6277, %v6858
        %v6873 = vadd.f32 %v6278, %v6859
        %v6874 = vadd.f32 %v6279, %v6860
        %v6875 = vadd.f32 %v6280, %v6861
        %v6876 = vadd.f32 %v6281, %v6862
        %v6877 = vadd.f32 %v6282, %v6863
        %v6878 = vadd.f32 %v6283, %v6864
        %6879 = vrot.lane.b32.xlu0 %v2305, 92
        %v6880 = vpop.permute.xlu0 %6879
        %6881 = vrot.lane.b32.xlu0 %v2306, 92
        %v6882 = vpop.permute.xlu0 %6881
        %6883 = vrot.lane.b32.xlu0 %v2307, 92
        %v6884 = vpop.permute.xlu0 %6883
        %6885 = vrot.lane.b32.xlu0 %v2308, 92
        %v6886 = vpop.permute.xlu0 %6885
        %6887 = vrot.lane.b32.xlu0 %v2309, 92
        %v6888 = vpop.permute.xlu0 %6887
        %6889 = vrot.lane.b32.xlu0 %v2310, 92
        %v6890 = vpop.permute.xlu0 %6889
        %6891 = vrot.lane.b32.xlu0 %v2311, 92
        %v6892 = vpop.permute.xlu0 %6891
        %v6893 = vsel %vm2743, %v6880, 0
        %v6895 = vsel %vm2743, %v6882, 0
        %v6897 = vsel %vm2743, %v6884, 0
        %v6899 = vsel %vm2743, %v6886, 0
        %v6901 = vsel %vm2743, %v6888, 0
        %v6903 = vsel %vm2743, %v6890, 0
        %v6905 = vsel %vm2743, %v6892, 0
        %6907 = vmatprep.subr.mxu0 0.0
        %6908 = vmatpush1.msra.mxu0 0.0
        %6909 = vmatprep.subr.mxu0 0.0
        %6910 = vmatpush1.msra.mxu0 0.0
        %6911 = vmatprep.subr.mxu0 0.0
        %6912 = vmatpush1.msra.mxu0 0.0
        %6913 = vmatprep.subr.mxu0 0.0
        %6914 = vmatpush1.msra.mxu0 0.0
        %6915 = vmatprep.subr.mxu0 0.0
        %6916 = vmatpush1.msra.mxu0 0.0
        %6917 = vmatprep.subr.mxu0 0.0
        %6918 = vmatpush1.msra.mxu0 0.0
        %6919 = vmatprep.subr.mxu0 0.0
        %6920 = vmatpush1.msra.mxu0 0.0
        %6921 = vmatprep.subr.mxu0 0.0
        %6922 = vmatpush1.msra.mxu0 0.0
        %6923 = vmatprep.subr.mxu0 0.0
        %6924 = vmatpush1.msra.mxu0 0.0
        %6925 = vmatprep.subr.mxu0 0.0
        %6926 = vmatpush1.msra.mxu0 0.0
        %6927 = vmatprep.subr.mxu0 0.0
        %6928 = vmatpush1.msra.mxu0 0.0
        %6929 = vmatprep.subr.mxu0 0.0
        %6930 = vmatpush1.msra.mxu0 0.0
        %6931 = vmatprep.subr.mxu0 0.0
        %6932 = vmatpush1.msra.mxu0 0.0
        %6933 = vmatprep.subr.mxu0 0.0
        %6934 = vmatpush1.msra.mxu0 0.0
        %6935 = vmatprep.subr.mxu0 0.0
        %6936 = vmatpush1.msra.mxu0 0.0
        %6937 = vmatprep.subr.mxu0 %v2768
        %6938 = vmatpush1.msra.mxu0 %v2766
        %6939 = vmatprep.subr.mxu0 0.0
        %6940 = vmatpush2.msra.mxu0 0.0
        %6941 = vmatprep.subr.mxu0 0.0
        %6942 = vmatpush2.msra.mxu0 0.0
        %6943 = vmatprep.subr.mxu0 0.0
        %6944 = vmatpush2.msra.mxu0 0.0
        %6945 = vmatprep.subr.mxu0 0.0
        %6946 = vmatpush2.msra.mxu0 0.0
        %6947 = vmatprep.subr.mxu0 0.0
        %6948 = vmatpush2.msra.mxu0 0.0
        %6949 = vmatprep.subr.mxu0 0.0
        %6950 = vmatpush2.msra.mxu0 0.0
        %6951 = vmatprep.subr.mxu0 0.0
        %6952 = vmatpush2.msra.mxu0 0.0
        %6953 = vmatprep.subr.mxu0 0.0
        %6954 = vmatpush2.msra.mxu0 0.0
        %6955 = vmatprep.subr.mxu0 0.0
        %6956 = vmatpush2.msra.mxu0 0.0
        %6957 = vmatprep.subr.mxu0 0.0
        %6958 = vmatpush2.msra.mxu0 0.0
        %6959 = vmatprep.subr.mxu0 0.0
        %6960 = vmatpush2.msra.mxu0 0.0
        %6961 = vmatprep.subr.mxu0 0.0
        %6962 = vmatpush2.msra.mxu0 0.0
        %6963 = vmatprep.subr.mxu0 0.0
        %6964 = vmatpush2.msra.mxu0 0.0
        %6965 = vmatprep.subr.mxu0 0.0
        %6966 = vmatpush2.msra.mxu0 0.0
        %6967 = vmatprep.subr.mxu0 0.0
        %6968 = vmatpush2.msra.mxu0 0.0
        %6969 = vmatprep.subr.mxu0 0.0
        %6970 = vmatpush2.msra.mxu0 0.0
        %6971 = vmatprep.mubr.f32.mxu0 0.0
        %6972 = vmatmul.mubr.f32.gmra.mxu0 %v6893
        %v6973 = vpop.f32.mrf.mxu0
        %v6974 = vadd.f32 0.0, %v6973
        %v6975 = vpop.f32.mrf.mxu0
        %v6976 = vadd.f32 0.0, %v6975
        %6977 = vmatprep.mubr.f32.mxu0 0.0
        %6978 = vmatmul.mubr.f32.gmra.mxu0 %v6895
        %v6979 = vpop.f32.mrf.mxu0
        %v6980 = vadd.f32 0.0, %v6979
        %v6981 = vpop.f32.mrf.mxu0
        %v6982 = vadd.f32 0.0, %v6981
        %6983 = vmatprep.mubr.f32.mxu0 0.0
        %6984 = vmatmul.mubr.f32.gmra.mxu0 %v6897
        %v6985 = vpop.f32.mrf.mxu0
        %v6986 = vadd.f32 0.0, %v6985
        %v6987 = vpop.f32.mrf.mxu0
        %v6988 = vadd.f32 0.0, %v6987
        %6989 = vmatprep.mubr.f32.mxu0 0.0
        %6990 = vmatmul.mubr.f32.gmra.mxu0 %v6899
        %v6991 = vpop.f32.mrf.mxu0
        %v6992 = vadd.f32 0.0, %v6991
        %v6993 = vpop.f32.mrf.mxu0
        %v6994 = vadd.f32 0.0, %v6993
        %6995 = vmatprep.mubr.f32.mxu0 0.0
        %6996 = vmatmul.mubr.f32.gmra.mxu0 %v6901
        %v6997 = vpop.f32.mrf.mxu0
        %v6998 = vadd.f32 0.0, %v6997
        %v6999 = vpop.f32.mrf.mxu0
        %v7000 = vadd.f32 0.0, %v6999
        %7001 = vmatprep.mubr.f32.mxu0 0.0
        %7002 = vmatmul.mubr.f32.gmra.mxu0 %v6903
        %v7003 = vpop.f32.mrf.mxu0
        %v7004 = vadd.f32 0.0, %v7003
        %v7005 = vpop.f32.mrf.mxu0
        %v7006 = vadd.f32 0.0, %v7005
        %7007 = vmatprep.mubr.f32.mxu0 0.0
        %7008 = vmatmul.mubr.f32.gmra.mxu0 %v6905
        %v7009 = vpop.f32.mrf.mxu0
        %v7010 = vadd.f32 0.0, %v7009
        %v7011 = vpop.f32.mrf.mxu0
        %v7012 = vadd.f32 0.0, %v7011
        %7013 = vdwg.mxu0
        %v7014 = vpack.c.bf16 %v6980, %v6974
        %v7015 = vpack.c.bf16 %v6982, %v6976
        %v7016 = vpack.c.bf16 %v6992, %v6986
        %v7017 = vpack.c.bf16 %v6994, %v6988
        %v7018 = vpack.c.bf16 %v7004, %v6998
        %v7019 = vpack.c.bf16 %v7006, %v7000
        %v7020 = vpack.c.bf16 %v7010, %v7010
        %v7021 = vpack.c.bf16 %v7012, %v7012
        %v7022 = vmul.bf16 %v5748, %v7014
        %v7023 = vmul.bf16 %v5749, %v7015
        %v7024 = vmul.bf16 %v5750, %v7016
        %v7025 = vmul.bf16 %v5751, %v7017
        %v7026 = vmul.bf16 %v5752, %v7018
        %v7027 = vmul.bf16 %v5753, %v7019
        %v7028 = vmul.bf16 %v5754, %v7020
        %v7029 = vmul.bf16 %v5755, %v7021
        %v7031 = vsel %vm2891, %v7023, 0
        %v7034 = vsel %vm2891, %v7025, 0
        %v7037 = vsel %vm2891, %v7027, 0
        %v7040 = vsel %vm2891, %v7029, 0
        %7042 = vmatprep.subr.bf16.mxu0 %v5997
        %7043 = vmatpush1.bf16.msra.mxu0 %v5996
        %7044 = vmatprep.subr.bf16.mxu0 %v5995
        %7045 = vmatpush1.bf16.msra.mxu0 %v5994
        %7046 = vmatprep.subr.bf16.mxu0 %v5993
        %7047 = vmatpush1.bf16.msra.mxu0 %v5992
        %7048 = vmatprep.subr.bf16.mxu0 %v5991
        %7049 = vmatpush1.bf16.msra.mxu0 %v5990
        %7050 = vmatprep.subr.bf16.mxu0 %v5989
        %7051 = vmatpush1.bf16.msra.mxu0 %v5988
        %7052 = vmatprep.subr.bf16.mxu0 %v5987
        %7053 = vmatpush1.bf16.msra.mxu0 %v5986
        %7054 = vmatprep.subr.bf16.mxu0 %v5985
        %7055 = vmatpush1.bf16.msra.mxu0 %v5984
        %7056 = vmatprep.subr.bf16.mxu0 %v5983
        %7057 = vmatpush1.bf16.msra.mxu0 %v5982
        %7058 = vmatprep.subr.bf16.mxu0 0
        %7059 = vmatpush2.bf16.msra.mxu0 0
        %7060 = vmatprep.subr.bf16.mxu0 0
        %7061 = vmatpush2.bf16.msra.mxu0 0
        %7062 = vmatprep.subr.bf16.mxu0 0
        %7063 = vmatpush2.bf16.msra.mxu0 0
        %7064 = vmatprep.subr.bf16.mxu0 %v6048
        %7065 = vmatpush2.bf16.msra.mxu0 %v6045
        %7066 = vmatprep.subr.bf16.mxu0 %v6005
        %7067 = vmatpush2.bf16.msra.mxu0 %v6004
        %7068 = vmatprep.subr.bf16.mxu0 %v6003
        %7069 = vmatpush2.bf16.msra.mxu0 %v6002
        %7070 = vmatprep.subr.bf16.mxu0 %v6001
        %7071 = vmatpush2.bf16.msra.mxu0 %v6000
        %7072 = vmatprep.subr.bf16.mxu0 %v5999
        %7073 = vmatpush2.bf16.msra.mxu0 %v5998
        %7074 = vmatprep.mubr.bf16.mxu0 %v7031
        %7075 = vmatmul.mubr.bf16.gmra.mxu0 %v7022
        %v7076 = vpop.f32.mrf.mxu0
        %v7077 = vadd.f32 0.0, %v7076
        %v7078 = vpop.f32.mrf.mxu0
        %v7079 = vadd.f32 0.0, %v7078
        %v7080 = vpop.f32.mrf.mxu0
        %v7081 = vadd.f32 0.0, %v7080
        %v7082 = vpop.f32.mrf.mxu0
        %v7083 = vadd.f32 0.0, %v7082
        %7084 = vmatprep.mubr.bf16.mxu0 %v7034
        %7085 = vmatmul.mubr.bf16.gmra.mxu0 %v7024
        %v7086 = vpop.f32.mrf.mxu0
        %v7087 = vadd.f32 0.0, %v7086
        %v7088 = vpop.f32.mrf.mxu0
        %v7089 = vadd.f32 0.0, %v7088
        %v7090 = vpop.f32.mrf.mxu0
        %v7091 = vadd.f32 0.0, %v7090
        %v7092 = vpop.f32.mrf.mxu0
        %v7093 = vadd.f32 0.0, %v7092
        %7094 = vmatprep.mubr.bf16.mxu0 %v7037
        %7095 = vmatmul.mubr.bf16.gmra.mxu0 %v7026
        %v7096 = vpop.f32.mrf.mxu0
        %v7097 = vadd.f32 0.0, %v7096
        %v7098 = vpop.f32.mrf.mxu0
        %v7099 = vadd.f32 0.0, %v7098
        %v7100 = vpop.f32.mrf.mxu0
        %v7101 = vadd.f32 0.0, %v7100
        %v7102 = vpop.f32.mrf.mxu0
        %v7103 = vadd.f32 0.0, %v7102
        %7104 = vmatprep.mubr.bf16.mxu0 %v7040
        %7105 = vmatmul.mubr.bf16.gmra.mxu0 %v7028
        %v7106 = vpop.f32.mrf.mxu0
        %v7107 = vadd.f32 0.0, %v7106
        %v7108 = vpop.f32.mrf.mxu0
        %v7109 = vadd.f32 0.0, %v7108
        %v7110 = vpop.f32.mrf.mxu0
        %v7111 = vpop.f32.mrf.mxu0
        %7112 = vdwg.mxu0
        %7113 = vrot.lane.b32.xlu0 %v2115, 84
        %v7114 = vpop.permute.xlu0 %7113
        %7115 = vrot.lane.b32.xlu0 %v2120, 84
        %v7116 = vpop.permute.xlu0 %7115
        %7117 = vrot.lane.b32.xlu0 %v2125, 84
        %v7118 = vpop.permute.xlu0 %7117
        %7119 = vrot.lane.b32.xlu0 %v2130, 84
        %v7120 = vpop.permute.xlu0 %7119
        %7121 = vrot.lane.b32.xlu0 %v2135, 84
        %v7122 = vpop.permute.xlu0 %7121
        %7123 = vrot.lane.b32.xlu0 %v2140, 84
        %v7124 = vpop.permute.xlu0 %7123
        %7125 = vrot.lane.b32.xlu0 %v2145, 84
        %v7126 = vpop.permute.xlu0 %7125
        %v7127 = vsel %vm2743, %v7114, 0
        %v7129 = vsel %vm2743, %v7116, 0
        %v7131 = vsel %vm2743, %v7118, 0
        %v7133 = vsel %vm2743, %v7120, 0
        %v7135 = vsel %vm2743, %v7122, 0
        %v7137 = vsel %vm2743, %v7124, 0
        %v7139 = vsel %vm2743, %v7126, 0
        %7141 = vmatprep.subr.mxu0 0.0
        %7142 = vmatpush1.msra.mxu0 0.0
        %7143 = vmatprep.subr.mxu0 0.0
        %7144 = vmatpush1.msra.mxu0 0.0
        %7145 = vmatprep.subr.mxu0 0.0
        %7146 = vmatpush1.msra.mxu0 0.0
        %7147 = vmatprep.subr.mxu0 0.0
        %7148 = vmatpush1.msra.mxu0 0.0
        %7149 = vmatprep.subr.mxu0 0.0
        %7150 = vmatpush1.msra.mxu0 0.0
        %7151 = vmatprep.subr.mxu0 0.0
        %7152 = vmatpush1.msra.mxu0 0.0
        %7153 = vmatprep.subr.mxu0 0.0
        %7154 = vmatpush1.msra.mxu0 0.0
        %7155 = vmatprep.subr.mxu0 0.0
        %7156 = vmatpush1.msra.mxu0 0.0
        %7157 = vmatprep.subr.mxu0 0.0
        %7158 = vmatpush1.msra.mxu0 0.0
        %7159 = vmatprep.subr.mxu0 0.0
        %7160 = vmatpush1.msra.mxu0 0.0
        %7161 = vmatprep.subr.mxu0 0.0
        %7162 = vmatpush1.msra.mxu0 0.0
        %7163 = vmatprep.subr.mxu0 0.0
        %7164 = vmatpush1.msra.mxu0 0.0
        %7165 = vmatprep.subr.mxu0 0.0
        %7166 = vmatpush1.msra.mxu0 0.0
        %7167 = vmatprep.subr.mxu0 0.0
        %7168 = vmatpush1.msra.mxu0 0.0
        %7169 = vmatprep.subr.mxu0 0.0
        %7170 = vmatpush1.msra.mxu0 0.0
        %7171 = vmatprep.subr.mxu0 %v2768
        %7172 = vmatpush1.msra.mxu0 %v2766
        %7173 = vmatprep.subr.mxu0 0.0
        %7174 = vmatpush2.msra.mxu0 0.0
        %7175 = vmatprep.subr.mxu0 0.0
        %7176 = vmatpush2.msra.mxu0 0.0
        %7177 = vmatprep.subr.mxu0 0.0
        %7178 = vmatpush2.msra.mxu0 0.0
        %7179 = vmatprep.subr.mxu0 0.0
        %7180 = vmatpush2.msra.mxu0 0.0
        %7181 = vmatprep.subr.mxu0 0.0
        %7182 = vmatpush2.msra.mxu0 0.0
        %7183 = vmatprep.subr.mxu0 0.0
        %7184 = vmatpush2.msra.mxu0 0.0
        %7185 = vmatprep.subr.mxu0 0.0
        %7186 = vmatpush2.msra.mxu0 0.0
        %7187 = vmatprep.subr.mxu0 0.0
        %7188 = vmatpush2.msra.mxu0 0.0
        %7189 = vmatprep.subr.mxu0 0.0
        %7190 = vmatpush2.msra.mxu0 0.0
        %7191 = vmatprep.subr.mxu0 0.0
        %7192 = vmatpush2.msra.mxu0 0.0
        %7193 = vmatprep.subr.mxu0 0.0
        %7194 = vmatpush2.msra.mxu0 0.0
        %7195 = vmatprep.subr.mxu0 0.0
        %7196 = vmatpush2.msra.mxu0 0.0
        %7197 = vmatprep.subr.mxu0 0.0
        %7198 = vmatpush2.msra.mxu0 0.0
        %7199 = vmatprep.subr.mxu0 0.0
        %7200 = vmatpush2.msra.mxu0 0.0
        %7201 = vmatprep.subr.mxu0 0.0
        %7202 = vmatpush2.msra.mxu0 0.0
        %7203 = vmatprep.subr.mxu0 0.0
        %7204 = vmatpush2.msra.mxu0 0.0
        %7205 = vmatprep.mubr.f32.mxu0 0.0
        %7206 = vmatmul.mubr.f32.gmra.mxu0 %v7127
        %v7207 = vpop.f32.mrf.mxu0
        %v7208 = vadd.f32 0.0, %v7207
        %v7209 = vpop.f32.mrf.mxu0
        %v7210 = vadd.f32 0.0, %v7209
        %7211 = vmatprep.mubr.f32.mxu0 0.0
        %7212 = vmatmul.mubr.f32.gmra.mxu0 %v7129
        %v7213 = vpop.f32.mrf.mxu0
        %v7214 = vadd.f32 0.0, %v7213
        %v7215 = vpop.f32.mrf.mxu0
        %v7216 = vadd.f32 0.0, %v7215
        %7217 = vmatprep.mubr.f32.mxu0 0.0
        %7218 = vmatmul.mubr.f32.gmra.mxu0 %v7131
        %v7219 = vpop.f32.mrf.mxu0
        %v7220 = vadd.f32 0.0, %v7219
        %v7221 = vpop.f32.mrf.mxu0
        %v7222 = vadd.f32 0.0, %v7221
        %7223 = vmatprep.mubr.f32.mxu0 0.0
        %7224 = vmatmul.mubr.f32.gmra.mxu0 %v7133
        %v7225 = vpop.f32.mrf.mxu0
        %v7226 = vadd.f32 0.0, %v7225
        %v7227 = vpop.f32.mrf.mxu0
        %v7228 = vadd.f32 0.0, %v7227
        %7229 = vmatprep.mubr.f32.mxu0 0.0
        %7230 = vmatmul.mubr.f32.gmra.mxu0 %v7135
        %v7231 = vpop.f32.mrf.mxu0
        %v7232 = vadd.f32 0.0, %v7231
        %v7233 = vpop.f32.mrf.mxu0
        %v7234 = vadd.f32 0.0, %v7233
        %7235 = vmatprep.mubr.f32.mxu0 0.0
        %7236 = vmatmul.mubr.f32.gmra.mxu0 %v7137
        %v7237 = vpop.f32.mrf.mxu0
        %v7238 = vadd.f32 0.0, %v7237
        %v7239 = vpop.f32.mrf.mxu0
        %v7240 = vadd.f32 0.0, %v7239
        %7241 = vmatprep.mubr.f32.mxu0 0.0
        %7242 = vmatmul.mubr.f32.gmra.mxu0 %v7139
        %v7243 = vpop.f32.mrf.mxu0
        %v7244 = vadd.f32 0.0, %v7243
        %v7245 = vpop.f32.mrf.mxu0
        %v7246 = vadd.f32 0.0, %v7245
        %7247 = vdwg.mxu0
        %v7248 = vmul.f32 %v7077, %v7208
        %v7249 = vmul.f32 %v7079, %v7210
        %v7250 = vmul.f32 %v7081, %v7214
        %v7251 = vmul.f32 %v7083, %v7216
        %v7252 = vmul.f32 %v7087, %v7220
        %v7253 = vmul.f32 %v7089, %v7222
        %v7254 = vmul.f32 %v7091, %v7226
        %v7255 = vmul.f32 %v7093, %v7228
        %v7256 = vmul.f32 %v7097, %v7232
        %v7257 = vmul.f32 %v7099, %v7234
        %v7258 = vmul.f32 %v7101, %v7238
        %v7259 = vmul.f32 %v7103, %v7240
        %v7260 = vmul.f32 %v7107, %v7244
        %v7261 = vmul.f32 %v7109, %v7246
        %v7262 = vadd.f32 %v6865, %v7248
        %v7263 = vadd.f32 %v6866, %v7249
        %v7264 = vadd.f32 %v6867, %v7250
        %v7265 = vadd.f32 %v6868, %v7251
        %v7266 = vadd.f32 %v6869, %v7252
        %v7267 = vadd.f32 %v6870, %v7253
        %v7268 = vadd.f32 %v6871, %v7254
        %v7269 = vadd.f32 %v6872, %v7255
        %v7270 = vadd.f32 %v6873, %v7256
        %v7271 = vadd.f32 %v6874, %v7257
        %v7272 = vadd.f32 %v6875, %v7258
        %v7273 = vadd.f32 %v6876, %v7259
        %v7274 = vadd.f32 %v6877, %v7260
        %v7275 = vadd.f32 %v6878, %v7261
        %7276 = vrot.lane.b32.xlu0 %v2305, 76
        %v7277 = vpop.permute.xlu0 %7276
        %7278 = vrot.lane.b32.xlu0 %v2306, 76
        %v7279 = vpop.permute.xlu0 %7278
        %7280 = vrot.lane.b32.xlu0 %v2307, 76
        %v7281 = vpop.permute.xlu0 %7280
        %7282 = vrot.lane.b32.xlu0 %v2308, 76
        %v7283 = vpop.permute.xlu0 %7282
        %7284 = vrot.lane.b32.xlu0 %v2309, 76
        %v7285 = vpop.permute.xlu0 %7284
        %7286 = vrot.lane.b32.xlu0 %v2310, 76
        %v7287 = vpop.permute.xlu0 %7286
        %7288 = vrot.lane.b32.xlu0 %v2311, 76
        %v7289 = vpop.permute.xlu0 %7288
        %v7290 = vsel %vm2743, %v7277, 0
        %v7292 = vsel %vm2743, %v7279, 0
        %v7294 = vsel %vm2743, %v7281, 0
        %v7296 = vsel %vm2743, %v7283, 0
        %v7298 = vsel %vm2743, %v7285, 0
        %v7300 = vsel %vm2743, %v7287, 0
        %v7302 = vsel %vm2743, %v7289, 0
        %7304 = vmatprep.subr.mxu0 0.0
        %7305 = vmatpush1.msra.mxu0 0.0
        %7306 = vmatprep.subr.mxu0 0.0
        %7307 = vmatpush1.msra.mxu0 0.0
        %7308 = vmatprep.subr.mxu0 0.0
        %7309 = vmatpush1.msra.mxu0 0.0
        %7310 = vmatprep.subr.mxu0 0.0
        %7311 = vmatpush1.msra.mxu0 0.0
        %7312 = vmatprep.subr.mxu0 0.0
        %7313 = vmatpush1.msra.mxu0 0.0
        %7314 = vmatprep.subr.mxu0 0.0
        %7315 = vmatpush1.msra.mxu0 0.0
        %7316 = vmatprep.subr.mxu0 0.0
        %7317 = vmatpush1.msra.mxu0 0.0
        %7318 = vmatprep.subr.mxu0 0.0
        %7319 = vmatpush1.msra.mxu0 0.0
        %7320 = vmatprep.subr.mxu0 0.0
        %7321 = vmatpush1.msra.mxu0 0.0
        %7322 = vmatprep.subr.mxu0 0.0
        %7323 = vmatpush1.msra.mxu0 0.0
        %7324 = vmatprep.subr.mxu0 0.0
        %7325 = vmatpush1.msra.mxu0 0.0
        %7326 = vmatprep.subr.mxu0 0.0
        %7327 = vmatpush1.msra.mxu0 0.0
        %7328 = vmatprep.subr.mxu0 0.0
        %7329 = vmatpush1.msra.mxu0 0.0
        %7330 = vmatprep.subr.mxu0 0.0
        %7331 = vmatpush1.msra.mxu0 0.0
        %7332 = vmatprep.subr.mxu0 0.0
        %7333 = vmatpush1.msra.mxu0 0.0
        %7334 = vmatprep.subr.mxu0 %v2768
        %7335 = vmatpush1.msra.mxu0 %v2766
        %7336 = vmatprep.subr.mxu0 0.0
        %7337 = vmatpush2.msra.mxu0 0.0
        %7338 = vmatprep.subr.mxu0 0.0
        %7339 = vmatpush2.msra.mxu0 0.0
        %7340 = vmatprep.subr.mxu0 0.0
        %7341 = vmatpush2.msra.mxu0 0.0
        %7342 = vmatprep.subr.mxu0 0.0
        %7343 = vmatpush2.msra.mxu0 0.0
        %7344 = vmatprep.subr.mxu0 0.0
        %7345 = vmatpush2.msra.mxu0 0.0
        %7346 = vmatprep.subr.mxu0 0.0
        %7347 = vmatpush2.msra.mxu0 0.0
        %7348 = vmatprep.subr.mxu0 0.0
        %7349 = vmatpush2.msra.mxu0 0.0
        %7350 = vmatprep.subr.mxu0 0.0
        %7351 = vmatpush2.msra.mxu0 0.0
        %7352 = vmatprep.subr.mxu0 0.0
        %7353 = vmatpush2.msra.mxu0 0.0
        %7354 = vmatprep.subr.mxu0 0.0
        %7355 = vmatpush2.msra.mxu0 0.0
        %7356 = vmatprep.subr.mxu0 0.0
        %7357 = vmatpush2.msra.mxu0 0.0
        %7358 = vmatprep.subr.mxu0 0.0
        %7359 = vmatpush2.msra.mxu0 0.0
        %7360 = vmatprep.subr.mxu0 0.0
        %7361 = vmatpush2.msra.mxu0 0.0
        %7362 = vmatprep.subr.mxu0 0.0
        %7363 = vmatpush2.msra.mxu0 0.0
        %7364 = vmatprep.subr.mxu0 0.0
        %7365 = vmatpush2.msra.mxu0 0.0
        %7366 = vmatprep.subr.mxu0 0.0
        %7367 = vmatpush2.msra.mxu0 0.0
        %7368 = vmatprep.mubr.f32.mxu0 0.0
        %7369 = vmatmul.mubr.f32.gmra.mxu0 %v7290
        %v7370 = vpop.f32.mrf.mxu0
        %v7371 = vadd.f32 0.0, %v7370
        %v7372 = vpop.f32.mrf.mxu0
        %v7373 = vadd.f32 0.0, %v7372
        %7374 = vmatprep.mubr.f32.mxu0 0.0
        %7375 = vmatmul.mubr.f32.gmra.mxu0 %v7292
        %v7376 = vpop.f32.mrf.mxu0
        %v7377 = vadd.f32 0.0, %v7376
        %v7378 = vpop.f32.mrf.mxu0
        %v7379 = vadd.f32 0.0, %v7378
        %7380 = vmatprep.mubr.f32.mxu0 0.0
        %7381 = vmatmul.mubr.f32.gmra.mxu0 %v7294
        %v7382 = vpop.f32.mrf.mxu0
        %v7383 = vadd.f32 0.0, %v7382
        %v7384 = vpop.f32.mrf.mxu0
        %v7385 = vadd.f32 0.0, %v7384
        %7386 = vmatprep.mubr.f32.mxu0 0.0
        %7387 = vmatmul.mubr.f32.gmra.mxu0 %v7296
        %v7388 = vpop.f32.mrf.mxu0
        %v7389 = vadd.f32 0.0, %v7388
        %v7390 = vpop.f32.mrf.mxu0
        %v7391 = vadd.f32 0.0, %v7390
        %7392 = vmatprep.mubr.f32.mxu0 0.0
        %7393 = vmatmul.mubr.f32.gmra.mxu0 %v7298
        %v7394 = vpop.f32.mrf.mxu0
        %v7395 = vadd.f32 0.0, %v7394
        %v7396 = vpop.f32.mrf.mxu0
        %v7397 = vadd.f32 0.0, %v7396
        %7398 = vmatprep.mubr.f32.mxu0 0.0
        %7399 = vmatmul.mubr.f32.gmra.mxu0 %v7300
        %v7400 = vpop.f32.mrf.mxu0
        %v7401 = vadd.f32 0.0, %v7400
        %v7402 = vpop.f32.mrf.mxu0
        %v7403 = vadd.f32 0.0, %v7402
        %7404 = vmatprep.mubr.f32.mxu0 0.0
        %7405 = vmatmul.mubr.f32.gmra.mxu0 %v7302
        %v7406 = vpop.f32.mrf.mxu0
        %v7407 = vadd.f32 0.0, %v7406
        %v7408 = vpop.f32.mrf.mxu0
        %v7409 = vadd.f32 0.0, %v7408
        %7410 = vdwg.mxu0
        %v7411 = vmul.f32 %v7371, %v2424
        %v7412 = vmul.f32 %v7373, %v2425
        %v7413 = vmul.f32 %v7377, %v2426
        %v7414 = vmul.f32 %v7379, %v2427
        %v7415 = vmul.f32 %v7383, %v2428
        %v7416 = vmul.f32 %v7385, %v2429
        %v7417 = vmul.f32 %v7389, %v2430
        %v7418 = vmul.f32 %v7391, %v2431
        %v7419 = vmul.f32 %v7395, %v2432
        %v7420 = vmul.f32 %v7397, %v2433
        %v7421 = vmul.f32 %v7401, %v2434
        %v7422 = vmul.f32 %v7403, %v2435
        %v7423 = vmul.f32 %v7407, %v2436
        %v7424 = vmul.f32 %v7409, %v2437
        %v7426 = vsel %vm2451, %v7423, 0
        %v7429 = vsel %vm2451, %v7424, 0
        %7431 = vmatprep.subr.mxu0 0.0
        %7432 = vmatpush1.msra.mxu0 0.0
        %7433 = vmatprep.subr.mxu0 0.0
        %7434 = vmatpush1.msra.mxu0 0.0
        %7435 = vmatprep.subr.mxu0 0.0
        %7436 = vmatpush1.msra.mxu0 0.0
        %7437 = vmatprep.subr.mxu0 0.0
        %7438 = vmatpush1.msra.mxu0 0.0
        %7439 = vmatprep.subr.mxu0 0.0
        %7440 = vmatpush1.msra.mxu0 0.0
        %7441 = vmatprep.subr.mxu0 0.0
        %7442 = vmatpush1.msra.mxu0 0.0
        %7443 = vmatprep.subr.mxu0 0.0
        %7444 = vmatpush1.msra.mxu0 0.0
        %7445 = vmatprep.subr.mxu0 0.0
        %7446 = vmatpush1.msra.mxu0 0.0
        %7447 = vmatprep.subr.mxu0 0.0
        %7448 = vmatpush1.msra.mxu0 0.0
        %7449 = vmatprep.subr.mxu0 %v7429
        %7450 = vmatpush1.msra.mxu0 %v7426
        %7451 = vmatprep.subr.mxu0 %v7422
        %7452 = vmatpush1.msra.mxu0 %v7421
        %7453 = vmatprep.subr.mxu0 %v7420
        %7454 = vmatpush1.msra.mxu0 %v7419
        %7455 = vmatprep.subr.mxu0 %v7418
        %7456 = vmatpush1.msra.mxu0 %v7417
        %7457 = vmatprep.subr.mxu0 %v7416
        %7458 = vmatpush1.msra.mxu0 %v7415
        %7459 = vmatprep.subr.mxu0 %v7414
        %7460 = vmatpush1.msra.mxu0 %v7413
        %7461 = vmatprep.subr.mxu0 %v7412
        %7462 = vmatpush1.msra.mxu0 %v7411
        %7463 = vmatprep.subr.mxu0 0.0
        %7464 = vmatpush2.msra.mxu0 0.0
        %7465 = vmatprep.subr.mxu0 0.0
        %7466 = vmatpush2.msra.mxu0 0.0
        %7467 = vmatprep.subr.mxu0 0.0
        %7468 = vmatpush2.msra.mxu0 0.0
        %7469 = vmatprep.subr.mxu0 0.0
        %7470 = vmatpush2.msra.mxu0 0.0
        %7471 = vmatprep.subr.mxu0 0.0
        %7472 = vmatpush2.msra.mxu0 0.0
        %7473 = vmatprep.subr.mxu0 0.0
        %7474 = vmatpush2.msra.mxu0 0.0
        %7475 = vmatprep.subr.mxu0 0.0
        %7476 = vmatpush2.msra.mxu0 0.0
        %7477 = vmatprep.subr.mxu0 0.0
        %7478 = vmatpush2.msra.mxu0 0.0
        %7479 = vmatprep.subr.mxu0 0.0
        %7480 = vmatpush2.msra.mxu0 0.0
        %7481 = vmatprep.subr.mxu0 0.0
        %7482 = vmatpush2.msra.mxu0 0.0
        %7483 = vmatprep.subr.mxu0 0.0
        %7484 = vmatpush2.msra.mxu0 0.0
        %7485 = vmatprep.subr.mxu0 0.0
        %7486 = vmatpush2.msra.mxu0 0.0
        %7487 = vmatprep.subr.mxu0 0.0
        %7488 = vmatpush2.msra.mxu0 0.0
        %7489 = vmatprep.subr.mxu0 0.0
        %7490 = vmatpush2.msra.mxu0 0.0
        %7491 = vmatprep.subr.mxu0 0.0
        %7492 = vmatpush2.msra.mxu0 0.0
        %7493 = vmatprep.subr.mxu0 0.0
        %7494 = vmatpush2.msra.mxu0 0.0
        %7495 = vmatprep.mubr.f32.mxu0 0.0
        %7496 = vmatmul.mubr.f32.gmra.mxu0 %v3346
        %v7497 = vpop.f32.mrf.mxu0
        %v7498 = vadd.f32 0.0, %v7497
        %v7499 = vpop.f32.mrf.mxu0
        %v7500 = vadd.f32 0.0, %v7499
        %7501 = vdwg.mxu0
        %v7502 = vpack.c.bf16 %v7498, %v7498
        %v7503 = vpack.c.bf16 %v7500, %v7500
        %v7505 = vpack.i.b16 %v7502, %v7502
        %v7507 = vlaneseq
        %v7508 = vshrl.u32 %v7507, 7
        %v7509 = vsub.s32 0, %v7508
        %v7510 = vrot.slane %v7505, %v7509
        %v7512 = vpack.i.b16 %v7503, %v7503
        %v7514 = vlaneseq
        %v7515 = vshrl.u32 %v7514, 7
        %v7516 = vsub.s32 0, %v7515
        %v7517 = vrot.slane %v7512, %v7516
        %v7518 = vmul.bf16 %v5748, %v7510
        %v7519 = vmul.bf16 %v5749, %v7517
        %v7520 = vmul.bf16 %v5750, %v7510
        %v7521 = vmul.bf16 %v5751, %v7517
        %v7522 = vmul.bf16 %v5752, %v7510
        %v7523 = vmul.bf16 %v5753, %v7517
        %v7524 = vmul.bf16 %v5754, %v7510
        %v7525 = vmul.bf16 %v5755, %v7517
        %v7527 = vsel %vm2891, %v7519, 0
        %v7530 = vsel %vm2891, %v7521, 0
        %v7533 = vsel %vm2891, %v7523, 0
        %v7536 = vsel %vm2891, %v7525, 0
        %7538 = vmatprep.subr.bf16.mxu0 %v5997
        %7539 = vmatpush1.bf16.msra.mxu0 %v5996
        %7540 = vmatprep.subr.bf16.mxu0 %v5995
        %7541 = vmatpush1.bf16.msra.mxu0 %v5994
        %7542 = vmatprep.subr.bf16.mxu0 %v5993
        %7543 = vmatpush1.bf16.msra.mxu0 %v5992
        %7544 = vmatprep.subr.bf16.mxu0 %v5991
        %7545 = vmatpush1.bf16.msra.mxu0 %v5990
        %7546 = vmatprep.subr.bf16.mxu0 %v5989
        %7547 = vmatpush1.bf16.msra.mxu0 %v5988
        %7548 = vmatprep.subr.bf16.mxu0 %v5987
        %7549 = vmatpush1.bf16.msra.mxu0 %v5986
        %7550 = vmatprep.subr.bf16.mxu0 %v5985
        %7551 = vmatpush1.bf16.msra.mxu0 %v5984
        %7552 = vmatprep.subr.bf16.mxu0 %v5983
        %7553 = vmatpush1.bf16.msra.mxu0 %v5982
        %7554 = vmatprep.subr.bf16.mxu0 0
        %7555 = vmatpush2.bf16.msra.mxu0 0
        %7556 = vmatprep.subr.bf16.mxu0 0
        %7557 = vmatpush2.bf16.msra.mxu0 0
        %7558 = vmatprep.subr.bf16.mxu0 0
        %7559 = vmatpush2.bf16.msra.mxu0 0
        %7560 = vmatprep.subr.bf16.mxu0 %v6048
        %7561 = vmatpush2.bf16.msra.mxu0 %v6045
        %7562 = vmatprep.subr.bf16.mxu0 %v6005
        %7563 = vmatpush2.bf16.msra.mxu0 %v6004
        %7564 = vmatprep.subr.bf16.mxu0 %v6003
        %7565 = vmatpush2.bf16.msra.mxu0 %v6002
        %7566 = vmatprep.subr.bf16.mxu0 %v6001
        %7567 = vmatpush2.bf16.msra.mxu0 %v6000
        %7568 = vmatprep.subr.bf16.mxu0 %v5999
        %7569 = vmatpush2.bf16.msra.mxu0 %v5998
        %7570 = vmatprep.mubr.bf16.mxu0 %v7527
        %7571 = vmatmul.mubr.bf16.gmra.mxu0 %v7518
        %v7572 = vpop.f32.mrf.mxu0
        %v7573 = vadd.f32 0.0, %v7572
        %v7574 = vpop.f32.mrf.mxu0
        %v7575 = vadd.f32 0.0, %v7574
        %v7576 = vpop.f32.mrf.mxu0
        %v7577 = vadd.f32 0.0, %v7576
        %v7578 = vpop.f32.mrf.mxu0
        %v7579 = vadd.f32 0.0, %v7578
        %7580 = vmatprep.mubr.bf16.mxu0 %v7530
        %7581 = vmatmul.mubr.bf16.gmra.mxu0 %v7520
        %v7582 = vpop.f32.mrf.mxu0
        %v7583 = vadd.f32 0.0, %v7582
        %v7584 = vpop.f32.mrf.mxu0
        %v7585 = vadd.f32 0.0, %v7584
        %v7586 = vpop.f32.mrf.mxu0
        %v7587 = vadd.f32 0.0, %v7586
        %v7588 = vpop.f32.mrf.mxu0
        %v7589 = vadd.f32 0.0, %v7588
        %7590 = vmatprep.mubr.bf16.mxu0 %v7533
        %7591 = vmatmul.mubr.bf16.gmra.mxu0 %v7522
        %v7592 = vpop.f32.mrf.mxu0
        %v7593 = vadd.f32 0.0, %v7592
        %v7594 = vpop.f32.mrf.mxu0
        %v7595 = vadd.f32 0.0, %v7594
        %v7596 = vpop.f32.mrf.mxu0
        %v7597 = vadd.f32 0.0, %v7596
        %v7598 = vpop.f32.mrf.mxu0
        %v7599 = vadd.f32 0.0, %v7598
        %7600 = vmatprep.mubr.bf16.mxu0 %v7536
        %7601 = vmatmul.mubr.bf16.gmra.mxu0 %v7524
        %v7602 = vpop.f32.mrf.mxu0
        %v7603 = vadd.f32 0.0, %v7602
        %v7604 = vpop.f32.mrf.mxu0
        %v7605 = vadd.f32 0.0, %v7604
        %v7606 = vpop.f32.mrf.mxu0
        %v7607 = vpop.f32.mrf.mxu0
        %7608 = vdwg.mxu0
        %7609 = vrot.lane.b32.xlu0 %v2115, 68
        %v7610 = vpop.permute.xlu0 %7609
        %7611 = vrot.lane.b32.xlu0 %v2120, 68
        %v7612 = vpop.permute.xlu0 %7611
        %7613 = vrot.lane.b32.xlu0 %v2125, 68
        %v7614 = vpop.permute.xlu0 %7613
        %7615 = vrot.lane.b32.xlu0 %v2130, 68
        %v7616 = vpop.permute.xlu0 %7615
        %7617 = vrot.lane.b32.xlu0 %v2135, 68
        %v7618 = vpop.permute.xlu0 %7617
        %7619 = vrot.lane.b32.xlu0 %v2140, 68
        %v7620 = vpop.permute.xlu0 %7619
        %7621 = vrot.lane.b32.xlu0 %v2145, 68
        %v7622 = vpop.permute.xlu0 %7621
        %v7623 = vsel %vm2743, %v7610, 0
        %v7625 = vsel %vm2743, %v7612, 0
        %v7627 = vsel %vm2743, %v7614, 0
        %v7629 = vsel %vm2743, %v7616, 0
        %v7631 = vsel %vm2743, %v7618, 0
        %v7633 = vsel %vm2743, %v7620, 0
        %v7635 = vsel %vm2743, %v7622, 0
        %7637 = vmatprep.subr.mxu0 0.0
        %7638 = vmatpush1.msra.mxu0 0.0
        %7639 = vmatprep.subr.mxu0 0.0
        %7640 = vmatpush1.msra.mxu0 0.0
        %7641 = vmatprep.subr.mxu0 0.0
        %7642 = vmatpush1.msra.mxu0 0.0
        %7643 = vmatprep.subr.mxu0 0.0
        %7644 = vmatpush1.msra.mxu0 0.0
        %7645 = vmatprep.subr.mxu0 0.0
        %7646 = vmatpush1.msra.mxu0 0.0
        %7647 = vmatprep.subr.mxu0 0.0
        %7648 = vmatpush1.msra.mxu0 0.0
        %7649 = vmatprep.subr.mxu0 0.0
        %7650 = vmatpush1.msra.mxu0 0.0
        %7651 = vmatprep.subr.mxu0 0.0
        %7652 = vmatpush1.msra.mxu0 0.0
        %7653 = vmatprep.subr.mxu0 0.0
        %7654 = vmatpush1.msra.mxu0 0.0
        %7655 = vmatprep.subr.mxu0 0.0
        %7656 = vmatpush1.msra.mxu0 0.0
        %7657 = vmatprep.subr.mxu0 0.0
        %7658 = vmatpush1.msra.mxu0 0.0
        %7659 = vmatprep.subr.mxu0 0.0
        %7660 = vmatpush1.msra.mxu0 0.0
        %7661 = vmatprep.subr.mxu0 0.0
        %7662 = vmatpush1.msra.mxu0 0.0
        %7663 = vmatprep.subr.mxu0 0.0
        %7664 = vmatpush1.msra.mxu0 0.0
        %7665 = vmatprep.subr.mxu0 0.0
        %7666 = vmatpush1.msra.mxu0 0.0
        %7667 = vmatprep.subr.mxu0 %v2768
        %7668 = vmatpush1.msra.mxu0 %v2766
        %7669 = vmatprep.subr.mxu0 0.0
        %7670 = vmatpush2.msra.mxu0 0.0
        %7671 = vmatprep.subr.mxu0 0.0
        %7672 = vmatpush2.msra.mxu0 0.0
        %7673 = vmatprep.subr.mxu0 0.0
        %7674 = vmatpush2.msra.mxu0 0.0
        %7675 = vmatprep.subr.mxu0 0.0
        %7676 = vmatpush2.msra.mxu0 0.0
        %7677 = vmatprep.subr.mxu0 0.0
        %7678 = vmatpush2.msra.mxu0 0.0
        %7679 = vmatprep.subr.mxu0 0.0
        %7680 = vmatpush2.msra.mxu0 0.0
        %7681 = vmatprep.subr.mxu0 0.0
        %7682 = vmatpush2.msra.mxu0 0.0
        %7683 = vmatprep.subr.mxu0 0.0
        %7684 = vmatpush2.msra.mxu0 0.0
        %7685 = vmatprep.subr.mxu0 0.0
        %7686 = vmatpush2.msra.mxu0 0.0
        %7687 = vmatprep.subr.mxu0 0.0
        %7688 = vmatpush2.msra.mxu0 0.0
        %7689 = vmatprep.subr.mxu0 0.0
        %7690 = vmatpush2.msra.mxu0 0.0
        %7691 = vmatprep.subr.mxu0 0.0
        %7692 = vmatpush2.msra.mxu0 0.0
        %7693 = vmatprep.subr.mxu0 0.0
        %7694 = vmatpush2.msra.mxu0 0.0
        %7695 = vmatprep.subr.mxu0 0.0
        %7696 = vmatpush2.msra.mxu0 0.0
        %7697 = vmatprep.subr.mxu0 0.0
        %7698 = vmatpush2.msra.mxu0 0.0
        %7699 = vmatprep.subr.mxu0 0.0
        %7700 = vmatpush2.msra.mxu0 0.0
        %7701 = vmatprep.mubr.f32.mxu0 0.0
        %7702 = vmatmul.mubr.f32.gmra.mxu0 %v7623
        %v7703 = vpop.f32.mrf.mxu0
        %v7704 = vadd.f32 0.0, %v7703
        %v7705 = vpop.f32.mrf.mxu0
        %v7706 = vadd.f32 0.0, %v7705
        %7707 = vmatprep.mubr.f32.mxu0 0.0
        %7708 = vmatmul.mubr.f32.gmra.mxu0 %v7625
        %v7709 = vpop.f32.mrf.mxu0
        %v7710 = vadd.f32 0.0, %v7709
        %v7711 = vpop.f32.mrf.mxu0
        %v7712 = vadd.f32 0.0, %v7711
        %7713 = vmatprep.mubr.f32.mxu0 0.0
        %7714 = vmatmul.mubr.f32.gmra.mxu0 %v7627
        %v7715 = vpop.f32.mrf.mxu0
        %v7716 = vadd.f32 0.0, %v7715
        %v7717 = vpop.f32.mrf.mxu0
        %v7718 = vadd.f32 0.0, %v7717
        %7719 = vmatprep.mubr.f32.mxu0 0.0
        %7720 = vmatmul.mubr.f32.gmra.mxu0 %v7629
        %v7721 = vpop.f32.mrf.mxu0
        %v7722 = vadd.f32 0.0, %v7721
        %v7723 = vpop.f32.mrf.mxu0
        %v7724 = vadd.f32 0.0, %v7723
        %7725 = vmatprep.mubr.f32.mxu0 0.0
        %7726 = vmatmul.mubr.f32.gmra.mxu0 %v7631
        %v7727 = vpop.f32.mrf.mxu0
        %v7728 = vadd.f32 0.0, %v7727
        %v7729 = vpop.f32.mrf.mxu0
        %v7730 = vadd.f32 0.0, %v7729
        %7731 = vmatprep.mubr.f32.mxu0 0.0
        %7732 = vmatmul.mubr.f32.gmra.mxu0 %v7633
        %v7733 = vpop.f32.mrf.mxu0
        %v7734 = vadd.f32 0.0, %v7733
        %v7735 = vpop.f32.mrf.mxu0
        %v7736 = vadd.f32 0.0, %v7735
        %7737 = vmatprep.mubr.f32.mxu0 0.0
        %7738 = vmatmul.mubr.f32.gmra.mxu0 %v7635
        %v7739 = vpop.f32.mrf.mxu0
        %v7740 = vadd.f32 0.0, %v7739
        %v7741 = vpop.f32.mrf.mxu0
        %v7742 = vadd.f32 0.0, %v7741
        %7743 = vdwg.mxu0
        %v7744 = vmul.f32 %v7704, %v2424
        %v7745 = vmul.f32 %v7706, %v2425
        %v7746 = vmul.f32 %v7710, %v2426
        %v7747 = vmul.f32 %v7712, %v2427
        %v7748 = vmul.f32 %v7716, %v2428
        %v7749 = vmul.f32 %v7718, %v2429
        %v7750 = vmul.f32 %v7722, %v2430
        %v7751 = vmul.f32 %v7724, %v2431
        %v7752 = vmul.f32 %v7728, %v2432
        %v7753 = vmul.f32 %v7730, %v2433
        %v7754 = vmul.f32 %v7734, %v2434
        %v7755 = vmul.f32 %v7736, %v2435
        %v7756 = vmul.f32 %v7740, %v2436
        %v7757 = vmul.f32 %v7742, %v2437
        %v7759 = vsel %vm2451, %v7756, 0
        %v7762 = vsel %vm2451, %v7757, 0
        %7764 = vmatprep.subr.mxu0 0.0
        %7765 = vmatpush1.msra.mxu0 0.0
        %7766 = vmatprep.subr.mxu0 0.0
        %7767 = vmatpush1.msra.mxu0 0.0
        %7768 = vmatprep.subr.mxu0 0.0
        %7769 = vmatpush1.msra.mxu0 0.0
        %7770 = vmatprep.subr.mxu0 0.0
        %7771 = vmatpush1.msra.mxu0 0.0
        %7772 = vmatprep.subr.mxu0 0.0
        %7773 = vmatpush1.msra.mxu0 0.0
        %7774 = vmatprep.subr.mxu0 0.0
        %7775 = vmatpush1.msra.mxu0 0.0
        %7776 = vmatprep.subr.mxu0 0.0
        %7777 = vmatpush1.msra.mxu0 0.0
        %7778 = vmatprep.subr.mxu0 0.0
        %7779 = vmatpush1.msra.mxu0 0.0
        %7780 = vmatprep.subr.mxu0 0.0
        %7781 = vmatpush1.msra.mxu0 0.0
        %7782 = vmatprep.subr.mxu0 %v7762
        %7783 = vmatpush1.msra.mxu0 %v7759
        %7784 = vmatprep.subr.mxu0 %v7755
        %7785 = vmatpush1.msra.mxu0 %v7754
        %7786 = vmatprep.subr.mxu0 %v7753
        %7787 = vmatpush1.msra.mxu0 %v7752
        %7788 = vmatprep.subr.mxu0 %v7751
        %7789 = vmatpush1.msra.mxu0 %v7750
        %7790 = vmatprep.subr.mxu0 %v7749
        %7791 = vmatpush1.msra.mxu0 %v7748
        %7792 = vmatprep.subr.mxu0 %v7747
        %7793 = vmatpush1.msra.mxu0 %v7746
        %7794 = vmatprep.subr.mxu0 %v7745
        %7795 = vmatpush1.msra.mxu0 %v7744
        %7796 = vmatprep.subr.mxu0 0.0
        %7797 = vmatpush2.msra.mxu0 0.0
        %7798 = vmatprep.subr.mxu0 0.0
        %7799 = vmatpush2.msra.mxu0 0.0
        %7800 = vmatprep.subr.mxu0 0.0
        %7801 = vmatpush2.msra.mxu0 0.0
        %7802 = vmatprep.subr.mxu0 0.0
        %7803 = vmatpush2.msra.mxu0 0.0
        %7804 = vmatprep.subr.mxu0 0.0
        %7805 = vmatpush2.msra.mxu0 0.0
        %7806 = vmatprep.subr.mxu0 0.0
        %7807 = vmatpush2.msra.mxu0 0.0
        %7808 = vmatprep.subr.mxu0 0.0
        %7809 = vmatpush2.msra.mxu0 0.0
        %7810 = vmatprep.subr.mxu0 0.0
        %7811 = vmatpush2.msra.mxu0 0.0
        %7812 = vmatprep.subr.mxu0 0.0
        %7813 = vmatpush2.msra.mxu0 0.0
        %7814 = vmatprep.subr.mxu0 0.0
        %7815 = vmatpush2.msra.mxu0 0.0
        %7816 = vmatprep.subr.mxu0 0.0
        %7817 = vmatpush2.msra.mxu0 0.0
        %7818 = vmatprep.subr.mxu0 0.0
        %7819 = vmatpush2.msra.mxu0 0.0
        %7820 = vmatprep.subr.mxu0 0.0
        %7821 = vmatpush2.msra.mxu0 0.0
        %7822 = vmatprep.subr.mxu0 0.0
        %7823 = vmatpush2.msra.mxu0 0.0
        %7824 = vmatprep.subr.mxu0 0.0
        %7825 = vmatpush2.msra.mxu0 0.0
        %7826 = vmatprep.subr.mxu0 0.0
        %7827 = vmatpush2.msra.mxu0 0.0
        %7828 = vmatprep.mubr.f32.mxu0 0.0
        %7829 = vmatmul.mubr.f32.gmra.mxu0 %v3346
        %v7830 = vpop.f32.mrf.mxu0
        %v7831 = vadd.f32 0.0, %v7830
        %v7832 = vpop.f32.mrf.mxu0
        %v7833 = vadd.f32 0.0, %v7832
        %7834 = vdwg.mxu0
        %v7835 = vlaneseq
        %v7836 = vshrl.u32 %v7835, 7
        %v7837 = vsub.s32 0, %v7836
        %v7838 = vrot.slane %v7831, %v7837
        %v7839 = vlaneseq
        %v7840 = vshrl.u32 %v7839, 7
        %v7841 = vsub.s32 0, %v7840
        %v7842 = vrot.slane %v7833, %v7841
        %v7843 = vmul.f32 %v7573, %v7838
        %v7844 = vmul.f32 %v7575, %v7842
        %v7845 = vmul.f32 %v7577, %v7838
        %v7846 = vmul.f32 %v7579, %v7842
        %v7847 = vmul.f32 %v7583, %v7838
        %v7848 = vmul.f32 %v7585, %v7842
        %v7849 = vmul.f32 %v7587, %v7838
        %v7850 = vmul.f32 %v7589, %v7842
        %v7851 = vmul.f32 %v7593, %v7838
        %v7852 = vmul.f32 %v7595, %v7842
        %v7853 = vmul.f32 %v7597, %v7838
        %v7854 = vmul.f32 %v7599, %v7842
        %v7855 = vmul.f32 %v7603, %v7838
        %v7856 = vmul.f32 %v7605, %v7842
        %v7857 = vadd.f32 %v7262, %v7843
        %v7858 = vadd.f32 %v7263, %v7844
        %v7859 = vadd.f32 %v7264, %v7845
        %v7860 = vadd.f32 %v7265, %v7846
        %v7861 = vadd.f32 %v7266, %v7847
        %v7862 = vadd.f32 %v7267, %v7848
        %v7863 = vadd.f32 %v7268, %v7849
        %v7864 = vadd.f32 %v7269, %v7850
        %v7865 = vadd.f32 %v7270, %v7851
        %v7866 = vadd.f32 %v7271, %v7852
        %v7867 = vadd.f32 %v7272, %v7853
        %v7868 = vadd.f32 %v7273, %v7854
        %v7869 = vadd.f32 %v7274, %v7855
        %v7870 = vadd.f32 %v7275, %v7856
        %7871 = vrot.lane.b32.xlu0 %v2416, 120
        %v7872 = vpop.permute.xlu0 %7871
        %7873 = vrot.lane.b32.xlu0 %v2417, 120
        %v7874 = vpop.permute.xlu0 %7873
        %7875 = vrot.lane.b32.xlu0 %v2418, 120
        %v7876 = vpop.permute.xlu0 %7875
        %7877 = vrot.lane.b32.xlu0 %v2419, 120
        %v7878 = vpop.permute.xlu0 %7877
        %7879 = vrot.lane.b32.xlu0 %v2420, 120
        %v7880 = vpop.permute.xlu0 %7879
        %7881 = vrot.lane.b32.xlu0 %v2421, 120
        %v7882 = vpop.permute.xlu0 %7881
        %7883 = vrot.lane.b32.xlu0 %v2422, 120
        %v7884 = vpop.permute.xlu0 %7883
        %v7885 = vsel %vm2743, %v7872, 0
        %v7887 = vsel %vm2743, %v7874, 0
        %v7889 = vsel %vm2743, %v7876, 0
        %v7891 = vsel %vm2743, %v7878, 0
        %v7893 = vsel %vm2743, %v7880, 0
        %v7895 = vsel %vm2743, %v7882, 0
        %v7897 = vsel %vm2743, %v7884, 0
        %7899 = vmatprep.subr.mxu0 0.0
        %7900 = vmatpush1.msra.mxu0 0.0
        %7901 = vmatprep.subr.mxu0 0.0
        %7902 = vmatpush1.msra.mxu0 0.0
        %7903 = vmatprep.subr.mxu0 0.0
        %7904 = vmatpush1.msra.mxu0 0.0
        %7905 = vmatprep.subr.mxu0 0.0
        %7906 = vmatpush1.msra.mxu0 0.0
        %7907 = vmatprep.subr.mxu0 0.0
        %7908 = vmatpush1.msra.mxu0 0.0
        %7909 = vmatprep.subr.mxu0 0.0
        %7910 = vmatpush1.msra.mxu0 0.0
        %7911 = vmatprep.subr.mxu0 0.0
        %7912 = vmatpush1.msra.mxu0 0.0
        %7913 = vmatprep.subr.mxu0 0.0
        %7914 = vmatpush1.msra.mxu0 0.0
        %7915 = vmatprep.subr.mxu0 0.0
        %7916 = vmatpush1.msra.mxu0 0.0
        %7917 = vmatprep.subr.mxu0 0.0
        %7918 = vmatpush1.msra.mxu0 0.0
        %7919 = vmatprep.subr.mxu0 0.0
        %7920 = vmatpush1.msra.mxu0 0.0
        %7921 = vmatprep.subr.mxu0 0.0
        %7922 = vmatpush1.msra.mxu0 0.0
        %7923 = vmatprep.subr.mxu0 0.0
        %7924 = vmatpush1.msra.mxu0 0.0
        %7925 = vmatprep.subr.mxu0 0.0
        %7926 = vmatpush1.msra.mxu0 0.0
        %7927 = vmatprep.subr.mxu0 0.0
        %7928 = vmatpush1.msra.mxu0 0.0
        %7929 = vmatprep.subr.mxu0 %v2768
        %7930 = vmatpush1.msra.mxu0 %v2766
        %7931 = vmatprep.subr.mxu0 0.0
        %7932 = vmatpush2.msra.mxu0 0.0
        %7933 = vmatprep.subr.mxu0 0.0
        %7934 = vmatpush2.msra.mxu0 0.0
        %7935 = vmatprep.subr.mxu0 0.0
        %7936 = vmatpush2.msra.mxu0 0.0
        %7937 = vmatprep.subr.mxu0 0.0
        %7938 = vmatpush2.msra.mxu0 0.0
        %7939 = vmatprep.subr.mxu0 0.0
        %7940 = vmatpush2.msra.mxu0 0.0
        %7941 = vmatprep.subr.mxu0 0.0
        %7942 = vmatpush2.msra.mxu0 0.0
        %7943 = vmatprep.subr.mxu0 0.0
        %7944 = vmatpush2.msra.mxu0 0.0
        %7945 = vmatprep.subr.mxu0 0.0
        %7946 = vmatpush2.msra.mxu0 0.0
        %7947 = vmatprep.subr.mxu0 0.0
        %7948 = vmatpush2.msra.mxu0 0.0
        %7949 = vmatprep.subr.mxu0 0.0
        %7950 = vmatpush2.msra.mxu0 0.0
        %7951 = vmatprep.subr.mxu0 0.0
        %7952 = vmatpush2.msra.mxu0 0.0
        %7953 = vmatprep.subr.mxu0 0.0
        %7954 = vmatpush2.msra.mxu0 0.0
        %7955 = vmatprep.subr.mxu0 0.0
        %7956 = vmatpush2.msra.mxu0 0.0
        %7957 = vmatprep.subr.mxu0 0.0
        %7958 = vmatpush2.msra.mxu0 0.0
        %7959 = vmatprep.subr.mxu0 0.0
        %7960 = vmatpush2.msra.mxu0 0.0
        %7961 = vmatprep.subr.mxu0 0.0
        %7962 = vmatpush2.msra.mxu0 0.0
        %7963 = vmatprep.mubr.f32.mxu0 0.0
        %7964 = vmatmul.mubr.f32.gmra.mxu0 %v7885
        %v7965 = vpop.f32.mrf.mxu0
        %v7966 = vadd.f32 0.0, %v7965
        %v7967 = vpop.f32.mrf.mxu0
        %v7968 = vadd.f32 0.0, %v7967
        %7969 = vmatprep.mubr.f32.mxu0 0.0
        %7970 = vmatmul.mubr.f32.gmra.mxu0 %v7887
        %v7971 = vpop.f32.mrf.mxu0
        %v7972 = vadd.f32 0.0, %v7971
        %v7973 = vpop.f32.mrf.mxu0
        %v7974 = vadd.f32 0.0, %v7973
        %7975 = vmatprep.mubr.f32.mxu0 0.0
        %7976 = vmatmul.mubr.f32.gmra.mxu0 %v7889
        %v7977 = vpop.f32.mrf.mxu0
        %v7978 = vadd.f32 0.0, %v7977
        %v7979 = vpop.f32.mrf.mxu0
        %v7980 = vadd.f32 0.0, %v7979
        %7981 = vmatprep.mubr.f32.mxu0 0.0
        %7982 = vmatmul.mubr.f32.gmra.mxu0 %v7891
        %v7983 = vpop.f32.mrf.mxu0
        %v7984 = vadd.f32 0.0, %v7983
        %v7985 = vpop.f32.mrf.mxu0
        %v7986 = vadd.f32 0.0, %v7985
        %7987 = vmatprep.mubr.f32.mxu0 0.0
        %7988 = vmatmul.mubr.f32.gmra.mxu0 %v7893
        %v7989 = vpop.f32.mrf.mxu0
        %v7990 = vadd.f32 0.0, %v7989
        %v7991 = vpop.f32.mrf.mxu0
        %v7992 = vadd.f32 0.0, %v7991
        %7993 = vmatprep.mubr.f32.mxu0 0.0
        %7994 = vmatmul.mubr.f32.gmra.mxu0 %v7895
        %v7995 = vpop.f32.mrf.mxu0
        %v7996 = vadd.f32 0.0, %v7995
        %v7997 = vpop.f32.mrf.mxu0
        %v7998 = vadd.f32 0.0, %v7997
        %7999 = vmatprep.mubr.f32.mxu0 0.0
        %8000 = vmatmul.mubr.f32.gmra.mxu0 %v7897
        %v8001 = vpop.f32.mrf.mxu0
        %v8002 = vadd.f32 0.0, %v8001
        %v8003 = vpop.f32.mrf.mxu0
        %v8004 = vadd.f32 0.0, %v8003
        %8005 = vdwg.mxu0
        %v8006 = vmul.f32 %v5709, %v7966
        %v8007 = vmul.f32 %v5710, %v7968
        %v8008 = vmul.f32 %v5711, %v7972
        %v8009 = vmul.f32 %v5712, %v7974
        %v8010 = vmul.f32 %v5713, %v7978
        %v8011 = vmul.f32 %v5714, %v7980
        %v8012 = vmul.f32 %v5715, %v7984
        %v8013 = vmul.f32 %v5716, %v7986
        %v8014 = vmul.f32 %v5717, %v7990
        %v8015 = vmul.f32 %v5718, %v7992
        %v8016 = vmul.f32 %v5719, %v7996
        %v8017 = vmul.f32 %v5720, %v7998
        %v8018 = vmul.f32 %v5721, %v8002
        %v8019 = vmul.f32 %v5722, %v8004
        %v8020 = vadd.f32 %v7857, %v8006
        %v8021 = vadd.f32 %v7858, %v8007
        %v8022 = vadd.f32 %v7859, %v8008
        %v8023 = vadd.f32 %v7860, %v8009
        %v8024 = vadd.f32 %v7861, %v8010
        %v8025 = vadd.f32 %v7862, %v8011
        %v8026 = vadd.f32 %v7863, %v8012
        %v8027 = vadd.f32 %v7864, %v8013
        %v8028 = vadd.f32 %v7865, %v8014
        %v8029 = vadd.f32 %v7866, %v8015
        %v8030 = vadd.f32 %v7867, %v8016
        %v8031 = vadd.f32 %v7868, %v8017
        %v8032 = vadd.f32 %v7869, %v8018
        %v8033 = vadd.f32 %v7870, %v8019
        %8034 = vrot.lane.b32.xlu0 %v2416, 116
        %v8035 = vpop.permute.xlu0 %8034
        %8036 = vrot.lane.b32.xlu0 %v2417, 116
        %v8037 = vpop.permute.xlu0 %8036
        %8038 = vrot.lane.b32.xlu0 %v2418, 116
        %v8039 = vpop.permute.xlu0 %8038
        %8040 = vrot.lane.b32.xlu0 %v2419, 116
        %v8041 = vpop.permute.xlu0 %8040
        %8042 = vrot.lane.b32.xlu0 %v2420, 116
        %v8043 = vpop.permute.xlu0 %8042
        %8044 = vrot.lane.b32.xlu0 %v2421, 116
        %v8045 = vpop.permute.xlu0 %8044
        %8046 = vrot.lane.b32.xlu0 %v2422, 116
        %v8047 = vpop.permute.xlu0 %8046
        %v8048 = vsel %vm2743, %v8035, 0
        %v8050 = vsel %vm2743, %v8037, 0
        %v8052 = vsel %vm2743, %v8039, 0
        %v8054 = vsel %vm2743, %v8041, 0
        %v8056 = vsel %vm2743, %v8043, 0
        %v8058 = vsel %vm2743, %v8045, 0
        %v8060 = vsel %vm2743, %v8047, 0
        %8062 = vmatprep.subr.mxu0 0.0
        %8063 = vmatpush1.msra.mxu0 0.0
        %8064 = vmatprep.subr.mxu0 0.0
        %8065 = vmatpush1.msra.mxu0 0.0
        %8066 = vmatprep.subr.mxu0 0.0
        %8067 = vmatpush1.msra.mxu0 0.0
        %8068 = vmatprep.subr.mxu0 0.0
        %8069 = vmatpush1.msra.mxu0 0.0
        %8070 = vmatprep.subr.mxu0 0.0
        %8071 = vmatpush1.msra.mxu0 0.0
        %8072 = vmatprep.subr.mxu0 0.0
        %8073 = vmatpush1.msra.mxu0 0.0
        %8074 = vmatprep.subr.mxu0 0.0
        %8075 = vmatpush1.msra.mxu0 0.0
        %8076 = vmatprep.subr.mxu0 0.0
        %8077 = vmatpush1.msra.mxu0 0.0
        %8078 = vmatprep.subr.mxu0 0.0
        %8079 = vmatpush1.msra.mxu0 0.0
        %8080 = vmatprep.subr.mxu0 0.0
        %8081 = vmatpush1.msra.mxu0 0.0
        %8082 = vmatprep.subr.mxu0 0.0
        %8083 = vmatpush1.msra.mxu0 0.0
        %8084 = vmatprep.subr.mxu0 0.0
        %8085 = vmatpush1.msra.mxu0 0.0
        %8086 = vmatprep.subr.mxu0 0.0
        %8087 = vmatpush1.msra.mxu0 0.0
        %8088 = vmatprep.subr.mxu0 0.0
        %8089 = vmatpush1.msra.mxu0 0.0
        %8090 = vmatprep.subr.mxu0 0.0
        %8091 = vmatpush1.msra.mxu0 0.0
        %8092 = vmatprep.subr.mxu0 %v2768
        %8093 = vmatpush1.msra.mxu0 %v2766
        %8094 = vmatprep.subr.mxu0 0.0
        %8095 = vmatpush2.msra.mxu0 0.0
        %8096 = vmatprep.subr.mxu0 0.0
        %8097 = vmatpush2.msra.mxu0 0.0
        %8098 = vmatprep.subr.mxu0 0.0
        %8099 = vmatpush2.msra.mxu0 0.0
        %8100 = vmatprep.subr.mxu0 0.0
        %8101 = vmatpush2.msra.mxu0 0.0
        %8102 = vmatprep.subr.mxu0 0.0
        %8103 = vmatpush2.msra.mxu0 0.0
        %8104 = vmatprep.subr.mxu0 0.0
        %8105 = vmatpush2.msra.mxu0 0.0
        %8106 = vmatprep.subr.mxu0 0.0
        %8107 = vmatpush2.msra.mxu0 0.0
        %8108 = vmatprep.subr.mxu0 0.0
        %8109 = vmatpush2.msra.mxu0 0.0
        %8110 = vmatprep.subr.mxu0 0.0
        %8111 = vmatpush2.msra.mxu0 0.0
        %8112 = vmatprep.subr.mxu0 0.0
        %8113 = vmatpush2.msra.mxu0 0.0
        %8114 = vmatprep.subr.mxu0 0.0
        %8115 = vmatpush2.msra.mxu0 0.0
        %8116 = vmatprep.subr.mxu0 0.0
        %8117 = vmatpush2.msra.mxu0 0.0
        %8118 = vmatprep.subr.mxu0 0.0
        %8119 = vmatpush2.msra.mxu0 0.0
        %8120 = vmatprep.subr.mxu0 0.0
        %8121 = vmatpush2.msra.mxu0 0.0
        %8122 = vmatprep.subr.mxu0 0.0
        %8123 = vmatpush2.msra.mxu0 0.0
        %8124 = vmatprep.subr.mxu0 0.0
        %8125 = vmatpush2.msra.mxu0 0.0
        %8126 = vmatprep.mubr.f32.mxu0 0.0
        %8127 = vmatmul.mubr.f32.gmra.mxu0 %v8048
        %v8128 = vpop.f32.mrf.mxu0
        %v8129 = vadd.f32 0.0, %v8128
        %v8130 = vpop.f32.mrf.mxu0
        %v8131 = vadd.f32 0.0, %v8130
        %8132 = vmatprep.mubr.f32.mxu0 0.0
        %8133 = vmatmul.mubr.f32.gmra.mxu0 %v8050
        %v8134 = vpop.f32.mrf.mxu0
        %v8135 = vadd.f32 0.0, %v8134
        %v8136 = vpop.f32.mrf.mxu0
        %v8137 = vadd.f32 0.0, %v8136
        %8138 = vmatprep.mubr.f32.mxu0 0.0
        %8139 = vmatmul.mubr.f32.gmra.mxu0 %v8052
        %v8140 = vpop.f32.mrf.mxu0
        %v8141 = vadd.f32 0.0, %v8140
        %v8142 = vpop.f32.mrf.mxu0
        %v8143 = vadd.f32 0.0, %v8142
        %8144 = vmatprep.mubr.f32.mxu0 0.0
        %8145 = vmatmul.mubr.f32.gmra.mxu0 %v8054
        %v8146 = vpop.f32.mrf.mxu0
        %v8147 = vadd.f32 0.0, %v8146
        %v8148 = vpop.f32.mrf.mxu0
        %v8149 = vadd.f32 0.0, %v8148
        %8150 = vmatprep.mubr.f32.mxu0 0.0
        %8151 = vmatmul.mubr.f32.gmra.mxu0 %v8056
        %v8152 = vpop.f32.mrf.mxu0
        %v8153 = vadd.f32 0.0, %v8152
        %v8154 = vpop.f32.mrf.mxu0
        %v8155 = vadd.f32 0.0, %v8154
        %8156 = vmatprep.mubr.f32.mxu0 0.0
        %8157 = vmatmul.mubr.f32.gmra.mxu0 %v8058
        %v8158 = vpop.f32.mrf.mxu0
        %v8159 = vadd.f32 0.0, %v8158
        %v8160 = vpop.f32.mrf.mxu0
        %v8161 = vadd.f32 0.0, %v8160
        %8162 = vmatprep.mubr.f32.mxu0 0.0
        %8163 = vmatmul.mubr.f32.gmra.mxu0 %v8060
        %v8164 = vpop.f32.mrf.mxu0
        %v8165 = vadd.f32 0.0, %v8164
        %v8166 = vpop.f32.mrf.mxu0
        %v8167 = vadd.f32 0.0, %v8166
        %8168 = vdwg.mxu0
        %v8169 = vmul.f32 %v8129, %v2424
        %v8170 = vmul.f32 %v8131, %v2425
        %v8171 = vmul.f32 %v8135, %v2426
        %v8172 = vmul.f32 %v8137, %v2427
        %v8173 = vmul.f32 %v8141, %v2428
        %v8174 = vmul.f32 %v8143, %v2429
        %v8175 = vmul.f32 %v8147, %v2430
        %v8176 = vmul.f32 %v8149, %v2431
        %v8177 = vmul.f32 %v8153, %v2432
        %v8178 = vmul.f32 %v8155, %v2433
        %v8179 = vmul.f32 %v8159, %v2434
        %v8180 = vmul.f32 %v8161, %v2435
        %v8181 = vmul.f32 %v8165, %v2436
        %v8182 = vmul.f32 %v8167, %v2437
        %v8184 = vsel %vm2451, %v8181, 0
        %v8187 = vsel %vm2451, %v8182, 0
        %8189 = vmatprep.subr.mxu0 0.0
        %8190 = vmatpush1.msra.mxu0 0.0
        %8191 = vmatprep.subr.mxu0 0.0
        %8192 = vmatpush1.msra.mxu0 0.0
        %8193 = vmatprep.subr.mxu0 0.0
        %8194 = vmatpush1.msra.mxu0 0.0
        %8195 = vmatprep.subr.mxu0 0.0
        %8196 = vmatpush1.msra.mxu0 0.0
        %8197 = vmatprep.subr.mxu0 0.0
        %8198 = vmatpush1.msra.mxu0 0.0
        %8199 = vmatprep.subr.mxu0 0.0
        %8200 = vmatpush1.msra.mxu0 0.0
        %8201 = vmatprep.subr.mxu0 0.0
        %8202 = vmatpush1.msra.mxu0 0.0
        %8203 = vmatprep.subr.mxu0 0.0
        %8204 = vmatpush1.msra.mxu0 0.0
        %8205 = vmatprep.subr.mxu0 0.0
        %8206 = vmatpush1.msra.mxu0 0.0
        %8207 = vmatprep.subr.mxu0 %v8187
        %8208 = vmatpush1.msra.mxu0 %v8184
        %8209 = vmatprep.subr.mxu0 %v8180
        %8210 = vmatpush1.msra.mxu0 %v8179
        %8211 = vmatprep.subr.mxu0 %v8178
        %8212 = vmatpush1.msra.mxu0 %v8177
        %8213 = vmatprep.subr.mxu0 %v8176
        %8214 = vmatpush1.msra.mxu0 %v8175
        %8215 = vmatprep.subr.mxu0 %v8174
        %8216 = vmatpush1.msra.mxu0 %v8173
        %8217 = vmatprep.subr.mxu0 %v8172
        %8218 = vmatpush1.msra.mxu0 %v8171
        %8219 = vmatprep.subr.mxu0 %v8170
        %8220 = vmatpush1.msra.mxu0 %v8169
        %8221 = vmatprep.subr.mxu0 0.0
        %8222 = vmatpush2.msra.mxu0 0.0
        %8223 = vmatprep.subr.mxu0 0.0
        %8224 = vmatpush2.msra.mxu0 0.0
        %8225 = vmatprep.subr.mxu0 0.0
        %8226 = vmatpush2.msra.mxu0 0.0
        %8227 = vmatprep.subr.mxu0 0.0
        %8228 = vmatpush2.msra.mxu0 0.0
        %8229 = vmatprep.subr.mxu0 0.0
        %8230 = vmatpush2.msra.mxu0 0.0
        %8231 = vmatprep.subr.mxu0 0.0
        %8232 = vmatpush2.msra.mxu0 0.0
        %8233 = vmatprep.subr.mxu0 0.0
        %8234 = vmatpush2.msra.mxu0 0.0
        %8235 = vmatprep.subr.mxu0 0.0
        %8236 = vmatpush2.msra.mxu0 0.0
        %8237 = vmatprep.subr.mxu0 0.0
        %8238 = vmatpush2.msra.mxu0 0.0
        %8239 = vmatprep.subr.mxu0 0.0
        %8240 = vmatpush2.msra.mxu0 0.0
        %8241 = vmatprep.subr.mxu0 0.0
        %8242 = vmatpush2.msra.mxu0 0.0
        %8243 = vmatprep.subr.mxu0 0.0
        %8244 = vmatpush2.msra.mxu0 0.0
        %8245 = vmatprep.subr.mxu0 0.0
        %8246 = vmatpush2.msra.mxu0 0.0
        %8247 = vmatprep.subr.mxu0 0.0
        %8248 = vmatpush2.msra.mxu0 0.0
        %8249 = vmatprep.subr.mxu0 0.0
        %8250 = vmatpush2.msra.mxu0 0.0
        %8251 = vmatprep.subr.mxu0 0.0
        %8252 = vmatpush2.msra.mxu0 0.0
        %8253 = vmatprep.mubr.f32.mxu0 0.0
        %8254 = vmatmul.mubr.f32.gmra.mxu0 %v3346
        %v8255 = vpop.f32.mrf.mxu0
        %v8256 = vadd.f32 0.0, %v8255
        %v8257 = vpop.f32.mrf.mxu0
        %v8258 = vadd.f32 0.0, %v8257
        %8259 = vdwg.mxu0
        %v8260 = vlaneseq
        %v8261 = vshrl.u32 %v8260, 7
        %v8262 = vsub.s32 0, %v8261
        %v8263 = vrot.slane %v8256, %v8262
        %v8264 = vlaneseq
        %v8265 = vshrl.u32 %v8264, 7
        %v8266 = vsub.s32 0, %v8265
        %v8267 = vrot.slane %v8258, %v8266
        %v8268 = vmul.f32 %v5709, %v8263
        %v8269 = vmul.f32 %v5710, %v8267
        %v8270 = vmul.f32 %v5711, %v8263
        %v8271 = vmul.f32 %v5712, %v8267
        %v8272 = vmul.f32 %v5713, %v8263
        %v8273 = vmul.f32 %v5714, %v8267
        %v8274 = vmul.f32 %v5715, %v8263
        %v8275 = vmul.f32 %v5716, %v8267
        %v8276 = vmul.f32 %v5717, %v8263
        %v8277 = vmul.f32 %v5718, %v8267
        %v8278 = vmul.f32 %v5719, %v8263
        %v8279 = vmul.f32 %v5720, %v8267
        %v8280 = vmul.f32 %v5721, %v8263
        %v8281 = vmul.f32 %v5722, %v8267
        %v8282 = vadd.f32 %v8020, %v8268
        %v8283 = vadd.f32 %v8021, %v8269
        %v8284 = vadd.f32 %v8022, %v8270
        %v8285 = vadd.f32 %v8023, %v8271
        %v8286 = vadd.f32 %v8024, %v8272
        %v8287 = vadd.f32 %v8025, %v8273
        %v8288 = vadd.f32 %v8026, %v8274
        %v8289 = vadd.f32 %v8027, %v8275
        %v8290 = vadd.f32 %v8028, %v8276
        %v8291 = vadd.f32 %v8029, %v8277
        %v8292 = vadd.f32 %v8030, %v8278
        %v8293 = vadd.f32 %v8031, %v8279
        %v8294 = vadd.f32 %v8032, %v8280
        %v8295 = vadd.f32 %v8033, %v8281
        %v8296 = vld [vmem:[%s17] sm:$0xf]
        %v8297 = vld [vmem:[%s17 + $0x4] sm:$0xf]
        %v8298 = vld [vmem:[%s17 + $0x8] sm:$0xf]
        %v8299 = vld [vmem:[%s17 + $0xc] sm:$0xf]
        %v8300 = vld [vmem:[%s17 + $0x10] sm:$0xf]
        %v8301 = vld [vmem:[%s17 + $0x14] sm:$0xf]
        %v8302 = vld [vmem:[%s17 + $0x18] sm:$0xf]
        %v8303 = vld [vmem:[%s17 + $0x1c] sm:$0xf]
        %v8304 = vld [vmem:[%s17 + $0x20] sm:$0xf]
        %v8305 = vld [vmem:[%s17 + $0x24] sm:$0xf]
        %v8306 = vld [vmem:[%s17 + $0x28] sm:$0xf]
        %v8307 = vld [vmem:[%s17 + $0x2c] sm:$0xf]
        %v8308 = vld [vmem:[%s17 + $0x30] sm:$0xf]
        %v8309 = vld [vmem:[%s17 + $0x34] sm:$0xf]
        %v8310 = vld [vmem:[%s17 + $0x38] sm:$0xf]
        %v8311 = vld [vmem:[%s17 + $0x3c] sm:$0xf]
        %v8312 = vld [vmem:[%s17 + $0x40] sm:$0xf]
        %v8313 = vld [vmem:[%s17 + $0x44] sm:$0xf]
        %v8314 = vld [vmem:[%s17 + $0x48] sm:$0xf]
        %v8315 = vld [vmem:[%s17 + $0x4c] sm:$0xf]
        %v8316 = vld [vmem:[%s17 + $0x50] sm:$0xf]
        %v8317 = vld [vmem:[%s17 + $0x54] sm:$0xf]
        %v8318 = vld [vmem:[%s17 + $0x58] sm:$0xf]
        %v8319 = vld [vmem:[%s17 + $0x5c] sm:$0xf]
        %v8320 = vld [vmem:[%s17 + $0x60] sm:$0x3]
        %v8321 = vpack.c.bf16 %v1697, %v1692
        %v8322 = vpack.c.bf16 %v1707, %v1702
        %v8323 = vpack.c.bf16 %v1717, %v1712
        %v8324 = vpack.c.bf16 %v1722, %v1722
        %v8350 = vunpack.c.l.b16 %v8296
        %v8351 = vunpack.c.l.b16 %v8297
        %v8352 = vunpack.c.l.b16 %v8298
        %v8353 = vunpack.c.l.b16 %v8299
        %v8354 = vunpack.c.l.b16 %v8300
        %v8355 = vunpack.c.l.b16 %v8301
        %v8356 = vunpack.c.l.b16 %v8302
        %v8357 = vunpack.c.l.b16 %v8303
        %v8358 = vunpack.c.l.b16 %v8304
        %v8359 = vunpack.c.l.b16 %v8305
        %v8360 = vunpack.c.l.b16 %v8306
        %v8361 = vunpack.c.l.b16 %v8307
        %v8362 = vunpack.c.l.b16 %v8308
        %v8363 = vunpack.c.l.b16 %v8309
        %v8364 = vunpack.c.l.b16 %v8310
        %v8365 = vunpack.c.l.b16 %v8311
        %v8366 = vunpack.c.l.b16 %v8312
        %v8367 = vunpack.c.l.b16 %v8313
        %v8368 = vunpack.c.l.b16 %v8314
        %v8369 = vunpack.c.l.b16 %v8315
        %v8370 = vunpack.c.l.b16 %v8316
        %v8371 = vunpack.c.l.b16 %v8317
        %v8372 = vunpack.c.l.b16 %v8318
        %v8373 = vunpack.c.l.b16 %v8319
        %v8374 = vunpack.c.l.b16 %v8320
        %v8375 = vpack.c.b16 %v8351, %v8350
        %v8376 = vpack.c.b16 %v8353, %v8352
        %v8377 = vpack.c.b16 %v8355, %v8354
        %v8378 = vpack.c.b16 %v8357, %v8356
        %v8379 = vpack.c.b16 %v8359, %v8358
        %v8380 = vpack.c.b16 %v8361, %v8360
        %v8381 = vpack.c.b16 %v8363, %v8362
        %v8382 = vpack.c.b16 %v8365, %v8364
        %v8383 = vpack.c.b16 %v8367, %v8366
        %v8384 = vpack.c.b16 %v8369, %v8368
        %v8385 = vpack.c.b16 %v8371, %v8370
        %v8386 = vpack.c.b16 %v8373, %v8372
        %v8387 = vpack.c.b16 %v8374, %v8374
        %v8389 = vsel %vm2438, %v8375, 0
        %v8392 = vsel %vm2438, %v8376, 0
        %v8395 = vsel %vm2438, %v8377, 0
        %v8398 = vsel %vm2438, %v8378, 0
        %v8401 = vsel %vm2438, %v8379, 0
        %v8404 = vsel %vm2438, %v8380, 0
        %v8407 = vsel %vm2438, %v8381, 0
        %v8410 = vsel %vm2438, %v8382, 0
        %v8413 = vsel %vm2438, %v8383, 0
        %v8416 = vsel %vm2438, %v8384, 0
        %v8419 = vsel %vm2438, %v8385, 0
        %v8422 = vsel %vm2438, %v8386, 0
        %v8425 = vsel %vm2438, %v8387, 0
        %v8427 = vsel 0, 4294967295, 65535
        %v8428 = vsel %vm2451, %v8427, 0
        %v8430 = vand.u32 %v8324, %v8428
        %8432 = vmatprep.subr.bf16.mxu0 0
        %8433 = vmatpush1.bf16.msra.mxu0 0
        %8434 = vmatprep.subr.bf16.mxu0 0
        %8435 = vmatpush1.bf16.msra.mxu0 0
        %8436 = vmatprep.subr.bf16.mxu0 0
        %8437 = vmatpush1.bf16.msra.mxu0 0
        %8438 = vmatprep.subr.bf16.mxu0 0
        %8439 = vmatpush1.bf16.msra.mxu0 0
        %8440 = vmatprep.subr.bf16.mxu0 0
        %8441 = vmatpush1.bf16.msra.mxu0 %v8430
        %8442 = vmatprep.subr.bf16.mxu0 0
        %8443 = vmatpush1.bf16.msra.mxu0 %v8323
        %8444 = vmatprep.subr.bf16.mxu0 0
        %8445 = vmatpush1.bf16.msra.mxu0 %v8322
        %8446 = vmatprep.subr.bf16.mxu0 0
        %8447 = vmatpush1.bf16.msra.mxu0 %v8321
        %8448 = vmatprep.subr.bf16.mxu0 0
        %8449 = vmatpush2.bf16.msra.mxu0 0
        %8450 = vmatprep.subr.bf16.mxu0 0
        %8451 = vmatpush2.bf16.msra.mxu0 0
        %8452 = vmatprep.subr.bf16.mxu0 0
        %8453 = vmatpush2.bf16.msra.mxu0 0
        %8454 = vmatprep.subr.bf16.mxu0 0
        %8455 = vmatpush2.bf16.msra.mxu0 0
        %8456 = vmatprep.subr.bf16.mxu0 0
        %8457 = vmatpush2.bf16.msra.mxu0 0
        %8458 = vmatprep.subr.bf16.mxu0 0
        %8459 = vmatpush2.bf16.msra.mxu0 0
        %8460 = vmatprep.subr.bf16.mxu0 0
        %8461 = vmatpush2.bf16.msra.mxu0 0
        %8462 = vmatprep.subr.bf16.mxu0 0
        %8463 = vmatpush2.bf16.msra.mxu0 0
        %8464 = vmatprep.mubr.bf16.mxu0 0
        %8465 = vmatmul.mubr.bf16.gmra.mxu0 %v8389
        %v8466 = vpop.f32.mrf.mxu0
        %v8467 = vadd.f32 0.0, %v8466
        %v8468 = vpop.f32.mrf.mxu0
        %v8469 = vpop.f32.mrf.mxu0
        %v8470 = vadd.f32 0.0, %v8469
        %v8471 = vpop.f32.mrf.mxu0
        %8472 = vmatprep.mubr.bf16.mxu0 0
        %8473 = vmatmul.mubr.bf16.gmra.mxu0 %v8392
        %v8474 = vpop.f32.mrf.mxu0
        %v8475 = vadd.f32 0.0, %v8474
        %v8476 = vpop.f32.mrf.mxu0
        %v8477 = vpop.f32.mrf.mxu0
        %v8478 = vadd.f32 0.0, %v8477
        %v8479 = vpop.f32.mrf.mxu0
        %8480 = vmatprep.mubr.bf16.mxu0 0
        %8481 = vmatmul.mubr.bf16.gmra.mxu0 %v8395
        %v8482 = vpop.f32.mrf.mxu0
        %v8483 = vadd.f32 0.0, %v8482
        %v8484 = vpop.f32.mrf.mxu0
        %v8485 = vpop.f32.mrf.mxu0
        %v8486 = vadd.f32 0.0, %v8485
        %v8487 = vpop.f32.mrf.mxu0
        %8488 = vmatprep.mubr.bf16.mxu0 0
        %8489 = vmatmul.mubr.bf16.gmra.mxu0 %v8398
        %v8490 = vpop.f32.mrf.mxu0
        %v8491 = vadd.f32 0.0, %v8490
        %v8492 = vpop.f32.mrf.mxu0
        %v8493 = vpop.f32.mrf.mxu0
        %v8494 = vadd.f32 0.0, %v8493
        %v8495 = vpop.f32.mrf.mxu0
        %8496 = vmatprep.mubr.bf16.mxu0 0
        %8497 = vmatmul.mubr.bf16.gmra.mxu0 %v8401
        %v8498 = vpop.f32.mrf.mxu0
        %v8499 = vadd.f32 0.0, %v8498
        %v8500 = vpop.f32.mrf.mxu0
        %v8501 = vpop.f32.mrf.mxu0
        %v8502 = vadd.f32 0.0, %v8501
        %v8503 = vpop.f32.mrf.mxu0
        %8504 = vmatprep.mubr.bf16.mxu0 0
        %8505 = vmatmul.mubr.bf16.gmra.mxu0 %v8404
        %v8506 = vpop.f32.mrf.mxu0
        %v8507 = vadd.f32 0.0, %v8506
        %v8508 = vpop.f32.mrf.mxu0
        %v8509 = vpop.f32.mrf.mxu0
        %v8510 = vadd.f32 0.0, %v8509
        %v8511 = vpop.f32.mrf.mxu0
        %8512 = vmatprep.mubr.bf16.mxu0 0
        %8513 = vmatmul.mubr.bf16.gmra.mxu0 %v8407
        %v8514 = vpop.f32.mrf.mxu0
        %v8515 = vadd.f32 0.0, %v8514
        %v8516 = vpop.f32.mrf.mxu0
        %v8517 = vpop.f32.mrf.mxu0
        %v8518 = vadd.f32 0.0, %v8517
        %v8519 = vpop.f32.mrf.mxu0
        %8520 = vmatprep.mubr.bf16.mxu0 0
        %8521 = vmatmul.mubr.bf16.gmra.mxu0 %v8410
        %v8522 = vpop.f32.mrf.mxu0
        %v8523 = vadd.f32 0.0, %v8522
        %v8524 = vpop.f32.mrf.mxu0
        %v8525 = vpop.f32.mrf.mxu0
        %v8526 = vadd.f32 0.0, %v8525
        %v8527 = vpop.f32.mrf.mxu0
        %8528 = vmatprep.mubr.bf16.mxu0 0
        %8529 = vmatmul.mubr.bf16.gmra.mxu0 %v8413
        %v8530 = vpop.f32.mrf.mxu0
        %v8531 = vadd.f32 0.0, %v8530
        %v8532 = vpop.f32.mrf.mxu0
        %v8533 = vpop.f32.mrf.mxu0
        %v8534 = vadd.f32 0.0, %v8533
        %v8535 = vpop.f32.mrf.mxu0
        %8536 = vmatprep.mubr.bf16.mxu0 0
        %8537 = vmatmul.mubr.bf16.gmra.mxu0 %v8416
        %v8538 = vpop.f32.mrf.mxu0
        %v8539 = vadd.f32 0.0, %v8538
        %v8540 = vpop.f32.mrf.mxu0
        %v8541 = vpop.f32.mrf.mxu0
        %v8542 = vadd.f32 0.0, %v8541
        %v8543 = vpop.f32.mrf.mxu0
        %8544 = vmatprep.mubr.bf16.mxu0 0
        %8545 = vmatmul.mubr.bf16.gmra.mxu0 %v8419
        %v8546 = vpop.f32.mrf.mxu0
        %v8547 = vadd.f32 0.0, %v8546
        %v8548 = vpop.f32.mrf.mxu0
        %v8549 = vpop.f32.mrf.mxu0
        %v8550 = vadd.f32 0.0, %v8549
        %v8551 = vpop.f32.mrf.mxu0
        %8552 = vmatprep.mubr.bf16.mxu0 0
        %8553 = vmatmul.mubr.bf16.gmra.mxu0 %v8422
        %v8554 = vpop.f32.mrf.mxu0
        %v8555 = vadd.f32 0.0, %v8554
        %v8556 = vpop.f32.mrf.mxu0
        %v8557 = vpop.f32.mrf.mxu0
        %v8558 = vadd.f32 0.0, %v8557
        %v8559 = vpop.f32.mrf.mxu0
        %8560 = vmatprep.mubr.bf16.mxu0 0
        %8561 = vmatmul.mubr.bf16.gmra.mxu0 %v8425
        %v8562 = vpop.f32.mrf.mxu0
        %v8563 = vadd.f32 0.0, %v8562
        %v8564 = vpop.f32.mrf.mxu0
        %v8565 = vpop.f32.mrf.mxu0
        %v8566 = vpop.f32.mrf.mxu0
        %8567 = vdwg.mxu0
        %v8568 = vld [vmem:[%s18] sm:$0xf]
        %v8569 = vld [vmem:[%s18 + $0x4] sm:$0xf]
        %v8570 = vld [vmem:[%s18 + $0x8] sm:$0xf]
        %v8571 = vld [vmem:[%s18 + $0xc] sm:$0xf]
        %v8572 = vld [vmem:[%s18 + $0x10] sm:$0xf]
        %v8573 = vld [vmem:[%s18 + $0x14] sm:$0xf]
        %v8574 = vld [vmem:[%s18 + $0x18] sm:$0xf]
        %v8575 = vld [vmem:[%s18 + $0x1c] sm:$0xf]
        %v8576 = vld [vmem:[%s18 + $0x20] sm:$0xf]
        %v8577 = vld [vmem:[%s18 + $0x24] sm:$0xf]
        %v8578 = vld [vmem:[%s18 + $0x28] sm:$0xf]
        %v8579 = vld [vmem:[%s18 + $0x2c] sm:$0xf]
        %v8580 = vld [vmem:[%s18 + $0x30] sm:$0xf]
        %v8581 = vld [vmem:[%s18 + $0x34] sm:$0xf]
        %v8582 = vld [vmem:[%s18 + $0x38] sm:$0xf]
        %v8583 = vld [vmem:[%s18 + $0x3c] sm:$0xf]
        %v8584 = vld [vmem:[%s18 + $0x40] sm:$0xf]
        %v8585 = vld [vmem:[%s18 + $0x44] sm:$0xf]
        %v8586 = vld [vmem:[%s18 + $0x48] sm:$0xf]
        %v8587 = vld [vmem:[%s18 + $0x4c] sm:$0xf]
        %v8588 = vld [vmem:[%s18 + $0x50] sm:$0xf]
        %v8589 = vld [vmem:[%s18 + $0x54] sm:$0xf]
        %v8590 = vld [vmem:[%s18 + $0x58] sm:$0xf]
        %v8591 = vld [vmem:[%s18 + $0x5c] sm:$0xf]
        %v8592 = vld [vmem:[%s18 + $0x60] sm:$0x3]
        %v8593 = vunpack.c.l.bf16 %v8568
        %v8594 = vunpack.c.l.bf16 %v8569
        %v8595 = vunpack.c.l.bf16 %v8570
        %v8596 = vunpack.c.l.bf16 %v8571
        %v8597 = vunpack.c.l.bf16 %v8572
        %v8598 = vunpack.c.l.bf16 %v8573
        %v8599 = vunpack.c.l.bf16 %v8574
        %v8600 = vunpack.c.l.bf16 %v8575
        %v8601 = vunpack.c.l.bf16 %v8576
        %v8602 = vunpack.c.l.bf16 %v8577
        %v8603 = vunpack.c.l.bf16 %v8578
        %v8604 = vunpack.c.l.bf16 %v8579
        %v8605 = vunpack.c.l.bf16 %v8580
        %v8606 = vunpack.c.l.bf16 %v8581
        %v8607 = vunpack.c.l.bf16 %v8582
        %v8608 = vunpack.c.l.bf16 %v8583
        %v8609 = vunpack.c.l.bf16 %v8584
        %v8610 = vunpack.c.l.bf16 %v8585
        %v8611 = vunpack.c.l.bf16 %v8586
        %v8612 = vunpack.c.l.bf16 %v8587
        %v8613 = vunpack.c.l.bf16 %v8588
        %v8614 = vunpack.c.l.bf16 %v8589
        %v8615 = vunpack.c.l.bf16 %v8590
        %v8616 = vunpack.c.l.bf16 %v8591
        %v8617 = vunpack.c.l.bf16 %v8592
        %v8618 = vmul.f32 %v8467, %v8593
        %v8619 = vmul.f32 %v8470, %v8594
        %v8620 = vmul.f32 %v8475, %v8595
        %v8621 = vmul.f32 %v8478, %v8596
        %v8622 = vmul.f32 %v8483, %v8597
        %v8623 = vmul.f32 %v8486, %v8598
        %v8624 = vmul.f32 %v8491, %v8599
        %v8625 = vmul.f32 %v8494, %v8600
        %v8626 = vmul.f32 %v8499, %v8601
        %v8627 = vmul.f32 %v8502, %v8602
        %v8628 = vmul.f32 %v8507, %v8603
        %v8629 = vmul.f32 %v8510, %v8604
        %v8630 = vmul.f32 %v8515, %v8605
        %v8631 = vmul.f32 %v8518, %v8606
        %v8632 = vmul.f32 %v8523, %v8607
        %v8633 = vmul.f32 %v8526, %v8608
        %v8634 = vmul.f32 %v8531, %v8609
        %v8635 = vmul.f32 %v8534, %v8610
        %v8636 = vmul.f32 %v8539, %v8611
        %v8637 = vmul.f32 %v8542, %v8612
        %v8638 = vmul.f32 %v8547, %v8613
        %v8639 = vmul.f32 %v8550, %v8614
        %v8640 = vmul.f32 %v8555, %v8615
        %v8641 = vmul.f32 %v8558, %v8616
        %v8642 = vmul.f32 %v8563, %v8617
        %v8643 = vpack.c.bf16 %v8619, %v8618
        %v8644 = vpack.c.bf16 %v8621, %v8620
        %v8645 = vpack.c.bf16 %v8623, %v8622
        %v8646 = vpack.c.bf16 %v8625, %v8624
        %v8647 = vpack.c.bf16 %v8627, %v8626
        %v8648 = vpack.c.bf16 %v8629, %v8628
        %v8649 = vpack.c.bf16 %v8631, %v8630
        %v8650 = vpack.c.bf16 %v8633, %v8632
        %v8651 = vpack.c.bf16 %v8635, %v8634
        %v8652 = vpack.c.bf16 %v8637, %v8636
        %v8653 = vpack.c.bf16 %v8639, %v8638
        %v8654 = vpack.c.bf16 %v8641, %v8640
        %v8655 = vpack.c.bf16 %v8642, %v8642
        %v8656 = vpack.c.bf16 %v8284, %v8282
        %v8657 = vpack.c.bf16 %v8285, %v8283
        %v8658 = vpack.c.bf16 %v8288, %v8286
        %v8659 = vpack.c.bf16 %v8289, %v8287
        %v8660 = vpack.c.bf16 %v8292, %v8290
        %v8661 = vpack.c.bf16 %v8293, %v8291
        %v8662 = vpack.c.bf16 %v8294, %v8294
        %v8663 = vpack.c.bf16 %v8295, %v8295
        %v8665 = vsel %vm2891, %v8657, 0
        %v8668 = vsel %vm2891, %v8659, 0
        %v8671 = vsel %vm2891, %v8661, 0
        %v8674 = vsel %vm2891, %v8663, 0
        %v8677 = vsel %vm5575, %v8655, 0
        %8679 = vmatprep.subr.bf16.mxu0 0
        %8680 = vmatpush1.bf16.msra.mxu0 %v8650
        %8681 = vmatprep.subr.bf16.mxu0 0
        %8682 = vmatpush1.bf16.msra.mxu0 %v8649
        %8683 = vmatprep.subr.bf16.mxu0 0
        %8684 = vmatpush1.bf16.msra.mxu0 %v8648
        %8685 = vmatprep.subr.bf16.mxu0 0
        %8686 = vmatpush1.bf16.msra.mxu0 %v8647
        %8687 = vmatprep.subr.bf16.mxu0 0
        %8688 = vmatpush1.bf16.msra.mxu0 %v8646
        %8689 = vmatprep.subr.bf16.mxu0 0
        %8690 = vmatpush1.bf16.msra.mxu0 %v8645
        %8691 = vmatprep.subr.bf16.mxu0 0
        %8692 = vmatpush1.bf16.msra.mxu0 %v8644
        %8693 = vmatprep.subr.bf16.mxu0 0
        %8694 = vmatpush1.bf16.msra.mxu0 %v8643
        %8695 = vmatprep.subr.bf16.mxu0 0
        %8696 = vmatpush2.bf16.msra.mxu0 0
        %8697 = vmatprep.subr.bf16.mxu0 0
        %8698 = vmatpush2.bf16.msra.mxu0 0
        %8699 = vmatprep.subr.bf16.mxu0 0
        %8700 = vmatpush2.bf16.msra.mxu0 0
        %8701 = vmatprep.subr.bf16.mxu0 0
        %8702 = vmatpush2.bf16.msra.mxu0 %v8677
        %8703 = vmatprep.subr.bf16.mxu0 0
        %8704 = vmatpush2.bf16.msra.mxu0 %v8654
        %8705 = vmatprep.subr.bf16.mxu0 0
        %8706 = vmatpush2.bf16.msra.mxu0 %v8653
        %8707 = vmatprep.subr.bf16.mxu0 0
        %8708 = vmatpush2.bf16.msra.mxu0 %v8652
        %8709 = vmatprep.subr.bf16.mxu0 0
        %8710 = vmatpush2.bf16.msra.mxu0 %v8651
        %8711 = vmatprep.mubr.bf16.mxu0 %v8665
        %8712 = vmatmul.mubr.bf16.gmra.mxu0 %v8656
        %v8713 = vpop.f32.mrf.mxu0
        %v8714 = vadd.f32 0.0, %v8713
        %v8715 = vpop.f32.mrf.mxu0
        %v8716 = vpop.f32.mrf.mxu0
        %v8717 = vadd.f32 0.0, %v8716
        %v8718 = vpop.f32.mrf.mxu0
        %8719 = vmatprep.mubr.bf16.mxu0 %v8668
        %8720 = vmatmul.mubr.bf16.gmra.mxu0 %v8658
        %v8721 = vpop.f32.mrf.mxu0
        %v8722 = vadd.f32 0.0, %v8721
        %v8723 = vpop.f32.mrf.mxu0
        %v8724 = vpop.f32.mrf.mxu0
        %v8725 = vadd.f32 0.0, %v8724
        %v8726 = vpop.f32.mrf.mxu0
        %8727 = vmatprep.mubr.bf16.mxu0 %v8671
        %8728 = vmatmul.mubr.bf16.gmra.mxu0 %v8660
        %v8729 = vpop.f32.mrf.mxu0
        %v8730 = vadd.f32 0.0, %v8729
        %v8731 = vpop.f32.mrf.mxu0
        %v8732 = vpop.f32.mrf.mxu0
        %v8733 = vadd.f32 0.0, %v8732
        %v8734 = vpop.f32.mrf.mxu0
        %8735 = vmatprep.mubr.bf16.mxu0 %v8674
        %8736 = vmatmul.mubr.bf16.gmra.mxu0 %v8662
        %v8737 = vpop.f32.mrf.mxu0
        %v8738 = vadd.f32 0.0, %v8737
        %v8739 = vpop.f32.mrf.mxu0
        %v8740 = vpop.f32.mrf.mxu0
        %v8741 = vpop.f32.mrf.mxu0
        %8742 = vdwg.mxu0
        %v8743 = vld [vmem:[#allocation16] sm:$0xff]
        %v8744 = vld [vmem:[#allocation16 + $0x8] sm:$0xff]
        %v8745 = vld [vmem:[#allocation16 + $0x10] sm:$0xff]
        %v8746 = vld [vmem:[#allocation16 + $0x18] sm:$0xff]
        %v8748 = vsel %vm907, %v8714, 0
        %v8751 = vsel %vm907, %v8717, 0
        %v8754 = vsel %vm907, %v8722, 0
        %v8757 = vsel %vm907, %v8725, 0
        %v8760 = vsel %vm907, %v8730, 0
        %v8763 = vsel %vm907, %v8733, 0
        %v8766 = vsel %vm907, %v8738, 0
        %8768 = vmatprep.subr.mxu0 0.0
        %8769 = vmatpush1.msra.mxu0 0.0
        %8770 = vmatprep.subr.mxu0 0.0
        %8771 = vmatpush1.msra.mxu0 0.0
        %8772 = vmatprep.subr.mxu0 0.0
        %8773 = vmatpush1.msra.mxu0 0.0
        %8774 = vmatprep.subr.mxu0 0.0
        %8775 = vmatpush1.msra.mxu0 0.0
        %8776 = vmatprep.subr.mxu0 0.0
        %8777 = vmatpush1.msra.mxu0 0.0
        %8778 = vmatprep.subr.mxu0 0.0
        %8779 = vmatpush1.msra.mxu0 0.0
        %8780 = vmatprep.subr.mxu0 0.0
        %8781 = vmatpush1.msra.mxu0 0.0
        %8782 = vmatprep.subr.mxu0 0.0
        %8783 = vmatpush1.msra.mxu0 0.0
        %8784 = vmatprep.subr.mxu0 0.0
        %8785 = vmatpush1.msra.mxu0 0.0
        %8786 = vmatprep.subr.mxu0 0.0
        %8787 = vmatpush1.msra.mxu0 0.0
        %8788 = vmatprep.subr.mxu0 0.0
        %8789 = vmatpush1.msra.mxu0 0.0
        %8790 = vmatprep.subr.mxu0 0.0
        %8791 = vmatpush1.msra.mxu0 0.0
        %8792 = vmatprep.subr.mxu0 0.0
        %8793 = vmatpush1.msra.mxu0 %v8746
        %8794 = vmatprep.subr.mxu0 0.0
        %8795 = vmatpush1.msra.mxu0 %v8745
        %8796 = vmatprep.subr.mxu0 0.0
        %8797 = vmatpush1.msra.mxu0 %v8744
        %8798 = vmatprep.subr.mxu0 0.0
        %8799 = vmatpush1.msra.mxu0 %v8743
        %8800 = vmatprep.subr.mxu0 0.0
        %8801 = vmatpush2.msra.mxu0 0.0
        %8802 = vmatprep.subr.mxu0 0.0
        %8803 = vmatpush2.msra.mxu0 0.0
        %8804 = vmatprep.subr.mxu0 0.0
        %8805 = vmatpush2.msra.mxu0 0.0
        %8806 = vmatprep.subr.mxu0 0.0
        %8807 = vmatpush2.msra.mxu0 0.0
        %8808 = vmatprep.subr.mxu0 0.0
        %8809 = vmatpush2.msra.mxu0 0.0
        %8810 = vmatprep.subr.mxu0 0.0
        %8811 = vmatpush2.msra.mxu0 0.0
        %8812 = vmatprep.subr.mxu0 0.0
        %8813 = vmatpush2.msra.mxu0 0.0
        %8814 = vmatprep.subr.mxu0 0.0
        %8815 = vmatpush2.msra.mxu0 0.0
        %8816 = vmatprep.subr.mxu0 0.0
        %8817 = vmatpush2.msra.mxu0 0.0
        %8818 = vmatprep.subr.mxu0 0.0
        %8819 = vmatpush2.msra.mxu0 0.0
        %8820 = vmatprep.subr.mxu0 0.0
        %8821 = vmatpush2.msra.mxu0 0.0
        %8822 = vmatprep.subr.mxu0 0.0
        %8823 = vmatpush2.msra.mxu0 0.0
        %8824 = vmatprep.subr.mxu0 0.0
        %8825 = vmatpush2.msra.mxu0 0.0
        %8826 = vmatprep.subr.mxu0 0.0
        %8827 = vmatpush2.msra.mxu0 0.0
        %8828 = vmatprep.subr.mxu0 0.0
        %8829 = vmatpush2.msra.mxu0 0.0
        %8830 = vmatprep.subr.mxu0 0.0
        %8831 = vmatpush2.msra.mxu0 0.0
        %8832 = vmatprep.mubr.f32.mxu0 0.0
        %8833 = vmatmul.mubr.f32.gmra.mxu0 %v8748
        %v8834 = vpop.f32.mrf.mxu0
        %v8835 = vadd.f32 0.0, %v8834
        %v8836 = vpop.f32.mrf.mxu0
        %8837 = vmatprep.mubr.f32.mxu0 0.0
        %8838 = vmatmul.mubr.f32.gmra.mxu0 %v8751
        %v8839 = vpop.f32.mrf.mxu0
        %v8840 = vadd.f32 0.0, %v8839
        %v8841 = vpop.f32.mrf.mxu0
        %8842 = vmatprep.mubr.f32.mxu0 0.0
        %8843 = vmatmul.mubr.f32.gmra.mxu0 %v8754
        %v8844 = vpop.f32.mrf.mxu0
        %v8845 = vadd.f32 0.0, %v8844
        %v8846 = vpop.f32.mrf.mxu0
        %8847 = vmatprep.mubr.f32.mxu0 0.0
        %8848 = vmatmul.mubr.f32.gmra.mxu0 %v8757
        %v8849 = vpop.f32.mrf.mxu0
        %v8850 = vadd.f32 0.0, %v8849
        %v8851 = vpop.f32.mrf.mxu0
        %8852 = vmatprep.mubr.f32.mxu0 0.0
        %8853 = vmatmul.mubr.f32.gmra.mxu0 %v8760
        %v8854 = vpop.f32.mrf.mxu0
        %v8855 = vadd.f32 0.0, %v8854
        %v8856 = vpop.f32.mrf.mxu0
        %8857 = vmatprep.mubr.f32.mxu0 0.0
        %8858 = vmatmul.mubr.f32.gmra.mxu0 %v8763
        %v8859 = vpop.f32.mrf.mxu0
        %v8860 = vadd.f32 0.0, %v8859
        %v8861 = vpop.f32.mrf.mxu0
        %8862 = vmatprep.mubr.f32.mxu0 0.0
        %8863 = vmatmul.mubr.f32.gmra.mxu0 %v8766
        %v8864 = vpop.f32.mrf.mxu0
        %v8865 = vadd.f32 0.0, %v8864
        %v8866 = vpop.f32.mrf.mxu0
        %8867 = vdwg.mxu0
        %v8868 = vadd.f32 %v897, %v8835
        %v8869 = vadd.f32 %v898, %v8840
        %v8870 = vadd.f32 %v899, %v8845
        %v8871 = vadd.f32 %v900, %v8850
        %v8872 = vadd.f32 %v901, %v8855
        %v8873 = vadd.f32 %v902, %v8860
        %v8874 = vadd.f32 %v903, %v8865
        %v8875 = vlaneseq
        %v8876 = vshrl.u32 %v8875, 7
        %v8877 = vsub.s32 5, %v8876
        %v8878 = vrot.slane %v904, %v8877
        %v8879 = vadd.f32 %v8868, %v8878
        %v8880 = vadd.f32 %v8869, %v8878
        %v8881 = vadd.f32 %v8870, %v8878
        %v8882 = vadd.f32 %v8871, %v8878
        %v8883 = vadd.f32 %v8872, %v8878
        %v8884 = vadd.f32 %v8873, %v8878
        %v8885 = vadd.f32 %v8874, %v8878
        %v8886 = vld [vmem:[%s20] sm:$0xf]
        %v8887 = vld [vmem:[%s20 + $0x4] sm:$0xf]
        %v8888 = vld [vmem:[%s20 + $0x8] sm:$0xf]
        %v8889 = vld [vmem:[%s20 + $0xc] sm:$0xf]
        %v8890 = vld [vmem:[%s20 + $0x10] sm:$0xf]
        %v8891 = vld [vmem:[%s20 + $0x14] sm:$0xf]
        %v8892 = vld [vmem:[%s20 + $0x18] sm:$0xf]
        %v8893 = vld [vmem:[%s20 + $0x1c] sm:$0xf]
        %v8894 = vld [vmem:[%s20 + $0x20] sm:$0xf]
        %v8895 = vld [vmem:[%s20 + $0x24] sm:$0xf]
        %v8896 = vld [vmem:[%s20 + $0x28] sm:$0xf]
        %v8897 = vld [vmem:[%s20 + $0x2c] sm:$0xf]
        %v8898 = vld [vmem:[%s20 + $0x30] sm:$0xf]
        %v8899 = vld [vmem:[%s20 + $0x34] sm:$0xf]
        %v8900 = vld [vmem:[%s20 + $0x38] sm:$0xf]
        %v8901 = vld [vmem:[%s20 + $0x3c] sm:$0xf]
        %v8902 = vld [vmem:[%s20 + $0x40] sm:$0xf]
        %v8903 = vld [vmem:[%s20 + $0x44] sm:$0xf]
        %v8904 = vld [vmem:[%s20 + $0x48] sm:$0xf]
        %v8905 = vld [vmem:[%s20 + $0x4c] sm:$0xf]
        %v8906 = vld [vmem:[%s20 + $0x50] sm:$0xf]
        %v8907 = vld [vmem:[%s20 + $0x54] sm:$0xf]
        %v8908 = vld [vmem:[%s20 + $0x58] sm:$0xf]
        %v8909 = vld [vmem:[%s20 + $0x5c] sm:$0xf]
        %v8910 = vld [vmem:[%s20 + $0x60] sm:$0xf]
        %v8911 = vld [vmem:[%s20 + $0x64] sm:$0xf]
        %v8912 = vld [vmem:[%s20 + $0x68] sm:$0xf]
        %v8913 = vld [vmem:[%s20 + $0x6c] sm:$0xf]
        %v8914 = vld [vmem:[%s20 + $0x70] sm:$0xf]
        %v8915 = vld [vmem:[%s20 + $0x74] sm:$0xf]
        %v8916 = vld [vmem:[%s20 + $0x78] sm:$0xf]
        %v8917 = vld [vmem:[%s20 + $0x7c] sm:$0xf]
        %v8918 = vld [vmem:[%s20 + $0x80] sm:$0xf]
        %v8919 = vld [vmem:[%s20 + $0x84] sm:$0xf]
        %v8920 = vld [vmem:[%s20 + $0x88] sm:$0xf]
        %v8921 = vld [vmem:[%s20 + $0x8c] sm:$0xf]
        %v8922 = vld [vmem:[%s20 + $0x90] sm:$0xf]
        %v8923 = vld [vmem:[%s20 + $0x94] sm:$0xf]
        %v8924 = vld [vmem:[%s20 + $0x98] sm:$0xf]
        %v8925 = vld [vmem:[%s20 + $0x9c] sm:$0xf]
        %v8926 = vld [vmem:[%s20 + $0xa0] sm:$0xf]
        %v8927 = vld [vmem:[%s20 + $0xa4] sm:$0xf]
        %v8928 = vld [vmem:[%s20 + $0xa8] sm:$0xf]
        %v8929 = vld [vmem:[%s20 + $0xac] sm:$0xf]
        %v8930 = vld [vmem:[%s20 + $0xb0] sm:$0xf]
        %v8931 = vld [vmem:[%s20 + $0xb4] sm:$0xf]
        %v8932 = vld [vmem:[%s20 + $0xb8] sm:$0xf]
        %v8933 = vld [vmem:[%s20 + $0xbc] sm:$0xf]
        %v8934 = vld [vmem:[%s20 + $0xc0] sm:$0xf]
        %v8935 = vld [vmem:[%s20 + $0xc4] sm:$0xf]
        %v8936 = vld [vmem:[%s20 + $0xc8] sm:$0xf]
        %v8937 = vld [vmem:[%s20 + $0xcc] sm:$0xf]
        %v8938 = vld [vmem:[%s20 + $0xd0] sm:$0xf]
        %v8939 = vld [vmem:[%s20 + $0xd4] sm:$0xf]
        %v8940 = vld [vmem:[%s20 + $0xd8] sm:$0xf]
        %v8941 = vld [vmem:[%s20 + $0xdc] sm:$0xf]
        %v8942 = vld [vmem:[%s20 + $0xe0] sm:$0xf]
        %v8943 = vld [vmem:[%s20 + $0xe4] sm:$0xf]
        %v8944 = vld [vmem:[%s20 + $0xe8] sm:$0xf]
        %v8945 = vld [vmem:[%s20 + $0xec] sm:$0xf]
        %v8946 = vld [vmem:[%s20 + $0xf0] sm:$0xf]
        %v8947 = vld [vmem:[%s20 + $0xf4] sm:$0xf]
        %v8948 = vld [vmem:[%s20 + $0xf8] sm:$0xf]
        %v8949 = vpack.c.bf16 %v8880, %v8879
        %v8950 = vpack.c.bf16 %v8882, %v8881
        %v8951 = vpack.c.bf16 %v8884, %v8883
        %v8952 = vpack.c.bf16 %v8885, %v8885
        %v9016 = vunpack.c.l.b16 %v8886
        %v9017 = vunpack.c.l.b16 %v8887
        %v9018 = vunpack.c.l.b16 %v8888
        %v9019 = vunpack.c.l.b16 %v8889
        %v9020 = vunpack.c.l.b16 %v8890
        %v9021 = vunpack.c.l.b16 %v8891
        %v9022 = vunpack.c.l.b16 %v8892
        %v9023 = vunpack.c.l.b16 %v8893
        %v9024 = vunpack.c.l.b16 %v8894
        %v9025 = vunpack.c.l.b16 %v8895
        %v9026 = vunpack.c.l.b16 %v8896
        %v9027 = vunpack.c.l.b16 %v8897
        %v9028 = vunpack.c.l.b16 %v8898
        %v9029 = vunpack.c.l.b16 %v8899
        %v9030 = vunpack.c.l.b16 %v8900
        %v9031 = vunpack.c.l.b16 %v8901
        %v9032 = vunpack.c.l.b16 %v8902
        %v9033 = vunpack.c.l.b16 %v8903
        %v9034 = vunpack.c.l.b16 %v8904
        %v9035 = vunpack.c.l.b16 %v8905
        %v9036 = vunpack.c.l.b16 %v8906
        %v9037 = vunpack.c.l.b16 %v8907
        %v9038 = vunpack.c.l.b16 %v8908
        %v9039 = vunpack.c.l.b16 %v8909
        %v9040 = vunpack.c.l.b16 %v8910
        %v9041 = vunpack.c.l.b16 %v8911
        %v9042 = vunpack.c.l.b16 %v8912
        %v9043 = vunpack.c.l.b16 %v8913
        %v9044 = vunpack.c.l.b16 %v8914
        %v9045 = vunpack.c.l.b16 %v8915
        %v9046 = vunpack.c.l.b16 %v8916
        %v9047 = vunpack.c.l.b16 %v8917
        %v9048 = vunpack.c.l.b16 %v8918
        %v9049 = vunpack.c.l.b16 %v8919
        %v9050 = vunpack.c.l.b16 %v8920
        %v9051 = vunpack.c.l.b16 %v8921
        %v9052 = vunpack.c.l.b16 %v8922
        %v9053 = vunpack.c.l.b16 %v8923
        %v9054 = vunpack.c.l.b16 %v8924
        %v9055 = vunpack.c.l.b16 %v8925
        %v9056 = vunpack.c.l.b16 %v8926
        %v9057 = vunpack.c.l.b16 %v8927
        %v9058 = vunpack.c.l.b16 %v8928
        %v9059 = vunpack.c.l.b16 %v8929
        %v9060 = vunpack.c.l.b16 %v8930
        %v9061 = vunpack.c.l.b16 %v8931
        %v9062 = vunpack.c.l.b16 %v8932
        %v9063 = vunpack.c.l.b16 %v8933
        %v9064 = vunpack.c.l.b16 %v8934
        %v9065 = vunpack.c.l.b16 %v8935
        %v9066 = vunpack.c.l.b16 %v8936
        %v9067 = vunpack.c.l.b16 %v8937
        %v9068 = vunpack.c.l.b16 %v8938
        %v9069 = vunpack.c.l.b16 %v8939
        %v9070 = vunpack.c.l.b16 %v8940
        %v9071 = vunpack.c.l.b16 %v8941
        %v9072 = vunpack.c.l.b16 %v8942
        %v9073 = vunpack.c.l.b16 %v8943
        %v9074 = vunpack.c.l.b16 %v8944
        %v9075 = vunpack.c.l.b16 %v8945
        %v9076 = vunpack.c.l.b16 %v8946
        %v9077 = vunpack.c.l.b16 %v8947
        %v9078 = vunpack.c.l.b16 %v8948
        %v9079 = vpack.c.b16 %v9017, %v9016
        %v9080 = vpack.c.b16 %v9019, %v9018
        %v9081 = vpack.c.b16 %v9021, %v9020
        %v9082 = vpack.c.b16 %v9023, %v9022
        %v9083 = vpack.c.b16 %v9025, %v9024
        %v9084 = vpack.c.b16 %v9027, %v9026
        %v9085 = vpack.c.b16 %v9029, %v9028
        %v9086 = vpack.c.b16 %v9031, %v9030
        %v9087 = vpack.c.b16 %v9033, %v9032
        %v9088 = vpack.c.b16 %v9035, %v9034
        %v9089 = vpack.c.b16 %v9037, %v9036
        %v9090 = vpack.c.b16 %v9039, %v9038
        %v9091 = vpack.c.b16 %v9041, %v9040
        %v9092 = vpack.c.b16 %v9043, %v9042
        %v9093 = vpack.c.b16 %v9045, %v9044
        %v9094 = vpack.c.b16 %v9047, %v9046
        %v9095 = vpack.c.b16 %v9049, %v9048
        %v9096 = vpack.c.b16 %v9051, %v9050
        %v9097 = vpack.c.b16 %v9053, %v9052
        %v9098 = vpack.c.b16 %v9055, %v9054
        %v9099 = vpack.c.b16 %v9057, %v9056
        %v9100 = vpack.c.b16 %v9059, %v9058
        %v9101 = vpack.c.b16 %v9061, %v9060
        %v9102 = vpack.c.b16 %v9063, %v9062
        %v9103 = vpack.c.b16 %v9065, %v9064
        %v9104 = vpack.c.b16 %v9067, %v9066
        %v9105 = vpack.c.b16 %v9069, %v9068
        %v9106 = vpack.c.b16 %v9071, %v9070
        %v9107 = vpack.c.b16 %v9073, %v9072
        %v9108 = vpack.c.b16 %v9075, %v9074
        %v9109 = vpack.c.b16 %v9077, %v9076
        %v9110 = vpack.c.b16 %v9078, %v9078
        %v9112 = vsel %vm2438, %v9079, 0
        %v9115 = vsel %vm2438, %v9080, 0
        %v9118 = vsel %vm2438, %v9081, 0
        %v9121 = vsel %vm2438, %v9082, 0
        %v9124 = vsel %vm2438, %v9083, 0
        %v9127 = vsel %vm2438, %v9084, 0
        %v9130 = vsel %vm2438, %v9085, 0
        %v9133 = vsel %vm2438, %v9086, 0
        %v9136 = vsel %vm2438, %v9087, 0
        %v9139 = vsel %vm2438, %v9088, 0
        %v9142 = vsel %vm2438, %v9089, 0
        %v9145 = vsel %vm2438, %v9090, 0
        %v9148 = vsel %vm2438, %v9091, 0
        %v9151 = vsel %vm2438, %v9092, 0
        %v9154 = vsel %vm2438, %v9093, 0
        %v9157 = vsel %vm2438, %v9094, 0
        %v9160 = vsel %vm2438, %v9095, 0
        %v9163 = vsel %vm2438, %v9096, 0
        %v9166 = vsel %vm2438, %v9097, 0
        %v9169 = vsel %vm2438, %v9098, 0
        %v9172 = vsel %vm2438, %v9099, 0
        %v9175 = vsel %vm2438, %v9100, 0
        %v9178 = vsel %vm2438, %v9101, 0
        %v9181 = vsel %vm2438, %v9102, 0
        %v9184 = vsel %vm2438, %v9103, 0
        %v9187 = vsel %vm2438, %v9104, 0
        %v9190 = vsel %vm2438, %v9105, 0
        %v9193 = vsel %vm2438, %v9106, 0
        %v9196 = vsel %vm2438, %v9107, 0
        %v9199 = vsel %vm2438, %v9108, 0
        %v9202 = vsel %vm2438, %v9109, 0
        %v9205 = vsel %vm2438, %v9110, 0
        %v9208 = vand.u32 %v8952, %v8428
        %9210 = vmatprep.subr.bf16.mxu0 0
        %9211 = vmatpush1.bf16.msra.mxu0 0
        %9212 = vmatprep.subr.bf16.mxu0 0
        %9213 = vmatpush1.bf16.msra.mxu0 0
        %9214 = vmatprep.subr.bf16.mxu0 0
        %9215 = vmatpush1.bf16.msra.mxu0 0
        %9216 = vmatprep.subr.bf16.mxu0 0
        %9217 = vmatpush1.bf16.msra.mxu0 0
        %9218 = vmatprep.subr.bf16.mxu0 0
        %9219 = vmatpush1.bf16.msra.mxu0 %v9208
        %9220 = vmatprep.subr.bf16.mxu0 0
        %9221 = vmatpush1.bf16.msra.mxu0 %v8951
        %9222 = vmatprep.subr.bf16.mxu0 0
        %9223 = vmatpush1.bf16.msra.mxu0 %v8950
        %9224 = vmatprep.subr.bf16.mxu0 0
        %9225 = vmatpush1.bf16.msra.mxu0 %v8949
        %9226 = vmatprep.subr.bf16.mxu0 0
        %9227 = vmatpush2.bf16.msra.mxu0 0
        %9228 = vmatprep.subr.bf16.mxu0 0
        %9229 = vmatpush2.bf16.msra.mxu0 0
        %9230 = vmatprep.subr.bf16.mxu0 0
        %9231 = vmatpush2.bf16.msra.mxu0 0
        %9232 = vmatprep.subr.bf16.mxu0 0
        %9233 = vmatpush2.bf16.msra.mxu0 0
        %9234 = vmatprep.subr.bf16.mxu0 0
        %9235 = vmatpush2.bf16.msra.mxu0 0
        %9236 = vmatprep.subr.bf16.mxu0 0
        %9237 = vmatpush2.bf16.msra.mxu0 0
        %9238 = vmatprep.subr.bf16.mxu0 0
        %9239 = vmatpush2.bf16.msra.mxu0 0
        %9240 = vmatprep.subr.bf16.mxu0 0
        %9241 = vmatpush2.bf16.msra.mxu0 0
        %9242 = vmatprep.mubr.bf16.mxu0 0
        %9243 = vmatmul.mubr.bf16.gmra.mxu0 %v9112
        %v9244 = vpop.f32.mrf.mxu0
        %v9245 = vadd.f32 0.0, %v9244
        %v9246 = vpop.f32.mrf.mxu0
        %v9247 = vpop.f32.mrf.mxu0
        %v9248 = vadd.f32 0.0, %v9247
        %v9249 = vpop.f32.mrf.mxu0
        %9250 = vmatprep.mubr.bf16.mxu0 0
        %9251 = vmatmul.mubr.bf16.gmra.mxu0 %v9115
        %v9252 = vpop.f32.mrf.mxu0
        %v9253 = vadd.f32 0.0, %v9252
        %v9254 = vpop.f32.mrf.mxu0
        %v9255 = vpop.f32.mrf.mxu0
        %v9256 = vadd.f32 0.0, %v9255
        %v9257 = vpop.f32.mrf.mxu0
        %9258 = vmatprep.mubr.bf16.mxu0 0
        %9259 = vmatmul.mubr.bf16.gmra.mxu0 %v9118
        %v9260 = vpop.f32.mrf.mxu0
        %v9261 = vadd.f32 0.0, %v9260
        %v9262 = vpop.f32.mrf.mxu0
        %v9263 = vpop.f32.mrf.mxu0
        %v9264 = vadd.f32 0.0, %v9263
        %v9265 = vpop.f32.mrf.mxu0
        %9266 = vmatprep.mubr.bf16.mxu0 0
        %9267 = vmatmul.mubr.bf16.gmra.mxu0 %v9121
        %v9268 = vpop.f32.mrf.mxu0
        %v9269 = vadd.f32 0.0, %v9268
        %v9270 = vpop.f32.mrf.mxu0
        %v9271 = vpop.f32.mrf.mxu0
        %v9272 = vadd.f32 0.0, %v9271
        %v9273 = vpop.f32.mrf.mxu0
        %9274 = vmatprep.mubr.bf16.mxu0 0
        %9275 = vmatmul.mubr.bf16.gmra.mxu0 %v9124
        %v9276 = vpop.f32.mrf.mxu0
        %v9277 = vadd.f32 0.0, %v9276
        %v9278 = vpop.f32.mrf.mxu0
        %v9279 = vpop.f32.mrf.mxu0
        %v9280 = vadd.f32 0.0, %v9279
        %v9281 = vpop.f32.mrf.mxu0
        %9282 = vmatprep.mubr.bf16.mxu0 0
        %9283 = vmatmul.mubr.bf16.gmra.mxu0 %v9127
        %v9284 = vpop.f32.mrf.mxu0
        %v9285 = vadd.f32 0.0, %v9284
        %v9286 = vpop.f32.mrf.mxu0
        %v9287 = vpop.f32.mrf.mxu0
        %v9288 = vadd.f32 0.0, %v9287
        %v9289 = vpop.f32.mrf.mxu0
        %9290 = vmatprep.mubr.bf16.mxu0 0
        %9291 = vmatmul.mubr.bf16.gmra.mxu0 %v9130
        %v9292 = vpop.f32.mrf.mxu0
        %v9293 = vadd.f32 0.0, %v9292
        %v9294 = vpop.f32.mrf.mxu0
        %v9295 = vpop.f32.mrf.mxu0
        %v9296 = vadd.f32 0.0, %v9295
        %v9297 = vpop.f32.mrf.mxu0
        %9298 = vmatprep.mubr.bf16.mxu0 0
        %9299 = vmatmul.mubr.bf16.gmra.mxu0 %v9133
        %v9300 = vpop.f32.mrf.mxu0
        %v9301 = vadd.f32 0.0, %v9300
        %v9302 = vpop.f32.mrf.mxu0
        %v9303 = vpop.f32.mrf.mxu0
        %v9304 = vadd.f32 0.0, %v9303
        %v9305 = vpop.f32.mrf.mxu0
        %9306 = vmatprep.mubr.bf16.mxu0 0
        %9307 = vmatmul.mubr.bf16.gmra.mxu0 %v9136
        %v9308 = vpop.f32.mrf.mxu0
        %v9309 = vadd.f32 0.0, %v9308
        %v9310 = vpop.f32.mrf.mxu0
        %v9311 = vpop.f32.mrf.mxu0
        %v9312 = vadd.f32 0.0, %v9311
        %v9313 = vpop.f32.mrf.mxu0
        %9314 = vmatprep.mubr.bf16.mxu0 0
        %9315 = vmatmul.mubr.bf16.gmra.mxu0 %v9139
        %v9316 = vpop.f32.mrf.mxu0
        %v9317 = vadd.f32 0.0, %v9316
        %v9318 = vpop.f32.mrf.mxu0
        %v9319 = vpop.f32.mrf.mxu0
        %v9320 = vadd.f32 0.0, %v9319
        %v9321 = vpop.f32.mrf.mxu0
        %9322 = vmatprep.mubr.bf16.mxu0 0
        %9323 = vmatmul.mubr.bf16.gmra.mxu0 %v9142
        %v9324 = vpop.f32.mrf.mxu0
        %v9325 = vadd.f32 0.0, %v9324
        %v9326 = vpop.f32.mrf.mxu0
        %v9327 = vpop.f32.mrf.mxu0
        %v9328 = vadd.f32 0.0, %v9327
        %v9329 = vpop.f32.mrf.mxu0
        %9330 = vmatprep.mubr.bf16.mxu0 0
        %9331 = vmatmul.mubr.bf16.gmra.mxu0 %v9145
        %v9332 = vpop.f32.mrf.mxu0
        %v9333 = vadd.f32 0.0, %v9332
        %v9334 = vpop.f32.mrf.mxu0
        %v9335 = vpop.f32.mrf.mxu0
        %v9336 = vadd.f32 0.0, %v9335
        %v9337 = vpop.f32.mrf.mxu0
        %9338 = vmatprep.mubr.bf16.mxu0 0
        %9339 = vmatmul.mubr.bf16.gmra.mxu0 %v9148
        %v9340 = vpop.f32.mrf.mxu0
        %v9341 = vadd.f32 0.0, %v9340
        %v9342 = vpop.f32.mrf.mxu0
        %v9343 = vpop.f32.mrf.mxu0
        %v9344 = vadd.f32 0.0, %v9343
        %v9345 = vpop.f32.mrf.mxu0
        %9346 = vmatprep.mubr.bf16.mxu0 0
        %9347 = vmatmul.mubr.bf16.gmra.mxu0 %v9151
        %v9348 = vpop.f32.mrf.mxu0
        %v9349 = vadd.f32 0.0, %v9348
        %v9350 = vpop.f32.mrf.mxu0
        %v9351 = vpop.f32.mrf.mxu0
        %v9352 = vadd.f32 0.0, %v9351
        %v9353 = vpop.f32.mrf.mxu0
        %9354 = vmatprep.mubr.bf16.mxu0 0
        %9355 = vmatmul.mubr.bf16.gmra.mxu0 %v9154
        %v9356 = vpop.f32.mrf.mxu0
        %v9357 = vadd.f32 0.0, %v9356
        %v9358 = vpop.f32.mrf.mxu0
        %v9359 = vpop.f32.mrf.mxu0
        %v9360 = vadd.f32 0.0, %v9359
        %v9361 = vpop.f32.mrf.mxu0
        %9362 = vmatprep.mubr.bf16.mxu0 0
        %9363 = vmatmul.mubr.bf16.gmra.mxu0 %v9157
        %v9364 = vpop.f32.mrf.mxu0
        %v9365 = vadd.f32 0.0, %v9364
        %v9366 = vpop.f32.mrf.mxu0
        %v9367 = vpop.f32.mrf.mxu0
        %v9368 = vadd.f32 0.0, %v9367
        %v9369 = vpop.f32.mrf.mxu0
        %9370 = vmatprep.mubr.bf16.mxu0 0
        %9371 = vmatmul.mubr.bf16.gmra.mxu0 %v9160
        %v9372 = vpop.f32.mrf.mxu0
        %v9373 = vadd.f32 0.0, %v9372
        %v9374 = vpop.f32.mrf.mxu0
        %v9375 = vpop.f32.mrf.mxu0
        %v9376 = vadd.f32 0.0, %v9375
        %v9377 = vpop.f32.mrf.mxu0
        %9378 = vmatprep.mubr.bf16.mxu0 0
        %9379 = vmatmul.mubr.bf16.gmra.mxu0 %v9163
        %v9380 = vpop.f32.mrf.mxu0
        %v9381 = vadd.f32 0.0, %v9380
        %v9382 = vpop.f32.mrf.mxu0
        %v9383 = vpop.f32.mrf.mxu0
        %v9384 = vadd.f32 0.0, %v9383
        %v9385 = vpop.f32.mrf.mxu0
        %9386 = vmatprep.mubr.bf16.mxu0 0
        %9387 = vmatmul.mubr.bf16.gmra.mxu0 %v9166
        %v9388 = vpop.f32.mrf.mxu0
        %v9389 = vadd.f32 0.0, %v9388
        %v9390 = vpop.f32.mrf.mxu0
        %v9391 = vpop.f32.mrf.mxu0
        %v9392 = vadd.f32 0.0, %v9391
        %v9393 = vpop.f32.mrf.mxu0
        %9394 = vmatprep.mubr.bf16.mxu0 0
        %9395 = vmatmul.mubr.bf16.gmra.mxu0 %v9169
        %v9396 = vpop.f32.mrf.mxu0
        %v9397 = vadd.f32 0.0, %v9396
        %v9398 = vpop.f32.mrf.mxu0
        %v9399 = vpop.f32.mrf.mxu0
        %v9400 = vadd.f32 0.0, %v9399
        %v9401 = vpop.f32.mrf.mxu0
        %9402 = vmatprep.mubr.bf16.mxu0 0
        %9403 = vmatmul.mubr.bf16.gmra.mxu0 %v9172
        %v9404 = vpop.f32.mrf.mxu0
        %v9405 = vadd.f32 0.0, %v9404
        %v9406 = vpop.f32.mrf.mxu0
        %v9407 = vpop.f32.mrf.mxu0
        %v9408 = vadd.f32 0.0, %v9407
        %v9409 = vpop.f32.mrf.mxu0
        %9410 = vmatprep.mubr.bf16.mxu0 0
        %9411 = vmatmul.mubr.bf16.gmra.mxu0 %v9175
        %v9412 = vpop.f32.mrf.mxu0
        %v9413 = vadd.f32 0.0, %v9412
        %v9414 = vpop.f32.mrf.mxu0
        %v9415 = vpop.f32.mrf.mxu0
        %v9416 = vadd.f32 0.0, %v9415
        %v9417 = vpop.f32.mrf.mxu0
        %9418 = vmatprep.mubr.bf16.mxu0 0
        %9419 = vmatmul.mubr.bf16.gmra.mxu0 %v9178
        %v9420 = vpop.f32.mrf.mxu0
        %v9421 = vadd.f32 0.0, %v9420
        %v9422 = vpop.f32.mrf.mxu0
        %v9423 = vpop.f32.mrf.mxu0
        %v9424 = vadd.f32 0.0, %v9423
        %v9425 = vpop.f32.mrf.mxu0
        %9426 = vmatprep.mubr.bf16.mxu0 0
        %9427 = vmatmul.mubr.bf16.gmra.mxu0 %v9181
        %v9428 = vpop.f32.mrf.mxu0
        %v9429 = vadd.f32 0.0, %v9428
        %v9430 = vpop.f32.mrf.mxu0
        %v9431 = vpop.f32.mrf.mxu0
        %v9432 = vadd.f32 0.0, %v9431
        %v9433 = vpop.f32.mrf.mxu0
        %9434 = vmatprep.mubr.bf16.mxu0 0
        %9435 = vmatmul.mubr.bf16.gmra.mxu0 %v9184
        %v9436 = vpop.f32.mrf.mxu0
        %v9437 = vadd.f32 0.0, %v9436
        %v9438 = vpop.f32.mrf.mxu0
        %v9439 = vpop.f32.mrf.mxu0
        %v9440 = vadd.f32 0.0, %v9439
        %v9441 = vpop.f32.mrf.mxu0
        %9442 = vmatprep.mubr.bf16.mxu0 0
        %9443 = vmatmul.mubr.bf16.gmra.mxu0 %v9187
        %v9444 = vpop.f32.mrf.mxu0
        %v9445 = vadd.f32 0.0, %v9444
        %v9446 = vpop.f32.mrf.mxu0
        %v9447 = vpop.f32.mrf.mxu0
        %v9448 = vadd.f32 0.0, %v9447
        %v9449 = vpop.f32.mrf.mxu0
        %9450 = vmatprep.mubr.bf16.mxu0 0
        %9451 = vmatmul.mubr.bf16.gmra.mxu0 %v9190
        %v9452 = vpop.f32.mrf.mxu0
        %v9453 = vadd.f32 0.0, %v9452
        %v9454 = vpop.f32.mrf.mxu0
        %v9455 = vpop.f32.mrf.mxu0
        %v9456 = vadd.f32 0.0, %v9455
        %v9457 = vpop.f32.mrf.mxu0
        %9458 = vmatprep.mubr.bf16.mxu0 0
        %9459 = vmatmul.mubr.bf16.gmra.mxu0 %v9193
        %v9460 = vpop.f32.mrf.mxu0
        %v9461 = vadd.f32 0.0, %v9460
        %v9462 = vpop.f32.mrf.mxu0
        %v9463 = vpop.f32.mrf.mxu0
        %v9464 = vadd.f32 0.0, %v9463
        %v9465 = vpop.f32.mrf.mxu0
        %9466 = vmatprep.mubr.bf16.mxu0 0
        %9467 = vmatmul.mubr.bf16.gmra.mxu0 %v9196
        %v9468 = vpop.f32.mrf.mxu0
        %v9469 = vadd.f32 0.0, %v9468
        %v9470 = vpop.f32.mrf.mxu0
        %v9471 = vpop.f32.mrf.mxu0
        %v9472 = vadd.f32 0.0, %v9471
        %v9473 = vpop.f32.mrf.mxu0
        %9474 = vmatprep.mubr.bf16.mxu0 0
        %9475 = vmatmul.mubr.bf16.gmra.mxu0 %v9199
        %v9476 = vpop.f32.mrf.mxu0
        %v9477 = vadd.f32 0.0, %v9476
        %v9478 = vpop.f32.mrf.mxu0
        %v9479 = vpop.f32.mrf.mxu0
        %v9480 = vadd.f32 0.0, %v9479
        %v9481 = vpop.f32.mrf.mxu0
        %9482 = vmatprep.mubr.bf16.mxu0 0
        %9483 = vmatmul.mubr.bf16.gmra.mxu0 %v9202
        %v9484 = vpop.f32.mrf.mxu0
        %v9485 = vadd.f32 0.0, %v9484
        %v9486 = vpop.f32.mrf.mxu0
        %v9487 = vpop.f32.mrf.mxu0
        %v9488 = vadd.f32 0.0, %v9487
        %v9489 = vpop.f32.mrf.mxu0
        %9490 = vmatprep.mubr.bf16.mxu0 0
        %9491 = vmatmul.mubr.bf16.gmra.mxu0 %v9205
        %v9492 = vpop.f32.mrf.mxu0
        %v9493 = vadd.f32 0.0, %v9492
        %v9494 = vpop.f32.mrf.mxu0
        %v9495 = vpop.f32.mrf.mxu0
        %v9496 = vpop.f32.mrf.mxu0
        %9497 = vdwg.mxu0
        %v9498 = vlaneseq
        %v9499 = vshrl.u32 %v9498, 7
        %v9500 = vsub.s32 3, %v9499
        %v9501 = vrot.slane %v905, %v9500
        %v9502 = vmul.f32 %v9245, %v9501
        %v9503 = vmul.f32 %v9248, %v9501
        %v9504 = vmul.f32 %v9253, %v9501
        %v9505 = vmul.f32 %v9256, %v9501
        %v9506 = vmul.f32 %v9261, %v9501
        %v9507 = vmul.f32 %v9264, %v9501
        %v9508 = vmul.f32 %v9269, %v9501
        %v9509 = vlaneseq
        %v9510 = vshrl.u32 %v9509, 7
        %v9511 = vsub.s32 4, %v9510
        %v9512 = vrot.slane %v905, %v9511
        %v9513 = vmul.f32 %v9272, %v9512
        %v9514 = vmul.f32 %v9277, %v9512
        %v9515 = vmul.f32 %v9280, %v9512
        %v9516 = vmul.f32 %v9285, %v9512
        %v9517 = vmul.f32 %v9288, %v9512
        %v9518 = vmul.f32 %v9293, %v9512
        %v9519 = vmul.f32 %v9296, %v9512
        %v9520 = vadd.f32 %v9502, %v9513
        %v9521 = vadd.f32 %v9503, %v9514
        %v9522 = vadd.f32 %v9504, %v9515
        %v9523 = vadd.f32 %v9505, %v9516
        %v9524 = vadd.f32 %v9506, %v9517
        %v9525 = vadd.f32 %v9507, %v9518
        %v9526 = vadd.f32 %v9508, %v9519
        %v9527 = vlaneseq
        %v9528 = vshrl.u32 %v9527, 7
        %v9529 = vsub.s32 5, %v9528
        %v9530 = vrot.slane %v905, %v9529
        %v9531 = vmul.f32 %v9301, %v9530
        %v9532 = vmul.f32 %v9304, %v9530
        %v9533 = vmul.f32 %v9309, %v9530
        %v9534 = vmul.f32 %v9312, %v9530
        %v9535 = vmul.f32 %v9317, %v9530
        %v9536 = vmul.f32 %v9320, %v9530
        %v9537 = vmul.f32 %v9325, %v9530
        %v9538 = vadd.f32 %v9520, %v9531
        %v9539 = vadd.f32 %v9521, %v9532
        %v9540 = vadd.f32 %v9522, %v9533
        %v9541 = vadd.f32 %v9523, %v9534
        %v9542 = vadd.f32 %v9524, %v9535
        %v9543 = vadd.f32 %v9525, %v9536
        %v9544 = vadd.f32 %v9526, %v9537
        %v9545 = vlaneseq
        %v9546 = vshrl.u32 %v9545, 7
        %v9547 = vsub.s32 6, %v9546
        %v9548 = vrot.slane %v905, %v9547
        %v9549 = vmul.f32 %v9328, %v9548
        %v9550 = vmul.f32 %v9333, %v9548
        %v9551 = vmul.f32 %v9336, %v9548
        %v9552 = vmul.f32 %v9341, %v9548
        %v9553 = vmul.f32 %v9344, %v9548
        %v9554 = vmul.f32 %v9349, %v9548
        %v9555 = vmul.f32 %v9352, %v9548
        %v9556 = vadd.f32 %v9538, %v9549
        %v9557 = vadd.f32 %v9539, %v9550
        %v9558 = vadd.f32 %v9540, %v9551
        %v9559 = vadd.f32 %v9541, %v9552
        %v9560 = vadd.f32 %v9542, %v9553
        %v9561 = vadd.f32 %v9543, %v9554
        %v9562 = vadd.f32 %v9544, %v9555
        %v9563 = vlaneseq
        %v9564 = vshrl.u32 %v9563, 7
        %v9565 = vsub.s32 7, %v9564
        %v9566 = vrot.slane %v905, %v9565
        %v9567 = vmul.f32 %v9357, %v9566
        %v9568 = vmul.f32 %v9360, %v9566
        %v9569 = vmul.f32 %v9365, %v9566
        %v9570 = vmul.f32 %v9368, %v9566
        %v9571 = vmul.f32 %v9373, %v9566
        %v9572 = vmul.f32 %v9376, %v9566
        %v9573 = vmul.f32 %v9381, %v9566
        %v9574 = vadd.f32 %v9556, %v9567
        %v9575 = vadd.f32 %v9557, %v9568
        %v9576 = vadd.f32 %v9558, %v9569
        %v9577 = vadd.f32 %v9559, %v9570
        %v9578 = vadd.f32 %v9560, %v9571
        %v9579 = vadd.f32 %v9561, %v9572
        %v9580 = vadd.f32 %v9562, %v9573
        %v9581 = vlaneseq
        %v9582 = vshrl.u32 %v9581, 7
        %v9583 = vsub.s32 0, %v9582
        %v9584 = vrot.slane %v906, %v9583
        %v9585 = vmul.f32 %v9384, %v9584
        %v9586 = vmul.f32 %v9389, %v9584
        %v9587 = vmul.f32 %v9392, %v9584
        %v9588 = vmul.f32 %v9397, %v9584
        %v9589 = vmul.f32 %v9400, %v9584
        %v9590 = vmul.f32 %v9405, %v9584
        %v9591 = vmul.f32 %v9408, %v9584
        %v9592 = vadd.f32 %v9574, %v9585
        %v9593 = vadd.f32 %v9575, %v9586
        %v9594 = vadd.f32 %v9576, %v9587
        %v9595 = vadd.f32 %v9577, %v9588
        %v9596 = vadd.f32 %v9578, %v9589
        %v9597 = vadd.f32 %v9579, %v9590
        %v9598 = vadd.f32 %v9580, %v9591
        %v9599 = vlaneseq
        %v9600 = vshrl.u32 %v9599, 7
        %v9601 = vsub.s32 1, %v9600
        %v9602 = vrot.slane %v906, %v9601
        %v9603 = vmul.f32 %v9413, %v9602
        %v9604 = vmul.f32 %v9416, %v9602
        %v9605 = vmul.f32 %v9421, %v9602
        %v9606 = vmul.f32 %v9424, %v9602
        %v9607 = vmul.f32 %v9429, %v9602
        %v9608 = vmul.f32 %v9432, %v9602
        %v9609 = vmul.f32 %v9437, %v9602
        %v9610 = vadd.f32 %v9592, %v9603
        %v9611 = vadd.f32 %v9593, %v9604
        %v9612 = vadd.f32 %v9594, %v9605
        %v9613 = vadd.f32 %v9595, %v9606
        %v9614 = vadd.f32 %v9596, %v9607
        %v9615 = vadd.f32 %v9597, %v9608
        %v9616 = vadd.f32 %v9598, %v9609
        %v9617 = vlaneseq
        %v9618 = vshrl.u32 %v9617, 7
        %v9619 = vsub.s32 2, %v9618
        %v9620 = vrot.slane %v906, %v9619
        %v9621 = vmul.f32 %v9440, %v9620
        %v9622 = vmul.f32 %v9445, %v9620
        %v9623 = vmul.f32 %v9448, %v9620
        %v9624 = vmul.f32 %v9453, %v9620
        %v9625 = vmul.f32 %v9456, %v9620
        %v9626 = vmul.f32 %v9461, %v9620
        %v9627 = vmul.f32 %v9464, %v9620
        %v9628 = vadd.f32 %v9610, %v9621
        %v9629 = vadd.f32 %v9611, %v9622
        %v9630 = vadd.f32 %v9612, %v9623
        %v9631 = vadd.f32 %v9613, %v9624
        %v9632 = vadd.f32 %v9614, %v9625
        %v9633 = vadd.f32 %v9615, %v9626
        %v9634 = vadd.f32 %v9616, %v9627
        %v9635 = vlaneseq
        %v9636 = vshrl.u32 %v9635, 7
        %v9637 = vsub.s32 3, %v9636
        %v9638 = vrot.slane %v906, %v9637
        %v9639 = vmul.f32 %v9469, %v9638
        %v9640 = vmul.f32 %v9472, %v9638
        %v9641 = vmul.f32 %v9477, %v9638
        %v9642 = vmul.f32 %v9480, %v9638
        %v9643 = vmul.f32 %v9485, %v9638
        %v9644 = vmul.f32 %v9488, %v9638
        %v9645 = vmul.f32 %v9493, %v9638
        %v9646 = vadd.f32 %v9628, %v9639
        %v9647 = vadd.f32 %v9629, %v9640
        %v9648 = vadd.f32 %v9630, %v9641
        %v9649 = vadd.f32 %v9631, %v9642
        %v9650 = vadd.f32 %v9632, %v9643
        %v9651 = vadd.f32 %v9633, %v9644
        %v9652 = vadd.f32 %v9634, %v9645
        %v9653 = vlaneseq
        %v9654 = vshrl.u32 %v9653, 7
        %v9655 = vsub.s32 6, %v9654
        %v9656 = vrot.slane %v904, %v9655
        %v9657 = vmul.f32 %v9646, %v9656
        %v9658 = vmul.f32 %v9647, %v9656
        %v9659 = vmul.f32 %v9648, %v9656
        %v9660 = vmul.f32 %v9649, %v9656
        %v9661 = vmul.f32 %v9650, %v9656
        %v9662 = vmul.f32 %v9651, %v9656
        %v9663 = vmul.f32 %v9652, %v9656
        %v9664 = vlaneseq
        %v9665 = vshrl.u32 %v9664, 7
        %v9666 = vsub.s32 7, %v9665
        %v9667 = vrot.slane %v904, %v9666
        %v9668 = vadd.f32 %v9657, %v9667
        %v9669 = vadd.f32 %v9658, %v9667
        %v9670 = vadd.f32 %v9659, %v9667
        %v9671 = vadd.f32 %v9660, %v9667
        %v9672 = vadd.f32 %v9661, %v9667
        %v9673 = vadd.f32 %v9662, %v9667
        %v9674 = vadd.f32 %v9663, %v9667
        %v9675 = vsel %vm907, %v9668, 0.0
        %9676 = vadd.xlane.f32.xlu0 %v9675
        %v9677 = vpop.xlane.xlu0 %9676
        %v9678 = vsel %vm907, %v9669, 0.0
        %9679 = vadd.xlane.f32.xlu0 %v9678
        %v9680 = vpop.xlane.xlu0 %9679
        %v9681 = vsel %vm907, %v9670, 0.0
        %9682 = vadd.xlane.f32.xlu0 %v9681
        %v9683 = vpop.xlane.xlu0 %9682
        %v9684 = vsel %vm907, %v9671, 0.0
        %9685 = vadd.xlane.f32.xlu0 %v9684
        %v9686 = vpop.xlane.xlu0 %9685
        %v9687 = vsel %vm907, %v9672, 0.0
        %9688 = vadd.xlane.f32.xlu0 %v9687
        %v9689 = vpop.xlane.xlu0 %9688
        %v9690 = vsel %vm907, %v9673, 0.0
        %9691 = vadd.xlane.f32.xlu0 %v9690
        %v9692 = vpop.xlane.xlu0 %9691
        %v9693 = vsel %vm926, %v9674, 0.0
        %9694 = vadd.xlane.f32.xlu0 %v9693
        %v9695 = vpop.xlane.xlu0 %9694
        %v9696 = vmul.f32 %v9677, %v930
        %v9697 = vmul.f32 %v9680, %v930
        %v9698 = vmul.f32 %v9683, %v930
        %v9699 = vmul.f32 %v9686, %v930
        %v9700 = vmul.f32 %v9689, %v930
        %v9701 = vmul.f32 %v9692, %v930
        %v9702 = vmul.f32 %v9695, %v930
        %v9703 = vsub.f32 %v9668, %v9696
        %v9704 = vsub.f32 %v9669, %v9697
        %v9705 = vsub.f32 %v9670, %v9698
        %v9706 = vsub.f32 %v9671, %v9699
        %v9707 = vsub.f32 %v9672, %v9700
        %v9708 = vsub.f32 %v9673, %v9701
        %v9709 = vsub.f32 %v9674, %v9702
        %v9710 = vmul.f32 %v9703, %v9703
        %v9711 = vmul.f32 %v9704, %v9704
        %v9712 = vmul.f32 %v9705, %v9705
        %v9713 = vmul.f32 %v9706, %v9706
        %v9714 = vmul.f32 %v9707, %v9707
        %v9715 = vmul.f32 %v9708, %v9708
        %v9716 = vmul.f32 %v9709, %v9709
        %v9717 = vsel %vm907, %v9710, 0.0
        %9718 = vadd.xlane.f32.xlu0 %v9717
        %v9719 = vpop.xlane.xlu0 %9718
        %v9720 = vsel %vm907, %v9711, 0.0
        %9721 = vadd.xlane.f32.xlu0 %v9720
        %v9722 = vpop.xlane.xlu0 %9721
        %v9723 = vsel %vm907, %v9712, 0.0
        %9724 = vadd.xlane.f32.xlu0 %v9723
        %v9725 = vpop.xlane.xlu0 %9724
        %v9726 = vsel %vm907, %v9713, 0.0
        %9727 = vadd.xlane.f32.xlu0 %v9726
        %v9728 = vpop.xlane.xlu0 %9727
        %v9729 = vsel %vm907, %v9714, 0.0
        %9730 = vadd.xlane.f32.xlu0 %v9729
        %v9731 = vpop.xlane.xlu0 %9730
        %v9732 = vsel %vm907, %v9715, 0.0
        %9733 = vadd.xlane.f32.xlu0 %v9732
        %v9734 = vpop.xlane.xlu0 %9733
        %v9735 = vsel %vm926, %v9716, 0.0
        %9736 = vadd.xlane.f32.xlu0 %v9735
        %v9737 = vpop.xlane.xlu0 %9736
        %v9738 = vmul.f32 %v9719, %v930
        %v9739 = vmul.f32 %v9722, %v930
        %v9740 = vmul.f32 %v9725, %v930
        %v9741 = vmul.f32 %v9728, %v930
        %v9742 = vmul.f32 %v9731, %v930
        %v9743 = vmul.f32 %v9734, %v930
        %v9744 = vmul.f32 %v9737, %v930
        %v9745 = vadd.f32 %v9738, 1e-05
        %v9746 = vadd.f32 %v9739, 1e-05
        %v9747 = vadd.f32 %v9740, 1e-05
        %v9748 = vadd.f32 %v9741, 1e-05
        %v9749 = vadd.f32 %v9742, 1e-05
        %v9750 = vadd.f32 %v9743, 1e-05
        %v9751 = vadd.f32 %v9744, 1e-05
        %v9752 = vrsqrt.pop %v9745
        %v9753 = vrsqrt.pop %v9746
        %v9754 = vrsqrt.pop %v9747
        %v9755 = vrsqrt.pop %v9748
        %v9756 = vrsqrt.pop %v9749
        %v9757 = vrsqrt.pop %v9750
        %v9758 = vrsqrt.pop %v9751
        %v9759 = vmul.f32 %v9703, %v9752
        %v9760 = vmul.f32 %v9704, %v9753
        %v9761 = vmul.f32 %v9705, %v9754
        %v9762 = vmul.f32 %v9706, %v9755
        %v9763 = vmul.f32 %v9707, %v9756
        %v9764 = vmul.f32 %v9708, %v9757
        %v9765 = vmul.f32 %v9709, %v9758
        %v9766 = vlaneseq
        %v9767 = vshrl.u32 %v9766, 7
        %v9768 = vsub.s32 0, %v9767
        %v9769 = vrot.slane %v905, %v9768
        %v9770 = vmul.f32 %v9759, %v9769
        %v9771 = vmul.f32 %v9760, %v9769
        %v9772 = vmul.f32 %v9761, %v9769
        %v9773 = vmul.f32 %v9762, %v9769
        %v9774 = vmul.f32 %v9763, %v9769
        %v9775 = vmul.f32 %v9764, %v9769
        %v9776 = vmul.f32 %v9765, %v9769
        %v9777 = vlaneseq
        %v9778 = vshrl.u32 %v9777, 7
        %v9779 = vsub.s32 1, %v9778
        %v9780 = vrot.slane %v905, %v9779
        %v9781 = vadd.f32 %v9770, %v9780
        %v9782 = vadd.f32 %v9771, %v9780
        %v9783 = vadd.f32 %v9772, %v9780
        %v9784 = vadd.f32 %v9773, %v9780
        %v9785 = vadd.f32 %v9774, %v9780
        %v9786 = vadd.f32 %v9775, %v9780
        %v9787 = vadd.f32 %v9776, %v9780
        %v9788 = vld [vmem:[#allocation18] sm:$0xff]
        %v9789 = vld [vmem:[#allocation18 + $0x8] sm:$0xff]
        %v9790 = vld [vmem:[#allocation18 + $0x10] sm:$0xff]
        %v9791 = vld [vmem:[#allocation18 + $0x18] sm:$0xff]
        %v9792 = vld [vmem:[%s22] sm:$0x1]
        %v9794 = vlaneseq
        %v9795 = vshrl.u32 %v9794, 7
        %v9796 = vsub.s32 0, %v9795
        %v9797 = vrot.slane %v9792, %v9796
        %v9800 = vsel %vm907, %v9781, 0
        %v9803 = vsel %vm907, %v9782, 0
        %v9806 = vsel %vm907, %v9783, 0
        %v9809 = vsel %vm907, %v9784, 0
        %v9812 = vsel %vm907, %v9785, 0
        %v9815 = vsel %vm907, %v9786, 0
        %v9818 = vsel %vm907, %v9787, 0
        %9820 = vmatprep.subr.mxu0 0.0
        %9821 = vmatpush1.msra.mxu0 0.0
        %9822 = vmatprep.subr.mxu0 0.0
        %9823 = vmatpush1.msra.mxu0 0.0
        %9824 = vmatprep.subr.mxu0 0.0
        %9825 = vmatpush1.msra.mxu0 0.0
        %9826 = vmatprep.subr.mxu0 0.0
        %9827 = vmatpush1.msra.mxu0 0.0
        %9828 = vmatprep.subr.mxu0 0.0
        %9829 = vmatpush1.msra.mxu0 0.0
        %9830 = vmatprep.subr.mxu0 0.0
        %9831 = vmatpush1.msra.mxu0 0.0
        %9832 = vmatprep.subr.mxu0 0.0
        %9833 = vmatpush1.msra.mxu0 0.0
        %9834 = vmatprep.subr.mxu0 0.0
        %9835 = vmatpush1.msra.mxu0 0.0
        %9836 = vmatprep.subr.mxu0 0.0
        %9837 = vmatpush1.msra.mxu0 0.0
        %9838 = vmatprep.subr.mxu0 0.0
        %9839 = vmatpush1.msra.mxu0 0.0
        %9840 = vmatprep.subr.mxu0 0.0
        %9841 = vmatpush1.msra.mxu0 0.0
        %9842 = vmatprep.subr.mxu0 0.0
        %9843 = vmatpush1.msra.mxu0 0.0
        %9844 = vmatprep.subr.mxu0 0.0
        %9845 = vmatpush1.msra.mxu0 %v9791
        %9846 = vmatprep.subr.mxu0 0.0
        %9847 = vmatpush1.msra.mxu0 %v9790
        %9848 = vmatprep.subr.mxu0 0.0
        %9849 = vmatpush1.msra.mxu0 %v9789
        %9850 = vmatprep.subr.mxu0 0.0
        %9851 = vmatpush1.msra.mxu0 %v9788
        %9852 = vmatprep.subr.mxu0 0.0
        %9853 = vmatpush2.msra.mxu0 0.0
        %9854 = vmatprep.subr.mxu0 0.0
        %9855 = vmatpush2.msra.mxu0 0.0
        %9856 = vmatprep.subr.mxu0 0.0
        %9857 = vmatpush2.msra.mxu0 0.0
        %9858 = vmatprep.subr.mxu0 0.0
        %9859 = vmatpush2.msra.mxu0 0.0
        %9860 = vmatprep.subr.mxu0 0.0
        %9861 = vmatpush2.msra.mxu0 0.0
        %9862 = vmatprep.subr.mxu0 0.0
        %9863 = vmatpush2.msra.mxu0 0.0
        %9864 = vmatprep.subr.mxu0 0.0
        %9865 = vmatpush2.msra.mxu0 0.0
        %9866 = vmatprep.subr.mxu0 0.0
        %9867 = vmatpush2.msra.mxu0 0.0
        %9868 = vmatprep.subr.mxu0 0.0
        %9869 = vmatpush2.msra.mxu0 0.0
        %9870 = vmatprep.subr.mxu0 0.0
        %9871 = vmatpush2.msra.mxu0 0.0
        %9872 = vmatprep.subr.mxu0 0.0
        %9873 = vmatpush2.msra.mxu0 0.0
        %9874 = vmatprep.subr.mxu0 0.0
        %9875 = vmatpush2.msra.mxu0 0.0
        %9876 = vmatprep.subr.mxu0 0.0
        %9877 = vmatpush2.msra.mxu0 0.0
        %9878 = vmatprep.subr.mxu0 0.0
        %9879 = vmatpush2.msra.mxu0 0.0
        %9880 = vmatprep.subr.mxu0 0.0
        %9881 = vmatpush2.msra.mxu0 0.0
        %9882 = vmatprep.subr.mxu0 0.0
        %9883 = vmatpush2.msra.mxu0 0.0
        %9884 = vmatprep.mubr.f32.mxu0 0.0
        %9885 = vmatmul.mubr.f32.gmra.mxu0 %v9800
        %v9886 = vpop.f32.mrf.mxu0
        %v9887 = vadd.f32 %v9797, %v9886
        %v9888 = vpop.f32.mrf.mxu0
        %9889 = vmatprep.mubr.f32.mxu0 0.0
        %9890 = vmatmul.mubr.f32.gmra.mxu0 %v9803
        %v9891 = vpop.f32.mrf.mxu0
        %v9892 = vadd.f32 %v9797, %v9891
        %v9893 = vpop.f32.mrf.mxu0
        %9894 = vmatprep.mubr.f32.mxu0 0.0
        %9895 = vmatmul.mubr.f32.gmra.mxu0 %v9806
        %v9896 = vpop.f32.mrf.mxu0
        %v9897 = vadd.f32 %v9797, %v9896
        %v9898 = vpop.f32.mrf.mxu0
        %9899 = vmatprep.mubr.f32.mxu0 0.0
        %9900 = vmatmul.mubr.f32.gmra.mxu0 %v9809
        %v9901 = vpop.f32.mrf.mxu0
        %v9902 = vadd.f32 %v9797, %v9901
        %v9903 = vpop.f32.mrf.mxu0
        %9904 = vmatprep.mubr.f32.mxu0 0.0
        %9905 = vmatmul.mubr.f32.gmra.mxu0 %v9812
        %v9906 = vpop.f32.mrf.mxu0
        %v9907 = vadd.f32 %v9797, %v9906
        %v9908 = vpop.f32.mrf.mxu0
        %9909 = vmatprep.mubr.f32.mxu0 0.0
        %9910 = vmatmul.mubr.f32.gmra.mxu0 %v9815
        %v9911 = vpop.f32.mrf.mxu0
        %v9912 = vadd.f32 %v9797, %v9911
        %v9913 = vpop.f32.mrf.mxu0
        %9914 = vmatprep.mubr.f32.mxu0 0.0
        %9915 = vmatmul.mubr.f32.gmra.mxu0 %v9818
        %v9916 = vpop.f32.mrf.mxu0
        %v9917 = vadd.f32 %v9797, %v9916
        %v9918 = vpop.f32.mrf.mxu0
        %9919 = vdwg.mxu0
        %v9920 = vmul.f32 %v9887, 0.70710677
        %v9921 = vmul.f32 %v9892, 0.70710677
        %v9922 = vmul.f32 %v9897, 0.70710677
        %v9923 = vmul.f32 %v9902, 0.70710677
        %v9924 = vmul.f32 %v9907, 0.70710677
        %v9925 = vmul.f32 %v9912, 0.70710677
        %v9926 = vmul.f32 %v9917, 0.70710677
        %v9927 = vand.u32 2147483647, %v9920
        %v9928 = vand.u32 2147483647, %v9921
        %v9929 = vand.u32 2147483647, %v9922
        %v9930 = vand.u32 2147483647, %v9923
        %v9931 = vand.u32 2147483647, %v9924
        %v9932 = vand.u32 2147483647, %v9925
        %v9933 = vand.u32 2147483647, %v9926
        %v9934 = vmul.f32 %v9927, 0.3275911
        %v9935 = vmul.f32 %v9928, 0.3275911
        %v9936 = vmul.f32 %v9929, 0.3275911
        %v9937 = vmul.f32 %v9930, 0.3275911
        %v9938 = vmul.f32 %v9931, 0.3275911
        %v9939 = vmul.f32 %v9932, 0.3275911
        %v9940 = vmul.f32 %v9933, 0.3275911
        %v9941 = vadd.f32 %v9934, 1.0
        %v9942 = vadd.f32 %v9935, 1.0
        %v9943 = vadd.f32 %v9936, 1.0
        %v9944 = vadd.f32 %v9937, 1.0
        %v9945 = vadd.f32 %v9938, 1.0
        %v9946 = vadd.f32 %v9939, 1.0
        %v9947 = vadd.f32 %v9940, 1.0
        %v9948 = vrcp.pop %v9941
        %v9949 = vmul.f32 1.0, %v9948
        %v9950 = vrcp.pop %v9942
        %v9951 = vmul.f32 1.0, %v9950
        %v9952 = vrcp.pop %v9943
        %v9953 = vmul.f32 1.0, %v9952
        %v9954 = vrcp.pop %v9944
        %v9955 = vmul.f32 1.0, %v9954
        %v9956 = vrcp.pop %v9945
        %v9957 = vmul.f32 1.0, %v9956
        %v9958 = vrcp.pop %v9946
        %v9959 = vmul.f32 1.0, %v9958
        %v9960 = vrcp.pop %v9947
        %v9961 = vmul.f32 1.0, %v9960
        %v9962 = vmul.f32 %v9949, 1.0614054
        %v9963 = vmul.f32 %v9951, 1.0614054
        %v9964 = vmul.f32 %v9953, 1.0614054
        %v9965 = vmul.f32 %v9955, 1.0614054
        %v9966 = vmul.f32 %v9957, 1.0614054
        %v9967 = vmul.f32 %v9959, 1.0614054
        %v9968 = vmul.f32 %v9961, 1.0614054
        %v9969 = vsub.f32 %v9962, 1.4531521
        %v9970 = vsub.f32 %v9963, 1.4531521
        %v9971 = vsub.f32 %v9964, 1.4531521
        %v9972 = vsub.f32 %v9965, 1.4531521
        %v9973 = vsub.f32 %v9966, 1.4531521
        %v9974 = vsub.f32 %v9967, 1.4531521
        %v9975 = vsub.f32 %v9968, 1.4531521
        %v9976 = vmul.f32 %v9969, %v9949
        %v9977 = vmul.f32 %v9970, %v9951
        %v9978 = vmul.f32 %v9971, %v9953
        %v9979 = vmul.f32 %v9972, %v9955
        %v9980 = vmul.f32 %v9973, %v9957
        %v9981 = vmul.f32 %v9974, %v9959
        %v9982 = vmul.f32 %v9975, %v9961
        %v9983 = vadd.f32 %v9976, 1.4214138
        %v9984 = vadd.f32 %v9977, 1.4214138
        %v9985 = vadd.f32 %v9978, 1.4214138
        %v9986 = vadd.f32 %v9979, 1.4214138
        %v9987 = vadd.f32 %v9980, 1.4214138
        %v9988 = vadd.f32 %v9981, 1.4214138
        %v9989 = vadd.f32 %v9982, 1.4214138
        %v9990 = vmul.f32 %v9983, %v9949
        %v9991 = vmul.f32 %v9984, %v9951
        %v9992 = vmul.f32 %v9985, %v9953
        %v9993 = vmul.f32 %v9986, %v9955
        %v9994 = vmul.f32 %v9987, %v9957
        %v9995 = vmul.f32 %v9988, %v9959
        %v9996 = vmul.f32 %v9989, %v9961
        %v9997 = vsub.f32 %v9990, 0.28449672
        %v9998 = vsub.f32 %v9991, 0.28449672
        %v9999 = vsub.f32 %v9992, 0.28449672
        %v10000 = vsub.f32 %v9993, 0.28449672
        %v10001 = vsub.f32 %v9994, 0.28449672
        %v10002 = vsub.f32 %v9995, 0.28449672
        %v10003 = vsub.f32 %v9996, 0.28449672
        %v10004 = vmul.f32 %v9997, %v9949
        %v10005 = vmul.f32 %v9998, %v9951
        %v10006 = vmul.f32 %v9999, %v9953
        %v10007 = vmul.f32 %v10000, %v9955
        %v10008 = vmul.f32 %v10001, %v9957
        %v10009 = vmul.f32 %v10002, %v9959
        %v10010 = vmul.f32 %v10003, %v9961
        %v10011 = vadd.f32 %v10004, 0.2548296
        %v10012 = vadd.f32 %v10005, 0.2548296
        %v10013 = vadd.f32 %v10006, 0.2548296
        %v10014 = vadd.f32 %v10007, 0.2548296
        %v10015 = vadd.f32 %v10008, 0.2548296
        %v10016 = vadd.f32 %v10009, 0.2548296
        %v10017 = vadd.f32 %v10010, 0.2548296
        %v10018 = vmul.f32 %v10011, %v9949
        %v10019 = vmul.f32 %v10012, %v9951
        %v10020 = vmul.f32 %v10013, %v9953
        %v10021 = vmul.f32 %v10014, %v9955
        %v10022 = vmul.f32 %v10015, %v9957
        %v10023 = vmul.f32 %v10016, %v9959
        %v10024 = vmul.f32 %v10017, %v9961
        %v10025 = vsub.f32 0.0, %v9927
        %v10026 = vsub.f32 0.0, %v9928
        %v10027 = vsub.f32 0.0, %v9929
        %v10028 = vsub.f32 0.0, %v9930
        %v10029 = vsub.f32 0.0, %v9931
        %v10030 = vsub.f32 0.0, %v9932
        %v10031 = vsub.f32 0.0, %v9933
        %v10032 = vmul.f32 %v10025, %v9927
        %v10033 = vmul.f32 %v10026, %v9928
        %v10034 = vmul.f32 %v10027, %v9929
        %v10035 = vmul.f32 %v10028, %v9930
        %v10036 = vmul.f32 %v10029, %v9931
        %v10037 = vmul.f32 %v10030, %v9932
        %v10038 = vmul.f32 %v10031, %v9933
        %v10039 = vmul.f32 %v10032, 1.442695
        %v10040 = vpow.pop %v10039
        %v10041 = vmul.f32 %v10033, 1.442695
        %v10042 = vpow.pop %v10041
        %v10043 = vmul.f32 %v10034, 1.442695
        %v10044 = vpow.pop %v10043
        %v10045 = vmul.f32 %v10035, 1.442695
        %v10046 = vpow.pop %v10045
        %v10047 = vmul.f32 %v10036, 1.442695
        %v10048 = vpow.pop %v10047
        %v10049 = vmul.f32 %v10037, 1.442695
        %v10050 = vpow.pop %v10049
        %v10051 = vmul.f32 %v10038, 1.442695
        %v10052 = vpow.pop %v10051
        %v10053 = vmul.f32 %v10018, %v10040
        %v10054 = vmul.f32 %v10019, %v10042
        %v10055 = vmul.f32 %v10020, %v10044
        %v10056 = vmul.f32 %v10021, %v10046
        %v10057 = vmul.f32 %v10022, %v10048
        %v10058 = vmul.f32 %v10023, %v10050
        %v10059 = vmul.f32 %v10024, %v10052
        %v10060 = vsub.f32 1.0, %v10053
        %v10061 = vsub.f32 1.0, %v10054
        %v10062 = vsub.f32 1.0, %v10055
        %v10063 = vsub.f32 1.0, %v10056
        %v10064 = vsub.f32 1.0, %v10057
        %v10065 = vsub.f32 1.0, %v10058
        %v10066 = vsub.f32 1.0, %v10059
        %vm10067 = vcmp.ge.f32.partialorder %v9920, 0.0
        %vm10068 = vcmp.ge.f32.partialorder %v9921, 0.0
        %vm10069 = vcmp.ge.f32.partialorder %v9922, 0.0
        %vm10070 = vcmp.ge.f32.partialorder %v9923, 0.0
        %vm10071 = vcmp.ge.f32.partialorder %v9924, 0.0
        %vm10072 = vcmp.ge.f32.partialorder %v9925, 0.0
        %vm10073 = vcmp.ge.f32.partialorder %v9926, 0.0
        %v10074 = vsub.f32 0.0, %v10060
        %v10075 = vsub.f32 0.0, %v10061
        %v10076 = vsub.f32 0.0, %v10062
        %v10077 = vsub.f32 0.0, %v10063
        %v10078 = vsub.f32 0.0, %v10064
        %v10079 = vsub.f32 0.0, %v10065
        %v10080 = vsub.f32 0.0, %v10066
        %v10081 = vsel %vm10067, %v10060, %v10074
        %v10082 = vsel %vm10068, %v10061, %v10075
        %v10083 = vsel %vm10069, %v10062, %v10076
        %v10084 = vsel %vm10070, %v10063, %v10077
        %v10085 = vsel %vm10071, %v10064, %v10078
        %v10086 = vsel %vm10072, %v10065, %v10079
        %v10087 = vsel %vm10073, %v10066, %v10080
        %v10088 = vmul.f32 %v9887, 0.5
        %v10089 = vmul.f32 %v9892, 0.5
        %v10090 = vmul.f32 %v9897, 0.5
        %v10091 = vmul.f32 %v9902, 0.5
        %v10092 = vmul.f32 %v9907, 0.5
        %v10093 = vmul.f32 %v9912, 0.5
        %v10094 = vmul.f32 %v9917, 0.5
        %v10095 = vadd.f32 %v10081, 1.0
        %v10096 = vadd.f32 %v10082, 1.0
        %v10097 = vadd.f32 %v10083, 1.0
        %v10098 = vadd.f32 %v10084, 1.0
        %v10099 = vadd.f32 %v10085, 1.0
        %v10100 = vadd.f32 %v10086, 1.0
        %v10101 = vadd.f32 %v10087, 1.0
        %v10102 = vmul.f32 %v10088, %v10095
        %v10103 = vmul.f32 %v10089, %v10096
        %v10104 = vmul.f32 %v10090, %v10097
        %v10105 = vmul.f32 %v10091, %v10098
        %v10106 = vmul.f32 %v10092, %v10099
        %v10107 = vmul.f32 %v10093, %v10100
        %v10108 = vmul.f32 %v10094, %v10101
        %v10109 = vld [vmem:[%s23] sm:$0xff]
        %v10110 = vld [vmem:[%s23 + $0x8] sm:$0xff]
        %v10111 = vld [vmem:[%s23 + $0x10] sm:$0xff]
        %v10112 = vld [vmem:[%s23 + $0x18] sm:$0xff]
        %v10113 = vld [vmem:[%s23 + $0x20] sm:$0xff]
        %v10114 = vld [vmem:[%s23 + $0x28] sm:$0xff]
        %v10115 = vld [vmem:[%s23 + $0x30] sm:$0xff]
        %v10116 = vld [vmem:[%s23 + $0x38] sm:$0xff]
        %v10117 = vld [vmem:[%s23 + $0x40] sm:$0xff]
        %v10118 = vld [vmem:[%s23 + $0x48] sm:$0xff]
        %v10119 = vld [vmem:[%s23 + $0x50] sm:$0xff]
        %v10120 = vld [vmem:[%s23 + $0x58] sm:$0xff]
        %v10121 = vld [vmem:[%s23 + $0x60] sm:$0xff]
        %v10122 = vld [vmem:[%s23 + $0x68] sm:$0xff]
        %v10123 = vld [vmem:[%s23 + $0x70] sm:$0xff]
        %v10124 = vld [vmem:[%s23 + $0x78] sm:$0xff]
        %10125 = vmatprep.subr.mxu0 0.0
        %10126 = vmatpush1.msra.mxu0 %v10124
        %10127 = vmatprep.subr.mxu0 0.0
        %10128 = vmatpush1.msra.mxu0 %v10123
        %10129 = vmatprep.subr.mxu0 0.0
        %10130 = vmatpush1.msra.mxu0 %v10122
        %10131 = vmatprep.subr.mxu0 0.0
        %10132 = vmatpush1.msra.mxu0 %v10121
        %10133 = vmatprep.subr.mxu0 0.0
        %10134 = vmatpush1.msra.mxu0 %v10120
        %10135 = vmatprep.subr.mxu0 0.0
        %10136 = vmatpush1.msra.mxu0 %v10119
        %10137 = vmatprep.subr.mxu0 0.0
        %10138 = vmatpush1.msra.mxu0 %v10118
        %10139 = vmatprep.subr.mxu0 0.0
        %10140 = vmatpush1.msra.mxu0 %v10117
        %10141 = vmatprep.subr.mxu0 0.0
        %10142 = vmatpush1.msra.mxu0 %v10116
        %10143 = vmatprep.subr.mxu0 0.0
        %10144 = vmatpush1.msra.mxu0 %v10115
        %10145 = vmatprep.subr.mxu0 0.0
        %10146 = vmatpush1.msra.mxu0 %v10114
        %10147 = vmatprep.subr.mxu0 0.0
        %10148 = vmatpush1.msra.mxu0 %v10113
        %10149 = vmatprep.subr.mxu0 0.0
        %10150 = vmatpush1.msra.mxu0 %v10112
        %10151 = vmatprep.subr.mxu0 0.0
        %10152 = vmatpush1.msra.mxu0 %v10111
        %10153 = vmatprep.subr.mxu0 0.0
        %10154 = vmatpush1.msra.mxu0 %v10110
        %10155 = vmatprep.subr.mxu0 0.0
        %10156 = vmatpush1.msra.mxu0 %v10109
        %10157 = vmatprep.subr.mxu0 0.0
        %10158 = vmatpush2.msra.mxu0 0.0
        %10159 = vmatprep.subr.mxu0 0.0
        %10160 = vmatpush2.msra.mxu0 0.0
        %10161 = vmatprep.subr.mxu0 0.0
        %10162 = vmatpush2.msra.mxu0 0.0
        %10163 = vmatprep.subr.mxu0 0.0
        %10164 = vmatpush2.msra.mxu0 0.0
        %10165 = vmatprep.subr.mxu0 0.0
        %10166 = vmatpush2.msra.mxu0 0.0
        %10167 = vmatprep.subr.mxu0 0.0
        %10168 = vmatpush2.msra.mxu0 0.0
        %10169 = vmatprep.subr.mxu0 0.0
        %10170 = vmatpush2.msra.mxu0 0.0
        %10171 = vmatprep.subr.mxu0 0.0
        %10172 = vmatpush2.msra.mxu0 0.0
        %10173 = vmatprep.subr.mxu0 0.0
        %10174 = vmatpush2.msra.mxu0 0.0
        %10175 = vmatprep.subr.mxu0 0.0
        %10176 = vmatpush2.msra.mxu0 0.0
        %10177 = vmatprep.subr.mxu0 0.0
        %10178 = vmatpush2.msra.mxu0 0.0
        %10179 = vmatprep.subr.mxu0 0.0
        %10180 = vmatpush2.msra.mxu0 0.0
        %10181 = vmatprep.subr.mxu0 0.0
        %10182 = vmatpush2.msra.mxu0 0.0
        %10183 = vmatprep.subr.mxu0 0.0
        %10184 = vmatpush2.msra.mxu0 0.0
        %10185 = vmatprep.subr.mxu0 0.0
        %10186 = vmatpush2.msra.mxu0 0.0
        %10187 = vmatprep.subr.mxu0 0.0
        %10188 = vmatpush2.msra.mxu0 0.0
        %10189 = vmatprep.mubr.f32.mxu0 0.0
        %10190 = vmatmul.mubr.f32.gmra.mxu0 %v10102
        %v10191 = vpop.f32.mrf.mxu0
        %v10192 = vadd.f32 0.0, %v10191
        %v10193 = vpop.f32.mrf.mxu0
        %10194 = vmatprep.mubr.f32.mxu0 0.0
        %10195 = vmatmul.mubr.f32.gmra.mxu0 %v10103
        %v10196 = vpop.f32.mrf.mxu0
        %v10197 = vadd.f32 0.0, %v10196
        %v10198 = vpop.f32.mrf.mxu0
        %10199 = vmatprep.mubr.f32.mxu0 0.0
        %10200 = vmatmul.mubr.f32.gmra.mxu0 %v10104
        %v10201 = vpop.f32.mrf.mxu0
        %v10202 = vadd.f32 0.0, %v10201
        %v10203 = vpop.f32.mrf.mxu0
        %10204 = vmatprep.mubr.f32.mxu0 0.0
        %10205 = vmatmul.mubr.f32.gmra.mxu0 %v10105
        %v10206 = vpop.f32.mrf.mxu0
        %v10207 = vadd.f32 0.0, %v10206
        %v10208 = vpop.f32.mrf.mxu0
        %10209 = vmatprep.mubr.f32.mxu0 0.0
        %10210 = vmatmul.mubr.f32.gmra.mxu0 %v10106
        %v10211 = vpop.f32.mrf.mxu0
        %v10212 = vadd.f32 0.0, %v10211
        %v10213 = vpop.f32.mrf.mxu0
        %10214 = vmatprep.mubr.f32.mxu0 0.0
        %10215 = vmatmul.mubr.f32.gmra.mxu0 %v10107
        %v10216 = vpop.f32.mrf.mxu0
        %v10217 = vadd.f32 0.0, %v10216
        %v10218 = vpop.f32.mrf.mxu0
        %10219 = vmatprep.mubr.f32.mxu0 0.0
        %10220 = vmatmul.mubr.f32.gmra.mxu0 %v10108
        %v10221 = vpop.f32.mrf.mxu0
        %v10222 = vadd.f32 0.0, %v10221
        %v10223 = vpop.f32.mrf.mxu0
        %10224 = vdwg.mxu0
        %v10225 = vadd.f32 %v9668, %v10192
        %v10226 = vadd.f32 %v9669, %v10197
        %v10227 = vadd.f32 %v9670, %v10202
        %v10228 = vadd.f32 %v9671, %v10207
        %v10229 = vadd.f32 %v9672, %v10212
        %v10230 = vadd.f32 %v9673, %v10217
        %v10231 = vadd.f32 %v9674, %v10222
        %v10232 = vlaneseq
        %v10233 = vshrl.u32 %v10232, 7
        %v10234 = vsub.s32 2, %v10233
        %v10235 = vrot.slane %v905, %v10234
        %v10236 = vadd.f32 %v10225, %v10235
        %v10237 = vadd.f32 %v10226, %v10235
        %v10238 = vadd.f32 %v10227, %v10235
        %v10239 = vadd.f32 %v10228, %v10235
        %v10240 = vadd.f32 %v10229, %v10235
        %v10241 = vadd.f32 %v10230, %v10235
        %v10242 = vadd.f32 %v10231, %v10235
        %10243 = vst.msk [vmem:[%s895] sm:$0xff] %vm907, %v10236
        %10244 = vst.msk [vmem:[%s895 + $0x8] sm:$0xff] %vm907, %v10237
        %10245 = vst.msk [vmem:[%s895 + $0x10] sm:$0xff] %vm907, %v10238
        %10246 = vst.msk [vmem:[%s895 + $0x18] sm:$0xff] %vm907, %v10239
        %10247 = vst.msk [vmem:[%s895 + $0x20] sm:$0xff] %vm907, %v10240
        %10248 = vst.msk [vmem:[%s895 + $0x28] sm:$0xff] %vm907, %v10241
        %10249 = vst.msk [vmem:[%s895 + $0x30] sm:$0x1] %vm926, %v10242
        %p10250 = scmp.lt.s32.totalorder %s41, 1
        %s10251 = scalar_select %p10250, %s41, 1
        %s10252 = smul.addr %s10251, 7
        %s10253 = smul.addr %s10252, 8
        %s10254 = scalar_lea.vmem %s24, %s10253
        // Predicated region
        $region161: #{dcformer_block.1} parent=115 // pred_check
          %p10255 = pneg %p568
        $region162: #{dcformer_block.1} parent=115 // pred_check_branch
          %10257 = sbr.rel (%p10255) target = $region164
        $region163: #{dcformer_block.1} parent=115 // pred_region
          _
        $region164: #{dcformer_block.1} parent=115 // pred_fallthru
          _
      $region116: #{dcformer_block.1} parent=5 // pred_fallthru
        _
      %p10258 = scmp.le.s32.totalorder 2, %s36
      // Predicated region
      $region165: #{dcformer_block.1} parent=5 // pred_check
        %p10259 = pneg %p10258
      $region166: #{dcformer_block.1} parent=5 // pred_check_branch
        %10261 = sbr.rel (%p10259) target = $region168
      $region167: #{dcformer_block.1} parent=5 // pred_region
        %s10262 = ssub.s32 %s36, 2
        // Predicated region
        $region169: #{dcformer_block.1} parent=167 // pred_check
          %p10263 = pneg %p574
        $region170: #{dcformer_block.1} parent=167 // pred_check_branch
          %10265 = sbr.rel (%p10263) target = $region172
        $region171: #{dcformer_block.1} parent=167 // pred_region
          %p10266 = scmp.lt.s32.totalorder %s42, 1
          %s10267 = scalar_select %p10266, %s42, 1
          %s10268 = smul.addr %s10267, 7
          %s10269 = smul.addr %s10268, 8
          %s10270 = scalar_lea.vmem %s24, %s10269
        $region172: #{dcformer_block.1} parent=167 // pred_fallthru
          _
      $region168: #{dcformer_block.1} parent=5 // pred_fallthru
        _
    $region6: #{dcformer_block.1} parent=1 // loop_footer
      %s40 = sadd.s32 1, %s36
    $region7: #{dcformer_block.1} parent=1 // loop_footer_branch
      %35 = sbr.rel target = $region3
    $region8: #{dcformer_block.1} parent=1 // loop_exit
      _
    %10271 = vsyncpa [#allocation3], 1
    %s10272 = scalar_lea.sflag [#allocation3], 1
    %10273 = vsyncpa %s10272, 1
    %10274 = vsyncpa [#allocation5], 1
    %10275 = vsyncpa [#allocation8], 1
    %10276 = vsyncpa [#allocation11], 1
    %10277 = vsyncpa [#allocation14], 1
    %10278 = vsyncpa [#allocation17], 1

</llo_original>
